<compile_context>
chip_gen: v7x
topology: tpu7x:2x2x1
jax: 0.10.0
libtpu: 0.0.40
codegen_flags: <defaults>
</compile_context>

<pallas_src>
import functools

import jax
import jax.numpy as jnp
from jax.experimental import pallas as pl
from jax.experimental.pallas import tpu as pltpu


def _round_up(x, m):
    return (x + m - 1) // m * m


# --------------------------------------------------------------------------
# Fused ConvODEFunc kernel:  out = conv2(t, conv1(t, x)),  both 3x3 pad=1.
#
# Spatial dims are flattened to HW rows.  A zero "halo" of (W+1) rows above
# and below the image lets every 3x3 tap (dy, dx) be read as a plain row
# slice at static offset dy*W + dx; left/right column wrap is fixed with a
# per-row mask.  All tensors inside the kernel are 2D (no in-kernel reshape).
# Channel order inside the kernel is [data channels ..., time channel].
# --------------------------------------------------------------------------
@functools.lru_cache(maxsize=None)
def _make_fused_ode_func_kernel(H, W, cin, f):
    HW = H * W
    c1 = cin + 1          # conv1 input channels (x + time)
    c2 = f + 1            # conv2 input channels (conv1 out + time)
    pad = W + 1           # flat zero rows before / after the image
    rows = HW + 2 * pad   # flat padded buffer rows

    def kernel(t_ref, x_ref, w1_ref, b1_ref, w2_ref, b2_ref, o_ref,
               xbuf_ref, mbuf_ref):
        t = t_ref[0]

        # Column-validity masks (left/right edge wrap of the flattened rows).
        col = jax.lax.broadcasted_iota(jnp.int32, (HW, 1), 0) % W
        mask_l = col != 0          # tap dx == 0 reads x-1 (invalid at x == 0)
        mask_r = col != (W - 1)    # tap dx == 2 reads x+1 (invalid at x == W-1)

        def tap_lhs(buf_ref, tap):
            dy, dx = tap // 3, tap % 3
            start = dy * W + dx                      # static offset
            win = buf_ref[start:start + HW, :]       # (HW, channels)
            if dx == 0:
                win = jnp.where(mask_l, win, 0.0)
            elif dx == 2:
                win = jnp.where(mask_r, win, 0.0)
            return win

        # ---- conv1 input: [x channels | t channel], flat, zero padded ----
        xbuf_ref[...] = jnp.zeros_like(xbuf_ref)
        xbuf_ref[pad:pad + HW, 0:cin] = x_ref[...]
        xbuf_ref[pad:pad + HW, cin:cin + 1] = jnp.full((HW, 1), t, jnp.float32)

        # ---- conv1: 9 accumulated matmuls (implicit im2col, K = cin+1) ----
        acc1 = jnp.broadcast_to(b1_ref[...], (HW, f))
        for tap in range(9):
            acc1 = acc1 + jnp.dot(tap_lhs(xbuf_ref, tap), w1_ref[tap],
                                  preferred_element_type=jnp.float32)
        # NOTE: reference ConvODEFunc.forward never applies non_linearity.

        # ---- conv2 input: [conv1 output | t channel], stays in VMEM ----
        mbuf_ref[...] = jnp.zeros_like(mbuf_ref)
        mbuf_ref[pad:pad + HW, 0:f] = acc1
        mbuf_ref[pad:pad + HW, f:f + 1] = jnp.full((HW, 1), t, jnp.float32)

        # ---- conv2: accumulate straight into the VMEM-resident output ----
        o_ref[...] = jnp.broadcast_to(b2_ref[...], (HW, cin))
        for tap in range(9):
            o_ref[...] += jnp.dot(tap_lhs(mbuf_ref, tap), w2_ref[tap],
                                  preferred_element_type=jnp.float32)

    return kernel, rows


def conv_ode_func(t, x, p):
    """Fused Pallas evaluation of ConvODEFunc.forward(t, x).  x: [N, H, W, cin]."""
    N, H, W, cin = x.shape
    f = p["w1"].shape[-1]
    HW = H * W
    kernel, rows = _make_fused_ode_func_kernel(H, W, cin, f)
    t_arr = jnp.full((1,), t, jnp.float32)
    x_flat = x.reshape(N, HW, cin)

    out = pl.pallas_call(
        kernel,
        out_shape=jax.ShapeDtypeStruct((N, HW, cin), jnp.float32),
        grid_spec=pltpu.PrefetchScalarGridSpec(
            num_scalar_prefetch=0,
            grid=(N,),
            in_specs=[
                pl.BlockSpec(memory_space=pltpu.MemorySpace.SMEM),    # t scalar
                pl.BlockSpec((None, HW, cin), lambda n: (n, 0, 0)),   # x (per image)
                pl.BlockSpec((9, cin + 1, f), lambda n: (0, 0, 0)),   # w1 packed
                pl.BlockSpec((1, f), lambda n: (0, 0)),               # b1
                pl.BlockSpec((9, f + 1, cin), lambda n: (0, 0, 0)),   # w2 packed
                pl.BlockSpec((1, cin), lambda n: (0, 0)),             # b2
            ],
            out_specs=pl.BlockSpec((None, HW, cin), lambda n: (n, 0, 0)),
            scratch_shapes=[
                pltpu.VMEM((rows, cin + 1), jnp.float32),   # padded conv1 input
                pltpu.VMEM((rows, f + 1), jnp.float32),     # padded conv2 input
            ],
        ),
        compiler_params=pltpu.CompilerParams(
            dimension_semantics=("parallel",),
            vmem_limit_bytes=32 * 1024 * 1024,
        ),
    )(t_arr, x_flat, p["w1"], p["b1"], p["w2"], p["b2"])
    return out.reshape(N, H, W, cin)


# --------------------------------------------------------------------------
# Tiled matmul + bias kernel for the final 1x1 conv.
# M/N/K tiled; tiles are clamped to the real problem size (no K padding to a
# fixed 512); the output block is the K-axis accumulator (no scratch).
# --------------------------------------------------------------------------
def _matmul_bias_kernel(x_ref, w_ref, b_ref, o_ref):
    k = pl.program_id(2)

    @pl.when(k == 0)
    def _():
        o_ref[...] = jnp.broadcast_to(b_ref[...], o_ref.shape)

    o_ref[...] += jnp.dot(x_ref[...], w_ref[...],
                          preferred_element_type=jnp.float32)


def matmul_bias(x, w, b, *, tm=256, tn=128, tk=256):
    """out[M, N] = x[M, K] @ w[K, N] + b[N], tiled Pallas TPU kernel (f32)."""
    M, K = x.shape
    K2, N = w.shape
    assert K == K2
    tm = min(tm, _round_up(M, 8))
    tk = min(tk, _round_up(K, 128))
    tn = min(tn, _round_up(N, 128))
    mpad, kpad, npad = _round_up(M, tm), _round_up(K, tk), _round_up(N, tn)
    xp = jnp.pad(x, ((0, mpad - M), (0, kpad - K)))
    wp = jnp.pad(w, ((0, kpad - K), (0, npad - N)))
    bp = jnp.pad(b.reshape(1, -1), ((0, 0), (0, npad - N)))

    out = pl.pallas_call(
        _matmul_bias_kernel,
        out_shape=jax.ShapeDtypeStruct((mpad, npad), jnp.float32),
        grid_spec=pltpu.PrefetchScalarGridSpec(
            num_scalar_prefetch=0,
            grid=(mpad // tm, npad // tn, kpad // tk),
            in_specs=[
                pl.BlockSpec((tm, tk), lambda i, j, k: (i, k)),
                pl.BlockSpec((tk, tn), lambda i, j, k: (k, j)),
                pl.BlockSpec((1, tn), lambda i, j, k: (0, j)),
            ],
            out_specs=pl.BlockSpec((tm, tn), lambda i, j, k: (i, j)),
        ),
        compiler_params=pltpu.CompilerParams(
            dimension_semantics=("parallel", "parallel", "arbitrary"),
            vmem_limit_bytes=32 * 1024 * 1024,
        ),
    )(xp, wp, bp)
    return out[:M, :N]


def conv1x1(x, w2d, b):
    N, H, W, C = x.shape
    out = matmul_bias(x.reshape(N * H * W, C), w2d, b)
    return out.reshape(N, H, W, -1)


# --------------------------------------------------------------------------
# ODEBlock / pooling / upsampling glue
# --------------------------------------------------------------------------
def ode_block(x, p, n_steps=2):
    # TODO(synk): reference ODEBlock uses adaptive dopri5 odeint (torchdiffeq,
    # tol=1e-3); its source is not provided, so it is replaced by fixed-step
    # RK4 over t in [0, 1].
    dt = 1.0 / n_steps
    y = x
    for i in range(n_steps):
        t = i * dt
        k1 = conv_ode_func(t, y, p)
        k2 = conv_ode_func(t + dt / 2, y + (dt / 2) * k1, p)
        k3 = conv_ode_func(t + dt / 2, y + (dt / 2) * k2, p)
        k4 = conv_ode_func(t + dt, y + dt * k3, p)
        y = y + (dt / 6) * (k1 + 2 * k2 + 2 * k3 + k4)
    return y


def maxpool2x2(x):
    N, H, W, C = x.shape
    return x.reshape(N, H // 2, 2, W // 2, 2, C).max(axis=(2, 4))


def upsample2x(x):
    # nn.Upsample(scale_factor=2), default nearest: one broadcast + reshape.
    N, H, W, C = x.shape
    y = jnp.broadcast_to(x[:, :, None, :, None, :], (N, H, 2, W, 2, C))
    return y.reshape(N, 2 * H, 2 * W, C)


# --------------------------------------------------------------------------
# Parameters (packed once for the kernels)
# --------------------------------------------------------------------------
FILTERS = (64, 128, 256, 512, 1028, 512, 256, 128, 64)  # 1028 matches the spec


def _pack_time_conv(w_hwio, b):
    """Pack a Conv2dTime weight [3,3,1+cin,cout] (HWIO, time channel FIRST as
    in torch.cat([t, x], 1)) into the kernel layout [9, cin+1, cout] with the
    time channel moved LAST (matching the in-kernel [x..., t] channel order)."""
    kh, kw, c1, cout = w_hwio.shape
    w = w_hwio.reshape(kh * kw, c1, cout)
    w = jnp.concatenate([w[:, 1:, :], w[:, :1, :]], axis=1)
    return w, b.reshape(1, cout)


def init_params(key, input_channels=1, output_channels=1):
    def init_conv(k, kh, kw, cin, cout):
        wk, bk = jax.random.split(k)
        bound = 1.0 / (kh * kw * cin) ** 0.5
        w = jax.random.uniform(wk, (kh, kw, cin, cout), jnp.float32, -bound, bound)
        b = jax.random.uniform(bk, (cout,), jnp.float32, -bound, bound)
        return w, b

    params = {}
    keys = jax.random.split(key, len(FILTERS) + 1)
    for i, f in enumerate(FILTERS):
        k1, k2 = jax.random.split(keys[i])
        # conv1: Conv2dTime(in_ch, f) -> HWIO weight [3,3,in_ch+1,f] (t first)
        # conv2: Conv2dTime(f, in_ch) -> HWIO weight [3,3,f+1,in_ch] (t first)
        w1, b1 = init_conv(k1, 3, 3, input_channels + 1, f)
        w2, b2 = init_conv(k2, 3, 3, f + 1, input_channels)
        w1p, b1p = _pack_time_conv(w1, b1)
        w2p, b2p = _pack_time_conv(w2, b2)
        params[f"ode{i + 1}"] = dict(w1=w1p, b1=b1p, w2=w2p, b2=b2p)
    wo, bo = init_conv(keys[-1], 1, 1, input_channels, output_channels)
    params["convout"] = dict(w=wo.reshape(input_channels, output_channels), b=bo)
    return params


# --------------------------------------------------------------------------
# Full ODENet forward
# --------------------------------------------------------------------------
def odenet_forward(x_nchw, params):
    y = jnp.transpose(x_nchw, (0, 2, 3, 1))  # NCHW -> NHWC
    for i in (1, 2, 3, 4):
        y = ode_block(y, params[f"ode{i}"])
        y = maxpool2x2(y)
    y = ode_block(y, params["ode5"])
    for i in (6, 7, 8, 9):
        y = upsample2x(y)
        y = ode_block(y, params[f"ode{i}"])
    y = conv1x1(y, params["convout"]["w"], params["convout"]["b"])
    return jnp.transpose(y, (0, 3, 1, 2))  # NHWC -> NCHW


# --------------------------------------------------------------------------
# Pure-JAX reference for the fused kernel (sanity check only)
# --------------------------------------------------------------------------
def _conv_ode_func_ref(t, x, p):
    def time_conv(t, inp, w_packed, b):
        n, h, w_, c = inp.shape
        z = jnp.concatenate([inp, jnp.full((n, h, w_, 1), t, inp.dtype)], axis=-1)
        wk = w_packed.reshape(3, 3, c + 1, -1)
        out = jax.lax.conv_general_dilated(
            z, wk, window_strides=(1, 1), padding="SAME",
            dimension_numbers=("NHWC", "HWIO", "NHWC"),
            precision=jax.lax.Precision.HIGHEST)
        return out + b.reshape(1, 1, 1, -1)

    return time_conv(t, time_conv(t, x, p["w1"], p["b1"]), p["w2"], p["b2"])


if __name__ == "__main__":
    key = jax.random.PRNGKey(0)
    pkey, xkey = jax.random.split(key)
    params = init_params(pkey, input_channels=1, output_channels=1)
    x = jax.random.normal(xkey, (2, 1, 16, 16), jnp.float32)  # NCHW

    # Sanity check: fused Pallas ODE-func kernel vs a pure-JAX lax.conv ref.
    x_nhwc = jnp.transpose(x, (0, 2, 3, 1))
    got = conv_ode_func(0.25, x_nhwc, params["ode1"])
    want = _conv_ode_func_ref(0.25, x_nhwc, params["ode1"])
    assert jnp.allclose(got, want, atol=1e-3, rtol=1e-3), "fused conv kernel mismatch"

    fwd = jax.jit(functools.partial(odenet_forward, params=params))
    y = fwd(x)
    jax.block_until_ready(y)
    assert y.shape == (2, 1, 16, 16) and y.dtype == jnp.float32
    print("KERNEL_OK")
</pallas_src>

<mosaic_0001>
module attributes {stable_mosaic.version = 11 : i64} {
  func.func @kernel(%arg0: i32, %arg1: memref<1xf32, #tpu.memory_space<smem>>, %arg2: memref<1x256x1xf32, #tpu.memory_space<vmem>>, %arg3: memref<9x2x64xf32, #tpu.memory_space<vmem>>, %arg4: memref<1x64xf32, #tpu.memory_space<vmem>>, %arg5: memref<9x65x1xf32, #tpu.memory_space<vmem>>, %arg6: memref<1x1xf32, #tpu.memory_space<vmem>>, %arg7: memref<1x256x1xf32, #tpu.memory_space<vmem>>, %arg8: memref<290x2xf32, #tpu.memory_space<vmem>>, %arg9: memref<290x65xf32, #tpu.memory_space<vmem>>) attributes {dimension_semantics = [#tpu.dimension_semantics<parallel>], iteration_bounds = array<i64: 2>, scalar_prefetch = 0 : i64, scratch_operands = 2 : i64, tpu.core_type = #tpu.core_type<tc>, window_params = [{transform_indices = @transform_0, window_bounds = array<i64: 1>}, {transform_indices = @transform_1, window_bounds = array<i64: 1, 256, 1>}, {pipeline_mode = #tpu.pipeline_mode<synchronous>, transform_indices = @transform_2, window_bounds = array<i64: 9, 2, 64>}, {pipeline_mode = #tpu.pipeline_mode<synchronous>, transform_indices = @transform_3, window_bounds = array<i64: 1, 64>}, {pipeline_mode = #tpu.pipeline_mode<synchronous>, transform_indices = @transform_4, window_bounds = array<i64: 9, 65, 1>}, {pipeline_mode = #tpu.pipeline_mode<synchronous>, transform_indices = @transform_5, window_bounds = array<i64: 1, 1>}, {transform_indices = @transform_6, window_bounds = array<i64: 1, 256, 1>}]} {
    %c0 = arith.constant 0 : index
    %0 = memref.load %arg1[%c0] : memref<1xf32, #tpu.memory_space<smem>>
    %1 = tpu.iota {dimensions = array<i32: 0>} : vector<256x1xi32>
    %c16_i32 = arith.constant 16 : i32
    %c0_i32 = arith.constant 0 : i32
    %2 = arith.cmpi eq, %c16_i32, %c0_i32 : i32
    %c1_i32 = arith.constant 1 : i32
    %3 = arith.select %2, %c1_i32, %c16_i32 : i32
    %4 = vector.broadcast %3 : i32 to vector<256x1xi32>
    %5 = arith.remsi %1, %4 : vector<256x1xi32>
    %c0_i32_0 = arith.constant 0 : i32
    %6 = vector.broadcast %c0_i32_0 : i32 to vector<256x1xi32>
    %7 = arith.cmpi ne, %5, %6 : vector<256x1xi32>
    %c0_i32_1 = arith.constant 0 : i32
    %8 = vector.broadcast %c0_i32_1 : i32 to vector<256x1xi32>
    %9 = arith.cmpi slt, %5, %8 : vector<256x1xi32>
    %c0_i32_2 = arith.constant 0 : i32
    %10 = arith.cmpi slt, %3, %c0_i32_2 : i32
    %11 = vector.broadcast %10 : i1 to vector<256x1xi1>
    %12 = vector.broadcast %11 : vector<256x1xi1> to vector<256x1xi1>
    %13 = arith.xori %9, %12 : vector<256x1xi1>
    %14 = arith.andi %13, %7 : vector<256x1xi1>
    %15 = vector.broadcast %3 : i32 to vector<256x1xi32>
    %16 = arith.addi %5, %15 : vector<256x1xi32>
    %17 = arith.select %14, %16, %5 : vector<256x1xi1>, vector<256x1xi32>
    %c0_i32_3 = arith.constant 0 : i32
    %18 = vector.broadcast %c0_i32_3 : i32 to vector<256x1xi32>
    %19 = arith.cmpi ne, %17, %18 : vector<256x1xi32>
    %c15_i32 = arith.constant 15 : i32
    %20 = vector.broadcast %c15_i32 : i32 to vector<256x1xi32>
    %21 = arith.cmpi ne, %17, %20 : vector<256x1xi32>
    %cst = arith.constant 0.000000e+00 : f32
    %22 = vector.broadcast %cst : f32 to vector<290x2xf32>
    %c0_4 = arith.constant 0 : index
    %c0_5 = arith.constant 0 : index
    %23 = vector.load %arg8[%c0_4, %c0_5] : memref<290x2xf32, #tpu.memory_space<vmem>>, vector<290x2xf32>
    tpu.vector_store %arg8[%c0_4, %c0_5], %22 {strides = array<i32>} : memref<290x2xf32, #tpu.memory_space<vmem>>, vector<290x2xf32>,
    %c0_6 = arith.constant 0 : index
    %c0_7 = arith.constant 0 : index
    %c0_8 = arith.constant 0 : index
    %24 = vector.load %arg2[%c0_6, %c0_7, %c0_8] : memref<1x256x1xf32, #tpu.memory_space<vmem>>, vector<1x256x1xf32>
    %25 = vector.shape_cast %24 : vector<1x256x1xf32> to vector<256x1xf32>
    %c17 = arith.constant 17 : index
    %c0_9 = arith.constant 0 : index
    %26 = vector.load %arg8[%c17, %c0_9] : memref<290x2xf32, #tpu.memory_space<vmem>>, vector<256x1xf32>
    tpu.vector_store %arg8[%c17, %c0_9], %25 {strides = array<i32>} : memref<290x2xf32, #tpu.memory_space<vmem>>, vector<256x1xf32>,
    %27 = vector.broadcast %0 : f32 to vector<256x1xf32>
    %c17_10 = arith.constant 17 : index
    %c1 = arith.constant 1 : index
    %28 = vector.load %arg8[%c17_10, %c1] : memref<290x2xf32, #tpu.memory_space<vmem>>, vector<256x1xf32>
    tpu.vector_store %arg8[%c17_10, %c1], %27 {strides = array<i32>} : memref<290x2xf32, #tpu.memory_space<vmem>>, vector<256x1xf32>,
    %c0_11 = arith.constant 0 : index
    %c0_12 = arith.constant 0 : index
    %29 = vector.load %arg4[%c0_11, %c0_12] : memref<1x64xf32, #tpu.memory_space<vmem>>, vector<1x64xf32>
    %30 = vector.shape_cast %29 : vector<1x64xf32> to vector<1x64xf32>
    %31 = vector.broadcast %30 : vector<1x64xf32> to vector<256x64xf32>
    %c0_13 = arith.constant 0 : index
    %c0_14 = arith.constant 0 : index
    %32 = vector.load %arg8[%c0_13, %c0_14] : memref<290x2xf32, #tpu.memory_space<vmem>>, vector<256x2xf32>
    %cst_15 = arith.constant 0.000000e+00 : f32
    %33 = vector.shape_cast %19 : vector<256x1xi1> to vector<256x1xi1>
    %34 = vector.broadcast %33 : vector<256x1xi1> to vector<256x2xi1>
    %35 = vector.broadcast %cst_15 : f32 to vector<256x2xf32>
    %36 = arith.select %34, %32, %35 : vector<256x2xi1>, vector<256x2xf32>
    %c0_16 = arith.constant 0 : index
    %c0_17 = arith.constant 0 : index
    %c0_18 = arith.constant 0 : index
    %37 = vector.load %arg3[%c0_16, %c0_17, %c0_18] : memref<9x2x64xf32, #tpu.memory_space<vmem>>, vector<1x2x64xf32>
    %38 = vector.shape_cast %37 : vector<1x2x64xf32> to vector<2x64xf32>
    %cst_19 = arith.constant dense<0.000000e+00> : vector<256x64xf32>
    %39 = tpu.matmul %36, %38, %cst_19 {dimension_numbers = #tpu.dot_dimension_numbers<[1], [0], [0], [1], [0, 0, 1, 1], [], []>} : vector<256x2xf32>, vector<2x64xf32>, vector<256x64xf32> -> vector<256x64xf32>
    %40 = arith.addf %31, %39 : vector<256x64xf32>
    %c1_20 = arith.constant 1 : index
    %c0_21 = arith.constant 0 : index
    %41 = vector.load %arg8[%c1_20, %c0_21] : memref<290x2xf32, #tpu.memory_space<vmem>>, vector<256x2xf32>
    %c1_22 = arith.constant 1 : index
    %c0_23 = arith.constant 0 : index
    %c0_24 = arith.constant 0 : index
    %42 = vector.load %arg3[%c1_22, %c0_23, %c0_24] : memref<9x2x64xf32, #tpu.memory_space<vmem>>, vector<1x2x64xf32>
    %43 = vector.shape_cast %42 : vector<1x2x64xf32> to vector<2x64xf32>
    %cst_25 = arith.constant dense<0.000000e+00> : vector<256x64xf32>
    %44 = tpu.matmul %41, %43, %cst_25 {dimension_numbers = #tpu.dot_dimension_numbers<[1], [0], [0], [1], [0, 0, 1, 1], [], []>} : vector<256x2xf32>, vector<2x64xf32>, vector<256x64xf32> -> vector<256x64xf32>
    %45 = arith.addf %40, %44 : vector<256x64xf32>
    %c2 = arith.constant 2 : index
    %c0_26 = arith.constant 0 : index
    %46 = vector.load %arg8[%c2, %c0_26] : memref<290x2xf32, #tpu.memory_space<vmem>>, vector<256x2xf32>
    %cst_27 = arith.constant 0.000000e+00 : f32
    %47 = vector.shape_cast %21 : vector<256x1xi1> to vector<256x1xi1>
    %48 = vector.broadcast %47 : vector<256x1xi1> to vector<256x2xi1>
    %49 = vector.broadcast %cst_27 : f32 to vector<256x2xf32>
    %50 = arith.select %48, %46, %49 : vector<256x2xi1>, vector<256x2xf32>
    %c2_28 = arith.constant 2 : index
    %c0_29 = arith.constant 0 : index
    %c0_30 = arith.constant 0 : index
    %51 = vector.load %arg3[%c2_28, %c0_29, %c0_30] : memref<9x2x64xf32, #tpu.memory_space<vmem>>, vector<1x2x64xf32>
    %52 = vector.shape_cast %51 : vector<1x2x64xf32> to vector<2x64xf32>
    %cst_31 = arith.constant dense<0.000000e+00> : vector<256x64xf32>
    %53 = tpu.matmul %50, %52, %cst_31 {dimension_numbers = #tpu.dot_dimension_numbers<[1], [0], [0], [1], [0, 0, 1, 1], [], []>} : vector<256x2xf32>, vector<2x64xf32>, vector<256x64xf32> -> vector<256x64xf32>
    %54 = arith.addf %45, %53 : vector<256x64xf32>
    %c16 = arith.constant 16 : index
    %c0_32 = arith.constant 0 : index
    %55 = vector.load %arg8[%c16, %c0_32] : memref<290x2xf32, #tpu.memory_space<vmem>>, vector<256x2xf32>
    %cst_33 = arith.constant 0.000000e+00 : f32
    %56 = vector.shape_cast %19 : vector<256x1xi1> to vector<256x1xi1>
    %57 = vector.broadcast %56 : vector<256x1xi1> to vector<256x2xi1>
    %58 = vector.broadcast %cst_33 : f32 to vector<256x2xf32>
    %59 = arith.select %57, %55, %58 : vector<256x2xi1>, vector<256x2xf32>
    %c3 = arith.constant 3 : index
    %c0_34 = arith.constant 0 : index
    %c0_35 = arith.constant 0 : index
    %60 = vector.load %arg3[%c3, %c0_34, %c0_35] : memref<9x2x64xf32, #tpu.memory_space<vmem>>, vector<1x2x64xf32>
    %61 = vector.shape_cast %60 : vector<1x2x64xf32> to vector<2x64xf32>
    %cst_36 = arith.constant dense<0.000000e+00> : vector<256x64xf32>
    %62 = tpu.matmul %59, %61, %cst_36 {dimension_numbers = #tpu.dot_dimension_numbers<[1], [0], [0], [1], [0, 0, 1, 1], [], []>} : vector<256x2xf32>, vector<2x64xf32>, vector<256x64xf32> -> vector<256x64xf32>
    %63 = arith.addf %54, %62 : vector<256x64xf32>
    %c17_37 = arith.constant 17 : index
    %c0_38 = arith.constant 0 : index
    %64 = vector.load %arg8[%c17_37, %c0_38] : memref<290x2xf32, #tpu.memory_space<vmem>>, vector<256x2xf32>
    %c4 = arith.constant 4 : index
    %c0_39 = arith.constant 0 : index
    %c0_40 = arith.constant 0 : index
    %65 = vector.load %arg3[%c4, %c0_39, %c0_40] : memref<9x2x64xf32, #tpu.memory_space<vmem>>, vector<1x2x64xf32>
    %66 = vector.shape_cast %65 : vector<1x2x64xf32> to vector<2x64xf32>
    %cst_41 = arith.constant dense<0.000000e+00> : vector<256x64xf32>
    %67 = tpu.matmul %64, %66, %cst_41 {dimension_numbers = #tpu.dot_dimension_numbers<[1], [0], [0], [1], [0, 0, 1, 1], [], []>} : vector<256x2xf32>, vector<2x64xf32>, vector<256x64xf32> -> vector<256x64xf32>
    %68 = arith.addf %63, %67 : vector<256x64xf32>
    %c18 = arith.constant 18 : index
    %c0_42 = arith.constant 0 : index
    %69 = vector.load %arg8[%c18, %c0_42] : memref<290x2xf32, #tpu.memory_space<vmem>>, vector<256x2xf32>
    %cst_43 = arith.constant 0.000000e+00 : f32
    %70 = vector.shape_cast %21 : vector<256x1xi1> to vector<256x1xi1>
    %71 = vector.broadcast %70 : vector<256x1xi1> to vector<256x2xi1>
    %72 = vector.broadcast %cst_43 : f32 to vector<256x2xf32>
    %73 = arith.select %71, %69, %72 : vector<256x2xi1>, vector<256x2xf32>
    %c5 = arith.constant 5 : index
    %c0_44 = arith.constant 0 : index
    %c0_45 = arith.constant 0 : index
    %74 = vector.load %arg3[%c5, %c0_44, %c0_45] : memref<9x2x64xf32, #tpu.memory_space<vmem>>, vector<1x2x64xf32>
    %75 = vector.shape_cast %74 : vector<1x2x64xf32> to vector<2x64xf32>
    %cst_46 = arith.constant dense<0.000000e+00> : vector<256x64xf32>
    %76 = tpu.matmul %73, %75, %cst_46 {dimension_numbers = #tpu.dot_dimension_numbers<[1], [0], [0], [1], [0, 0, 1, 1], [], []>} : vector<256x2xf32>, vector<2x64xf32>, vector<256x64xf32> -> vector<256x64xf32>
    %77 = arith.addf %68, %76 : vector<256x64xf32>
    %c32 = arith.constant 32 : index
    %c0_47 = arith.constant 0 : index
    %78 = vector.load %arg8[%c32, %c0_47] : memref<290x2xf32, #tpu.memory_space<vmem>>, vector<256x2xf32>
    %cst_48 = arith.constant 0.000000e+00 : f32
    %79 = vector.shape_cast %19 : vector<256x1xi1> to vector<256x1xi1>
    %80 = vector.broadcast %79 : vector<256x1xi1> to vector<256x2xi1>
    %81 = vector.broadcast %cst_48 : f32 to vector<256x2xf32>
    %82 = arith.select %80, %78, %81 : vector<256x2xi1>, vector<256x2xf32>
    %c6 = arith.constant 6 : index
    %c0_49 = arith.constant 0 : index
    %c0_50 = arith.constant 0 : index
    %83 = vector.load %arg3[%c6, %c0_49, %c0_50] : memref<9x2x64xf32, #tpu.memory_space<vmem>>, vector<1x2x64xf32>
    %84 = vector.shape_cast %83 : vector<1x2x64xf32> to vector<2x64xf32>
    %cst_51 = arith.constant dense<0.000000e+00> : vector<256x64xf32>
    %85 = tpu.matmul %82, %84, %cst_51 {dimension_numbers = #tpu.dot_dimension_numbers<[1], [0], [0], [1], [0, 0, 1, 1], [], []>} : vector<256x2xf32>, vector<2x64xf32>, vector<256x64xf32> -> vector<256x64xf32>
    %86 = arith.addf %77, %85 : vector<256x64xf32>
    %c33 = arith.constant 33 : index
    %c0_52 = arith.constant 0 : index
    %87 = vector.load %arg8[%c33, %c0_52] : memref<290x2xf32, #tpu.memory_space<vmem>>, vector<256x2xf32>
    %c7 = arith.constant 7 : index
    %c0_53 = arith.constant 0 : index
    %c0_54 = arith.constant 0 : index
    %88 = vector.load %arg3[%c7, %c0_53, %c0_54] : memref<9x2x64xf32, #tpu.memory_space<vmem>>, vector<1x2x64xf32>
    %89 = vector.shape_cast %88 : vector<1x2x64xf32> to vector<2x64xf32>
    %cst_55 = arith.constant dense<0.000000e+00> : vector<256x64xf32>
    %90 = tpu.matmul %87, %89, %cst_55 {dimension_numbers = #tpu.dot_dimension_numbers<[1], [0], [0], [1], [0, 0, 1, 1], [], []>} : vector<256x2xf32>, vector<2x64xf32>, vector<256x64xf32> -> vector<256x64xf32>
    %91 = arith.addf %86, %90 : vector<256x64xf32>
    %c34 = arith.constant 34 : index
    %c0_56 = arith.constant 0 : index
    %92 = vector.load %arg8[%c34, %c0_56] : memref<290x2xf32, #tpu.memory_space<vmem>>, vector<256x2xf32>
    %cst_57 = arith.constant 0.000000e+00 : f32
    %93 = vector.shape_cast %21 : vector<256x1xi1> to vector<256x1xi1>
    %94 = vector.broadcast %93 : vector<256x1xi1> to vector<256x2xi1>
    %95 = vector.broadcast %cst_57 : f32 to vector<256x2xf32>
    %96 = arith.select %94, %92, %95 : vector<256x2xi1>, vector<256x2xf32>
    %c8 = arith.constant 8 : index
    %c0_58 = arith.constant 0 : index
    %c0_59 = arith.constant 0 : index
    %97 = vector.load %arg3[%c8, %c0_58, %c0_59] : memref<9x2x64xf32, #tpu.memory_space<vmem>>, vector<1x2x64xf32>
    %98 = vector.shape_cast %97 : vector<1x2x64xf32> to vector<2x64xf32>
    %cst_60 = arith.constant dense<0.000000e+00> : vector<256x64xf32>
    %99 = tpu.matmul %96, %98, %cst_60 {dimension_numbers = #tpu.dot_dimension_numbers<[1], [0], [0], [1], [0, 0, 1, 1], [], []>} : vector<256x2xf32>, vector<2x64xf32>, vector<256x64xf32> -> vector<256x64xf32>
    %100 = arith.addf %91, %99 : vector<256x64xf32>
    %cst_61 = arith.constant 0.000000e+00 : f32
    %101 = vector.broadcast %cst_61 : f32 to vector<290x65xf32>
    %c0_62 = arith.constant 0 : index
    %c0_63 = arith.constant 0 : index
    %102 = vector.load %arg9[%c0_62, %c0_63] : memref<290x65xf32, #tpu.memory_space<vmem>>, vector<290x65xf32>
    tpu.vector_store %arg9[%c0_62, %c0_63], %101 {strides = array<i32>} : memref<290x65xf32, #tpu.memory_space<vmem>>, vector<290x65xf32>,
    %c17_64 = arith.constant 17 : index
    %c0_65 = arith.constant 0 : index
    %103 = vector.load %arg9[%c17_64, %c0_65] : memref<290x65xf32, #tpu.memory_space<vmem>>, vector<256x64xf32>
    tpu.vector_store %arg9[%c17_64, %c0_65], %100 {strides = array<i32>} : memref<290x65xf32, #tpu.memory_space<vmem>>, vector<256x64xf32>,
    %104 = vector.broadcast %0 : f32 to vector<256x1xf32>
    %c17_66 = arith.constant 17 : index
    %c64 = arith.constant 64 : index
    %105 = vector.load %arg9[%c17_66, %c64] : memref<290x65xf32, #tpu.memory_space<vmem>>, vector<256x1xf32>
    tpu.vector_store %arg9[%c17_66, %c64], %104 {strides = array<i32>} : memref<290x65xf32, #tpu.memory_space<vmem>>, vector<256x1xf32>,
    %c0_67 = arith.constant 0 : index
    %c0_68 = arith.constant 0 : index
    %106 = vector.load %arg6[%c0_67, %c0_68] : memref<1x1xf32, #tpu.memory_space<vmem>>, vector<1x1xf32>
    %107 = vector.shape_cast %106 : vector<1x1xf32> to vector<1x1xf32>
    %108 = vector.broadcast %107 : vector<1x1xf32> to vector<256x1xf32>
    %c0_69 = arith.constant 0 : index
    %c0_70 = arith.constant 0 : index
    %c0_71 = arith.constant 0 : index
    %109 = vector.load %arg7[%c0_69, %c0_70, %c0_71] : memref<1x256x1xf32, #tpu.memory_space<vmem>>, vector<1x256x1xf32>
    %110 = vector.shape_cast %109 : vector<1x256x1xf32> to vector<256x1xf32>
    %111 = vector.shape_cast %108 : vector<256x1xf32> to vector<1x256x1xf32>
    tpu.vector_store %arg7[%c0_69, %c0_70, %c0_71], %111 {strides = array<i32>} : memref<1x256x1xf32, #tpu.memory_space<vmem>>, vector<1x256x1xf32>,
    %c0_72 = arith.constant 0 : index
    %c0_73 = arith.constant 0 : index
    %c0_74 = arith.constant 0 : index
    %112 = vector.load %arg7[%c0_72, %c0_73, %c0_74] : memref<1x256x1xf32, #tpu.memory_space<vmem>>, vector<1x256x1xf32>
    %113 = vector.shape_cast %112 : vector<1x256x1xf32> to vector<256x1xf32>
    %c0_75 = arith.constant 0 : index
    %c0_76 = arith.constant 0 : index
    %114 = vector.load %arg9[%c0_75, %c0_76] : memref<290x65xf32, #tpu.memory_space<vmem>>, vector<256x65xf32>
    %cst_77 = arith.constant 0.000000e+00 : f32
    %115 = vector.shape_cast %19 : vector<256x1xi1> to vector<256x1xi1>
    %116 = vector.broadcast %115 : vector<256x1xi1> to vector<256x65xi1>
    %117 = vector.broadcast %cst_77 : f32 to vector<256x65xf32>
    %118 = arith.select %116, %114, %117 : vector<256x65xi1>, vector<256x65xf32>
    %c0_78 = arith.constant 0 : index
    %c0_79 = arith.constant 0 : index
    %c0_80 = arith.constant 0 : index
    %119 = vector.load %arg5[%c0_78, %c0_79, %c0_80] : memref<9x65x1xf32, #tpu.memory_space<vmem>>, vector<1x65x1xf32>
    %120 = vector.shape_cast %119 : vector<1x65x1xf32> to vector<65x1xf32>
    %cst_81 = arith.constant dense<0.000000e+00> : vector<256x1xf32>
    %121 = tpu.matmul %118, %120, %cst_81 {dimension_numbers = #tpu.dot_dimension_numbers<[1], [0], [0], [1], [0, 0, 1, 1], [], []>} : vector<256x65xf32>, vector<65x1xf32>, vector<256x1xf32> -> vector<256x1xf32>
    %122 = arith.addf %113, %121 : vector<256x1xf32>
    %c0_82 = arith.constant 0 : index
    %c0_83 = arith.constant 0 : index
    %c0_84 = arith.constant 0 : index
    %123 = vector.load %arg7[%c0_82, %c0_83, %c0_84] : memref<1x256x1xf32, #tpu.memory_space<vmem>>, vector<1x256x1xf32>
    %124 = vector.shape_cast %123 : vector<1x256x1xf32> to vector<256x1xf32>
    %125 = vector.shape_cast %122 : vector<256x1xf32> to vector<1x256x1xf32>
    tpu.vector_store %arg7[%c0_82, %c0_83, %c0_84], %125 {strides = array<i32>} : memref<1x256x1xf32, #tpu.memory_space<vmem>>, vector<1x256x1xf32>,
    %c0_85 = arith.constant 0 : index
    %c0_86 = arith.constant 0 : index
    %c0_87 = arith.constant 0 : index
    %126 = vector.load %arg7[%c0_85, %c0_86, %c0_87] : memref<1x256x1xf32, #tpu.memory_space<vmem>>, vector<1x256x1xf32>
    %127 = vector.shape_cast %126 : vector<1x256x1xf32> to vector<256x1xf32>
    %c1_88 = arith.constant 1 : index
    %c0_89 = arith.constant 0 : index
    %128 = vector.load %arg9[%c1_88, %c0_89] : memref<290x65xf32, #tpu.memory_space<vmem>>, vector<256x65xf32>
    %c1_90 = arith.constant 1 : index
    %c0_91 = arith.constant 0 : index
    %c0_92 = arith.constant 0 : index
    %129 = vector.load %arg5[%c1_90, %c0_91, %c0_92] : memref<9x65x1xf32, #tpu.memory_space<vmem>>, vector<1x65x1xf32>
    %130 = vector.shape_cast %129 : vector<1x65x1xf32> to vector<65x1xf32>
    %cst_93 = arith.constant dense<0.000000e+00> : vector<256x1xf32>
    %131 = tpu.matmul %128, %130, %cst_93 {dimension_numbers = #tpu.dot_dimension_numbers<[1], [0], [0], [1], [0, 0, 1, 1], [], []>} : vector<256x65xf32>, vector<65x1xf32>, vector<256x1xf32> -> vector<256x1xf32>
    %132 = arith.addf %127, %131 : vector<256x1xf32>
    %c0_94 = arith.constant 0 : index
    %c0_95 = arith.constant 0 : index
    %c0_96 = arith.constant 0 : index
    %133 = vector.load %arg7[%c0_94, %c0_95, %c0_96] : memref<1x256x1xf32, #tpu.memory_space<vmem>>, vector<1x256x1xf32>
    %134 = vector.shape_cast %133 : vector<1x256x1xf32> to vector<256x1xf32>
    %135 = vector.shape_cast %132 : vector<256x1xf32> to vector<1x256x1xf32>
    tpu.vector_store %arg7[%c0_94, %c0_95, %c0_96], %135 {strides = array<i32>} : memref<1x256x1xf32, #tpu.memory_space<vmem>>, vector<1x256x1xf32>,
    %c0_97 = arith.constant 0 : index
    %c0_98 = arith.constant 0 : index
    %c0_99 = arith.constant 0 : index
    %136 = vector.load %arg7[%c0_97, %c0_98, %c0_99] : memref<1x256x1xf32, #tpu.memory_space<vmem>>, vector<1x256x1xf32>
    %137 = vector.shape_cast %136 : vector<1x256x1xf32> to vector<256x1xf32>
    %c2_100 = arith.constant 2 : index
    %c0_101 = arith.constant 0 : index
    %138 = vector.load %arg9[%c2_100, %c0_101] : memref<290x65xf32, #tpu.memory_space<vmem>>, vector<256x65xf32>
    %cst_102 = arith.constant 0.000000e+00 : f32
    %139 = vector.shape_cast %21 : vector<256x1xi1> to vector<256x1xi1>
    %140 = vector.broadcast %139 : vector<256x1xi1> to vector<256x65xi1>
    %141 = vector.broadcast %cst_102 : f32 to vector<256x65xf32>
    %142 = arith.select %140, %138, %141 : vector<256x65xi1>, vector<256x65xf32>
    %c2_103 = arith.constant 2 : index
    %c0_104 = arith.constant 0 : index
    %c0_105 = arith.constant 0 : index
    %143 = vector.load %arg5[%c2_103, %c0_104, %c0_105] : memref<9x65x1xf32, #tpu.memory_space<vmem>>, vector<1x65x1xf32>
    %144 = vector.shape_cast %143 : vector<1x65x1xf32> to vector<65x1xf32>
    %cst_106 = arith.constant dense<0.000000e+00> : vector<256x1xf32>
    %145 = tpu.matmul %142, %144, %cst_106 {dimension_numbers = #tpu.dot_dimension_numbers<[1], [0], [0], [1], [0, 0, 1, 1], [], []>} : vector<256x65xf32>, vector<65x1xf32>, vector<256x1xf32> -> vector<256x1xf32>
    %146 = arith.addf %137, %145 : vector<256x1xf32>
    %c0_107 = arith.constant 0 : index
    %c0_108 = arith.constant 0 : index
    %c0_109 = arith.constant 0 : index
    %147 = vector.load %arg7[%c0_107, %c0_108, %c0_109] : memref<1x256x1xf32, #tpu.memory_space<vmem>>, vector<1x256x1xf32>
    %148 = vector.shape_cast %147 : vector<1x256x1xf32> to vector<256x1xf32>
    %149 = vector.shape_cast %146 : vector<256x1xf32> to vector<1x256x1xf32>
    tpu.vector_store %arg7[%c0_107, %c0_108, %c0_109], %149 {strides = array<i32>} : memref<1x256x1xf32, #tpu.memory_space<vmem>>, vector<1x256x1xf32>,
    %c0_110 = arith.constant 0 : index
    %c0_111 = arith.constant 0 : index
    %c0_112 = arith.constant 0 : index
    %150 = vector.load %arg7[%c0_110, %c0_111, %c0_112] : memref<1x256x1xf32, #tpu.memory_space<vmem>>, vector<1x256x1xf32>
    %151 = vector.shape_cast %150 : vector<1x256x1xf32> to vector<256x1xf32>
    %c16_113 = arith.constant 16 : index
    %c0_114 = arith.constant 0 : index
    %152 = vector.load %arg9[%c16_113, %c0_114] : memref<290x65xf32, #tpu.memory_space<vmem>>, vector<256x65xf32>
    %cst_115 = arith.constant 0.000000e+00 : f32
    %153 = vector.shape_cast %19 : vector<256x1xi1> to vector<256x1xi1>
    %154 = vector.broadcast %153 : vector<256x1xi1> to vector<256x65xi1>
    %155 = vector.broadcast %cst_115 : f32 to vector<256x65xf32>
    %156 = arith.select %154, %152, %155 : vector<256x65xi1>, vector<256x65xf32>
    %c3_116 = arith.constant 3 : index
    %c0_117 = arith.constant 0 : index
    %c0_118 = arith.constant 0 : index
    %157 = vector.load %arg5[%c3_116, %c0_117, %c0_118] : memref<9x65x1xf32, #tpu.memory_space<vmem>>, vector<1x65x1xf32>
    %158 = vector.shape_cast %157 : vector<1x65x1xf32> to vector<65x1xf32>
    %cst_119 = arith.constant dense<0.000000e+00> : vector<256x1xf32>
    %159 = tpu.matmul %156, %158, %cst_119 {dimension_numbers = #tpu.dot_dimension_numbers<[1], [0], [0], [1], [0, 0, 1, 1], [], []>} : vector<256x65xf32>, vector<65x1xf32>, vector<256x1xf32> -> vector<256x1xf32>
    %160 = arith.addf %151, %159 : vector<256x1xf32>
    %c0_120 = arith.constant 0 : index
    %c0_121 = arith.constant 0 : index
    %c0_122 = arith.constant 0 : index
    %161 = vector.load %arg7[%c0_120, %c0_121, %c0_122] : memref<1x256x1xf32, #tpu.memory_space<vmem>>, vector<1x256x1xf32>
    %162 = vector.shape_cast %161 : vector<1x256x1xf32> to vector<256x1xf32>
    %163 = vector.shape_cast %160 : vector<256x1xf32> to vector<1x256x1xf32>
    tpu.vector_store %arg7[%c0_120, %c0_121, %c0_122], %163 {strides = array<i32>} : memref<1x256x1xf32, #tpu.memory_space<vmem>>, vector<1x256x1xf32>,
    %c0_123 = arith.constant 0 : index
    %c0_124 = arith.constant 0 : index
    %c0_125 = arith.constant 0 : index
    %164 = vector.load %arg7[%c0_123, %c0_124, %c0_125] : memref<1x256x1xf32, #tpu.memory_space<vmem>>, vector<1x256x1xf32>
    %165 = vector.shape_cast %164 : vector<1x256x1xf32> to vector<256x1xf32>
    %c17_126 = arith.constant 17 : index
    %c0_127 = arith.constant 0 : index
    %166 = vector.load %arg9[%c17_126, %c0_127] : memref<290x65xf32, #tpu.memory_space<vmem>>, vector<256x65xf32>
    %c4_128 = arith.constant 4 : index
    %c0_129 = arith.constant 0 : index
    %c0_130 = arith.constant 0 : index
    %167 = vector.load %arg5[%c4_128, %c0_129, %c0_130] : memref<9x65x1xf32, #tpu.memory_space<vmem>>, vector<1x65x1xf32>
    %168 = vector.shape_cast %167 : vector<1x65x1xf32> to vector<65x1xf32>
    %cst_131 = arith.constant dense<0.000000e+00> : vector<256x1xf32>
    %169 = tpu.matmul %166, %168, %cst_131 {dimension_numbers = #tpu.dot_dimension_numbers<[1], [0], [0], [1], [0, 0, 1, 1], [], []>} : vector<256x65xf32>, vector<65x1xf32>, vector<256x1xf32> -> vector<256x1xf32>
    %170 = arith.addf %165, %169 : vector<256x1xf32>
    %c0_132 = arith.constant 0 : index
    %c0_133 = arith.constant 0 : index
    %c0_134 = arith.constant 0 : index
    %171 = vector.load %arg7[%c0_132, %c0_133, %c0_134] : memref<1x256x1xf32, #tpu.memory_space<vmem>>, vector<1x256x1xf32>
    %172 = vector.shape_cast %171 : vector<1x256x1xf32> to vector<256x1xf32>
    %173 = vector.shape_cast %170 : vector<256x1xf32> to vector<1x256x1xf32>
    tpu.vector_store %arg7[%c0_132, %c0_133, %c0_134], %173 {strides = array<i32>} : memref<1x256x1xf32, #tpu.memory_space<vmem>>, vector<1x256x1xf32>,
    %c0_135 = arith.constant 0 : index
    %c0_136 = arith.constant 0 : index
    %c0_137 = arith.constant 0 : index
    %174 = vector.load %arg7[%c0_135, %c0_136, %c0_137] : memref<1x256x1xf32, #tpu.memory_space<vmem>>, vector<1x256x1xf32>
    %175 = vector.shape_cast %174 : vector<1x256x1xf32> to vector<256x1xf32>
    %c18_138 = arith.constant 18 : index
    %c0_139 = arith.constant 0 : index
    %176 = vector.load %arg9[%c18_138, %c0_139] : memref<290x65xf32, #tpu.memory_space<vmem>>, vector<256x65xf32>
    %cst_140 = arith.constant 0.000000e+00 : f32
    %177 = vector.shape_cast %21 : vector<256x1xi1> to vector<256x1xi1>
    %178 = vector.broadcast %177 : vector<256x1xi1> to vector<256x65xi1>
    %179 = vector.broadcast %cst_140 : f32 to vector<256x65xf32>
    %180 = arith.select %178, %176, %179 : vector<256x65xi1>, vector<256x65xf32>
    %c5_141 = arith.constant 5 : index
    %c0_142 = arith.constant 0 : index
    %c0_143 = arith.constant 0 : index
    %181 = vector.load %arg5[%c5_141, %c0_142, %c0_143] : memref<9x65x1xf32, #tpu.memory_space<vmem>>, vector<1x65x1xf32>
    %182 = vector.shape_cast %181 : vector<1x65x1xf32> to vector<65x1xf32>
    %cst_144 = arith.constant dense<0.000000e+00> : vector<256x1xf32>
    %183 = tpu.matmul %180, %182, %cst_144 {dimension_numbers = #tpu.dot_dimension_numbers<[1], [0], [0], [1], [0, 0, 1, 1], [], []>} : vector<256x65xf32>, vector<65x1xf32>, vector<256x1xf32> -> vector<256x1xf32>
    %184 = arith.addf %175, %183 : vector<256x1xf32>
    %c0_145 = arith.constant 0 : index
    %c0_146 = arith.constant 0 : index
    %c0_147 = arith.constant 0 : index
    %185 = vector.load %arg7[%c0_145, %c0_146, %c0_147] : memref<1x256x1xf32, #tpu.memory_space<vmem>>, vector<1x256x1xf32>
    %186 = vector.shape_cast %185 : vector<1x256x1xf32> to vector<256x1xf32>
    %187 = vector.shape_cast %184 : vector<256x1xf32> to vector<1x256x1xf32>
    tpu.vector_store %arg7[%c0_145, %c0_146, %c0_147], %187 {strides = array<i32>} : memref<1x256x1xf32, #tpu.memory_space<vmem>>, vector<1x256x1xf32>,
    %c0_148 = arith.constant 0 : index
    %c0_149 = arith.constant 0 : index
    %c0_150 = arith.constant 0 : index
    %188 = vector.load %arg7[%c0_148, %c0_149, %c0_150] : memref<1x256x1xf32, #tpu.memory_space<vmem>>, vector<1x256x1xf32>
    %189 = vector.shape_cast %188 : vector<1x256x1xf32> to vector<256x1xf32>
    %c32_151 = arith.constant 32 : index
    %c0_152 = arith.constant 0 : index
    %190 = vector.load %arg9[%c32_151, %c0_152] : memref<290x65xf32, #tpu.memory_space<vmem>>, vector<256x65xf32>
    %cst_153 = arith.constant 0.000000e+00 : f32
    %191 = vector.shape_cast %19 : vector<256x1xi1> to vector<256x1xi1>
    %192 = vector.broadcast %191 : vector<256x1xi1> to vector<256x65xi1>
    %193 = vector.broadcast %cst_153 : f32 to vector<256x65xf32>
    %194 = arith.select %192, %190, %193 : vector<256x65xi1>, vector<256x65xf32>
    %c6_154 = arith.constant 6 : index
    %c0_155 = arith.constant 0 : index
    %c0_156 = arith.constant 0 : index
    %195 = vector.load %arg5[%c6_154, %c0_155, %c0_156] : memref<9x65x1xf32, #tpu.memory_space<vmem>>, vector<1x65x1xf32>
    %196 = vector.shape_cast %195 : vector<1x65x1xf32> to vector<65x1xf32>
    %cst_157 = arith.constant dense<0.000000e+00> : vector<256x1xf32>
    %197 = tpu.matmul %194, %196, %cst_157 {dimension_numbers = #tpu.dot_dimension_numbers<[1], [0], [0], [1], [0, 0, 1, 1], [], []>} : vector<256x65xf32>, vector<65x1xf32>, vector<256x1xf32> -> vector<256x1xf32>
    %198 = arith.addf %189, %197 : vector<256x1xf32>
    %c0_158 = arith.constant 0 : index
    %c0_159 = arith.constant 0 : index
    %c0_160 = arith.constant 0 : index
    %199 = vector.load %arg7[%c0_158, %c0_159, %c0_160] : memref<1x256x1xf32, #tpu.memory_space<vmem>>, vector<1x256x1xf32>
    %200 = vector.shape_cast %199 : vector<1x256x1xf32> to vector<256x1xf32>
    %201 = vector.shape_cast %198 : vector<256x1xf32> to vector<1x256x1xf32>
    tpu.vector_store %arg7[%c0_158, %c0_159, %c0_160], %201 {strides = array<i32>} : memref<1x256x1xf32, #tpu.memory_space<vmem>>, vector<1x256x1xf32>,
    %c0_161 = arith.constant 0 : index
    %c0_162 = arith.constant 0 : index
    %c0_163 = arith.constant 0 : index
    %202 = vector.load %arg7[%c0_161, %c0_162, %c0_163] : memref<1x256x1xf32, #tpu.memory_space<vmem>>, vector<1x256x1xf32>
    %203 = vector.shape_cast %202 : vector<1x256x1xf32> to vector<256x1xf32>
    %c33_164 = arith.constant 33 : index
    %c0_165 = arith.constant 0 : index
    %204 = vector.load %arg9[%c33_164, %c0_165] : memref<290x65xf32, #tpu.memory_space<vmem>>, vector<256x65xf32>
    %c7_166 = arith.constant 7 : index
    %c0_167 = arith.constant 0 : index
    %c0_168 = arith.constant 0 : index
    %205 = vector.load %arg5[%c7_166, %c0_167, %c0_168] : memref<9x65x1xf32, #tpu.memory_space<vmem>>, vector<1x65x1xf32>
    %206 = vector.shape_cast %205 : vector<1x65x1xf32> to vector<65x1xf32>
    %cst_169 = arith.constant dense<0.000000e+00> : vector<256x1xf32>
    %207 = tpu.matmul %204, %206, %cst_169 {dimension_numbers = #tpu.dot_dimension_numbers<[1], [0], [0], [1], [0, 0, 1, 1], [], []>} : vector<256x65xf32>, vector<65x1xf32>, vector<256x1xf32> -> vector<256x1xf32>
    %208 = arith.addf %203, %207 : vector<256x1xf32>
    %c0_170 = arith.constant 0 : index
    %c0_171 = arith.constant 0 : index
    %c0_172 = arith.constant 0 : index
    %209 = vector.load %arg7[%c0_170, %c0_171, %c0_172] : memref<1x256x1xf32, #tpu.memory_space<vmem>>, vector<1x256x1xf32>
    %210 = vector.shape_cast %209 : vector<1x256x1xf32> to vector<256x1xf32>
    %211 = vector.shape_cast %208 : vector<256x1xf32> to vector<1x256x1xf32>
    tpu.vector_store %arg7[%c0_170, %c0_171, %c0_172], %211 {strides = array<i32>} : memref<1x256x1xf32, #tpu.memory_space<vmem>>, vector<1x256x1xf32>,
    %c0_173 = arith.constant 0 : index
    %c0_174 = arith.constant 0 : index
    %c0_175 = arith.constant 0 : index
    %212 = vector.load %arg7[%c0_173, %c0_174, %c0_175] : memref<1x256x1xf32, #tpu.memory_space<vmem>>, vector<1x256x1xf32>
    %213 = vector.shape_cast %212 : vector<1x256x1xf32> to vector<256x1xf32>
    %c34_176 = arith.constant 34 : index
    %c0_177 = arith.constant 0 : index
    %214 = vector.load %arg9[%c34_176, %c0_177] : memref<290x65xf32, #tpu.memory_space<vmem>>, vector<256x65xf32>
    %cst_178 = arith.constant 0.000000e+00 : f32
    %215 = vector.shape_cast %21 : vector<256x1xi1> to vector<256x1xi1>
    %216 = vector.broadcast %215 : vector<256x1xi1> to vector<256x65xi1>
    %217 = vector.broadcast %cst_178 : f32 to vector<256x65xf32>
    %218 = arith.select %216, %214, %217 : vector<256x65xi1>, vector<256x65xf32>
    %c8_179 = arith.constant 8 : index
    %c0_180 = arith.constant 0 : index
    %c0_181 = arith.constant 0 : index
    %219 = vector.load %arg5[%c8_179, %c0_180, %c0_181] : memref<9x65x1xf32, #tpu.memory_space<vmem>>, vector<1x65x1xf32>
    %220 = vector.shape_cast %219 : vector<1x65x1xf32> to vector<65x1xf32>
    %cst_182 = arith.constant dense<0.000000e+00> : vector<256x1xf32>
    %221 = tpu.matmul %218, %220, %cst_182 {dimension_numbers = #tpu.dot_dimension_numbers<[1], [0], [0], [1], [0, 0, 1, 1], [], []>} : vector<256x65xf32>, vector<65x1xf32>, vector<256x1xf32> -> vector<256x1xf32>
    %222 = arith.addf %213, %221 : vector<256x1xf32>
    %c0_183 = arith.constant 0 : index
    %c0_184 = arith.constant 0 : index
    %c0_185 = arith.constant 0 : index
    %223 = vector.load %arg7[%c0_183, %c0_184, %c0_185] : memref<1x256x1xf32, #tpu.memory_space<vmem>>, vector<1x256x1xf32>
    %224 = vector.shape_cast %223 : vector<1x256x1xf32> to vector<256x1xf32>
    %225 = vector.shape_cast %222 : vector<256x1xf32> to vector<1x256x1xf32>
    tpu.vector_store %arg7[%c0_183, %c0_184, %c0_185], %225 {strides = array<i32>} : memref<1x256x1xf32, #tpu.memory_space<vmem>>, vector<1x256x1xf32>,
    return
  }
  func.func @transform_0(%arg0: i32) -> i32 {
    %c0_i32 = arith.constant 0 : i32
    %c0_i32_0 = arith.constant 0 : i32
    return %c0_i32 : i32
  }
  func.func @transform_1(%arg0: i32) -> (i32, i32, i32) {
    %c0_i32 = arith.constant 0 : i32
    %c0_i32_0 = arith.constant 0 : i32
    %c0_i32_1 = arith.constant 0 : i32
    return %arg0, %c0_i32, %c0_i32_0 : i32, i32, i32
  }
  func.func @transform_2(%arg0: i32) -> (i32, i32, i32) {
    %c0_i32 = arith.constant 0 : i32
    %c0_i32_0 = arith.constant 0 : i32
    %c0_i32_1 = arith.constant 0 : i32
    %c0_i32_2 = arith.constant 0 : i32
    return %c0_i32, %c0_i32_0, %c0_i32_1 : i32, i32, i32
  }
  func.func @transform_3(%arg0: i32) -> (i32, i32) {
    %c0_i32 = arith.constant 0 : i32
    %c0_i32_0 = arith.constant 0 : i32
    %c0_i32_1 = arith.constant 0 : i32
    return %c0_i32, %c0_i32_0 : i32, i32
  }
  func.func @transform_4(%arg0: i32) -> (i32, i32, i32) {
    %c0_i32 = arith.constant 0 : i32
    %c0_i32_0 = arith.constant 0 : i32
    %c0_i32_1 = arith.constant 0 : i32
    %c0_i32_2 = arith.constant 0 : i32
    return %c0_i32, %c0_i32_0, %c0_i32_1 : i32, i32, i32
  }
  func.func @transform_5(%arg0: i32) -> (i32, i32) {
    %c0_i32 = arith.constant 0 : i32
    %c0_i32_0 = arith.constant 0 : i32
    %c0_i32_1 = arith.constant 0 : i32
    return %c0_i32, %c0_i32_0 : i32, i32
  }
  func.func @transform_6(%arg0: i32) -> (i32, i32, i32) {
    %c0_i32 = arith.constant 0 : i32
    %c0_i32_0 = arith.constant 0 : i32
    %c0_i32_1 = arith.constant 0 : i32
    return %arg0, %c0_i32, %c0_i32_0 : i32, i32, i32
  }
}

</mosaic_0001>

<llo_original>
// kernel: tpu_custom_call.1
$region0: #{tpu_custom_call.1}
  #allocation0 [shape = 'u32[]', space=smem, size = 0x4, offset = 0x4, fixed_abs, tag = 'smem constant byte address 0x4 - core index']
  #allocation1 [shape = 'u32[144,128]{1,0:T(1,128)}', space=vmem, size = 0x12000, scoped, tag = 'internal scratch']
  #allocation2 [shape = 'f32[290,2]{1,0:T(8,128)}', space=vmem, size = 0x25000, scoped, tag = 'scratch operand']
  #allocation3 [shape = 'f32[290,65]{1,0:T(8,128)}', space=vmem, size = 0x25000, scoped, tag = 'scratch operand']
  #allocation4 [shape = 'f32[1]{0:T(128)S(6)}', space=smem, size = 0x200, scoped, tag = 'scoped memory for tpu_custom_call.1']
  #allocation5 [shape = 'f32[1,1]{1,0:T(1,128)S(1)}', space=vmem, size = 0x200, scoped, tag = 'scoped memory for tpu_custom_call.1']
  %s0 = inlined_call_operand.<no memory space> [shape: f32[1], index: 0, kind: input, shape index: {}]
  %s1 = inlined_call_operand.vmem [shape: f32[2,256,1], index: 1, kind: input, shape index: {}]
  %s2 = inlined_call_operand.vmem [shape: f32[9,2,64], index: 2, kind: input, shape index: {}]
  %s3 = inlined_call_operand.vmem [shape: f32[1,64], index: 3, kind: input, shape index: {}]
  %s4 = inlined_call_operand.vmem [shape: f32[9,65,1], index: 4, kind: input, shape index: {}]
  %s5 = inlined_call_operand.<no memory space> [shape: f32[1,1], index: 5, kind: input, shape index: {}]
  %s6 = inlined_call_operand.vmem [shape: f32[2,256,1], index: 6, kind: output, shape index: {}]
  %s7 = sld [smem:[#allocation0]]
  $region57: #{tpu_custom_call.1} parent=0
    _
  %s9 = ssub.s32 1, %s7
  %s10 = scalar_select 0, %s9, %s7
  %11 = sst [smem:[#allocation4]] %s0
  %v12 = vstv %s5
  %13 = vst [vmem:[#allocation5] sm:$0x1] %v12
  loop: start=0, step=1, limit=4
  $region2: #{tpu_custom_call.1} parent=0 // loop_pre_header
    _
  $region3: #{tpu_custom_call.1} parent=0 // loop_header
    %s15 = sphi 0, %s19
    %p16 = scmp.ge.s32.totalorder %s15, 4
    %s23 = sphi 0, %s23
    %s25 = sphi 0, %s23
    %s26 = sphi 0, %s25
    %s40 = sphi 0, %s26
    %s46 = sphi 0, %s48
    %s49 = sphi 0, %s46
    %s50 = sphi 0, %s49
    %s66 = sphi 0, %s50
    %s70 = sphi 0, %s70
    %s72 = sphi 0, %s70
    %s73 = sphi 0, %s72
    %s87 = sphi 0, %s73
    %s91 = sphi 0, %s91
    %s93 = sphi 0, %s91
    %s94 = sphi 0, %s93
    %s108 = sphi 0, %s94
    %s112 = sphi 0, %s112
    %s114 = sphi 0, %s112
    %s115 = sphi 0, %s114
    %s129 = sphi 0, %s115
    %s133 = sphi 0, %s133
    %s135 = sphi 0, %s133
    %s136 = sphi 0, %s135
    %s150 = sphi 0, %s136
    %s156 = sphi 0, %s158
    %s159 = sphi 0, %s156
    %s160 = sphi 0, %s159
    %s176 = sphi 0, %s160
  $region4: #{tpu_custom_call.1} parent=0 // loop_header_branch
    %18 = sbr.rel (%p16) target = $region8
  $region5: #{tpu_custom_call.1} parent=0 // loop_body
    %s20 = ssub.s32 %s15, 1
    %s21 = ssub.s32 %s15, 2
    %s22 = sadd.s32 %s15, 1
    %s24 = sadd.s32 %s23, 1
    %p27 = scmp.eq.s32.totalorder %s15, 1
    %p28 = scmp.ne.s32.totalorder %s23, %s25
    %p29 = scmp.eq.s32.totalorder %s15, 0
    %p30 = por %p28, %p29
    %p31 = scmp.ne.s32.totalorder %s23, %s25
    %p32 = scmp.eq.s32.totalorder %s20, 1
    %p33 = por %p31, %p32
    %p34 = scmp.ne.s32.totalorder %s25, %s26
    %p35 = scmp.eq.s32.totalorder %s20, 0
    %p36 = por %p34, %p35
    %p37 = scmp.ne.s32.totalorder %s25, %s26
    %p38 = scmp.eq.s32.totalorder %s21, 1
    %p39 = por %p37, %p38
    %p41 = scmp.ne.s32.totalorder %s26, %s40
    %p42 = scmp.eq.s32.totalorder %s21, 0
    %p43 = por %p41, %p42
    %s44 = ssub.s32 %s15, %s22
    %p45 = scmp.eq.s32.totalorder %s44, 0
    %s47 = sadd.s32 %s46, 1
    %s48 = scalar_select %p45, %s46, %s47
    %p51 = pneg %p45
    %p52 = scmp.eq.s32.totalorder %s15, 1
    %p53 = por %p51, %p52
    %p54 = scmp.ne.s32.totalorder %s46, %s49
    %p55 = scmp.eq.s32.totalorder %s15, 0
    %p56 = por %p54, %p55
    %p57 = scmp.ne.s32.totalorder %s46, %s49
    %p58 = scmp.eq.s32.totalorder %s20, 1
    %p59 = por %p57, %p58
    %p60 = scmp.ne.s32.totalorder %s49, %s50
    %p61 = scmp.eq.s32.totalorder %s20, 0
    %p62 = por %p60, %p61
    %p63 = scmp.ne.s32.totalorder %s49, %s50
    %p64 = scmp.eq.s32.totalorder %s21, 1
    %p65 = por %p63, %p64
    %p67 = scmp.ne.s32.totalorder %s50, %s66
    %p68 = scmp.eq.s32.totalorder %s21, 0
    %p69 = por %p67, %p68
    %s71 = sadd.s32 %s70, 1
    %p74 = scmp.eq.s32.totalorder %s15, 1
    %p75 = scmp.ne.s32.totalorder %s70, %s72
    %p76 = scmp.eq.s32.totalorder %s15, 0
    %p77 = por %p75, %p76
    %p78 = scmp.ne.s32.totalorder %s70, %s72
    %p79 = scmp.eq.s32.totalorder %s20, 1
    %p80 = por %p78, %p79
    %p81 = scmp.ne.s32.totalorder %s72, %s73
    %p82 = scmp.eq.s32.totalorder %s20, 0
    %p83 = por %p81, %p82
    %p84 = scmp.ne.s32.totalorder %s72, %s73
    %p85 = scmp.eq.s32.totalorder %s21, 1
    %p86 = por %p84, %p85
    %p88 = scmp.ne.s32.totalorder %s73, %s87
    %p89 = scmp.eq.s32.totalorder %s21, 0
    %p90 = por %p88, %p89
    %s92 = sadd.s32 %s91, 1
    %p95 = scmp.eq.s32.totalorder %s15, 1
    %p96 = scmp.ne.s32.totalorder %s91, %s93
    %p97 = scmp.eq.s32.totalorder %s15, 0
    %p98 = por %p96, %p97
    %p99 = scmp.ne.s32.totalorder %s91, %s93
    %p100 = scmp.eq.s32.totalorder %s20, 1
    %p101 = por %p99, %p100
    %p102 = scmp.ne.s32.totalorder %s93, %s94
    %p103 = scmp.eq.s32.totalorder %s20, 0
    %p104 = por %p102, %p103
    %p105 = scmp.ne.s32.totalorder %s93, %s94
    %p106 = scmp.eq.s32.totalorder %s21, 1
    %p107 = por %p105, %p106
    %p109 = scmp.ne.s32.totalorder %s94, %s108
    %p110 = scmp.eq.s32.totalorder %s21, 0
    %p111 = por %p109, %p110
    %s113 = sadd.s32 %s112, 1
    %p116 = scmp.eq.s32.totalorder %s15, 1
    %p117 = scmp.ne.s32.totalorder %s112, %s114
    %p118 = scmp.eq.s32.totalorder %s15, 0
    %p119 = por %p117, %p118
    %p120 = scmp.ne.s32.totalorder %s112, %s114
    %p121 = scmp.eq.s32.totalorder %s20, 1
    %p122 = por %p120, %p121
    %p123 = scmp.ne.s32.totalorder %s114, %s115
    %p124 = scmp.eq.s32.totalorder %s20, 0
    %p125 = por %p123, %p124
    %p126 = scmp.ne.s32.totalorder %s114, %s115
    %p127 = scmp.eq.s32.totalorder %s21, 1
    %p128 = por %p126, %p127
    %p130 = scmp.ne.s32.totalorder %s115, %s129
    %p131 = scmp.eq.s32.totalorder %s21, 0
    %p132 = por %p130, %p131
    %s134 = sadd.s32 %s133, 1
    %p137 = scmp.eq.s32.totalorder %s15, 1
    %p138 = scmp.ne.s32.totalorder %s133, %s135
    %p139 = scmp.eq.s32.totalorder %s15, 0
    %p140 = por %p138, %p139
    %p141 = scmp.ne.s32.totalorder %s133, %s135
    %p142 = scmp.eq.s32.totalorder %s20, 1
    %p143 = por %p141, %p142
    %p144 = scmp.ne.s32.totalorder %s135, %s136
    %p145 = scmp.eq.s32.totalorder %s20, 0
    %p146 = por %p144, %p145
    %p147 = scmp.ne.s32.totalorder %s135, %s136
    %p148 = scmp.eq.s32.totalorder %s21, 1
    %p149 = por %p147, %p148
    %p151 = scmp.ne.s32.totalorder %s136, %s150
    %p152 = scmp.eq.s32.totalorder %s21, 0
    %p153 = por %p151, %p152
    %s154 = ssub.s32 %s15, %s22
    %p155 = scmp.eq.s32.totalorder %s154, 0
    %s157 = sadd.s32 %s156, 1
    %s158 = scalar_select %p155, %s156, %s157
    %p161 = pneg %p155
    %p162 = scmp.eq.s32.totalorder %s15, 1
    %p163 = por %p161, %p162
    %p164 = scmp.ne.s32.totalorder %s156, %s159
    %p165 = scmp.eq.s32.totalorder %s15, 0
    %p166 = por %p164, %p165
    %p167 = scmp.ne.s32.totalorder %s156, %s159
    %p168 = scmp.eq.s32.totalorder %s20, 1
    %p169 = por %p167, %p168
    %p170 = scmp.ne.s32.totalorder %s159, %s160
    %p171 = scmp.eq.s32.totalorder %s20, 0
    %p172 = por %p170, %p171
    %p173 = scmp.ne.s32.totalorder %s159, %s160
    %p174 = scmp.eq.s32.totalorder %s21, 1
    %p175 = por %p173, %p174
    %p177 = scmp.ne.s32.totalorder %s160, %s176
    %p178 = scmp.eq.s32.totalorder %s21, 0
    %p179 = por %p177, %p178
    %p180 = scmp.le.s32.totalorder 1, %s15
    %p181 = scmp.lt.s32.totalorder %s15, 3
    %p182 = pnand %p180, %p181
    %p183 = pneg %p182
    // Predicated region
    $region9: #{tpu_custom_call.1} parent=5 // pred_check
      _
    $region10: #{tpu_custom_call.1} parent=5 // pred_check_branch
      %185 = sbr.rel (%p182) target = $region12
    $region11: #{tpu_custom_call.1} parent=5 // pred_region
      %s186 = ssub.s32 %s15, 1
      // Predicated region
      $region13: #{tpu_custom_call.1} parent=11 // pred_check
        %p187 = pneg %p36
      $region14: #{tpu_custom_call.1} parent=11 // pred_check_branch
        %189 = sbr.rel (%p187) target = $region16
      $region15: #{tpu_custom_call.1} parent=11 // pred_region
        _
      $region16: #{tpu_custom_call.1} parent=11 // pred_fallthru
        _
      // Predicated region
      $region17: #{tpu_custom_call.1} parent=11 // pred_check
        %p190 = pneg %p83
      $region18: #{tpu_custom_call.1} parent=11 // pred_check_branch
        %192 = sbr.rel (%p190) target = $region20
      $region19: #{tpu_custom_call.1} parent=11 // pred_region
        _
      $region20: #{tpu_custom_call.1} parent=11 // pred_fallthru
        _
      // Predicated region
      $region21: #{tpu_custom_call.1} parent=11 // pred_check
        %p193 = pneg %p104
      $region22: #{tpu_custom_call.1} parent=11 // pred_check_branch
        %195 = sbr.rel (%p193) target = $region24
      $region23: #{tpu_custom_call.1} parent=11 // pred_region
        _
      $region24: #{tpu_custom_call.1} parent=11 // pred_fallthru
        _
      // Predicated region
      $region25: #{tpu_custom_call.1} parent=11 // pred_check
        %p196 = pneg %p125
      $region26: #{tpu_custom_call.1} parent=11 // pred_check_branch
        %198 = sbr.rel (%p196) target = $region28
      $region27: #{tpu_custom_call.1} parent=11 // pred_region
        _
      $region28: #{tpu_custom_call.1} parent=11 // pred_fallthru
        _
      // Predicated region
      $region29: #{tpu_custom_call.1} parent=11 // pred_check
        %p199 = pneg %p146
      $region30: #{tpu_custom_call.1} parent=11 // pred_check_branch
        %201 = sbr.rel (%p199) target = $region32
      $region31: #{tpu_custom_call.1} parent=11 // pred_region
        _
      $region32: #{tpu_custom_call.1} parent=11 // pred_fallthru
        _
    $region12: #{tpu_custom_call.1} parent=5 // pred_fallthru
      _
    %p202 = scmp.lt.s32.totalorder %s15, 2
    // Predicated region
    $region33: #{tpu_custom_call.1} parent=5 // pred_check
      %p203 = pneg %p202
    $region34: #{tpu_custom_call.1} parent=5 // pred_check_branch
      %205 = sbr.rel (%p203) target = $region36
    $region35: #{tpu_custom_call.1} parent=5 // pred_region
      // Predicated region
      $region37: #{tpu_custom_call.1} parent=35 // pred_check
        %p206 = pneg %p56
      $region38: #{tpu_custom_call.1} parent=35 // pred_check_branch
        %208 = sbr.rel (%p206) target = $region40
      $region39: #{tpu_custom_call.1} parent=35 // pred_region
        %p209 = scmp.lt.s32.totalorder %s15, 1
        %s210 = scalar_select %p209, %s15, 1
        %s211 = smul.addr %s210, 32
        %s212 = smul.addr %s211, 8
        %s213 = scalar_lea.vmem %s1, %s212
      $region40: #{tpu_custom_call.1} parent=35 // pred_fallthru
        _
    $region36: #{tpu_custom_call.1} parent=5 // pred_fallthru
      _
    %p214 = scmp.le.s32.totalorder 1, %s15
    %p215 = scmp.lt.s32.totalorder %s15, 3
    %p216 = pnand %p214, %p215
    %p217 = pneg %p216
    // Predicated region
    $region41: #{tpu_custom_call.1} parent=5 // pred_check
      _
    $region42: #{tpu_custom_call.1} parent=5 // pred_check_branch
      %219 = sbr.rel (%p216) target = $region44
    $region43: #{tpu_custom_call.1} parent=5 // pred_region
      %s220 = ssub.s32 %s15, 1
      %p221 = pneg %p36
      %p222 = pneg %p33
      %p223 = scmp.lt.s32.totalorder %s20, 1
      %s224 = scalar_select %p223, %s20, 1
      %s225 = smul.addr %s224, 32
      %s226 = smul.addr %s225, 8
      %s227 = scalar_lea.vmem %s1, %s226
      %p228 = pneg %p62
      %p229 = pneg %p59
      %p230 = pneg %p83
      %p231 = pneg %p80
      %p232 = pneg %p104
      %p233 = pneg %p101
      %p234 = pneg %p125
      %p235 = pneg %p122
      %p236 = pneg %p146
      %p237 = pneg %p143
      %p238 = pneg %p172
      %p239 = pneg %p169
      %p240 = scmp.lt.s32.totalorder %s20, 1
      %s241 = scalar_select %p240, %s20, 1
      %s242 = smul.addr %s241, 32
      %s243 = smul.addr %s242, 8
      %s244 = scalar_lea.vmem %s6, %s243
      %p245 = scmp.lt.s32.totalorder %s20, 1
      %s246 = scalar_select %p245, %s20, 1
      %s247 = smul.addr %s246, 32
      %s248 = smul.addr %s247, 8
      %s249 = scalar_lea.vmem %s1, %s248
      %p250 = scmp.lt.s32.totalorder %s20, 1
      %s251 = scalar_select %p250, %s20, 1
      %s252 = smul.addr %s251, 32
      %s253 = smul.addr %s252, 8
      %s254 = scalar_lea.vmem %s6, %s253
      %s255 = sld [smem:[#allocation4]]
      %v256 = vlaneseq
      %v257 = vshrl.u32 %v256, 7
      %v258 = vadd.s32 %v257, 8
      %v259 = vadd.s32 %v257, 16
      %v260 = vadd.s32 %v257, 24
      %v261 = vadd.s32 %v257, 32
      %v262 = vadd.s32 %v257, 40
      %v263 = vadd.s32 %v257, 48
      %v264 = vadd.s32 %v257, 56
      %v265 = vadd.s32 %v257, 64
      %v266 = vadd.s32 %v257, 72
      %v267 = vadd.s32 %v257, 80
      %v268 = vadd.s32 %v257, 88
      %v269 = vadd.s32 %v257, 96
      %v270 = vadd.s32 %v257, 104
      %v271 = vadd.s32 %v257, 112
      %v272 = vadd.s32 %v257, 120
      %v273 = vadd.s32 %v257, 128
      %v274 = vadd.s32 %v257, 136
      %v275 = vadd.s32 %v257, 144
      %v276 = vadd.s32 %v257, 152
      %v277 = vadd.s32 %v257, 160
      %v278 = vadd.s32 %v257, 168
      %v279 = vadd.s32 %v257, 176
      %v280 = vadd.s32 %v257, 184
      %v281 = vadd.s32 %v257, 192
      %v282 = vadd.s32 %v257, 200
      %v283 = vadd.s32 %v257, 208
      %v284 = vadd.s32 %v257, 216
      %v285 = vadd.s32 %v257, 224
      %v286 = vadd.s32 %v257, 232
      %v287 = vadd.s32 %v257, 240
      %v288 = vadd.s32 %v257, 248
      %vm289 = vcmp.lt.s32.totalorder %v257, 0
      %v290 = vsub.s32 0, %v257
      %v291 = vsel %vm289, %v290, %v257
      %v292 = vshrl.u32 %v291, 4
      %v293 = vand.u32 %v291, 15
      %v294 = vsub.s32 0, %v293
      %v295 = vsel %vm289, %v294, %v293
      %vm296 = vcmp.lt.s32.totalorder %v258, 0
      %v297 = vsub.s32 0, %v258
      %v298 = vsel %vm296, %v297, %v258
      %v299 = vshrl.u32 %v298, 4
      %v300 = vand.u32 %v298, 15
      %v301 = vsub.s32 0, %v300
      %v302 = vsel %vm296, %v301, %v300
      %vm303 = vcmp.lt.s32.totalorder %v259, 0
      %v304 = vsub.s32 0, %v259
      %v305 = vsel %vm303, %v304, %v259
      %v306 = vshrl.u32 %v305, 4
      %v307 = vand.u32 %v305, 15
      %v308 = vsub.s32 0, %v307
      %v309 = vsel %vm303, %v308, %v307
      %vm310 = vcmp.lt.s32.totalorder %v260, 0
      %v311 = vsub.s32 0, %v260
      %v312 = vsel %vm310, %v311, %v260
      %v313 = vshrl.u32 %v312, 4
      %v314 = vand.u32 %v312, 15
      %v315 = vsub.s32 0, %v314
      %v316 = vsel %vm310, %v315, %v314
      %vm317 = vcmp.lt.s32.totalorder %v261, 0
      %v318 = vsub.s32 0, %v261
      %v319 = vsel %vm317, %v318, %v261
      %v320 = vshrl.u32 %v319, 4
      %v321 = vand.u32 %v319, 15
      %v322 = vsub.s32 0, %v321
      %v323 = vsel %vm317, %v322, %v321
      %vm324 = vcmp.lt.s32.totalorder %v262, 0
      %v325 = vsub.s32 0, %v262
      %v326 = vsel %vm324, %v325, %v262
      %v327 = vshrl.u32 %v326, 4
      %v328 = vand.u32 %v326, 15
      %v329 = vsub.s32 0, %v328
      %v330 = vsel %vm324, %v329, %v328
      %vm331 = vcmp.lt.s32.totalorder %v263, 0
      %v332 = vsub.s32 0, %v263
      %v333 = vsel %vm331, %v332, %v263
      %v334 = vshrl.u32 %v333, 4
      %v335 = vand.u32 %v333, 15
      %v336 = vsub.s32 0, %v335
      %v337 = vsel %vm331, %v336, %v335
      %vm338 = vcmp.lt.s32.totalorder %v264, 0
      %v339 = vsub.s32 0, %v264
      %v340 = vsel %vm338, %v339, %v264
      %v341 = vshrl.u32 %v340, 4
      %v342 = vand.u32 %v340, 15
      %v343 = vsub.s32 0, %v342
      %v344 = vsel %vm338, %v343, %v342
      %vm345 = vcmp.lt.s32.totalorder %v265, 0
      %v346 = vsub.s32 0, %v265
      %v347 = vsel %vm345, %v346, %v265
      %v348 = vshrl.u32 %v347, 4
      %v349 = vand.u32 %v347, 15
      %v350 = vsub.s32 0, %v349
      %v351 = vsel %vm345, %v350, %v349
      %vm352 = vcmp.lt.s32.totalorder %v266, 0
      %v353 = vsub.s32 0, %v266
      %v354 = vsel %vm352, %v353, %v266
      %v355 = vshrl.u32 %v354, 4
      %v356 = vand.u32 %v354, 15
      %v357 = vsub.s32 0, %v356
      %v358 = vsel %vm352, %v357, %v356
      %vm359 = vcmp.lt.s32.totalorder %v267, 0
      %v360 = vsub.s32 0, %v267
      %v361 = vsel %vm359, %v360, %v267
      %v362 = vshrl.u32 %v361, 4
      %v363 = vand.u32 %v361, 15
      %v364 = vsub.s32 0, %v363
      %v365 = vsel %vm359, %v364, %v363
      %vm366 = vcmp.lt.s32.totalorder %v268, 0
      %v367 = vsub.s32 0, %v268
      %v368 = vsel %vm366, %v367, %v268
      %v369 = vshrl.u32 %v368, 4
      %v370 = vand.u32 %v368, 15
      %v371 = vsub.s32 0, %v370
      %v372 = vsel %vm366, %v371, %v370
      %vm373 = vcmp.lt.s32.totalorder %v269, 0
      %v374 = vsub.s32 0, %v269
      %v375 = vsel %vm373, %v374, %v269
      %v376 = vshrl.u32 %v375, 4
      %v377 = vand.u32 %v375, 15
      %v378 = vsub.s32 0, %v377
      %v379 = vsel %vm373, %v378, %v377
      %vm380 = vcmp.lt.s32.totalorder %v270, 0
      %v381 = vsub.s32 0, %v270
      %v382 = vsel %vm380, %v381, %v270
      %v383 = vshrl.u32 %v382, 4
      %v384 = vand.u32 %v382, 15
      %v385 = vsub.s32 0, %v384
      %v386 = vsel %vm380, %v385, %v384
      %vm387 = vcmp.lt.s32.totalorder %v271, 0
      %v388 = vsub.s32 0, %v271
      %v389 = vsel %vm387, %v388, %v271
      %v390 = vshrl.u32 %v389, 4
      %v391 = vand.u32 %v389, 15
      %v392 = vsub.s32 0, %v391
      %v393 = vsel %vm387, %v392, %v391
      %vm394 = vcmp.lt.s32.totalorder %v272, 0
      %v395 = vsub.s32 0, %v272
      %v396 = vsel %vm394, %v395, %v272
      %v397 = vshrl.u32 %v396, 4
      %v398 = vand.u32 %v396, 15
      %v399 = vsub.s32 0, %v398
      %v400 = vsel %vm394, %v399, %v398
      %vm401 = vcmp.lt.s32.totalorder %v273, 0
      %v402 = vsub.s32 0, %v273
      %v403 = vsel %vm401, %v402, %v273
      %v404 = vshrl.u32 %v403, 4
      %v405 = vand.u32 %v403, 15
      %v406 = vsub.s32 0, %v405
      %v407 = vsel %vm401, %v406, %v405
      %vm408 = vcmp.lt.s32.totalorder %v274, 0
      %v409 = vsub.s32 0, %v274
      %v410 = vsel %vm408, %v409, %v274
      %v411 = vshrl.u32 %v410, 4
      %v412 = vand.u32 %v410, 15
      %v413 = vsub.s32 0, %v412
      %v414 = vsel %vm408, %v413, %v412
      %vm415 = vcmp.lt.s32.totalorder %v275, 0
      %v416 = vsub.s32 0, %v275
      %v417 = vsel %vm415, %v416, %v275
      %v418 = vshrl.u32 %v417, 4
      %v419 = vand.u32 %v417, 15
      %v420 = vsub.s32 0, %v419
      %v421 = vsel %vm415, %v420, %v419
      %vm422 = vcmp.lt.s32.totalorder %v276, 0
      %v423 = vsub.s32 0, %v276
      %v424 = vsel %vm422, %v423, %v276
      %v425 = vshrl.u32 %v424, 4
      %v426 = vand.u32 %v424, 15
      %v427 = vsub.s32 0, %v426
      %v428 = vsel %vm422, %v427, %v426
      %vm429 = vcmp.lt.s32.totalorder %v277, 0
      %v430 = vsub.s32 0, %v277
      %v431 = vsel %vm429, %v430, %v277
      %v432 = vshrl.u32 %v431, 4
      %v433 = vand.u32 %v431, 15
      %v434 = vsub.s32 0, %v433
      %v435 = vsel %vm429, %v434, %v433
      %vm436 = vcmp.lt.s32.totalorder %v278, 0
      %v437 = vsub.s32 0, %v278
      %v438 = vsel %vm436, %v437, %v278
      %v439 = vshrl.u32 %v438, 4
      %v440 = vand.u32 %v438, 15
      %v441 = vsub.s32 0, %v440
      %v442 = vsel %vm436, %v441, %v440
      %vm443 = vcmp.lt.s32.totalorder %v279, 0
      %v444 = vsub.s32 0, %v279
      %v445 = vsel %vm443, %v444, %v279
      %v446 = vshrl.u32 %v445, 4
      %v447 = vand.u32 %v445, 15
      %v448 = vsub.s32 0, %v447
      %v449 = vsel %vm443, %v448, %v447
      %vm450 = vcmp.lt.s32.totalorder %v280, 0
      %v451 = vsub.s32 0, %v280
      %v452 = vsel %vm450, %v451, %v280
      %v453 = vshrl.u32 %v452, 4
      %v454 = vand.u32 %v452, 15
      %v455 = vsub.s32 0, %v454
      %v456 = vsel %vm450, %v455, %v454
      %vm457 = vcmp.lt.s32.totalorder %v281, 0
      %v458 = vsub.s32 0, %v281
      %v459 = vsel %vm457, %v458, %v281
      %v460 = vshrl.u32 %v459, 4
      %v461 = vand.u32 %v459, 15
      %v462 = vsub.s32 0, %v461
      %v463 = vsel %vm457, %v462, %v461
      %vm464 = vcmp.lt.s32.totalorder %v282, 0
      %v465 = vsub.s32 0, %v282
      %v466 = vsel %vm464, %v465, %v282
      %v467 = vshrl.u32 %v466, 4
      %v468 = vand.u32 %v466, 15
      %v469 = vsub.s32 0, %v468
      %v470 = vsel %vm464, %v469, %v468
      %vm471 = vcmp.lt.s32.totalorder %v283, 0
      %v472 = vsub.s32 0, %v283
      %v473 = vsel %vm471, %v472, %v283
      %v474 = vshrl.u32 %v473, 4
      %v475 = vand.u32 %v473, 15
      %v476 = vsub.s32 0, %v475
      %v477 = vsel %vm471, %v476, %v475
      %vm478 = vcmp.lt.s32.totalorder %v284, 0
      %v479 = vsub.s32 0, %v284
      %v480 = vsel %vm478, %v479, %v284
      %v481 = vshrl.u32 %v480, 4
      %v482 = vand.u32 %v480, 15
      %v483 = vsub.s32 0, %v482
      %v484 = vsel %vm478, %v483, %v482
      %vm485 = vcmp.lt.s32.totalorder %v285, 0
      %v486 = vsub.s32 0, %v285
      %v487 = vsel %vm485, %v486, %v285
      %v488 = vshrl.u32 %v487, 4
      %v489 = vand.u32 %v487, 15
      %v490 = vsub.s32 0, %v489
      %v491 = vsel %vm485, %v490, %v489
      %vm492 = vcmp.lt.s32.totalorder %v286, 0
      %v493 = vsub.s32 0, %v286
      %v494 = vsel %vm492, %v493, %v286
      %v495 = vshrl.u32 %v494, 4
      %v496 = vand.u32 %v494, 15
      %v497 = vsub.s32 0, %v496
      %v498 = vsel %vm492, %v497, %v496
      %vm499 = vcmp.lt.s32.totalorder %v287, 0
      %v500 = vsub.s32 0, %v287
      %v501 = vsel %vm499, %v500, %v287
      %v502 = vshrl.u32 %v501, 4
      %v503 = vand.u32 %v501, 15
      %v504 = vsub.s32 0, %v503
      %v505 = vsel %vm499, %v504, %v503
      %vm506 = vcmp.lt.s32.totalorder %v288, 0
      %v507 = vsub.s32 0, %v288
      %v508 = vsel %vm506, %v507, %v288
      %v509 = vshrl.u32 %v508, 4
      %v510 = vand.u32 %v508, 15
      %v511 = vsub.s32 0, %v510
      %v512 = vsel %vm506, %v511, %v510
      %vm513 = vcmp.ne.s32.totalorder %v295, 0
      %vm514 = vcmp.ne.s32.totalorder %v302, 0
      %vm515 = vcmp.ne.s32.totalorder %v309, 0
      %vm516 = vcmp.ne.s32.totalorder %v316, 0
      %vm517 = vcmp.ne.s32.totalorder %v323, 0
      %vm518 = vcmp.ne.s32.totalorder %v330, 0
      %vm519 = vcmp.ne.s32.totalorder %v337, 0
      %vm520 = vcmp.ne.s32.totalorder %v344, 0
      %vm521 = vcmp.ne.s32.totalorder %v351, 0
      %vm522 = vcmp.ne.s32.totalorder %v358, 0
      %vm523 = vcmp.ne.s32.totalorder %v365, 0
      %vm524 = vcmp.ne.s32.totalorder %v372, 0
      %vm525 = vcmp.ne.s32.totalorder %v379, 0
      %vm526 = vcmp.ne.s32.totalorder %v386, 0
      %vm527 = vcmp.ne.s32.totalorder %v393, 0
      %vm528 = vcmp.ne.s32.totalorder %v400, 0
      %vm529 = vcmp.ne.s32.totalorder %v407, 0
      %vm530 = vcmp.ne.s32.totalorder %v414, 0
      %vm531 = vcmp.ne.s32.totalorder %v421, 0
      %vm532 = vcmp.ne.s32.totalorder %v428, 0
      %vm533 = vcmp.ne.s32.totalorder %v435, 0
      %vm534 = vcmp.ne.s32.totalorder %v442, 0
      %vm535 = vcmp.ne.s32.totalorder %v449, 0
      %vm536 = vcmp.ne.s32.totalorder %v456, 0
      %vm537 = vcmp.ne.s32.totalorder %v463, 0
      %vm538 = vcmp.ne.s32.totalorder %v470, 0
      %vm539 = vcmp.ne.s32.totalorder %v477, 0
      %vm540 = vcmp.ne.s32.totalorder %v484, 0
      %vm541 = vcmp.ne.s32.totalorder %v491, 0
      %vm542 = vcmp.ne.s32.totalorder %v498, 0
      %vm543 = vcmp.ne.s32.totalorder %v505, 0
      %vm544 = vcmp.ne.s32.totalorder %v512, 0
      %vm545 = vcmp.lt.s32.totalorder %v295, 0
      %vm546 = vcmp.lt.s32.totalorder %v302, 0
      %vm547 = vcmp.lt.s32.totalorder %v309, 0
      %vm548 = vcmp.lt.s32.totalorder %v316, 0
      %vm549 = vcmp.lt.s32.totalorder %v323, 0
      %vm550 = vcmp.lt.s32.totalorder %v330, 0
      %vm551 = vcmp.lt.s32.totalorder %v337, 0
      %vm552 = vcmp.lt.s32.totalorder %v344, 0
      %vm553 = vcmp.lt.s32.totalorder %v351, 0
      %vm554 = vcmp.lt.s32.totalorder %v358, 0
      %vm555 = vcmp.lt.s32.totalorder %v365, 0
      %vm556 = vcmp.lt.s32.totalorder %v372, 0
      %vm557 = vcmp.lt.s32.totalorder %v379, 0
      %vm558 = vcmp.lt.s32.totalorder %v386, 0
      %vm559 = vcmp.lt.s32.totalorder %v393, 0
      %vm560 = vcmp.lt.s32.totalorder %v400, 0
      %vm561 = vcmp.lt.s32.totalorder %v407, 0
      %vm562 = vcmp.lt.s32.totalorder %v414, 0
      %vm563 = vcmp.lt.s32.totalorder %v421, 0
      %vm564 = vcmp.lt.s32.totalorder %v428, 0
      %vm565 = vcmp.lt.s32.totalorder %v435, 0
      %vm566 = vcmp.lt.s32.totalorder %v442, 0
      %vm567 = vcmp.lt.s32.totalorder %v449, 0
      %vm568 = vcmp.lt.s32.totalorder %v456, 0
      %vm569 = vcmp.lt.s32.totalorder %v463, 0
      %vm570 = vcmp.lt.s32.totalorder %v470, 0
      %vm571 = vcmp.lt.s32.totalorder %v477, 0
      %vm572 = vcmp.lt.s32.totalorder %v484, 0
      %vm573 = vcmp.lt.s32.totalorder %v491, 0
      %vm574 = vcmp.lt.s32.totalorder %v498, 0
      %vm575 = vcmp.lt.s32.totalorder %v505, 0
      %vm576 = vcmp.lt.s32.totalorder %v512, 0
      %vm577 = vmand %vm545, %vm513
      %vm578 = vmand %vm546, %vm514
      %vm579 = vmand %vm547, %vm515
      %vm580 = vmand %vm548, %vm516
      %vm581 = vmand %vm549, %vm517
      %vm582 = vmand %vm550, %vm518
      %vm583 = vmand %vm551, %vm519
      %vm584 = vmand %vm552, %vm520
      %vm585 = vmand %vm553, %vm521
      %vm586 = vmand %vm554, %vm522
      %vm587 = vmand %vm555, %vm523
      %vm588 = vmand %vm556, %vm524
      %vm589 = vmand %vm557, %vm525
      %vm590 = vmand %vm558, %vm526
      %vm591 = vmand %vm559, %vm527
      %vm592 = vmand %vm560, %vm528
      %vm593 = vmand %vm561, %vm529
      %vm594 = vmand %vm562, %vm530
      %vm595 = vmand %vm563, %vm531
      %vm596 = vmand %vm564, %vm532
      %vm597 = vmand %vm565, %vm533
      %vm598 = vmand %vm566, %vm534
      %vm599 = vmand %vm567, %vm535
      %vm600 = vmand %vm568, %vm536
      %vm601 = vmand %vm569, %vm537
      %vm602 = vmand %vm570, %vm538
      %vm603 = vmand %vm571, %vm539
      %vm604 = vmand %vm572, %vm540
      %vm605 = vmand %vm573, %vm541
      %vm606 = vmand %vm574, %vm542
      %vm607 = vmand %vm575, %vm543
      %vm608 = vmand %vm576, %vm544
      %v609 = vadd.s32 %v295, 16
      %v610 = vadd.s32 %v302, 16
      %v611 = vadd.s32 %v309, 16
      %v612 = vadd.s32 %v316, 16
      %v613 = vadd.s32 %v323, 16
      %v614 = vadd.s32 %v330, 16
      %v615 = vadd.s32 %v337, 16
      %v616 = vadd.s32 %v344, 16
      %v617 = vadd.s32 %v351, 16
      %v618 = vadd.s32 %v358, 16
      %v619 = vadd.s32 %v365, 16
      %v620 = vadd.s32 %v372, 16
      %v621 = vadd.s32 %v379, 16
      %v622 = vadd.s32 %v386, 16
      %v623 = vadd.s32 %v393, 16
      %v624 = vadd.s32 %v400, 16
      %v625 = vadd.s32 %v407, 16
      %v626 = vadd.s32 %v414, 16
      %v627 = vadd.s32 %v421, 16
      %v628 = vadd.s32 %v428, 16
      %v629 = vadd.s32 %v435, 16
      %v630 = vadd.s32 %v442, 16
      %v631 = vadd.s32 %v449, 16
      %v632 = vadd.s32 %v456, 16
      %v633 = vadd.s32 %v463, 16
      %v634 = vadd.s32 %v470, 16
      %v635 = vadd.s32 %v477, 16
      %v636 = vadd.s32 %v484, 16
      %v637 = vadd.s32 %v491, 16
      %v638 = vadd.s32 %v498, 16
      %v639 = vadd.s32 %v505, 16
      %v640 = vadd.s32 %v512, 16
      %v641 = vsel %vm577, %v609, %v295
      %v642 = vsel %vm578, %v610, %v302
      %v643 = vsel %vm579, %v611, %v309
      %v644 = vsel %vm580, %v612, %v316
      %v645 = vsel %vm581, %v613, %v323
      %v646 = vsel %vm582, %v614, %v330
      %v647 = vsel %vm583, %v615, %v337
      %v648 = vsel %vm584, %v616, %v344
      %v649 = vsel %vm585, %v617, %v351
      %v650 = vsel %vm586, %v618, %v358
      %v651 = vsel %vm587, %v619, %v365
      %v652 = vsel %vm588, %v620, %v372
      %v653 = vsel %vm589, %v621, %v379
      %v654 = vsel %vm590, %v622, %v386
      %v655 = vsel %vm591, %v623, %v393
      %v656 = vsel %vm592, %v624, %v400
      %v657 = vsel %vm593, %v625, %v407
      %v658 = vsel %vm594, %v626, %v414
      %v659 = vsel %vm595, %v627, %v421
      %v660 = vsel %vm596, %v628, %v428
      %v661 = vsel %vm597, %v629, %v435
      %v662 = vsel %vm598, %v630, %v442
      %v663 = vsel %vm599, %v631, %v449
      %v664 = vsel %vm600, %v632, %v456
      %v665 = vsel %vm601, %v633, %v463
      %v666 = vsel %vm602, %v634, %v470
      %v667 = vsel %vm603, %v635, %v477
      %v668 = vsel %vm604, %v636, %v484
      %v669 = vsel %vm605, %v637, %v491
      %v670 = vsel %vm606, %v638, %v498
      %v671 = vsel %vm607, %v639, %v505
      %v672 = vsel %vm608, %v640, %v512
      %vm673 = vcmp.ne.s32.totalorder %v641, 0
      %vm674 = vcmp.ne.s32.totalorder %v642, 0
      %vm675 = vcmp.ne.s32.totalorder %v643, 0
      %vm676 = vcmp.ne.s32.totalorder %v644, 0
      %vm677 = vcmp.ne.s32.totalorder %v645, 0
      %vm678 = vcmp.ne.s32.totalorder %v646, 0
      %vm679 = vcmp.ne.s32.totalorder %v647, 0
      %vm680 = vcmp.ne.s32.totalorder %v648, 0
      %vm681 = vcmp.ne.s32.totalorder %v649, 0
      %vm682 = vcmp.ne.s32.totalorder %v650, 0
      %vm683 = vcmp.ne.s32.totalorder %v651, 0
      %vm684 = vcmp.ne.s32.totalorder %v652, 0
      %vm685 = vcmp.ne.s32.totalorder %v653, 0
      %vm686 = vcmp.ne.s32.totalorder %v654, 0
      %vm687 = vcmp.ne.s32.totalorder %v655, 0
      %vm688 = vcmp.ne.s32.totalorder %v656, 0
      %vm689 = vcmp.ne.s32.totalorder %v657, 0
      %vm690 = vcmp.ne.s32.totalorder %v658, 0
      %vm691 = vcmp.ne.s32.totalorder %v659, 0
      %vm692 = vcmp.ne.s32.totalorder %v660, 0
      %vm693 = vcmp.ne.s32.totalorder %v661, 0
      %vm694 = vcmp.ne.s32.totalorder %v662, 0
      %vm695 = vcmp.ne.s32.totalorder %v663, 0
      %vm696 = vcmp.ne.s32.totalorder %v664, 0
      %vm697 = vcmp.ne.s32.totalorder %v665, 0
      %vm698 = vcmp.ne.s32.totalorder %v666, 0
      %vm699 = vcmp.ne.s32.totalorder %v667, 0
      %vm700 = vcmp.ne.s32.totalorder %v668, 0
      %vm701 = vcmp.ne.s32.totalorder %v669, 0
      %vm702 = vcmp.ne.s32.totalorder %v670, 0
      %vm703 = vcmp.ne.s32.totalorder %v671, 0
      %vm704 = vcmp.ne.s32.totalorder %v672, 0
      %vm705 = vcmp.ne.s32.totalorder %v641, 15
      %vm706 = vcmp.ne.s32.totalorder %v642, 15
      %vm707 = vcmp.ne.s32.totalorder %v643, 15
      %vm708 = vcmp.ne.s32.totalorder %v644, 15
      %vm709 = vcmp.ne.s32.totalorder %v645, 15
      %vm710 = vcmp.ne.s32.totalorder %v646, 15
      %vm711 = vcmp.ne.s32.totalorder %v647, 15
      %vm712 = vcmp.ne.s32.totalorder %v648, 15
      %vm713 = vcmp.ne.s32.totalorder %v649, 15
      %vm714 = vcmp.ne.s32.totalorder %v650, 15
      %vm715 = vcmp.ne.s32.totalorder %v651, 15
      %vm716 = vcmp.ne.s32.totalorder %v652, 15
      %vm717 = vcmp.ne.s32.totalorder %v653, 15
      %vm718 = vcmp.ne.s32.totalorder %v654, 15
      %vm719 = vcmp.ne.s32.totalorder %v655, 15
      %vm720 = vcmp.ne.s32.totalorder %v656, 15
      %vm721 = vcmp.ne.s32.totalorder %v657, 15
      %vm722 = vcmp.ne.s32.totalorder %v658, 15
      %vm723 = vcmp.ne.s32.totalorder %v659, 15
      %vm724 = vcmp.ne.s32.totalorder %v660, 15
      %vm725 = vcmp.ne.s32.totalorder %v661, 15
      %vm726 = vcmp.ne.s32.totalorder %v662, 15
      %vm727 = vcmp.ne.s32.totalorder %v663, 15
      %vm728 = vcmp.ne.s32.totalorder %v664, 15
      %vm729 = vcmp.ne.s32.totalorder %v665, 15
      %vm730 = vcmp.ne.s32.totalorder %v666, 15
      %vm731 = vcmp.ne.s32.totalorder %v667, 15
      %vm732 = vcmp.ne.s32.totalorder %v668, 15
      %vm733 = vcmp.ne.s32.totalorder %v669, 15
      %vm734 = vcmp.ne.s32.totalorder %v670, 15
      %vm735 = vcmp.ne.s32.totalorder %v671, 15
      %vm736 = vcmp.ne.s32.totalorder %v672, 15
      %vm737 = vcmask 15360
      %738 = vst.msk [vmem:[#allocation2] sm:$0xff] %vm737, 0.0
      %739 = vst.msk [vmem:[#allocation2 + $0x8] sm:$0xff] %vm737, 0.0
      %740 = vst.msk [vmem:[#allocation2 + $0x10] sm:$0xff] %vm737, 0.0
      %741 = vst.msk [vmem:[#allocation2 + $0x18] sm:$0xff] %vm737, 0.0
      %742 = vst.msk [vmem:[#allocation2 + $0x20] sm:$0xff] %vm737, 0.0
      %743 = vst.msk [vmem:[#allocation2 + $0x28] sm:$0xff] %vm737, 0.0
      %744 = vst.msk [vmem:[#allocation2 + $0x30] sm:$0xff] %vm737, 0.0
      %745 = vst.msk [vmem:[#allocation2 + $0x38] sm:$0xff] %vm737, 0.0
      %746 = vst.msk [vmem:[#allocation2 + $0x40] sm:$0xff] %vm737, 0.0
      %747 = vst.msk [vmem:[#allocation2 + $0x48] sm:$0xff] %vm737, 0.0
      %748 = vst.msk [vmem:[#allocation2 + $0x50] sm:$0xff] %vm737, 0.0
      %749 = vst.msk [vmem:[#allocation2 + $0x58] sm:$0xff] %vm737, 0.0
      %750 = vst.msk [vmem:[#allocation2 + $0x60] sm:$0xff] %vm737, 0.0
      %751 = vst.msk [vmem:[#allocation2 + $0x68] sm:$0xff] %vm737, 0.0
      %752 = vst.msk [vmem:[#allocation2 + $0x70] sm:$0xff] %vm737, 0.0
      %753 = vst.msk [vmem:[#allocation2 + $0x78] sm:$0xff] %vm737, 0.0
      %754 = vst.msk [vmem:[#allocation2 + $0x80] sm:$0xff] %vm737, 0.0
      %755 = vst.msk [vmem:[#allocation2 + $0x88] sm:$0xff] %vm737, 0.0
      %756 = vst.msk [vmem:[#allocation2 + $0x90] sm:$0xff] %vm737, 0.0
      %757 = vst.msk [vmem:[#allocation2 + $0x98] sm:$0xff] %vm737, 0.0
      %758 = vst.msk [vmem:[#allocation2 + $0xa0] sm:$0xff] %vm737, 0.0
      %759 = vst.msk [vmem:[#allocation2 + $0xa8] sm:$0xff] %vm737, 0.0
      %760 = vst.msk [vmem:[#allocation2 + $0xb0] sm:$0xff] %vm737, 0.0
      %761 = vst.msk [vmem:[#allocation2 + $0xb8] sm:$0xff] %vm737, 0.0
      %762 = vst.msk [vmem:[#allocation2 + $0xc0] sm:$0xff] %vm737, 0.0
      %763 = vst.msk [vmem:[#allocation2 + $0xc8] sm:$0xff] %vm737, 0.0
      %764 = vst.msk [vmem:[#allocation2 + $0xd0] sm:$0xff] %vm737, 0.0
      %765 = vst.msk [vmem:[#allocation2 + $0xd8] sm:$0xff] %vm737, 0.0
      %766 = vst.msk [vmem:[#allocation2 + $0xe0] sm:$0xff] %vm737, 0.0
      %767 = vst.msk [vmem:[#allocation2 + $0xe8] sm:$0xff] %vm737, 0.0
      %768 = vst.msk [vmem:[#allocation2 + $0xf0] sm:$0xff] %vm737, 0.0
      %769 = vst.msk [vmem:[#allocation2 + $0xf8] sm:$0xff] %vm737, 0.0
      %770 = vst.msk [vmem:[#allocation2 + $0x100] sm:$0xff] %vm737, 0.0
      %771 = vst.msk [vmem:[#allocation2 + $0x108] sm:$0xff] %vm737, 0.0
      %772 = vst.msk [vmem:[#allocation2 + $0x110] sm:$0xff] %vm737, 0.0
      %773 = vst.msk [vmem:[#allocation2 + $0x118] sm:$0xff] %vm737, 0.0
      %vm774 = vcmask 9216
      %775 = vst.msk [vmem:[#allocation2 + $0x120] sm:$0x3] %vm774, 0.0
      %v776 = vld [vmem:[%s249] sm:$0xff]
      %v777 = vld [vmem:[%s249 + $0x8] sm:$0xff]
      %v778 = vld [vmem:[%s249 + $0x10] sm:$0xff]
      %v779 = vld [vmem:[%s249 + $0x18] sm:$0xff]
      %v780 = vld [vmem:[%s249 + $0x20] sm:$0xff]
      %v781 = vld [vmem:[%s249 + $0x28] sm:$0xff]
      %v782 = vld [vmem:[%s249 + $0x30] sm:$0xff]
      %v783 = vld [vmem:[%s249 + $0x38] sm:$0xff]
      %v784 = vld [vmem:[%s249 + $0x40] sm:$0xff]
      %v785 = vld [vmem:[%s249 + $0x48] sm:$0xff]
      %v786 = vld [vmem:[%s249 + $0x50] sm:$0xff]
      %v787 = vld [vmem:[%s249 + $0x58] sm:$0xff]
      %v788 = vld [vmem:[%s249 + $0x60] sm:$0xff]
      %v789 = vld [vmem:[%s249 + $0x68] sm:$0xff]
      %v790 = vld [vmem:[%s249 + $0x70] sm:$0xff]
      %v791 = vld [vmem:[%s249 + $0x78] sm:$0xff]
      %v792 = vld [vmem:[%s249 + $0x80] sm:$0xff]
      %v793 = vld [vmem:[%s249 + $0x88] sm:$0xff]
      %v794 = vld [vmem:[%s249 + $0x90] sm:$0xff]
      %v795 = vld [vmem:[%s249 + $0x98] sm:$0xff]
      %v796 = vld [vmem:[%s249 + $0xa0] sm:$0xff]
      %v797 = vld [vmem:[%s249 + $0xa8] sm:$0xff]
      %v798 = vld [vmem:[%s249 + $0xb0] sm:$0xff]
      %v799 = vld [vmem:[%s249 + $0xb8] sm:$0xff]
      %v800 = vld [vmem:[%s249 + $0xc0] sm:$0xff]
      %v801 = vld [vmem:[%s249 + $0xc8] sm:$0xff]
      %v802 = vld [vmem:[%s249 + $0xd0] sm:$0xff]
      %v803 = vld [vmem:[%s249 + $0xd8] sm:$0xff]
      %v804 = vld [vmem:[%s249 + $0xe0] sm:$0xff]
      %v805 = vld [vmem:[%s249 + $0xe8] sm:$0xff]
      %v806 = vld [vmem:[%s249 + $0xf0] sm:$0xff]
      %v807 = vld [vmem:[%s249 + $0xf8] sm:$0xff]
      %vm808 = vcmask 7168
      %809 = vst.msk [vmem:[#allocation2 + $0x11] sm:$0xff] %vm808, %v776
      %810 = vst.msk [vmem:[#allocation2 + $0x19] sm:$0xff] %vm808, %v777
      %811 = vst.msk [vmem:[#allocation2 + $0x21] sm:$0xff] %vm808, %v778
      %812 = vst.msk [vmem:[#allocation2 + $0x29] sm:$0xff] %vm808, %v779
      %813 = vst.msk [vmem:[#allocation2 + $0x31] sm:$0xff] %vm808, %v780
      %814 = vst.msk [vmem:[#allocation2 + $0x39] sm:$0xff] %vm808, %v781
      %815 = vst.msk [vmem:[#allocation2 + $0x41] sm:$0xff] %vm808, %v782
      %816 = vst.msk [vmem:[#allocation2 + $0x49] sm:$0xff] %vm808, %v783
      %817 = vst.msk [vmem:[#allocation2 + $0x51] sm:$0xff] %vm808, %v784
      %818 = vst.msk [vmem:[#allocation2 + $0x59] sm:$0xff] %vm808, %v785
      %819 = vst.msk [vmem:[#allocation2 + $0x61] sm:$0xff] %vm808, %v786
      %820 = vst.msk [vmem:[#allocation2 + $0x69] sm:$0xff] %vm808, %v787
      %821 = vst.msk [vmem:[#allocation2 + $0x71] sm:$0xff] %vm808, %v788
      %822 = vst.msk [vmem:[#allocation2 + $0x79] sm:$0xff] %vm808, %v789
      %823 = vst.msk [vmem:[#allocation2 + $0x81] sm:$0xff] %vm808, %v790
      %824 = vst.msk [vmem:[#allocation2 + $0x89] sm:$0xff] %vm808, %v791
      %825 = vst.msk [vmem:[#allocation2 + $0x91] sm:$0xff] %vm808, %v792
      %826 = vst.msk [vmem:[#allocation2 + $0x99] sm:$0xff] %vm808, %v793
      %827 = vst.msk [vmem:[#allocation2 + $0xa1] sm:$0xff] %vm808, %v794
      %828 = vst.msk [vmem:[#allocation2 + $0xa9] sm:$0xff] %vm808, %v795
      %829 = vst.msk [vmem:[#allocation2 + $0xb1] sm:$0xff] %vm808, %v796
      %830 = vst.msk [vmem:[#allocation2 + $0xb9] sm:$0xff] %vm808, %v797
      %831 = vst.msk [vmem:[#allocation2 + $0xc1] sm:$0xff] %vm808, %v798
      %832 = vst.msk [vmem:[#allocation2 + $0xc9] sm:$0xff] %vm808, %v799
      %833 = vst.msk [vmem:[#allocation2 + $0xd1] sm:$0xff] %vm808, %v800
      %834 = vst.msk [vmem:[#allocation2 + $0xd9] sm:$0xff] %vm808, %v801
      %835 = vst.msk [vmem:[#allocation2 + $0xe1] sm:$0xff] %vm808, %v802
      %836 = vst.msk [vmem:[#allocation2 + $0xe9] sm:$0xff] %vm808, %v803
      %837 = vst.msk [vmem:[#allocation2 + $0xf1] sm:$0xff] %vm808, %v804
      %838 = vst.msk [vmem:[#allocation2 + $0xf9] sm:$0xff] %vm808, %v805
      %839 = vst.msk [vmem:[#allocation2 + $0x101] sm:$0xff] %vm808, %v806
      %840 = vst.msk [vmem:[#allocation2 + $0x109] sm:$0xff] %vm808, %v807
      %v841 = vstv %s255
      %vm842 = vcmask 15368
      %843 = vst.msk [vmem:[#allocation2 + $0x11] sm:$0xff] %vm842, %v841
      %844 = vst.msk [vmem:[#allocation2 + $0x19] sm:$0xff] %vm842, %v841
      %845 = vst.msk [vmem:[#allocation2 + $0x21] sm:$0xff] %vm842, %v841
      %846 = vst.msk [vmem:[#allocation2 + $0x29] sm:$0xff] %vm842, %v841
      %847 = vst.msk [vmem:[#allocation2 + $0x31] sm:$0xff] %vm842, %v841
      %848 = vst.msk [vmem:[#allocation2 + $0x39] sm:$0xff] %vm842, %v841
      %849 = vst.msk [vmem:[#allocation2 + $0x41] sm:$0xff] %vm842, %v841
      %850 = vst.msk [vmem:[#allocation2 + $0x49] sm:$0xff] %vm842, %v841
      %851 = vst.msk [vmem:[#allocation2 + $0x51] sm:$0xff] %vm842, %v841
      %852 = vst.msk [vmem:[#allocation2 + $0x59] sm:$0xff] %vm842, %v841
      %853 = vst.msk [vmem:[#allocation2 + $0x61] sm:$0xff] %vm842, %v841
      %854 = vst.msk [vmem:[#allocation2 + $0x69] sm:$0xff] %vm842, %v841
      %855 = vst.msk [vmem:[#allocation2 + $0x71] sm:$0xff] %vm842, %v841
      %856 = vst.msk [vmem:[#allocation2 + $0x79] sm:$0xff] %vm842, %v841
      %857 = vst.msk [vmem:[#allocation2 + $0x81] sm:$0xff] %vm842, %v841
      %858 = vst.msk [vmem:[#allocation2 + $0x89] sm:$0xff] %vm842, %v841
      %859 = vst.msk [vmem:[#allocation2 + $0x91] sm:$0xff] %vm842, %v841
      %860 = vst.msk [vmem:[#allocation2 + $0x99] sm:$0xff] %vm842, %v841
      %861 = vst.msk [vmem:[#allocation2 + $0xa1] sm:$0xff] %vm842, %v841
      %862 = vst.msk [vmem:[#allocation2 + $0xa9] sm:$0xff] %vm842, %v841
      %863 = vst.msk [vmem:[#allocation2 + $0xb1] sm:$0xff] %vm842, %v841
      %864 = vst.msk [vmem:[#allocation2 + $0xb9] sm:$0xff] %vm842, %v841
      %865 = vst.msk [vmem:[#allocation2 + $0xc1] sm:$0xff] %vm842, %v841
      %866 = vst.msk [vmem:[#allocation2 + $0xc9] sm:$0xff] %vm842, %v841
      %867 = vst.msk [vmem:[#allocation2 + $0xd1] sm:$0xff] %vm842, %v841
      %868 = vst.msk [vmem:[#allocation2 + $0xd9] sm:$0xff] %vm842, %v841
      %869 = vst.msk [vmem:[#allocation2 + $0xe1] sm:$0xff] %vm842, %v841
      %870 = vst.msk [vmem:[#allocation2 + $0xe9] sm:$0xff] %vm842, %v841
      %871 = vst.msk [vmem:[#allocation2 + $0xf1] sm:$0xff] %vm842, %v841
      %872 = vst.msk [vmem:[#allocation2 + $0xf9] sm:$0xff] %vm842, %v841
      %873 = vst.msk [vmem:[#allocation2 + $0x101] sm:$0xff] %vm842, %v841
      %874 = vst.msk [vmem:[#allocation2 + $0x109] sm:$0xff] %vm842, %v841
      %v875 = vld [vmem:[%s3] sm:$0x1]
      %v877 = vlaneseq
      %v878 = vshrl.u32 %v877, 7
      %v879 = vsub.s32 0, %v878
      %v880 = vrot.slane %v875, %v879
      %v882 = vld [vmem:[#allocation2] sm:$0xff]
      %v883 = vld [vmem:[#allocation2 + $0x8] sm:$0xff]
      %v884 = vld [vmem:[#allocation2 + $0x10] sm:$0xff]
      %v885 = vld [vmem:[#allocation2 + $0x18] sm:$0xff]
      %v886 = vld [vmem:[#allocation2 + $0x20] sm:$0xff]
      %v887 = vld [vmem:[#allocation2 + $0x28] sm:$0xff]
      %v888 = vld [vmem:[#allocation2 + $0x30] sm:$0xff]
      %v889 = vld [vmem:[#allocation2 + $0x38] sm:$0xff]
      %v890 = vld [vmem:[#allocation2 + $0x40] sm:$0xff]
      %v891 = vld [vmem:[#allocation2 + $0x48] sm:$0xff]
      %v892 = vld [vmem:[#allocation2 + $0x50] sm:$0xff]
      %v893 = vld [vmem:[#allocation2 + $0x58] sm:$0xff]
      %v894 = vld [vmem:[#allocation2 + $0x60] sm:$0xff]
      %v895 = vld [vmem:[#allocation2 + $0x68] sm:$0xff]
      %v896 = vld [vmem:[#allocation2 + $0x70] sm:$0xff]
      %v897 = vld [vmem:[#allocation2 + $0x78] sm:$0xff]
      %v898 = vld [vmem:[#allocation2 + $0x80] sm:$0xff]
      %v899 = vld [vmem:[#allocation2 + $0x88] sm:$0xff]
      %v900 = vld [vmem:[#allocation2 + $0x90] sm:$0xff]
      %v901 = vld [vmem:[#allocation2 + $0x98] sm:$0xff]
      %v902 = vld [vmem:[#allocation2 + $0xa0] sm:$0xff]
      %v903 = vld [vmem:[#allocation2 + $0xa8] sm:$0xff]
      %v904 = vld [vmem:[#allocation2 + $0xb0] sm:$0xff]
      %v905 = vld [vmem:[#allocation2 + $0xb8] sm:$0xff]
      %v906 = vld [vmem:[#allocation2 + $0xc0] sm:$0xff]
      %v907 = vld [vmem:[#allocation2 + $0xc8] sm:$0xff]
      %v908 = vld [vmem:[#allocation2 + $0xd0] sm:$0xff]
      %v909 = vld [vmem:[#allocation2 + $0xd8] sm:$0xff]
      %v910 = vld [vmem:[#allocation2 + $0xe0] sm:$0xff]
      %v911 = vld [vmem:[#allocation2 + $0xe8] sm:$0xff]
      %v912 = vld [vmem:[#allocation2 + $0xf0] sm:$0xff]
      %v913 = vld [vmem:[#allocation2 + $0xf8] sm:$0xff]
      %v914 = vsel %vm673, 1, 0
      %v915 = vsel %vm674, 1, 0
      %v916 = vsel %vm675, 1, 0
      %v917 = vsel %vm676, 1, 0
      %v918 = vsel %vm677, 1, 0
      %v919 = vsel %vm678, 1, 0
      %v920 = vsel %vm679, 1, 0
      %v921 = vsel %vm680, 1, 0
      %v922 = vsel %vm681, 1, 0
      %v923 = vsel %vm682, 1, 0
      %v924 = vsel %vm683, 1, 0
      %v925 = vsel %vm684, 1, 0
      %v926 = vsel %vm685, 1, 0
      %v927 = vsel %vm686, 1, 0
      %v928 = vsel %vm687, 1, 0
      %v929 = vsel %vm688, 1, 0
      %v930 = vsel %vm689, 1, 0
      %v931 = vsel %vm690, 1, 0
      %v932 = vsel %vm691, 1, 0
      %v933 = vsel %vm692, 1, 0
      %v934 = vsel %vm693, 1, 0
      %v935 = vsel %vm694, 1, 0
      %v936 = vsel %vm695, 1, 0
      %v937 = vsel %vm696, 1, 0
      %v938 = vsel %vm697, 1, 0
      %v939 = vsel %vm698, 1, 0
      %v940 = vsel %vm699, 1, 0
      %v941 = vsel %vm700, 1, 0
      %v942 = vsel %vm701, 1, 0
      %v943 = vsel %vm702, 1, 0
      %v944 = vsel %vm703, 1, 0
      %v945 = vsel %vm704, 1, 0
      %vm946 = vcmp.eq.s32.totalorder %v914, 1
      %vm947 = vcmp.eq.s32.totalorder %v915, 1
      %vm948 = vcmp.eq.s32.totalorder %v916, 1
      %vm949 = vcmp.eq.s32.totalorder %v917, 1
      %vm950 = vcmp.eq.s32.totalorder %v918, 1
      %vm951 = vcmp.eq.s32.totalorder %v919, 1
      %vm952 = vcmp.eq.s32.totalorder %v920, 1
      %vm953 = vcmp.eq.s32.totalorder %v921, 1
      %vm954 = vcmp.eq.s32.totalorder %v922, 1
      %vm955 = vcmp.eq.s32.totalorder %v923, 1
      %vm956 = vcmp.eq.s32.totalorder %v924, 1
      %vm957 = vcmp.eq.s32.totalorder %v925, 1
      %vm958 = vcmp.eq.s32.totalorder %v926, 1
      %vm959 = vcmp.eq.s32.totalorder %v927, 1
      %vm960 = vcmp.eq.s32.totalorder %v928, 1
      %vm961 = vcmp.eq.s32.totalorder %v929, 1
      %vm962 = vcmp.eq.s32.totalorder %v930, 1
      %vm963 = vcmp.eq.s32.totalorder %v931, 1
      %vm964 = vcmp.eq.s32.totalorder %v932, 1
      %vm965 = vcmp.eq.s32.totalorder %v933, 1
      %vm966 = vcmp.eq.s32.totalorder %v934, 1
      %vm967 = vcmp.eq.s32.totalorder %v935, 1
      %vm968 = vcmp.eq.s32.totalorder %v936, 1
      %vm969 = vcmp.eq.s32.totalorder %v937, 1
      %vm970 = vcmp.eq.s32.totalorder %v938, 1
      %vm971 = vcmp.eq.s32.totalorder %v939, 1
      %vm972 = vcmp.eq.s32.totalorder %v940, 1
      %vm973 = vcmp.eq.s32.totalorder %v941, 1
      %vm974 = vcmp.eq.s32.totalorder %v942, 1
      %vm975 = vcmp.eq.s32.totalorder %v943, 1
      %vm976 = vcmp.eq.s32.totalorder %v944, 1
      %vm977 = vcmp.eq.s32.totalorder %v945, 1
      %v978 = vsel %vm946, %v882, 0.0
      %v979 = vsel %vm947, %v883, 0.0
      %v980 = vsel %vm948, %v884, 0.0
      %v981 = vsel %vm949, %v885, 0.0
      %v982 = vsel %vm950, %v886, 0.0
      %v983 = vsel %vm951, %v887, 0.0
      %v984 = vsel %vm952, %v888, 0.0
      %v985 = vsel %vm953, %v889, 0.0
      %v986 = vsel %vm954, %v890, 0.0
      %v987 = vsel %vm955, %v891, 0.0
      %v988 = vsel %vm956, %v892, 0.0
      %v989 = vsel %vm957, %v893, 0.0
      %v990 = vsel %vm958, %v894, 0.0
      %v991 = vsel %vm959, %v895, 0.0
      %v992 = vsel %vm960, %v896, 0.0
      %v993 = vsel %vm961, %v897, 0.0
      %v994 = vsel %vm962, %v898, 0.0
      %v995 = vsel %vm963, %v899, 0.0
      %v996 = vsel %vm964, %v900, 0.0
      %v997 = vsel %vm965, %v901, 0.0
      %v998 = vsel %vm966, %v902, 0.0
      %v999 = vsel %vm967, %v903, 0.0
      %v1000 = vsel %vm968, %v904, 0.0
      %v1001 = vsel %vm969, %v905, 0.0
      %v1002 = vsel %vm970, %v906, 0.0
      %v1003 = vsel %vm971, %v907, 0.0
      %v1004 = vsel %vm972, %v908, 0.0
      %v1005 = vsel %vm973, %v909, 0.0
      %v1006 = vsel %vm974, %v910, 0.0
      %v1007 = vsel %vm975, %v911, 0.0
      %v1008 = vsel %vm976, %v912, 0.0
      %v1009 = vsel %vm977, %v913, 0.0
      %v1010 = vld [vmem:[%s2] sm:$0x3]
      %v1012 = vsel %vm737, %v978, 0
      %v1015 = vsel %vm737, %v979, 0
      %v1018 = vsel %vm737, %v980, 0
      %v1021 = vsel %vm737, %v981, 0
      %v1024 = vsel %vm737, %v982, 0
      %v1027 = vsel %vm737, %v983, 0
      %v1030 = vsel %vm737, %v984, 0
      %v1033 = vsel %vm737, %v985, 0
      %v1036 = vsel %vm737, %v986, 0
      %v1039 = vsel %vm737, %v987, 0
      %v1042 = vsel %vm737, %v988, 0
      %v1045 = vsel %vm737, %v989, 0
      %v1048 = vsel %vm737, %v990, 0
      %v1051 = vsel %vm737, %v991, 0
      %v1054 = vsel %vm737, %v992, 0
      %v1057 = vsel %vm737, %v993, 0
      %v1060 = vsel %vm737, %v994, 0
      %v1063 = vsel %vm737, %v995, 0
      %v1066 = vsel %vm737, %v996, 0
      %v1069 = vsel %vm737, %v997, 0
      %v1072 = vsel %vm737, %v998, 0
      %v1075 = vsel %vm737, %v999, 0
      %v1078 = vsel %vm737, %v1000, 0
      %v1081 = vsel %vm737, %v1001, 0
      %v1084 = vsel %vm737, %v1002, 0
      %v1087 = vsel %vm737, %v1003, 0
      %v1090 = vsel %vm737, %v1004, 0
      %v1093 = vsel %vm737, %v1005, 0
      %v1096 = vsel %vm737, %v1006, 0
      %v1099 = vsel %vm737, %v1007, 0
      %v1102 = vsel %vm737, %v1008, 0
      %v1105 = vsel %vm737, %v1009, 0
      %vm1107 = vcmask 1041408
      %v1109 = vsel %vm1107, %v1010, 0
      %1111 = vmatprep.subr.mxu0 0.0
      %1112 = vmatpush1.msra.mxu0 %v1109
      %1113 = vmatprep.subr.mxu0 0.0
      %1114 = vmatpush1.msra.mxu0 0.0
      %1115 = vmatprep.subr.mxu0 0.0
      %1116 = vmatpush1.msra.mxu0 0.0
      %1117 = vmatprep.subr.mxu0 0.0
      %1118 = vmatpush1.msra.mxu0 0.0
      %1119 = vmatprep.subr.mxu0 0.0
      %1120 = vmatpush1.msra.mxu0 0.0
      %1121 = vmatprep.subr.mxu0 0.0
      %1122 = vmatpush1.msra.mxu0 0.0
      %1123 = vmatprep.subr.mxu0 0.0
      %1124 = vmatpush1.msra.mxu0 0.0
      %1125 = vmatprep.subr.mxu0 0.0
      %1126 = vmatpush1.msra.mxu0 0.0
      %1127 = vmatprep.subr.mxu0 0.0
      %1128 = vmatpush1.msra.mxu0 0.0
      %1129 = vmatprep.subr.mxu0 0.0
      %1130 = vmatpush1.msra.mxu0 0.0
      %1131 = vmatprep.subr.mxu0 0.0
      %1132 = vmatpush1.msra.mxu0 0.0
      %1133 = vmatprep.subr.mxu0 0.0
      %1134 = vmatpush1.msra.mxu0 0.0
      %1135 = vmatprep.subr.mxu0 0.0
      %1136 = vmatpush1.msra.mxu0 0.0
      %1137 = vmatprep.subr.mxu0 0.0
      %1138 = vmatpush1.msra.mxu0 0.0
      %1139 = vmatprep.subr.mxu0 0.0
      %1140 = vmatpush1.msra.mxu0 0.0
      %1141 = vmatprep.subr.mxu0 0.0
      %1142 = vmatpush1.msra.mxu0 0.0
      %1143 = vmatprep.subr.mxu0 0.0
      %1144 = vmatpush1.msra.mxu0 0.0
      %1145 = vmatprep.subr.mxu0 0.0
      %1146 = vmatpush1.msra.mxu0 0.0
      %1147 = vmatprep.subr.mxu0 0.0
      %1148 = vmatpush1.msra.mxu0 0.0
      %1149 = vmatprep.subr.mxu0 0.0
      %1150 = vmatpush1.msra.mxu0 0.0
      %1151 = vmatprep.subr.mxu0 0.0
      %1152 = vmatpush1.msra.mxu0 0.0
      %1153 = vmatprep.subr.mxu0 0.0
      %1154 = vmatpush1.msra.mxu0 0.0
      %1155 = vmatprep.subr.mxu0 0.0
      %1156 = vmatpush1.msra.mxu0 0.0
      %1157 = vmatprep.subr.mxu0 0.0
      %1158 = vmatpush1.msra.mxu0 0.0
      %1159 = vmatprep.subr.mxu0 0.0
      %1160 = vmatpush1.msra.mxu0 0.0
      %1161 = vmatprep.subr.mxu0 0.0
      %1162 = vmatpush1.msra.mxu0 0.0
      %1163 = vmatprep.subr.mxu0 0.0
      %1164 = vmatpush1.msra.mxu0 0.0
      %1165 = vmatprep.subr.mxu0 0.0
      %1166 = vmatpush1.msra.mxu0 0.0
      %1167 = vmatprep.subr.mxu0 0.0
      %1168 = vmatpush1.msra.mxu0 0.0
      %1169 = vmatprep.subr.mxu0 0.0
      %1170 = vmatpush1.msra.mxu0 0.0
      %1171 = vmatprep.subr.mxu0 0.0
      %1172 = vmatpush1.msra.mxu0 0.0
      %1173 = vmatprep.subr.mxu0 0.0
      %1174 = vmatpush1.msra.mxu0 0.0
      %1175 = vmatprep.mubr.f32.mxu0 0.0
      %1176 = vmatmul.mubr.f32.gmra.mrb[0].mxu0 %v1012
      %v1177 = vpop.f32.mrb[0].mxu0
      %v1178 = vadd.f32 0.0, %v1177
      %v1179 = vpop.f32.mrb[0].mxu0
      %1180 = vmatprep.mubr.f32.mxu0 0.0
      %1181 = vmatmul.mubr.f32.gmra.mrb[0].mxu0 %v1015
      %v1182 = vpop.f32.mrb[0].mxu0
      %v1183 = vadd.f32 0.0, %v1182
      %v1184 = vpop.f32.mrb[0].mxu0
      %1185 = vmatprep.mubr.f32.mxu0 0.0
      %1186 = vmatmul.mubr.f32.gmra.mrb[0].mxu0 %v1018
      %v1187 = vpop.f32.mrb[0].mxu0
      %v1188 = vadd.f32 0.0, %v1187
      %v1189 = vpop.f32.mrb[0].mxu0
      %1190 = vmatprep.mubr.f32.mxu0 0.0
      %1191 = vmatmul.mubr.f32.gmra.mrb[0].mxu0 %v1021
      %v1192 = vpop.f32.mrb[0].mxu0
      %v1193 = vadd.f32 0.0, %v1192
      %v1194 = vpop.f32.mrb[0].mxu0
      %1195 = vmatprep.mubr.f32.mxu0 0.0
      %1196 = vmatmul.mubr.f32.gmra.mrb[0].mxu0 %v1024
      %v1197 = vpop.f32.mrb[0].mxu0
      %v1198 = vadd.f32 0.0, %v1197
      %v1199 = vpop.f32.mrb[0].mxu0
      %1200 = vmatprep.mubr.f32.mxu0 0.0
      %1201 = vmatmul.mubr.f32.gmra.mrb[0].mxu0 %v1027
      %v1202 = vpop.f32.mrb[0].mxu0
      %v1203 = vadd.f32 0.0, %v1202
      %v1204 = vpop.f32.mrb[0].mxu0
      %1205 = vmatprep.mubr.f32.mxu0 0.0
      %1206 = vmatmul.mubr.f32.gmra.mrb[0].mxu0 %v1030
      %v1207 = vpop.f32.mrb[0].mxu0
      %v1208 = vadd.f32 0.0, %v1207
      %v1209 = vpop.f32.mrb[0].mxu0
      %1210 = vmatprep.mubr.f32.mxu0 0.0
      %1211 = vmatmul.mubr.f32.gmra.mrb[0].mxu0 %v1033
      %v1212 = vpop.f32.mrb[0].mxu0
      %v1213 = vadd.f32 0.0, %v1212
      %v1214 = vpop.f32.mrb[0].mxu0
      %1215 = vmatprep.mubr.f32.mxu0 0.0
      %1216 = vmatmul.mubr.f32.gmra.mrb[0].mxu0 %v1036
      %v1217 = vpop.f32.mrb[0].mxu0
      %v1218 = vadd.f32 0.0, %v1217
      %v1219 = vpop.f32.mrb[0].mxu0
      %1220 = vmatprep.mubr.f32.mxu0 0.0
      %1221 = vmatmul.mubr.f32.gmra.mrb[0].mxu0 %v1039
      %v1222 = vpop.f32.mrb[0].mxu0
      %v1223 = vadd.f32 0.0, %v1222
      %v1224 = vpop.f32.mrb[0].mxu0
      %1225 = vmatprep.mubr.f32.mxu0 0.0
      %1226 = vmatmul.mubr.f32.gmra.mrb[0].mxu0 %v1042
      %v1227 = vpop.f32.mrb[0].mxu0
      %v1228 = vadd.f32 0.0, %v1227
      %v1229 = vpop.f32.mrb[0].mxu0
      %1230 = vmatprep.mubr.f32.mxu0 0.0
      %1231 = vmatmul.mubr.f32.gmra.mrb[0].mxu0 %v1045
      %v1232 = vpop.f32.mrb[0].mxu0
      %v1233 = vadd.f32 0.0, %v1232
      %v1234 = vpop.f32.mrb[0].mxu0
      %1235 = vmatprep.mubr.f32.mxu0 0.0
      %1236 = vmatmul.mubr.f32.gmra.mrb[0].mxu0 %v1048
      %v1237 = vpop.f32.mrb[0].mxu0
      %v1238 = vadd.f32 0.0, %v1237
      %v1239 = vpop.f32.mrb[0].mxu0
      %1240 = vmatprep.mubr.f32.mxu0 0.0
      %1241 = vmatmul.mubr.f32.gmra.mrb[0].mxu0 %v1051
      %v1242 = vpop.f32.mrb[0].mxu0
      %v1243 = vadd.f32 0.0, %v1242
      %v1244 = vpop.f32.mrb[0].mxu0
      %1245 = vmatprep.mubr.f32.mxu0 0.0
      %1246 = vmatmul.mubr.f32.gmra.mrb[0].mxu0 %v1054
      %v1247 = vpop.f32.mrb[0].mxu0
      %v1248 = vadd.f32 0.0, %v1247
      %v1249 = vpop.f32.mrb[0].mxu0
      %1250 = vmatprep.mubr.f32.mxu0 0.0
      %1251 = vmatmul.mubr.f32.gmra.mrb[0].mxu0 %v1057
      %v1252 = vpop.f32.mrb[0].mxu0
      %v1253 = vadd.f32 0.0, %v1252
      %v1254 = vpop.f32.mrb[0].mxu0
      %1255 = vmatprep.mubr.f32.mxu0 0.0
      %1256 = vmatmul.mubr.f32.gmra.mrb[0].mxu0 %v1060
      %v1257 = vpop.f32.mrb[0].mxu0
      %v1258 = vadd.f32 0.0, %v1257
      %v1259 = vpop.f32.mrb[0].mxu0
      %1260 = vmatprep.mubr.f32.mxu0 0.0
      %1261 = vmatmul.mubr.f32.gmra.mrb[0].mxu0 %v1063
      %v1262 = vpop.f32.mrb[0].mxu0
      %v1263 = vadd.f32 0.0, %v1262
      %v1264 = vpop.f32.mrb[0].mxu0
      %1265 = vmatprep.mubr.f32.mxu0 0.0
      %1266 = vmatmul.mubr.f32.gmra.mrb[0].mxu0 %v1066
      %v1267 = vpop.f32.mrb[0].mxu0
      %v1268 = vadd.f32 0.0, %v1267
      %v1269 = vpop.f32.mrb[0].mxu0
      %1270 = vmatprep.mubr.f32.mxu0 0.0
      %1271 = vmatmul.mubr.f32.gmra.mrb[0].mxu0 %v1069
      %v1272 = vpop.f32.mrb[0].mxu0
      %v1273 = vadd.f32 0.0, %v1272
      %v1274 = vpop.f32.mrb[0].mxu0
      %1275 = vmatprep.mubr.f32.mxu0 0.0
      %1276 = vmatmul.mubr.f32.gmra.mrb[0].mxu0 %v1072
      %v1277 = vpop.f32.mrb[0].mxu0
      %v1278 = vadd.f32 0.0, %v1277
      %v1279 = vpop.f32.mrb[0].mxu0
      %1280 = vmatprep.mubr.f32.mxu0 0.0
      %1281 = vmatmul.mubr.f32.gmra.mrb[0].mxu0 %v1075
      %v1282 = vpop.f32.mrb[0].mxu0
      %v1283 = vadd.f32 0.0, %v1282
      %v1284 = vpop.f32.mrb[0].mxu0
      %1285 = vmatprep.mubr.f32.mxu0 0.0
      %1286 = vmatmul.mubr.f32.gmra.mrb[0].mxu0 %v1078
      %v1287 = vpop.f32.mrb[0].mxu0
      %v1288 = vadd.f32 0.0, %v1287
      %v1289 = vpop.f32.mrb[0].mxu0
      %1290 = vmatprep.mubr.f32.mxu0 0.0
      %1291 = vmatmul.mubr.f32.gmra.mrb[0].mxu0 %v1081
      %v1292 = vpop.f32.mrb[0].mxu0
      %v1293 = vadd.f32 0.0, %v1292
      %v1294 = vpop.f32.mrb[0].mxu0
      %1295 = vmatprep.mubr.f32.mxu0 0.0
      %1296 = vmatmul.mubr.f32.gmra.mrb[0].mxu0 %v1084
      %v1297 = vpop.f32.mrb[0].mxu0
      %v1298 = vadd.f32 0.0, %v1297
      %v1299 = vpop.f32.mrb[0].mxu0
      %1300 = vmatprep.mubr.f32.mxu0 0.0
      %1301 = vmatmul.mubr.f32.gmra.mrb[0].mxu0 %v1087
      %v1302 = vpop.f32.mrb[0].mxu0
      %v1303 = vadd.f32 0.0, %v1302
      %v1304 = vpop.f32.mrb[0].mxu0
      %1305 = vmatprep.mubr.f32.mxu0 0.0
      %1306 = vmatmul.mubr.f32.gmra.mrb[0].mxu0 %v1090
      %v1307 = vpop.f32.mrb[0].mxu0
      %v1308 = vadd.f32 0.0, %v1307
      %v1309 = vpop.f32.mrb[0].mxu0
      %1310 = vmatprep.mubr.f32.mxu0 0.0
      %1311 = vmatmul.mubr.f32.gmra.mrb[0].mxu0 %v1093
      %v1312 = vpop.f32.mrb[0].mxu0
      %v1313 = vadd.f32 0.0, %v1312
      %v1314 = vpop.f32.mrb[0].mxu0
      %1315 = vmatprep.mubr.f32.mxu0 0.0
      %1316 = vmatmul.mubr.f32.gmra.mrb[0].mxu0 %v1096
      %v1317 = vpop.f32.mrb[0].mxu0
      %v1318 = vadd.f32 0.0, %v1317
      %v1319 = vpop.f32.mrb[0].mxu0
      %1320 = vmatprep.mubr.f32.mxu0 0.0
      %1321 = vmatmul.mubr.f32.gmra.mrb[0].mxu0 %v1099
      %v1322 = vpop.f32.mrb[0].mxu0
      %v1323 = vadd.f32 0.0, %v1322
      %v1324 = vpop.f32.mrb[0].mxu0
      %1325 = vmatprep.mubr.f32.mxu0 0.0
      %1326 = vmatmul.mubr.f32.gmra.mrb[0].mxu0 %v1102
      %v1327 = vpop.f32.mrb[0].mxu0
      %v1328 = vadd.f32 0.0, %v1327
      %v1329 = vpop.f32.mrb[0].mxu0
      %1330 = vmatprep.mubr.f32.mxu0 0.0
      %1331 = vmatmul.mubr.f32.gmra.mrb[0].mxu0 %v1105
      %v1332 = vpop.f32.mrb[0].mxu0
      %v1333 = vadd.f32 0.0, %v1332
      %v1334 = vpop.f32.mrb[0].mxu0
      %1335 = vdwg.mxu0
      %v1336 = vadd.f32 %v880, %v1178
      %v1337 = vadd.f32 %v880, %v1183
      %v1338 = vadd.f32 %v880, %v1188
      %v1339 = vadd.f32 %v880, %v1193
      %v1340 = vadd.f32 %v880, %v1198
      %v1341 = vadd.f32 %v880, %v1203
      %v1342 = vadd.f32 %v880, %v1208
      %v1343 = vadd.f32 %v880, %v1213
      %v1344 = vadd.f32 %v880, %v1218
      %v1345 = vadd.f32 %v880, %v1223
      %v1346 = vadd.f32 %v880, %v1228
      %v1347 = vadd.f32 %v880, %v1233
      %v1348 = vadd.f32 %v880, %v1238
      %v1349 = vadd.f32 %v880, %v1243
      %v1350 = vadd.f32 %v880, %v1248
      %v1351 = vadd.f32 %v880, %v1253
      %v1352 = vadd.f32 %v880, %v1258
      %v1353 = vadd.f32 %v880, %v1263
      %v1354 = vadd.f32 %v880, %v1268
      %v1355 = vadd.f32 %v880, %v1273
      %v1356 = vadd.f32 %v880, %v1278
      %v1357 = vadd.f32 %v880, %v1283
      %v1358 = vadd.f32 %v880, %v1288
      %v1359 = vadd.f32 %v880, %v1293
      %v1360 = vadd.f32 %v880, %v1298
      %v1361 = vadd.f32 %v880, %v1303
      %v1362 = vadd.f32 %v880, %v1308
      %v1363 = vadd.f32 %v880, %v1313
      %v1364 = vadd.f32 %v880, %v1318
      %v1365 = vadd.f32 %v880, %v1323
      %v1366 = vadd.f32 %v880, %v1328
      %v1367 = vadd.f32 %v880, %v1333
      %v1368 = vld [vmem:[#allocation2 + $0x1] sm:$0xff]
      %v1369 = vld [vmem:[#allocation2 + $0x9] sm:$0xff]
      %v1370 = vld [vmem:[#allocation2 + $0x11] sm:$0xff]
      %v1371 = vld [vmem:[#allocation2 + $0x19] sm:$0xff]
      %v1372 = vld [vmem:[#allocation2 + $0x21] sm:$0xff]
      %v1373 = vld [vmem:[#allocation2 + $0x29] sm:$0xff]
      %v1374 = vld [vmem:[#allocation2 + $0x31] sm:$0xff]
      %v1375 = vld [vmem:[#allocation2 + $0x39] sm:$0xff]
      %v1376 = vld [vmem:[#allocation2 + $0x41] sm:$0xff]
      %v1377 = vld [vmem:[#allocation2 + $0x49] sm:$0xff]
      %v1378 = vld [vmem:[#allocation2 + $0x51] sm:$0xff]
      %v1379 = vld [vmem:[#allocation2 + $0x59] sm:$0xff]
      %v1380 = vld [vmem:[#allocation2 + $0x61] sm:$0xff]
      %v1381 = vld [vmem:[#allocation2 + $0x69] sm:$0xff]
      %v1382 = vld [vmem:[#allocation2 + $0x71] sm:$0xff]
      %v1383 = vld [vmem:[#allocation2 + $0x79] sm:$0xff]
      %v1384 = vld [vmem:[#allocation2 + $0x81] sm:$0xff]
      %v1385 = vld [vmem:[#allocation2 + $0x89] sm:$0xff]
      %v1386 = vld [vmem:[#allocation2 + $0x91] sm:$0xff]
      %v1387 = vld [vmem:[#allocation2 + $0x99] sm:$0xff]
      %v1388 = vld [vmem:[#allocation2 + $0xa1] sm:$0xff]
      %v1389 = vld [vmem:[#allocation2 + $0xa9] sm:$0xff]
      %v1390 = vld [vmem:[#allocation2 + $0xb1] sm:$0xff]
      %v1391 = vld [vmem:[#allocation2 + $0xb9] sm:$0xff]
      %v1392 = vld [vmem:[#allocation2 + $0xc1] sm:$0xff]
      %v1393 = vld [vmem:[#allocation2 + $0xc9] sm:$0xff]
      %v1394 = vld [vmem:[#allocation2 + $0xd1] sm:$0xff]
      %v1395 = vld [vmem:[#allocation2 + $0xd9] sm:$0xff]
      %v1396 = vld [vmem:[#allocation2 + $0xe1] sm:$0xff]
      %v1397 = vld [vmem:[#allocation2 + $0xe9] sm:$0xff]
      %v1398 = vld [vmem:[#allocation2 + $0xf1] sm:$0xff]
      %v1399 = vld [vmem:[#allocation2 + $0xf9] sm:$0xff]
      %s1400 = scalar_lea.vmem %s2, 2
      %v1401 = vld [vmem:[%s1400] sm:$0x3]
      %v1403 = vsel %vm737, %v1368, 0
      %v1406 = vsel %vm737, %v1369, 0
      %v1409 = vsel %vm737, %v1370, 0
      %v1412 = vsel %vm737, %v1371, 0
      %v1415 = vsel %vm737, %v1372, 0
      %v1418 = vsel %vm737, %v1373, 0
      %v1421 = vsel %vm737, %v1374, 0
      %v1424 = vsel %vm737, %v1375, 0
      %v1427 = vsel %vm737, %v1376, 0
      %v1430 = vsel %vm737, %v1377, 0
      %v1433 = vsel %vm737, %v1378, 0
      %v1436 = vsel %vm737, %v1379, 0
      %v1439 = vsel %vm737, %v1380, 0
      %v1442 = vsel %vm737, %v1381, 0
      %v1445 = vsel %vm737, %v1382, 0
      %v1448 = vsel %vm737, %v1383, 0
      %v1451 = vsel %vm737, %v1384, 0
      %v1454 = vsel %vm737, %v1385, 0
      %v1457 = vsel %vm737, %v1386, 0
      %v1460 = vsel %vm737, %v1387, 0
      %v1463 = vsel %vm737, %v1388, 0
      %v1466 = vsel %vm737, %v1389, 0
      %v1469 = vsel %vm737, %v1390, 0
      %v1472 = vsel %vm737, %v1391, 0
      %v1475 = vsel %vm737, %v1392, 0
      %v1478 = vsel %vm737, %v1393, 0
      %v1481 = vsel %vm737, %v1394, 0
      %v1484 = vsel %vm737, %v1395, 0
      %v1487 = vsel %vm737, %v1396, 0
      %v1490 = vsel %vm737, %v1397, 0
      %v1493 = vsel %vm737, %v1398, 0
      %v1496 = vsel %vm737, %v1399, 0
      %v1499 = vsel %vm1107, %v1401, 0
      %1501 = vmatprep.subr.mxu0 0.0
      %1502 = vmatpush1.msra.mxu0 %v1499
      %1503 = vmatprep.subr.mxu0 0.0
      %1504 = vmatpush1.msra.mxu0 0.0
      %1505 = vmatprep.subr.mxu0 0.0
      %1506 = vmatpush1.msra.mxu0 0.0
      %1507 = vmatprep.subr.mxu0 0.0
      %1508 = vmatpush1.msra.mxu0 0.0
      %1509 = vmatprep.subr.mxu0 0.0
      %1510 = vmatpush1.msra.mxu0 0.0
      %1511 = vmatprep.subr.mxu0 0.0
      %1512 = vmatpush1.msra.mxu0 0.0
      %1513 = vmatprep.subr.mxu0 0.0
      %1514 = vmatpush1.msra.mxu0 0.0
      %1515 = vmatprep.subr.mxu0 0.0
      %1516 = vmatpush1.msra.mxu0 0.0
      %1517 = vmatprep.subr.mxu0 0.0
      %1518 = vmatpush1.msra.mxu0 0.0
      %1519 = vmatprep.subr.mxu0 0.0
      %1520 = vmatpush1.msra.mxu0 0.0
      %1521 = vmatprep.subr.mxu0 0.0
      %1522 = vmatpush1.msra.mxu0 0.0
      %1523 = vmatprep.subr.mxu0 0.0
      %1524 = vmatpush1.msra.mxu0 0.0
      %1525 = vmatprep.subr.mxu0 0.0
      %1526 = vmatpush1.msra.mxu0 0.0
      %1527 = vmatprep.subr.mxu0 0.0
      %1528 = vmatpush1.msra.mxu0 0.0
      %1529 = vmatprep.subr.mxu0 0.0
      %1530 = vmatpush1.msra.mxu0 0.0
      %1531 = vmatprep.subr.mxu0 0.0
      %1532 = vmatpush1.msra.mxu0 0.0
      %1533 = vmatprep.subr.mxu0 0.0
      %1534 = vmatpush1.msra.mxu0 0.0
      %1535 = vmatprep.subr.mxu0 0.0
      %1536 = vmatpush1.msra.mxu0 0.0
      %1537 = vmatprep.subr.mxu0 0.0
      %1538 = vmatpush1.msra.mxu0 0.0
      %1539 = vmatprep.subr.mxu0 0.0
      %1540 = vmatpush1.msra.mxu0 0.0
      %1541 = vmatprep.subr.mxu0 0.0
      %1542 = vmatpush1.msra.mxu0 0.0
      %1543 = vmatprep.subr.mxu0 0.0
      %1544 = vmatpush1.msra.mxu0 0.0
      %1545 = vmatprep.subr.mxu0 0.0
      %1546 = vmatpush1.msra.mxu0 0.0
      %1547 = vmatprep.subr.mxu0 0.0
      %1548 = vmatpush1.msra.mxu0 0.0
      %1549 = vmatprep.subr.mxu0 0.0
      %1550 = vmatpush1.msra.mxu0 0.0
      %1551 = vmatprep.subr.mxu0 0.0
      %1552 = vmatpush1.msra.mxu0 0.0
      %1553 = vmatprep.subr.mxu0 0.0
      %1554 = vmatpush1.msra.mxu0 0.0
      %1555 = vmatprep.subr.mxu0 0.0
      %1556 = vmatpush1.msra.mxu0 0.0
      %1557 = vmatprep.subr.mxu0 0.0
      %1558 = vmatpush1.msra.mxu0 0.0
      %1559 = vmatprep.subr.mxu0 0.0
      %1560 = vmatpush1.msra.mxu0 0.0
      %1561 = vmatprep.subr.mxu0 0.0
      %1562 = vmatpush1.msra.mxu0 0.0
      %1563 = vmatprep.subr.mxu0 0.0
      %1564 = vmatpush1.msra.mxu0 0.0
      %1565 = vmatprep.mubr.f32.mxu0 0.0
      %1566 = vmatmul.mubr.f32.gmra.mrb[0].mxu0 %v1403
      %v1567 = vpop.f32.mrb[0].mxu0
      %v1568 = vadd.f32 0.0, %v1567
      %v1569 = vpop.f32.mrb[0].mxu0
      %1570 = vmatprep.mubr.f32.mxu0 0.0
      %1571 = vmatmul.mubr.f32.gmra.mrb[0].mxu0 %v1406
      %v1572 = vpop.f32.mrb[0].mxu0
      %v1573 = vadd.f32 0.0, %v1572
      %v1574 = vpop.f32.mrb[0].mxu0
      %1575 = vmatprep.mubr.f32.mxu0 0.0
      %1576 = vmatmul.mubr.f32.gmra.mrb[0].mxu0 %v1409
      %v1577 = vpop.f32.mrb[0].mxu0
      %v1578 = vadd.f32 0.0, %v1577
      %v1579 = vpop.f32.mrb[0].mxu0
      %1580 = vmatprep.mubr.f32.mxu0 0.0
      %1581 = vmatmul.mubr.f32.gmra.mrb[0].mxu0 %v1412
      %v1582 = vpop.f32.mrb[0].mxu0
      %v1583 = vadd.f32 0.0, %v1582
      %v1584 = vpop.f32.mrb[0].mxu0
      %1585 = vmatprep.mubr.f32.mxu0 0.0
      %1586 = vmatmul.mubr.f32.gmra.mrb[0].mxu0 %v1415
      %v1587 = vpop.f32.mrb[0].mxu0
      %v1588 = vadd.f32 0.0, %v1587
      %v1589 = vpop.f32.mrb[0].mxu0
      %1590 = vmatprep.mubr.f32.mxu0 0.0
      %1591 = vmatmul.mubr.f32.gmra.mrb[0].mxu0 %v1418
      %v1592 = vpop.f32.mrb[0].mxu0
      %v1593 = vadd.f32 0.0, %v1592
      %v1594 = vpop.f32.mrb[0].mxu0
      %1595 = vmatprep.mubr.f32.mxu0 0.0
      %1596 = vmatmul.mubr.f32.gmra.mrb[0].mxu0 %v1421
      %v1597 = vpop.f32.mrb[0].mxu0
      %v1598 = vadd.f32 0.0, %v1597
      %v1599 = vpop.f32.mrb[0].mxu0
      %1600 = vmatprep.mubr.f32.mxu0 0.0
      %1601 = vmatmul.mubr.f32.gmra.mrb[0].mxu0 %v1424
      %v1602 = vpop.f32.mrb[0].mxu0
      %v1603 = vadd.f32 0.0, %v1602
      %v1604 = vpop.f32.mrb[0].mxu0
      %1605 = vmatprep.mubr.f32.mxu0 0.0
      %1606 = vmatmul.mubr.f32.gmra.mrb[0].mxu0 %v1427
      %v1607 = vpop.f32.mrb[0].mxu0
      %v1608 = vadd.f32 0.0, %v1607
      %v1609 = vpop.f32.mrb[0].mxu0
      %1610 = vmatprep.mubr.f32.mxu0 0.0
      %1611 = vmatmul.mubr.f32.gmra.mrb[0].mxu0 %v1430
      %v1612 = vpop.f32.mrb[0].mxu0
      %v1613 = vadd.f32 0.0, %v1612
      %v1614 = vpop.f32.mrb[0].mxu0
      %1615 = vmatprep.mubr.f32.mxu0 0.0
      %1616 = vmatmul.mubr.f32.gmra.mrb[0].mxu0 %v1433
      %v1617 = vpop.f32.mrb[0].mxu0
      %v1618 = vadd.f32 0.0, %v1617
      %v1619 = vpop.f32.mrb[0].mxu0
      %1620 = vmatprep.mubr.f32.mxu0 0.0
      %1621 = vmatmul.mubr.f32.gmra.mrb[0].mxu0 %v1436
      %v1622 = vpop.f32.mrb[0].mxu0
      %v1623 = vadd.f32 0.0, %v1622
      %v1624 = vpop.f32.mrb[0].mxu0
      %1625 = vmatprep.mubr.f32.mxu0 0.0
      %1626 = vmatmul.mubr.f32.gmra.mrb[0].mxu0 %v1439
      %v1627 = vpop.f32.mrb[0].mxu0
      %v1628 = vadd.f32 0.0, %v1627
      %v1629 = vpop.f32.mrb[0].mxu0
      %1630 = vmatprep.mubr.f32.mxu0 0.0
      %1631 = vmatmul.mubr.f32.gmra.mrb[0].mxu0 %v1442
      %v1632 = vpop.f32.mrb[0].mxu0
      %v1633 = vadd.f32 0.0, %v1632
      %v1634 = vpop.f32.mrb[0].mxu0
      %1635 = vmatprep.mubr.f32.mxu0 0.0
      %1636 = vmatmul.mubr.f32.gmra.mrb[0].mxu0 %v1445
      %v1637 = vpop.f32.mrb[0].mxu0
      %v1638 = vadd.f32 0.0, %v1637
      %v1639 = vpop.f32.mrb[0].mxu0
      %1640 = vmatprep.mubr.f32.mxu0 0.0
      %1641 = vmatmul.mubr.f32.gmra.mrb[0].mxu0 %v1448
      %v1642 = vpop.f32.mrb[0].mxu0
      %v1643 = vadd.f32 0.0, %v1642
      %v1644 = vpop.f32.mrb[0].mxu0
      %1645 = vmatprep.mubr.f32.mxu0 0.0
      %1646 = vmatmul.mubr.f32.gmra.mrb[0].mxu0 %v1451
      %v1647 = vpop.f32.mrb[0].mxu0
      %v1648 = vadd.f32 0.0, %v1647
      %v1649 = vpop.f32.mrb[0].mxu0
      %1650 = vmatprep.mubr.f32.mxu0 0.0
      %1651 = vmatmul.mubr.f32.gmra.mrb[0].mxu0 %v1454
      %v1652 = vpop.f32.mrb[0].mxu0
      %v1653 = vadd.f32 0.0, %v1652
      %v1654 = vpop.f32.mrb[0].mxu0
      %1655 = vmatprep.mubr.f32.mxu0 0.0
      %1656 = vmatmul.mubr.f32.gmra.mrb[0].mxu0 %v1457
      %v1657 = vpop.f32.mrb[0].mxu0
      %v1658 = vadd.f32 0.0, %v1657
      %v1659 = vpop.f32.mrb[0].mxu0
      %1660 = vmatprep.mubr.f32.mxu0 0.0
      %1661 = vmatmul.mubr.f32.gmra.mrb[0].mxu0 %v1460
      %v1662 = vpop.f32.mrb[0].mxu0
      %v1663 = vadd.f32 0.0, %v1662
      %v1664 = vpop.f32.mrb[0].mxu0
      %1665 = vmatprep.mubr.f32.mxu0 0.0
      %1666 = vmatmul.mubr.f32.gmra.mrb[0].mxu0 %v1463
      %v1667 = vpop.f32.mrb[0].mxu0
      %v1668 = vadd.f32 0.0, %v1667
      %v1669 = vpop.f32.mrb[0].mxu0
      %1670 = vmatprep.mubr.f32.mxu0 0.0
      %1671 = vmatmul.mubr.f32.gmra.mrb[0].mxu0 %v1466
      %v1672 = vpop.f32.mrb[0].mxu0
      %v1673 = vadd.f32 0.0, %v1672
      %v1674 = vpop.f32.mrb[0].mxu0
      %1675 = vmatprep.mubr.f32.mxu0 0.0
      %1676 = vmatmul.mubr.f32.gmra.mrb[0].mxu0 %v1469
      %v1677 = vpop.f32.mrb[0].mxu0
      %v1678 = vadd.f32 0.0, %v1677
      %v1679 = vpop.f32.mrb[0].mxu0
      %1680 = vmatprep.mubr.f32.mxu0 0.0
      %1681 = vmatmul.mubr.f32.gmra.mrb[0].mxu0 %v1472
      %v1682 = vpop.f32.mrb[0].mxu0
      %v1683 = vadd.f32 0.0, %v1682
      %v1684 = vpop.f32.mrb[0].mxu0
      %1685 = vmatprep.mubr.f32.mxu0 0.0
      %1686 = vmatmul.mubr.f32.gmra.mrb[0].mxu0 %v1475
      %v1687 = vpop.f32.mrb[0].mxu0
      %v1688 = vadd.f32 0.0, %v1687
      %v1689 = vpop.f32.mrb[0].mxu0
      %1690 = vmatprep.mubr.f32.mxu0 0.0
      %1691 = vmatmul.mubr.f32.gmra.mrb[0].mxu0 %v1478
      %v1692 = vpop.f32.mrb[0].mxu0
      %v1693 = vadd.f32 0.0, %v1692
      %v1694 = vpop.f32.mrb[0].mxu0
      %1695 = vmatprep.mubr.f32.mxu0 0.0
      %1696 = vmatmul.mubr.f32.gmra.mrb[0].mxu0 %v1481
      %v1697 = vpop.f32.mrb[0].mxu0
      %v1698 = vadd.f32 0.0, %v1697
      %v1699 = vpop.f32.mrb[0].mxu0
      %1700 = vmatprep.mubr.f32.mxu0 0.0
      %1701 = vmatmul.mubr.f32.gmra.mrb[0].mxu0 %v1484
      %v1702 = vpop.f32.mrb[0].mxu0
      %v1703 = vadd.f32 0.0, %v1702
      %v1704 = vpop.f32.mrb[0].mxu0
      %1705 = vmatprep.mubr.f32.mxu0 0.0
      %1706 = vmatmul.mubr.f32.gmra.mrb[0].mxu0 %v1487
      %v1707 = vpop.f32.mrb[0].mxu0
      %v1708 = vadd.f32 0.0, %v1707
      %v1709 = vpop.f32.mrb[0].mxu0
      %1710 = vmatprep.mubr.f32.mxu0 0.0
      %1711 = vmatmul.mubr.f32.gmra.mrb[0].mxu0 %v1490
      %v1712 = vpop.f32.mrb[0].mxu0
      %v1713 = vadd.f32 0.0, %v1712
      %v1714 = vpop.f32.mrb[0].mxu0
      %1715 = vmatprep.mubr.f32.mxu0 0.0
      %1716 = vmatmul.mubr.f32.gmra.mrb[0].mxu0 %v1493
      %v1717 = vpop.f32.mrb[0].mxu0
      %v1718 = vadd.f32 0.0, %v1717
      %v1719 = vpop.f32.mrb[0].mxu0
      %1720 = vmatprep.mubr.f32.mxu0 0.0
      %1721 = vmatmul.mubr.f32.gmra.mrb[0].mxu0 %v1496
      %v1722 = vpop.f32.mrb[0].mxu0
      %v1723 = vadd.f32 0.0, %v1722
      %v1724 = vpop.f32.mrb[0].mxu0
      %1725 = vdwg.mxu0
      %v1726 = vadd.f32 %v1336, %v1568
      %v1727 = vadd.f32 %v1337, %v1573
      %v1728 = vadd.f32 %v1338, %v1578
      %v1729 = vadd.f32 %v1339, %v1583
      %v1730 = vadd.f32 %v1340, %v1588
      %v1731 = vadd.f32 %v1341, %v1593
      %v1732 = vadd.f32 %v1342, %v1598
      %v1733 = vadd.f32 %v1343, %v1603
      %v1734 = vadd.f32 %v1344, %v1608
      %v1735 = vadd.f32 %v1345, %v1613
      %v1736 = vadd.f32 %v1346, %v1618
      %v1737 = vadd.f32 %v1347, %v1623
      %v1738 = vadd.f32 %v1348, %v1628
      %v1739 = vadd.f32 %v1349, %v1633
      %v1740 = vadd.f32 %v1350, %v1638
      %v1741 = vadd.f32 %v1351, %v1643
      %v1742 = vadd.f32 %v1352, %v1648
      %v1743 = vadd.f32 %v1353, %v1653
      %v1744 = vadd.f32 %v1354, %v1658
      %v1745 = vadd.f32 %v1355, %v1663
      %v1746 = vadd.f32 %v1356, %v1668
      %v1747 = vadd.f32 %v1357, %v1673
      %v1748 = vadd.f32 %v1358, %v1678
      %v1749 = vadd.f32 %v1359, %v1683
      %v1750 = vadd.f32 %v1360, %v1688
      %v1751 = vadd.f32 %v1361, %v1693
      %v1752 = vadd.f32 %v1362, %v1698
      %v1753 = vadd.f32 %v1363, %v1703
      %v1754 = vadd.f32 %v1364, %v1708
      %v1755 = vadd.f32 %v1365, %v1713
      %v1756 = vadd.f32 %v1366, %v1718
      %v1757 = vadd.f32 %v1367, %v1723
      %v1758 = vld [vmem:[#allocation2 + $0x2] sm:$0xff]
      %v1759 = vld [vmem:[#allocation2 + $0xa] sm:$0xff]
      %v1760 = vld [vmem:[#allocation2 + $0x12] sm:$0xff]
      %v1761 = vld [vmem:[#allocation2 + $0x1a] sm:$0xff]
      %v1762 = vld [vmem:[#allocation2 + $0x22] sm:$0xff]
      %v1763 = vld [vmem:[#allocation2 + $0x2a] sm:$0xff]
      %v1764 = vld [vmem:[#allocation2 + $0x32] sm:$0xff]
      %v1765 = vld [vmem:[#allocation2 + $0x3a] sm:$0xff]
      %v1766 = vld [vmem:[#allocation2 + $0x42] sm:$0xff]
      %v1767 = vld [vmem:[#allocation2 + $0x4a] sm:$0xff]
      %v1768 = vld [vmem:[#allocation2 + $0x52] sm:$0xff]
      %v1769 = vld [vmem:[#allocation2 + $0x5a] sm:$0xff]
      %v1770 = vld [vmem:[#allocation2 + $0x62] sm:$0xff]
      %v1771 = vld [vmem:[#allocation2 + $0x6a] sm:$0xff]
      %v1772 = vld [vmem:[#allocation2 + $0x72] sm:$0xff]
      %v1773 = vld [vmem:[#allocation2 + $0x7a] sm:$0xff]
      %v1774 = vld [vmem:[#allocation2 + $0x82] sm:$0xff]
      %v1775 = vld [vmem:[#allocation2 + $0x8a] sm:$0xff]
      %v1776 = vld [vmem:[#allocation2 + $0x92] sm:$0xff]
      %v1777 = vld [vmem:[#allocation2 + $0x9a] sm:$0xff]
      %v1778 = vld [vmem:[#allocation2 + $0xa2] sm:$0xff]
      %v1779 = vld [vmem:[#allocation2 + $0xaa] sm:$0xff]
      %v1780 = vld [vmem:[#allocation2 + $0xb2] sm:$0xff]
      %v1781 = vld [vmem:[#allocation2 + $0xba] sm:$0xff]
      %v1782 = vld [vmem:[#allocation2 + $0xc2] sm:$0xff]
      %v1783 = vld [vmem:[#allocation2 + $0xca] sm:$0xff]
      %v1784 = vld [vmem:[#allocation2 + $0xd2] sm:$0xff]
      %v1785 = vld [vmem:[#allocation2 + $0xda] sm:$0xff]
      %v1786 = vld [vmem:[#allocation2 + $0xe2] sm:$0xff]
      %v1787 = vld [vmem:[#allocation2 + $0xea] sm:$0xff]
      %v1788 = vld [vmem:[#allocation2 + $0xf2] sm:$0xff]
      %v1789 = vld [vmem:[#allocation2 + $0xfa] sm:$0xff]
      %v1790 = vsel %vm705, 1, 0
      %v1791 = vsel %vm706, 1, 0
      %v1792 = vsel %vm707, 1, 0
      %v1793 = vsel %vm708, 1, 0
      %v1794 = vsel %vm709, 1, 0
      %v1795 = vsel %vm710, 1, 0
      %v1796 = vsel %vm711, 1, 0
      %v1797 = vsel %vm712, 1, 0
      %v1798 = vsel %vm713, 1, 0
      %v1799 = vsel %vm714, 1, 0
      %v1800 = vsel %vm715, 1, 0
      %v1801 = vsel %vm716, 1, 0
      %v1802 = vsel %vm717, 1, 0
      %v1803 = vsel %vm718, 1, 0
      %v1804 = vsel %vm719, 1, 0
      %v1805 = vsel %vm720, 1, 0
      %v1806 = vsel %vm721, 1, 0
      %v1807 = vsel %vm722, 1, 0
      %v1808 = vsel %vm723, 1, 0
      %v1809 = vsel %vm724, 1, 0
      %v1810 = vsel %vm725, 1, 0
      %v1811 = vsel %vm726, 1, 0
      %v1812 = vsel %vm727, 1, 0
      %v1813 = vsel %vm728, 1, 0
      %v1814 = vsel %vm729, 1, 0
      %v1815 = vsel %vm730, 1, 0
      %v1816 = vsel %vm731, 1, 0
      %v1817 = vsel %vm732, 1, 0
      %v1818 = vsel %vm733, 1, 0
      %v1819 = vsel %vm734, 1, 0
      %v1820 = vsel %vm735, 1, 0
      %v1821 = vsel %vm736, 1, 0
      %vm1822 = vcmp.eq.s32.totalorder %v1790, 1
      %vm1823 = vcmp.eq.s32.totalorder %v1791, 1
      %vm1824 = vcmp.eq.s32.totalorder %v1792, 1
      %vm1825 = vcmp.eq.s32.totalorder %v1793, 1
      %vm1826 = vcmp.eq.s32.totalorder %v1794, 1
      %vm1827 = vcmp.eq.s32.totalorder %v1795, 1
      %vm1828 = vcmp.eq.s32.totalorder %v1796, 1
      %vm1829 = vcmp.eq.s32.totalorder %v1797, 1
      %vm1830 = vcmp.eq.s32.totalorder %v1798, 1
      %vm1831 = vcmp.eq.s32.totalorder %v1799, 1
      %vm1832 = vcmp.eq.s32.totalorder %v1800, 1
      %vm1833 = vcmp.eq.s32.totalorder %v1801, 1
      %vm1834 = vcmp.eq.s32.totalorder %v1802, 1
      %vm1835 = vcmp.eq.s32.totalorder %v1803, 1
      %vm1836 = vcmp.eq.s32.totalorder %v1804, 1
      %vm1837 = vcmp.eq.s32.totalorder %v1805, 1
      %vm1838 = vcmp.eq.s32.totalorder %v1806, 1
      %vm1839 = vcmp.eq.s32.totalorder %v1807, 1
      %vm1840 = vcmp.eq.s32.totalorder %v1808, 1
      %vm1841 = vcmp.eq.s32.totalorder %v1809, 1
      %vm1842 = vcmp.eq.s32.totalorder %v1810, 1
      %vm1843 = vcmp.eq.s32.totalorder %v1811, 1
      %vm1844 = vcmp.eq.s32.totalorder %v1812, 1
      %vm1845 = vcmp.eq.s32.totalorder %v1813, 1
      %vm1846 = vcmp.eq.s32.totalorder %v1814, 1
      %vm1847 = vcmp.eq.s32.totalorder %v1815, 1
      %vm1848 = vcmp.eq.s32.totalorder %v1816, 1
      %vm1849 = vcmp.eq.s32.totalorder %v1817, 1
      %vm1850 = vcmp.eq.s32.totalorder %v1818, 1
      %vm1851 = vcmp.eq.s32.totalorder %v1819, 1
      %vm1852 = vcmp.eq.s32.totalorder %v1820, 1
      %vm1853 = vcmp.eq.s32.totalorder %v1821, 1
      %v1854 = vsel %vm1822, %v1758, 0.0
      %v1855 = vsel %vm1823, %v1759, 0.0
      %v1856 = vsel %vm1824, %v1760, 0.0
      %v1857 = vsel %vm1825, %v1761, 0.0
      %v1858 = vsel %vm1826, %v1762, 0.0
      %v1859 = vsel %vm1827, %v1763, 0.0
      %v1860 = vsel %vm1828, %v1764, 0.0
      %v1861 = vsel %vm1829, %v1765, 0.0
      %v1862 = vsel %vm1830, %v1766, 0.0
      %v1863 = vsel %vm1831, %v1767, 0.0
      %v1864 = vsel %vm1832, %v1768, 0.0
      %v1865 = vsel %vm1833, %v1769, 0.0
      %v1866 = vsel %vm1834, %v1770, 0.0
      %v1867 = vsel %vm1835, %v1771, 0.0
      %v1868 = vsel %vm1836, %v1772, 0.0
      %v1869 = vsel %vm1837, %v1773, 0.0
      %v1870 = vsel %vm1838, %v1774, 0.0
      %v1871 = vsel %vm1839, %v1775, 0.0
      %v1872 = vsel %vm1840, %v1776, 0.0
      %v1873 = vsel %vm1841, %v1777, 0.0
      %v1874 = vsel %vm1842, %v1778, 0.0
      %v1875 = vsel %vm1843, %v1779, 0.0
      %v1876 = vsel %vm1844, %v1780, 0.0
      %v1877 = vsel %vm1845, %v1781, 0.0
      %v1878 = vsel %vm1846, %v1782, 0.0
      %v1879 = vsel %vm1847, %v1783, 0.0
      %v1880 = vsel %vm1848, %v1784, 0.0
      %v1881 = vsel %vm1849, %v1785, 0.0
      %v1882 = vsel %vm1850, %v1786, 0.0
      %v1883 = vsel %vm1851, %v1787, 0.0
      %v1884 = vsel %vm1852, %v1788, 0.0
      %v1885 = vsel %vm1853, %v1789, 0.0
      %s1886 = scalar_lea.vmem %s2, 4
      %v1887 = vld [vmem:[%s1886] sm:$0x3]
      %v1889 = vsel %vm737, %v1854, 0
      %v1892 = vsel %vm737, %v1855, 0
      %v1895 = vsel %vm737, %v1856, 0
      %v1898 = vsel %vm737, %v1857, 0
      %v1901 = vsel %vm737, %v1858, 0
      %v1904 = vsel %vm737, %v1859, 0
      %v1907 = vsel %vm737, %v1860, 0
      %v1910 = vsel %vm737, %v1861, 0
      %v1913 = vsel %vm737, %v1862, 0
      %v1916 = vsel %vm737, %v1863, 0
      %v1919 = vsel %vm737, %v1864, 0
      %v1922 = vsel %vm737, %v1865, 0
      %v1925 = vsel %vm737, %v1866, 0
      %v1928 = vsel %vm737, %v1867, 0
      %v1931 = vsel %vm737, %v1868, 0
      %v1934 = vsel %vm737, %v1869, 0
      %v1937 = vsel %vm737, %v1870, 0
      %v1940 = vsel %vm737, %v1871, 0
      %v1943 = vsel %vm737, %v1872, 0
      %v1946 = vsel %vm737, %v1873, 0
      %v1949 = vsel %vm737, %v1874, 0
      %v1952 = vsel %vm737, %v1875, 0
      %v1955 = vsel %vm737, %v1876, 0
      %v1958 = vsel %vm737, %v1877, 0
      %v1961 = vsel %vm737, %v1878, 0
      %v1964 = vsel %vm737, %v1879, 0
      %v1967 = vsel %vm737, %v1880, 0
      %v1970 = vsel %vm737, %v1881, 0
      %v1973 = vsel %vm737, %v1882, 0
      %v1976 = vsel %vm737, %v1883, 0
      %v1979 = vsel %vm737, %v1884, 0
      %v1982 = vsel %vm737, %v1885, 0
      %v1985 = vsel %vm1107, %v1887, 0
      %1987 = vmatprep.subr.mxu0 0.0
      %1988 = vmatpush1.msra.mxu0 %v1985
      %1989 = vmatprep.subr.mxu0 0.0
      %1990 = vmatpush1.msra.mxu0 0.0
      %1991 = vmatprep.subr.mxu0 0.0
      %1992 = vmatpush1.msra.mxu0 0.0
      %1993 = vmatprep.subr.mxu0 0.0
      %1994 = vmatpush1.msra.mxu0 0.0
      %1995 = vmatprep.subr.mxu0 0.0
      %1996 = vmatpush1.msra.mxu0 0.0
      %1997 = vmatprep.subr.mxu0 0.0
      %1998 = vmatpush1.msra.mxu0 0.0
      %1999 = vmatprep.subr.mxu0 0.0
      %2000 = vmatpush1.msra.mxu0 0.0
      %2001 = vmatprep.subr.mxu0 0.0
      %2002 = vmatpush1.msra.mxu0 0.0
      %2003 = vmatprep.subr.mxu0 0.0
      %2004 = vmatpush1.msra.mxu0 0.0
      %2005 = vmatprep.subr.mxu0 0.0
      %2006 = vmatpush1.msra.mxu0 0.0
      %2007 = vmatprep.subr.mxu0 0.0
      %2008 = vmatpush1.msra.mxu0 0.0
      %2009 = vmatprep.subr.mxu0 0.0
      %2010 = vmatpush1.msra.mxu0 0.0
      %2011 = vmatprep.subr.mxu0 0.0
      %2012 = vmatpush1.msra.mxu0 0.0
      %2013 = vmatprep.subr.mxu0 0.0
      %2014 = vmatpush1.msra.mxu0 0.0
      %2015 = vmatprep.subr.mxu0 0.0
      %2016 = vmatpush1.msra.mxu0 0.0
      %2017 = vmatprep.subr.mxu0 0.0
      %2018 = vmatpush1.msra.mxu0 0.0
      %2019 = vmatprep.subr.mxu0 0.0
      %2020 = vmatpush1.msra.mxu0 0.0
      %2021 = vmatprep.subr.mxu0 0.0
      %2022 = vmatpush1.msra.mxu0 0.0
      %2023 = vmatprep.subr.mxu0 0.0
      %2024 = vmatpush1.msra.mxu0 0.0
      %2025 = vmatprep.subr.mxu0 0.0
      %2026 = vmatpush1.msra.mxu0 0.0
      %2027 = vmatprep.subr.mxu0 0.0
      %2028 = vmatpush1.msra.mxu0 0.0
      %2029 = vmatprep.subr.mxu0 0.0
      %2030 = vmatpush1.msra.mxu0 0.0
      %2031 = vmatprep.subr.mxu0 0.0
      %2032 = vmatpush1.msra.mxu0 0.0
      %2033 = vmatprep.subr.mxu0 0.0
      %2034 = vmatpush1.msra.mxu0 0.0
      %2035 = vmatprep.subr.mxu0 0.0
      %2036 = vmatpush1.msra.mxu0 0.0
      %2037 = vmatprep.subr.mxu0 0.0
      %2038 = vmatpush1.msra.mxu0 0.0
      %2039 = vmatprep.subr.mxu0 0.0
      %2040 = vmatpush1.msra.mxu0 0.0
      %2041 = vmatprep.subr.mxu0 0.0
      %2042 = vmatpush1.msra.mxu0 0.0
      %2043 = vmatprep.subr.mxu0 0.0
      %2044 = vmatpush1.msra.mxu0 0.0
      %2045 = vmatprep.subr.mxu0 0.0
      %2046 = vmatpush1.msra.mxu0 0.0
      %2047 = vmatprep.subr.mxu0 0.0
      %2048 = vmatpush1.msra.mxu0 0.0
      %2049 = vmatprep.subr.mxu0 0.0
      %2050 = vmatpush1.msra.mxu0 0.0
      %2051 = vmatprep.mubr.f32.mxu0 0.0
      %2052 = vmatmul.mubr.f32.gmra.mrb[0].mxu0 %v1889
      %v2053 = vpop.f32.mrb[0].mxu0
      %v2054 = vadd.f32 0.0, %v2053
      %v2055 = vpop.f32.mrb[0].mxu0
      %2056 = vmatprep.mubr.f32.mxu0 0.0
      %2057 = vmatmul.mubr.f32.gmra.mrb[0].mxu0 %v1892
      %v2058 = vpop.f32.mrb[0].mxu0
      %v2059 = vadd.f32 0.0, %v2058
      %v2060 = vpop.f32.mrb[0].mxu0
      %2061 = vmatprep.mubr.f32.mxu0 0.0
      %2062 = vmatmul.mubr.f32.gmra.mrb[0].mxu0 %v1895
      %v2063 = vpop.f32.mrb[0].mxu0
      %v2064 = vadd.f32 0.0, %v2063
      %v2065 = vpop.f32.mrb[0].mxu0
      %2066 = vmatprep.mubr.f32.mxu0 0.0
      %2067 = vmatmul.mubr.f32.gmra.mrb[0].mxu0 %v1898
      %v2068 = vpop.f32.mrb[0].mxu0
      %v2069 = vadd.f32 0.0, %v2068
      %v2070 = vpop.f32.mrb[0].mxu0
      %2071 = vmatprep.mubr.f32.mxu0 0.0
      %2072 = vmatmul.mubr.f32.gmra.mrb[0].mxu0 %v1901
      %v2073 = vpop.f32.mrb[0].mxu0
      %v2074 = vadd.f32 0.0, %v2073
      %v2075 = vpop.f32.mrb[0].mxu0
      %2076 = vmatprep.mubr.f32.mxu0 0.0
      %2077 = vmatmul.mubr.f32.gmra.mrb[0].mxu0 %v1904
      %v2078 = vpop.f32.mrb[0].mxu0
      %v2079 = vadd.f32 0.0, %v2078
      %v2080 = vpop.f32.mrb[0].mxu0
      %2081 = vmatprep.mubr.f32.mxu0 0.0
      %2082 = vmatmul.mubr.f32.gmra.mrb[0].mxu0 %v1907
      %v2083 = vpop.f32.mrb[0].mxu0
      %v2084 = vadd.f32 0.0, %v2083
      %v2085 = vpop.f32.mrb[0].mxu0
      %2086 = vmatprep.mubr.f32.mxu0 0.0
      %2087 = vmatmul.mubr.f32.gmra.mrb[0].mxu0 %v1910
      %v2088 = vpop.f32.mrb[0].mxu0
      %v2089 = vadd.f32 0.0, %v2088
      %v2090 = vpop.f32.mrb[0].mxu0
      %2091 = vmatprep.mubr.f32.mxu0 0.0
      %2092 = vmatmul.mubr.f32.gmra.mrb[0].mxu0 %v1913
      %v2093 = vpop.f32.mrb[0].mxu0
      %v2094 = vadd.f32 0.0, %v2093
      %v2095 = vpop.f32.mrb[0].mxu0
      %2096 = vmatprep.mubr.f32.mxu0 0.0
      %2097 = vmatmul.mubr.f32.gmra.mrb[0].mxu0 %v1916
      %v2098 = vpop.f32.mrb[0].mxu0
      %v2099 = vadd.f32 0.0, %v2098
      %v2100 = vpop.f32.mrb[0].mxu0
      %2101 = vmatprep.mubr.f32.mxu0 0.0
      %2102 = vmatmul.mubr.f32.gmra.mrb[0].mxu0 %v1919
      %v2103 = vpop.f32.mrb[0].mxu0
      %v2104 = vadd.f32 0.0, %v2103
      %v2105 = vpop.f32.mrb[0].mxu0
      %2106 = vmatprep.mubr.f32.mxu0 0.0
      %2107 = vmatmul.mubr.f32.gmra.mrb[0].mxu0 %v1922
      %v2108 = vpop.f32.mrb[0].mxu0
      %v2109 = vadd.f32 0.0, %v2108
      %v2110 = vpop.f32.mrb[0].mxu0
      %2111 = vmatprep.mubr.f32.mxu0 0.0
      %2112 = vmatmul.mubr.f32.gmra.mrb[0].mxu0 %v1925
      %v2113 = vpop.f32.mrb[0].mxu0
      %v2114 = vadd.f32 0.0, %v2113
      %v2115 = vpop.f32.mrb[0].mxu0
      %2116 = vmatprep.mubr.f32.mxu0 0.0
      %2117 = vmatmul.mubr.f32.gmra.mrb[0].mxu0 %v1928
      %v2118 = vpop.f32.mrb[0].mxu0
      %v2119 = vadd.f32 0.0, %v2118
      %v2120 = vpop.f32.mrb[0].mxu0
      %2121 = vmatprep.mubr.f32.mxu0 0.0
      %2122 = vmatmul.mubr.f32.gmra.mrb[0].mxu0 %v1931
      %v2123 = vpop.f32.mrb[0].mxu0
      %v2124 = vadd.f32 0.0, %v2123
      %v2125 = vpop.f32.mrb[0].mxu0
      %2126 = vmatprep.mubr.f32.mxu0 0.0
      %2127 = vmatmul.mubr.f32.gmra.mrb[0].mxu0 %v1934
      %v2128 = vpop.f32.mrb[0].mxu0
      %v2129 = vadd.f32 0.0, %v2128
      %v2130 = vpop.f32.mrb[0].mxu0
      %2131 = vmatprep.mubr.f32.mxu0 0.0
      %2132 = vmatmul.mubr.f32.gmra.mrb[0].mxu0 %v1937
      %v2133 = vpop.f32.mrb[0].mxu0
      %v2134 = vadd.f32 0.0, %v2133
      %v2135 = vpop.f32.mrb[0].mxu0
      %2136 = vmatprep.mubr.f32.mxu0 0.0
      %2137 = vmatmul.mubr.f32.gmra.mrb[0].mxu0 %v1940
      %v2138 = vpop.f32.mrb[0].mxu0
      %v2139 = vadd.f32 0.0, %v2138
      %v2140 = vpop.f32.mrb[0].mxu0
      %2141 = vmatprep.mubr.f32.mxu0 0.0
      %2142 = vmatmul.mubr.f32.gmra.mrb[0].mxu0 %v1943
      %v2143 = vpop.f32.mrb[0].mxu0
      %v2144 = vadd.f32 0.0, %v2143
      %v2145 = vpop.f32.mrb[0].mxu0
      %2146 = vmatprep.mubr.f32.mxu0 0.0
      %2147 = vmatmul.mubr.f32.gmra.mrb[0].mxu0 %v1946
      %v2148 = vpop.f32.mrb[0].mxu0
      %v2149 = vadd.f32 0.0, %v2148
      %v2150 = vpop.f32.mrb[0].mxu0
      %2151 = vmatprep.mubr.f32.mxu0 0.0
      %2152 = vmatmul.mubr.f32.gmra.mrb[0].mxu0 %v1949
      %v2153 = vpop.f32.mrb[0].mxu0
      %v2154 = vadd.f32 0.0, %v2153
      %v2155 = vpop.f32.mrb[0].mxu0
      %2156 = vmatprep.mubr.f32.mxu0 0.0
      %2157 = vmatmul.mubr.f32.gmra.mrb[0].mxu0 %v1952
      %v2158 = vpop.f32.mrb[0].mxu0
      %v2159 = vadd.f32 0.0, %v2158
      %v2160 = vpop.f32.mrb[0].mxu0
      %2161 = vmatprep.mubr.f32.mxu0 0.0
      %2162 = vmatmul.mubr.f32.gmra.mrb[0].mxu0 %v1955
      %v2163 = vpop.f32.mrb[0].mxu0
      %v2164 = vadd.f32 0.0, %v2163
      %v2165 = vpop.f32.mrb[0].mxu0
      %2166 = vmatprep.mubr.f32.mxu0 0.0
      %2167 = vmatmul.mubr.f32.gmra.mrb[0].mxu0 %v1958
      %v2168 = vpop.f32.mrb[0].mxu0
      %v2169 = vadd.f32 0.0, %v2168
      %v2170 = vpop.f32.mrb[0].mxu0
      %2171 = vmatprep.mubr.f32.mxu0 0.0
      %2172 = vmatmul.mubr.f32.gmra.mrb[0].mxu0 %v1961
      %v2173 = vpop.f32.mrb[0].mxu0
      %v2174 = vadd.f32 0.0, %v2173
      %v2175 = vpop.f32.mrb[0].mxu0
      %2176 = vmatprep.mubr.f32.mxu0 0.0
      %2177 = vmatmul.mubr.f32.gmra.mrb[0].mxu0 %v1964
      %v2178 = vpop.f32.mrb[0].mxu0
      %v2179 = vadd.f32 0.0, %v2178
      %v2180 = vpop.f32.mrb[0].mxu0
      %2181 = vmatprep.mubr.f32.mxu0 0.0
      %2182 = vmatmul.mubr.f32.gmra.mrb[0].mxu0 %v1967
      %v2183 = vpop.f32.mrb[0].mxu0
      %v2184 = vadd.f32 0.0, %v2183
      %v2185 = vpop.f32.mrb[0].mxu0
      %2186 = vmatprep.mubr.f32.mxu0 0.0
      %2187 = vmatmul.mubr.f32.gmra.mrb[0].mxu0 %v1970
      %v2188 = vpop.f32.mrb[0].mxu0
      %v2189 = vadd.f32 0.0, %v2188
      %v2190 = vpop.f32.mrb[0].mxu0
      %2191 = vmatprep.mubr.f32.mxu0 0.0
      %2192 = vmatmul.mubr.f32.gmra.mrb[0].mxu0 %v1973
      %v2193 = vpop.f32.mrb[0].mxu0
      %v2194 = vadd.f32 0.0, %v2193
      %v2195 = vpop.f32.mrb[0].mxu0
      %2196 = vmatprep.mubr.f32.mxu0 0.0
      %2197 = vmatmul.mubr.f32.gmra.mrb[0].mxu0 %v1976
      %v2198 = vpop.f32.mrb[0].mxu0
      %v2199 = vadd.f32 0.0, %v2198
      %v2200 = vpop.f32.mrb[0].mxu0
      %2201 = vmatprep.mubr.f32.mxu0 0.0
      %2202 = vmatmul.mubr.f32.gmra.mrb[0].mxu0 %v1979
      %v2203 = vpop.f32.mrb[0].mxu0
      %v2204 = vadd.f32 0.0, %v2203
      %v2205 = vpop.f32.mrb[0].mxu0
      %2206 = vmatprep.mubr.f32.mxu0 0.0
      %2207 = vmatmul.mubr.f32.gmra.mrb[0].mxu0 %v1982
      %v2208 = vpop.f32.mrb[0].mxu0
      %v2209 = vadd.f32 0.0, %v2208
      %v2210 = vpop.f32.mrb[0].mxu0
      %2211 = vdwg.mxu0
      %v2212 = vadd.f32 %v1726, %v2054
      %v2213 = vadd.f32 %v1727, %v2059
      %v2214 = vadd.f32 %v1728, %v2064
      %v2215 = vadd.f32 %v1729, %v2069
      %v2216 = vadd.f32 %v1730, %v2074
      %v2217 = vadd.f32 %v1731, %v2079
      %v2218 = vadd.f32 %v1732, %v2084
      %v2219 = vadd.f32 %v1733, %v2089
      %v2220 = vadd.f32 %v1734, %v2094
      %v2221 = vadd.f32 %v1735, %v2099
      %v2222 = vadd.f32 %v1736, %v2104
      %v2223 = vadd.f32 %v1737, %v2109
      %v2224 = vadd.f32 %v1738, %v2114
      %v2225 = vadd.f32 %v1739, %v2119
      %v2226 = vadd.f32 %v1740, %v2124
      %v2227 = vadd.f32 %v1741, %v2129
      %v2228 = vadd.f32 %v1742, %v2134
      %v2229 = vadd.f32 %v1743, %v2139
      %v2230 = vadd.f32 %v1744, %v2144
      %v2231 = vadd.f32 %v1745, %v2149
      %v2232 = vadd.f32 %v1746, %v2154
      %v2233 = vadd.f32 %v1747, %v2159
      %v2234 = vadd.f32 %v1748, %v2164
      %v2235 = vadd.f32 %v1749, %v2169
      %v2236 = vadd.f32 %v1750, %v2174
      %v2237 = vadd.f32 %v1751, %v2179
      %v2238 = vadd.f32 %v1752, %v2184
      %v2239 = vadd.f32 %v1753, %v2189
      %v2240 = vadd.f32 %v1754, %v2194
      %v2241 = vadd.f32 %v1755, %v2199
      %v2242 = vadd.f32 %v1756, %v2204
      %v2243 = vadd.f32 %v1757, %v2209
      %v2244 = vld [vmem:[#allocation2 + $0x10] sm:$0xff]
      %v2245 = vld [vmem:[#allocation2 + $0x18] sm:$0xff]
      %v2246 = vld [vmem:[#allocation2 + $0x20] sm:$0xff]
      %v2247 = vld [vmem:[#allocation2 + $0x28] sm:$0xff]
      %v2248 = vld [vmem:[#allocation2 + $0x30] sm:$0xff]
      %v2249 = vld [vmem:[#allocation2 + $0x38] sm:$0xff]
      %v2250 = vld [vmem:[#allocation2 + $0x40] sm:$0xff]
      %v2251 = vld [vmem:[#allocation2 + $0x48] sm:$0xff]
      %v2252 = vld [vmem:[#allocation2 + $0x50] sm:$0xff]
      %v2253 = vld [vmem:[#allocation2 + $0x58] sm:$0xff]
      %v2254 = vld [vmem:[#allocation2 + $0x60] sm:$0xff]
      %v2255 = vld [vmem:[#allocation2 + $0x68] sm:$0xff]
      %v2256 = vld [vmem:[#allocation2 + $0x70] sm:$0xff]
      %v2257 = vld [vmem:[#allocation2 + $0x78] sm:$0xff]
      %v2258 = vld [vmem:[#allocation2 + $0x80] sm:$0xff]
      %v2259 = vld [vmem:[#allocation2 + $0x88] sm:$0xff]
      %v2260 = vld [vmem:[#allocation2 + $0x90] sm:$0xff]
      %v2261 = vld [vmem:[#allocation2 + $0x98] sm:$0xff]
      %v2262 = vld [vmem:[#allocation2 + $0xa0] sm:$0xff]
      %v2263 = vld [vmem:[#allocation2 + $0xa8] sm:$0xff]
      %v2264 = vld [vmem:[#allocation2 + $0xb0] sm:$0xff]
      %v2265 = vld [vmem:[#allocation2 + $0xb8] sm:$0xff]
      %v2266 = vld [vmem:[#allocation2 + $0xc0] sm:$0xff]
      %v2267 = vld [vmem:[#allocation2 + $0xc8] sm:$0xff]
      %v2268 = vld [vmem:[#allocation2 + $0xd0] sm:$0xff]
      %v2269 = vld [vmem:[#allocation2 + $0xd8] sm:$0xff]
      %v2270 = vld [vmem:[#allocation2 + $0xe0] sm:$0xff]
      %v2271 = vld [vmem:[#allocation2 + $0xe8] sm:$0xff]
      %v2272 = vld [vmem:[#allocation2 + $0xf0] sm:$0xff]
      %v2273 = vld [vmem:[#allocation2 + $0xf8] sm:$0xff]
      %v2274 = vld [vmem:[#allocation2 + $0x100] sm:$0xff]
      %v2275 = vld [vmem:[#allocation2 + $0x108] sm:$0xff]
      %v2276 = vsel %vm946, %v2244, 0.0
      %v2277 = vsel %vm947, %v2245, 0.0
      %v2278 = vsel %vm948, %v2246, 0.0
      %v2279 = vsel %vm949, %v2247, 0.0
      %v2280 = vsel %vm950, %v2248, 0.0
      %v2281 = vsel %vm951, %v2249, 0.0
      %v2282 = vsel %vm952, %v2250, 0.0
      %v2283 = vsel %vm953, %v2251, 0.0
      %v2284 = vsel %vm954, %v2252, 0.0
      %v2285 = vsel %vm955, %v2253, 0.0
      %v2286 = vsel %vm956, %v2254, 0.0
      %v2287 = vsel %vm957, %v2255, 0.0
      %v2288 = vsel %vm958, %v2256, 0.0
      %v2289 = vsel %vm959, %v2257, 0.0
      %v2290 = vsel %vm960, %v2258, 0.0
      %v2291 = vsel %vm961, %v2259, 0.0
      %v2292 = vsel %vm962, %v2260, 0.0
      %v2293 = vsel %vm963, %v2261, 0.0
      %v2294 = vsel %vm964, %v2262, 0.0
      %v2295 = vsel %vm965, %v2263, 0.0
      %v2296 = vsel %vm966, %v2264, 0.0
      %v2297 = vsel %vm967, %v2265, 0.0
      %v2298 = vsel %vm968, %v2266, 0.0
      %v2299 = vsel %vm969, %v2267, 0.0
      %v2300 = vsel %vm970, %v2268, 0.0
      %v2301 = vsel %vm971, %v2269, 0.0
      %v2302 = vsel %vm972, %v2270, 0.0
      %v2303 = vsel %vm973, %v2271, 0.0
      %v2304 = vsel %vm974, %v2272, 0.0
      %v2305 = vsel %vm975, %v2273, 0.0
      %v2306 = vsel %vm976, %v2274, 0.0
      %v2307 = vsel %vm977, %v2275, 0.0
      %s2308 = scalar_lea.vmem %s2, 6
      %v2309 = vld [vmem:[%s2308] sm:$0x3]
      %v2311 = vsel %vm737, %v2276, 0
      %v2314 = vsel %vm737, %v2277, 0
      %v2317 = vsel %vm737, %v2278, 0
      %v2320 = vsel %vm737, %v2279, 0
      %v2323 = vsel %vm737, %v2280, 0
      %v2326 = vsel %vm737, %v2281, 0
      %v2329 = vsel %vm737, %v2282, 0
      %v2332 = vsel %vm737, %v2283, 0
      %v2335 = vsel %vm737, %v2284, 0
      %v2338 = vsel %vm737, %v2285, 0
      %v2341 = vsel %vm737, %v2286, 0
      %v2344 = vsel %vm737, %v2287, 0
      %v2347 = vsel %vm737, %v2288, 0
      %v2350 = vsel %vm737, %v2289, 0
      %v2353 = vsel %vm737, %v2290, 0
      %v2356 = vsel %vm737, %v2291, 0
      %v2359 = vsel %vm737, %v2292, 0
      %v2362 = vsel %vm737, %v2293, 0
      %v2365 = vsel %vm737, %v2294, 0
      %v2368 = vsel %vm737, %v2295, 0
      %v2371 = vsel %vm737, %v2296, 0
      %v2374 = vsel %vm737, %v2297, 0
      %v2377 = vsel %vm737, %v2298, 0
      %v2380 = vsel %vm737, %v2299, 0
      %v2383 = vsel %vm737, %v2300, 0
      %v2386 = vsel %vm737, %v2301, 0
      %v2389 = vsel %vm737, %v2302, 0
      %v2392 = vsel %vm737, %v2303, 0
      %v2395 = vsel %vm737, %v2304, 0
      %v2398 = vsel %vm737, %v2305, 0
      %v2401 = vsel %vm737, %v2306, 0
      %v2404 = vsel %vm737, %v2307, 0
      %v2407 = vsel %vm1107, %v2309, 0
      %2409 = vmatprep.subr.mxu0 0.0
      %2410 = vmatpush1.msra.mxu0 %v2407
      %2411 = vmatprep.subr.mxu0 0.0
      %2412 = vmatpush1.msra.mxu0 0.0
      %2413 = vmatprep.subr.mxu0 0.0
      %2414 = vmatpush1.msra.mxu0 0.0
      %2415 = vmatprep.subr.mxu0 0.0
      %2416 = vmatpush1.msra.mxu0 0.0
      %2417 = vmatprep.subr.mxu0 0.0
      %2418 = vmatpush1.msra.mxu0 0.0
      %2419 = vmatprep.subr.mxu0 0.0
      %2420 = vmatpush1.msra.mxu0 0.0
      %2421 = vmatprep.subr.mxu0 0.0
      %2422 = vmatpush1.msra.mxu0 0.0
      %2423 = vmatprep.subr.mxu0 0.0
      %2424 = vmatpush1.msra.mxu0 0.0
      %2425 = vmatprep.subr.mxu0 0.0
      %2426 = vmatpush1.msra.mxu0 0.0
      %2427 = vmatprep.subr.mxu0 0.0
      %2428 = vmatpush1.msra.mxu0 0.0
      %2429 = vmatprep.subr.mxu0 0.0
      %2430 = vmatpush1.msra.mxu0 0.0
      %2431 = vmatprep.subr.mxu0 0.0
      %2432 = vmatpush1.msra.mxu0 0.0
      %2433 = vmatprep.subr.mxu0 0.0
      %2434 = vmatpush1.msra.mxu0 0.0
      %2435 = vmatprep.subr.mxu0 0.0
      %2436 = vmatpush1.msra.mxu0 0.0
      %2437 = vmatprep.subr.mxu0 0.0
      %2438 = vmatpush1.msra.mxu0 0.0
      %2439 = vmatprep.subr.mxu0 0.0
      %2440 = vmatpush1.msra.mxu0 0.0
      %2441 = vmatprep.subr.mxu0 0.0
      %2442 = vmatpush1.msra.mxu0 0.0
      %2443 = vmatprep.subr.mxu0 0.0
      %2444 = vmatpush1.msra.mxu0 0.0
      %2445 = vmatprep.subr.mxu0 0.0
      %2446 = vmatpush1.msra.mxu0 0.0
      %2447 = vmatprep.subr.mxu0 0.0
      %2448 = vmatpush1.msra.mxu0 0.0
      %2449 = vmatprep.subr.mxu0 0.0
      %2450 = vmatpush1.msra.mxu0 0.0
      %2451 = vmatprep.subr.mxu0 0.0
      %2452 = vmatpush1.msra.mxu0 0.0
      %2453 = vmatprep.subr.mxu0 0.0
      %2454 = vmatpush1.msra.mxu0 0.0
      %2455 = vmatprep.subr.mxu0 0.0
      %2456 = vmatpush1.msra.mxu0 0.0
      %2457 = vmatprep.subr.mxu0 0.0
      %2458 = vmatpush1.msra.mxu0 0.0
      %2459 = vmatprep.subr.mxu0 0.0
      %2460 = vmatpush1.msra.mxu0 0.0
      %2461 = vmatprep.subr.mxu0 0.0
      %2462 = vmatpush1.msra.mxu0 0.0
      %2463 = vmatprep.subr.mxu0 0.0
      %2464 = vmatpush1.msra.mxu0 0.0
      %2465 = vmatprep.subr.mxu0 0.0
      %2466 = vmatpush1.msra.mxu0 0.0
      %2467 = vmatprep.subr.mxu0 0.0
      %2468 = vmatpush1.msra.mxu0 0.0
      %2469 = vmatprep.subr.mxu0 0.0
      %2470 = vmatpush1.msra.mxu0 0.0
      %2471 = vmatprep.subr.mxu0 0.0
      %2472 = vmatpush1.msra.mxu0 0.0
      %2473 = vmatprep.mubr.f32.mxu0 0.0
      %2474 = vmatmul.mubr.f32.gmra.mrb[0].mxu0 %v2311
      %v2475 = vpop.f32.mrb[0].mxu0
      %v2476 = vadd.f32 0.0, %v2475
      %v2477 = vpop.f32.mrb[0].mxu0
      %2478 = vmatprep.mubr.f32.mxu0 0.0
      %2479 = vmatmul.mubr.f32.gmra.mrb[0].mxu0 %v2314
      %v2480 = vpop.f32.mrb[0].mxu0
      %v2481 = vadd.f32 0.0, %v2480
      %v2482 = vpop.f32.mrb[0].mxu0
      %2483 = vmatprep.mubr.f32.mxu0 0.0
      %2484 = vmatmul.mubr.f32.gmra.mrb[0].mxu0 %v2317
      %v2485 = vpop.f32.mrb[0].mxu0
      %v2486 = vadd.f32 0.0, %v2485
      %v2487 = vpop.f32.mrb[0].mxu0
      %2488 = vmatprep.mubr.f32.mxu0 0.0
      %2489 = vmatmul.mubr.f32.gmra.mrb[0].mxu0 %v2320
      %v2490 = vpop.f32.mrb[0].mxu0
      %v2491 = vadd.f32 0.0, %v2490
      %v2492 = vpop.f32.mrb[0].mxu0
      %2493 = vmatprep.mubr.f32.mxu0 0.0
      %2494 = vmatmul.mubr.f32.gmra.mrb[0].mxu0 %v2323
      %v2495 = vpop.f32.mrb[0].mxu0
      %v2496 = vadd.f32 0.0, %v2495
      %v2497 = vpop.f32.mrb[0].mxu0
      %2498 = vmatprep.mubr.f32.mxu0 0.0
      %2499 = vmatmul.mubr.f32.gmra.mrb[0].mxu0 %v2326
      %v2500 = vpop.f32.mrb[0].mxu0
      %v2501 = vadd.f32 0.0, %v2500
      %v2502 = vpop.f32.mrb[0].mxu0
      %2503 = vmatprep.mubr.f32.mxu0 0.0
      %2504 = vmatmul.mubr.f32.gmra.mrb[0].mxu0 %v2329
      %v2505 = vpop.f32.mrb[0].mxu0
      %v2506 = vadd.f32 0.0, %v2505
      %v2507 = vpop.f32.mrb[0].mxu0
      %2508 = vmatprep.mubr.f32.mxu0 0.0
      %2509 = vmatmul.mubr.f32.gmra.mrb[0].mxu0 %v2332
      %v2510 = vpop.f32.mrb[0].mxu0
      %v2511 = vadd.f32 0.0, %v2510
      %v2512 = vpop.f32.mrb[0].mxu0
      %2513 = vmatprep.mubr.f32.mxu0 0.0
      %2514 = vmatmul.mubr.f32.gmra.mrb[0].mxu0 %v2335
      %v2515 = vpop.f32.mrb[0].mxu0
      %v2516 = vadd.f32 0.0, %v2515
      %v2517 = vpop.f32.mrb[0].mxu0
      %2518 = vmatprep.mubr.f32.mxu0 0.0
      %2519 = vmatmul.mubr.f32.gmra.mrb[0].mxu0 %v2338
      %v2520 = vpop.f32.mrb[0].mxu0
      %v2521 = vadd.f32 0.0, %v2520
      %v2522 = vpop.f32.mrb[0].mxu0
      %2523 = vmatprep.mubr.f32.mxu0 0.0
      %2524 = vmatmul.mubr.f32.gmra.mrb[0].mxu0 %v2341
      %v2525 = vpop.f32.mrb[0].mxu0
      %v2526 = vadd.f32 0.0, %v2525
      %v2527 = vpop.f32.mrb[0].mxu0
      %2528 = vmatprep.mubr.f32.mxu0 0.0
      %2529 = vmatmul.mubr.f32.gmra.mrb[0].mxu0 %v2344
      %v2530 = vpop.f32.mrb[0].mxu0
      %v2531 = vadd.f32 0.0, %v2530
      %v2532 = vpop.f32.mrb[0].mxu0
      %2533 = vmatprep.mubr.f32.mxu0 0.0
      %2534 = vmatmul.mubr.f32.gmra.mrb[0].mxu0 %v2347
      %v2535 = vpop.f32.mrb[0].mxu0
      %v2536 = vadd.f32 0.0, %v2535
      %v2537 = vpop.f32.mrb[0].mxu0
      %2538 = vmatprep.mubr.f32.mxu0 0.0
      %2539 = vmatmul.mubr.f32.gmra.mrb[0].mxu0 %v2350
      %v2540 = vpop.f32.mrb[0].mxu0
      %v2541 = vadd.f32 0.0, %v2540
      %v2542 = vpop.f32.mrb[0].mxu0
      %2543 = vmatprep.mubr.f32.mxu0 0.0
      %2544 = vmatmul.mubr.f32.gmra.mrb[0].mxu0 %v2353
      %v2545 = vpop.f32.mrb[0].mxu0
      %v2546 = vadd.f32 0.0, %v2545
      %v2547 = vpop.f32.mrb[0].mxu0
      %2548 = vmatprep.mubr.f32.mxu0 0.0
      %2549 = vmatmul.mubr.f32.gmra.mrb[0].mxu0 %v2356
      %v2550 = vpop.f32.mrb[0].mxu0
      %v2551 = vadd.f32 0.0, %v2550
      %v2552 = vpop.f32.mrb[0].mxu0
      %2553 = vmatprep.mubr.f32.mxu0 0.0
      %2554 = vmatmul.mubr.f32.gmra.mrb[0].mxu0 %v2359
      %v2555 = vpop.f32.mrb[0].mxu0
      %v2556 = vadd.f32 0.0, %v2555
      %v2557 = vpop.f32.mrb[0].mxu0
      %2558 = vmatprep.mubr.f32.mxu0 0.0
      %2559 = vmatmul.mubr.f32.gmra.mrb[0].mxu0 %v2362
      %v2560 = vpop.f32.mrb[0].mxu0
      %v2561 = vadd.f32 0.0, %v2560
      %v2562 = vpop.f32.mrb[0].mxu0
      %2563 = vmatprep.mubr.f32.mxu0 0.0
      %2564 = vmatmul.mubr.f32.gmra.mrb[0].mxu0 %v2365
      %v2565 = vpop.f32.mrb[0].mxu0
      %v2566 = vadd.f32 0.0, %v2565
      %v2567 = vpop.f32.mrb[0].mxu0
      %2568 = vmatprep.mubr.f32.mxu0 0.0
      %2569 = vmatmul.mubr.f32.gmra.mrb[0].mxu0 %v2368
      %v2570 = vpop.f32.mrb[0].mxu0
      %v2571 = vadd.f32 0.0, %v2570
      %v2572 = vpop.f32.mrb[0].mxu0
      %2573 = vmatprep.mubr.f32.mxu0 0.0
      %2574 = vmatmul.mubr.f32.gmra.mrb[0].mxu0 %v2371
      %v2575 = vpop.f32.mrb[0].mxu0
      %v2576 = vadd.f32 0.0, %v2575
      %v2577 = vpop.f32.mrb[0].mxu0
      %2578 = vmatprep.mubr.f32.mxu0 0.0
      %2579 = vmatmul.mubr.f32.gmra.mrb[0].mxu0 %v2374
      %v2580 = vpop.f32.mrb[0].mxu0
      %v2581 = vadd.f32 0.0, %v2580
      %v2582 = vpop.f32.mrb[0].mxu0
      %2583 = vmatprep.mubr.f32.mxu0 0.0
      %2584 = vmatmul.mubr.f32.gmra.mrb[0].mxu0 %v2377
      %v2585 = vpop.f32.mrb[0].mxu0
      %v2586 = vadd.f32 0.0, %v2585
      %v2587 = vpop.f32.mrb[0].mxu0
      %2588 = vmatprep.mubr.f32.mxu0 0.0
      %2589 = vmatmul.mubr.f32.gmra.mrb[0].mxu0 %v2380
      %v2590 = vpop.f32.mrb[0].mxu0
      %v2591 = vadd.f32 0.0, %v2590
      %v2592 = vpop.f32.mrb[0].mxu0
      %2593 = vmatprep.mubr.f32.mxu0 0.0
      %2594 = vmatmul.mubr.f32.gmra.mrb[0].mxu0 %v2383
      %v2595 = vpop.f32.mrb[0].mxu0
      %v2596 = vadd.f32 0.0, %v2595
      %v2597 = vpop.f32.mrb[0].mxu0
      %2598 = vmatprep.mubr.f32.mxu0 0.0
      %2599 = vmatmul.mubr.f32.gmra.mrb[0].mxu0 %v2386
      %v2600 = vpop.f32.mrb[0].mxu0
      %v2601 = vadd.f32 0.0, %v2600
      %v2602 = vpop.f32.mrb[0].mxu0
      %2603 = vmatprep.mubr.f32.mxu0 0.0
      %2604 = vmatmul.mubr.f32.gmra.mrb[0].mxu0 %v2389
      %v2605 = vpop.f32.mrb[0].mxu0
      %v2606 = vadd.f32 0.0, %v2605
      %v2607 = vpop.f32.mrb[0].mxu0
      %2608 = vmatprep.mubr.f32.mxu0 0.0
      %2609 = vmatmul.mubr.f32.gmra.mrb[0].mxu0 %v2392
      %v2610 = vpop.f32.mrb[0].mxu0
      %v2611 = vadd.f32 0.0, %v2610
      %v2612 = vpop.f32.mrb[0].mxu0
      %2613 = vmatprep.mubr.f32.mxu0 0.0
      %2614 = vmatmul.mubr.f32.gmra.mrb[0].mxu0 %v2395
      %v2615 = vpop.f32.mrb[0].mxu0
      %v2616 = vadd.f32 0.0, %v2615
      %v2617 = vpop.f32.mrb[0].mxu0
      %2618 = vmatprep.mubr.f32.mxu0 0.0
      %2619 = vmatmul.mubr.f32.gmra.mrb[0].mxu0 %v2398
      %v2620 = vpop.f32.mrb[0].mxu0
      %v2621 = vadd.f32 0.0, %v2620
      %v2622 = vpop.f32.mrb[0].mxu0
      %2623 = vmatprep.mubr.f32.mxu0 0.0
      %2624 = vmatmul.mubr.f32.gmra.mrb[0].mxu0 %v2401
      %v2625 = vpop.f32.mrb[0].mxu0
      %v2626 = vadd.f32 0.0, %v2625
      %v2627 = vpop.f32.mrb[0].mxu0
      %2628 = vmatprep.mubr.f32.mxu0 0.0
      %2629 = vmatmul.mubr.f32.gmra.mrb[0].mxu0 %v2404
      %v2630 = vpop.f32.mrb[0].mxu0
      %v2631 = vadd.f32 0.0, %v2630
      %v2632 = vpop.f32.mrb[0].mxu0
      %2633 = vdwg.mxu0
      %v2634 = vadd.f32 %v2212, %v2476
      %v2635 = vadd.f32 %v2213, %v2481
      %v2636 = vadd.f32 %v2214, %v2486
      %v2637 = vadd.f32 %v2215, %v2491
      %v2638 = vadd.f32 %v2216, %v2496
      %v2639 = vadd.f32 %v2217, %v2501
      %v2640 = vadd.f32 %v2218, %v2506
      %v2641 = vadd.f32 %v2219, %v2511
      %v2642 = vadd.f32 %v2220, %v2516
      %v2643 = vadd.f32 %v2221, %v2521
      %v2644 = vadd.f32 %v2222, %v2526
      %v2645 = vadd.f32 %v2223, %v2531
      %v2646 = vadd.f32 %v2224, %v2536
      %v2647 = vadd.f32 %v2225, %v2541
      %v2648 = vadd.f32 %v2226, %v2546
      %v2649 = vadd.f32 %v2227, %v2551
      %v2650 = vadd.f32 %v2228, %v2556
      %v2651 = vadd.f32 %v2229, %v2561
      %v2652 = vadd.f32 %v2230, %v2566
      %v2653 = vadd.f32 %v2231, %v2571
      %v2654 = vadd.f32 %v2232, %v2576
      %v2655 = vadd.f32 %v2233, %v2581
      %v2656 = vadd.f32 %v2234, %v2586
      %v2657 = vadd.f32 %v2235, %v2591
      %v2658 = vadd.f32 %v2236, %v2596
      %v2659 = vadd.f32 %v2237, %v2601
      %v2660 = vadd.f32 %v2238, %v2606
      %v2661 = vadd.f32 %v2239, %v2611
      %v2662 = vadd.f32 %v2240, %v2616
      %v2663 = vadd.f32 %v2241, %v2621
      %v2664 = vadd.f32 %v2242, %v2626
      %v2665 = vadd.f32 %v2243, %v2631
      %v2666 = vld [vmem:[#allocation2 + $0x11] sm:$0xff]
      %v2667 = vld [vmem:[#allocation2 + $0x19] sm:$0xff]
      %v2668 = vld [vmem:[#allocation2 + $0x21] sm:$0xff]
      %v2669 = vld [vmem:[#allocation2 + $0x29] sm:$0xff]
      %v2670 = vld [vmem:[#allocation2 + $0x31] sm:$0xff]
      %v2671 = vld [vmem:[#allocation2 + $0x39] sm:$0xff]
      %v2672 = vld [vmem:[#allocation2 + $0x41] sm:$0xff]
      %v2673 = vld [vmem:[#allocation2 + $0x49] sm:$0xff]
      %v2674 = vld [vmem:[#allocation2 + $0x51] sm:$0xff]
      %v2675 = vld [vmem:[#allocation2 + $0x59] sm:$0xff]
      %v2676 = vld [vmem:[#allocation2 + $0x61] sm:$0xff]
      %v2677 = vld [vmem:[#allocation2 + $0x69] sm:$0xff]
      %v2678 = vld [vmem:[#allocation2 + $0x71] sm:$0xff]
      %v2679 = vld [vmem:[#allocation2 + $0x79] sm:$0xff]
      %v2680 = vld [vmem:[#allocation2 + $0x81] sm:$0xff]
      %v2681 = vld [vmem:[#allocation2 + $0x89] sm:$0xff]
      %v2682 = vld [vmem:[#allocation2 + $0x91] sm:$0xff]
      %v2683 = vld [vmem:[#allocation2 + $0x99] sm:$0xff]
      %v2684 = vld [vmem:[#allocation2 + $0xa1] sm:$0xff]
      %v2685 = vld [vmem:[#allocation2 + $0xa9] sm:$0xff]
      %v2686 = vld [vmem:[#allocation2 + $0xb1] sm:$0xff]
      %v2687 = vld [vmem:[#allocation2 + $0xb9] sm:$0xff]
      %v2688 = vld [vmem:[#allocation2 + $0xc1] sm:$0xff]
      %v2689 = vld [vmem:[#allocation2 + $0xc9] sm:$0xff]
      %v2690 = vld [vmem:[#allocation2 + $0xd1] sm:$0xff]
      %v2691 = vld [vmem:[#allocation2 + $0xd9] sm:$0xff]
      %v2692 = vld [vmem:[#allocation2 + $0xe1] sm:$0xff]
      %v2693 = vld [vmem:[#allocation2 + $0xe9] sm:$0xff]
      %v2694 = vld [vmem:[#allocation2 + $0xf1] sm:$0xff]
      %v2695 = vld [vmem:[#allocation2 + $0xf9] sm:$0xff]
      %v2696 = vld [vmem:[#allocation2 + $0x101] sm:$0xff]
      %v2697 = vld [vmem:[#allocation2 + $0x109] sm:$0xff]
      %s2698 = scalar_lea.vmem %s2, 8
      %v2699 = vld [vmem:[%s2698] sm:$0x3]
      %v2701 = vsel %vm737, %v2666, 0
      %v2704 = vsel %vm737, %v2667, 0
      %v2707 = vsel %vm737, %v2668, 0
      %v2710 = vsel %vm737, %v2669, 0
      %v2713 = vsel %vm737, %v2670, 0
      %v2716 = vsel %vm737, %v2671, 0
      %v2719 = vsel %vm737, %v2672, 0
      %v2722 = vsel %vm737, %v2673, 0
      %v2725 = vsel %vm737, %v2674, 0
      %v2728 = vsel %vm737, %v2675, 0
      %v2731 = vsel %vm737, %v2676, 0
      %v2734 = vsel %vm737, %v2677, 0
      %v2737 = vsel %vm737, %v2678, 0
      %v2740 = vsel %vm737, %v2679, 0
      %v2743 = vsel %vm737, %v2680, 0
      %v2746 = vsel %vm737, %v2681, 0
      %v2749 = vsel %vm737, %v2682, 0
      %v2752 = vsel %vm737, %v2683, 0
      %v2755 = vsel %vm737, %v2684, 0
      %v2758 = vsel %vm737, %v2685, 0
      %v2761 = vsel %vm737, %v2686, 0
      %v2764 = vsel %vm737, %v2687, 0
      %v2767 = vsel %vm737, %v2688, 0
      %v2770 = vsel %vm737, %v2689, 0
      %v2773 = vsel %vm737, %v2690, 0
      %v2776 = vsel %vm737, %v2691, 0
      %v2779 = vsel %vm737, %v2692, 0
      %v2782 = vsel %vm737, %v2693, 0
      %v2785 = vsel %vm737, %v2694, 0
      %v2788 = vsel %vm737, %v2695, 0
      %v2791 = vsel %vm737, %v2696, 0
      %v2794 = vsel %vm737, %v2697, 0
      %v2797 = vsel %vm1107, %v2699, 0
      %2799 = vmatprep.subr.mxu0 0.0
      %2800 = vmatpush1.msra.mxu0 %v2797
      %2801 = vmatprep.subr.mxu0 0.0
      %2802 = vmatpush1.msra.mxu0 0.0
      %2803 = vmatprep.subr.mxu0 0.0
      %2804 = vmatpush1.msra.mxu0 0.0
      %2805 = vmatprep.subr.mxu0 0.0
      %2806 = vmatpush1.msra.mxu0 0.0
      %2807 = vmatprep.subr.mxu0 0.0
      %2808 = vmatpush1.msra.mxu0 0.0
      %2809 = vmatprep.subr.mxu0 0.0
      %2810 = vmatpush1.msra.mxu0 0.0
      %2811 = vmatprep.subr.mxu0 0.0
      %2812 = vmatpush1.msra.mxu0 0.0
      %2813 = vmatprep.subr.mxu0 0.0
      %2814 = vmatpush1.msra.mxu0 0.0
      %2815 = vmatprep.subr.mxu0 0.0
      %2816 = vmatpush1.msra.mxu0 0.0
      %2817 = vmatprep.subr.mxu0 0.0
      %2818 = vmatpush1.msra.mxu0 0.0
      %2819 = vmatprep.subr.mxu0 0.0
      %2820 = vmatpush1.msra.mxu0 0.0
      %2821 = vmatprep.subr.mxu0 0.0
      %2822 = vmatpush1.msra.mxu0 0.0
      %2823 = vmatprep.subr.mxu0 0.0
      %2824 = vmatpush1.msra.mxu0 0.0
      %2825 = vmatprep.subr.mxu0 0.0
      %2826 = vmatpush1.msra.mxu0 0.0
      %2827 = vmatprep.subr.mxu0 0.0
      %2828 = vmatpush1.msra.mxu0 0.0
      %2829 = vmatprep.subr.mxu0 0.0
      %2830 = vmatpush1.msra.mxu0 0.0
      %2831 = vmatprep.subr.mxu0 0.0
      %2832 = vmatpush1.msra.mxu0 0.0
      %2833 = vmatprep.subr.mxu0 0.0
      %2834 = vmatpush1.msra.mxu0 0.0
      %2835 = vmatprep.subr.mxu0 0.0
      %2836 = vmatpush1.msra.mxu0 0.0
      %2837 = vmatprep.subr.mxu0 0.0
      %2838 = vmatpush1.msra.mxu0 0.0
      %2839 = vmatprep.subr.mxu0 0.0
      %2840 = vmatpush1.msra.mxu0 0.0
      %2841 = vmatprep.subr.mxu0 0.0
      %2842 = vmatpush1.msra.mxu0 0.0
      %2843 = vmatprep.subr.mxu0 0.0
      %2844 = vmatpush1.msra.mxu0 0.0
      %2845 = vmatprep.subr.mxu0 0.0
      %2846 = vmatpush1.msra.mxu0 0.0
      %2847 = vmatprep.subr.mxu0 0.0
      %2848 = vmatpush1.msra.mxu0 0.0
      %2849 = vmatprep.subr.mxu0 0.0
      %2850 = vmatpush1.msra.mxu0 0.0
      %2851 = vmatprep.subr.mxu0 0.0
      %2852 = vmatpush1.msra.mxu0 0.0
      %2853 = vmatprep.subr.mxu0 0.0
      %2854 = vmatpush1.msra.mxu0 0.0
      %2855 = vmatprep.subr.mxu0 0.0
      %2856 = vmatpush1.msra.mxu0 0.0
      %2857 = vmatprep.subr.mxu0 0.0
      %2858 = vmatpush1.msra.mxu0 0.0
      %2859 = vmatprep.subr.mxu0 0.0
      %2860 = vmatpush1.msra.mxu0 0.0
      %2861 = vmatprep.subr.mxu0 0.0
      %2862 = vmatpush1.msra.mxu0 0.0
      %2863 = vmatprep.mubr.f32.mxu0 0.0
      %2864 = vmatmul.mubr.f32.gmra.mrb[0].mxu0 %v2701
      %v2865 = vpop.f32.mrb[0].mxu0
      %v2866 = vadd.f32 0.0, %v2865
      %v2867 = vpop.f32.mrb[0].mxu0
      %2868 = vmatprep.mubr.f32.mxu0 0.0
      %2869 = vmatmul.mubr.f32.gmra.mrb[0].mxu0 %v2704
      %v2870 = vpop.f32.mrb[0].mxu0
      %v2871 = vadd.f32 0.0, %v2870
      %v2872 = vpop.f32.mrb[0].mxu0
      %2873 = vmatprep.mubr.f32.mxu0 0.0
      %2874 = vmatmul.mubr.f32.gmra.mrb[0].mxu0 %v2707
      %v2875 = vpop.f32.mrb[0].mxu0
      %v2876 = vadd.f32 0.0, %v2875
      %v2877 = vpop.f32.mrb[0].mxu0
      %2878 = vmatprep.mubr.f32.mxu0 0.0
      %2879 = vmatmul.mubr.f32.gmra.mrb[0].mxu0 %v2710
      %v2880 = vpop.f32.mrb[0].mxu0
      %v2881 = vadd.f32 0.0, %v2880
      %v2882 = vpop.f32.mrb[0].mxu0
      %2883 = vmatprep.mubr.f32.mxu0 0.0
      %2884 = vmatmul.mubr.f32.gmra.mrb[0].mxu0 %v2713
      %v2885 = vpop.f32.mrb[0].mxu0
      %v2886 = vadd.f32 0.0, %v2885
      %v2887 = vpop.f32.mrb[0].mxu0
      %2888 = vmatprep.mubr.f32.mxu0 0.0
      %2889 = vmatmul.mubr.f32.gmra.mrb[0].mxu0 %v2716
      %v2890 = vpop.f32.mrb[0].mxu0
      %v2891 = vadd.f32 0.0, %v2890
      %v2892 = vpop.f32.mrb[0].mxu0
      %2893 = vmatprep.mubr.f32.mxu0 0.0
      %2894 = vmatmul.mubr.f32.gmra.mrb[0].mxu0 %v2719
      %v2895 = vpop.f32.mrb[0].mxu0
      %v2896 = vadd.f32 0.0, %v2895
      %v2897 = vpop.f32.mrb[0].mxu0
      %2898 = vmatprep.mubr.f32.mxu0 0.0
      %2899 = vmatmul.mubr.f32.gmra.mrb[0].mxu0 %v2722
      %v2900 = vpop.f32.mrb[0].mxu0
      %v2901 = vadd.f32 0.0, %v2900
      %v2902 = vpop.f32.mrb[0].mxu0
      %2903 = vmatprep.mubr.f32.mxu0 0.0
      %2904 = vmatmul.mubr.f32.gmra.mrb[0].mxu0 %v2725
      %v2905 = vpop.f32.mrb[0].mxu0
      %v2906 = vadd.f32 0.0, %v2905
      %v2907 = vpop.f32.mrb[0].mxu0
      %2908 = vmatprep.mubr.f32.mxu0 0.0
      %2909 = vmatmul.mubr.f32.gmra.mrb[0].mxu0 %v2728
      %v2910 = vpop.f32.mrb[0].mxu0
      %v2911 = vadd.f32 0.0, %v2910
      %v2912 = vpop.f32.mrb[0].mxu0
      %2913 = vmatprep.mubr.f32.mxu0 0.0
      %2914 = vmatmul.mubr.f32.gmra.mrb[0].mxu0 %v2731
      %v2915 = vpop.f32.mrb[0].mxu0
      %v2916 = vadd.f32 0.0, %v2915
      %v2917 = vpop.f32.mrb[0].mxu0
      %2918 = vmatprep.mubr.f32.mxu0 0.0
      %2919 = vmatmul.mubr.f32.gmra.mrb[0].mxu0 %v2734
      %v2920 = vpop.f32.mrb[0].mxu0
      %v2921 = vadd.f32 0.0, %v2920
      %v2922 = vpop.f32.mrb[0].mxu0
      %2923 = vmatprep.mubr.f32.mxu0 0.0
      %2924 = vmatmul.mubr.f32.gmra.mrb[0].mxu0 %v2737
      %v2925 = vpop.f32.mrb[0].mxu0
      %v2926 = vadd.f32 0.0, %v2925
      %v2927 = vpop.f32.mrb[0].mxu0
      %2928 = vmatprep.mubr.f32.mxu0 0.0
      %2929 = vmatmul.mubr.f32.gmra.mrb[0].mxu0 %v2740
      %v2930 = vpop.f32.mrb[0].mxu0
      %v2931 = vadd.f32 0.0, %v2930
      %v2932 = vpop.f32.mrb[0].mxu0
      %2933 = vmatprep.mubr.f32.mxu0 0.0
      %2934 = vmatmul.mubr.f32.gmra.mrb[0].mxu0 %v2743
      %v2935 = vpop.f32.mrb[0].mxu0
      %v2936 = vadd.f32 0.0, %v2935
      %v2937 = vpop.f32.mrb[0].mxu0
      %2938 = vmatprep.mubr.f32.mxu0 0.0
      %2939 = vmatmul.mubr.f32.gmra.mrb[0].mxu0 %v2746
      %v2940 = vpop.f32.mrb[0].mxu0
      %v2941 = vadd.f32 0.0, %v2940
      %v2942 = vpop.f32.mrb[0].mxu0
      %2943 = vmatprep.mubr.f32.mxu0 0.0
      %2944 = vmatmul.mubr.f32.gmra.mrb[0].mxu0 %v2749
      %v2945 = vpop.f32.mrb[0].mxu0
      %v2946 = vadd.f32 0.0, %v2945
      %v2947 = vpop.f32.mrb[0].mxu0
      %2948 = vmatprep.mubr.f32.mxu0 0.0
      %2949 = vmatmul.mubr.f32.gmra.mrb[0].mxu0 %v2752
      %v2950 = vpop.f32.mrb[0].mxu0
      %v2951 = vadd.f32 0.0, %v2950
      %v2952 = vpop.f32.mrb[0].mxu0
      %2953 = vmatprep.mubr.f32.mxu0 0.0
      %2954 = vmatmul.mubr.f32.gmra.mrb[0].mxu0 %v2755
      %v2955 = vpop.f32.mrb[0].mxu0
      %v2956 = vadd.f32 0.0, %v2955
      %v2957 = vpop.f32.mrb[0].mxu0
      %2958 = vmatprep.mubr.f32.mxu0 0.0
      %2959 = vmatmul.mubr.f32.gmra.mrb[0].mxu0 %v2758
      %v2960 = vpop.f32.mrb[0].mxu0
      %v2961 = vadd.f32 0.0, %v2960
      %v2962 = vpop.f32.mrb[0].mxu0
      %2963 = vmatprep.mubr.f32.mxu0 0.0
      %2964 = vmatmul.mubr.f32.gmra.mrb[0].mxu0 %v2761
      %v2965 = vpop.f32.mrb[0].mxu0
      %v2966 = vadd.f32 0.0, %v2965
      %v2967 = vpop.f32.mrb[0].mxu0
      %2968 = vmatprep.mubr.f32.mxu0 0.0
      %2969 = vmatmul.mubr.f32.gmra.mrb[0].mxu0 %v2764
      %v2970 = vpop.f32.mrb[0].mxu0
      %v2971 = vadd.f32 0.0, %v2970
      %v2972 = vpop.f32.mrb[0].mxu0
      %2973 = vmatprep.mubr.f32.mxu0 0.0
      %2974 = vmatmul.mubr.f32.gmra.mrb[0].mxu0 %v2767
      %v2975 = vpop.f32.mrb[0].mxu0
      %v2976 = vadd.f32 0.0, %v2975
      %v2977 = vpop.f32.mrb[0].mxu0
      %2978 = vmatprep.mubr.f32.mxu0 0.0
      %2979 = vmatmul.mubr.f32.gmra.mrb[0].mxu0 %v2770
      %v2980 = vpop.f32.mrb[0].mxu0
      %v2981 = vadd.f32 0.0, %v2980
      %v2982 = vpop.f32.mrb[0].mxu0
      %2983 = vmatprep.mubr.f32.mxu0 0.0
      %2984 = vmatmul.mubr.f32.gmra.mrb[0].mxu0 %v2773
      %v2985 = vpop.f32.mrb[0].mxu0
      %v2986 = vadd.f32 0.0, %v2985
      %v2987 = vpop.f32.mrb[0].mxu0
      %2988 = vmatprep.mubr.f32.mxu0 0.0
      %2989 = vmatmul.mubr.f32.gmra.mrb[0].mxu0 %v2776
      %v2990 = vpop.f32.mrb[0].mxu0
      %v2991 = vadd.f32 0.0, %v2990
      %v2992 = vpop.f32.mrb[0].mxu0
      %2993 = vmatprep.mubr.f32.mxu0 0.0
      %2994 = vmatmul.mubr.f32.gmra.mrb[0].mxu0 %v2779
      %v2995 = vpop.f32.mrb[0].mxu0
      %v2996 = vadd.f32 0.0, %v2995
      %v2997 = vpop.f32.mrb[0].mxu0
      %2998 = vmatprep.mubr.f32.mxu0 0.0
      %2999 = vmatmul.mubr.f32.gmra.mrb[0].mxu0 %v2782
      %v3000 = vpop.f32.mrb[0].mxu0
      %v3001 = vadd.f32 0.0, %v3000
      %v3002 = vpop.f32.mrb[0].mxu0
      %3003 = vmatprep.mubr.f32.mxu0 0.0
      %3004 = vmatmul.mubr.f32.gmra.mrb[0].mxu0 %v2785
      %v3005 = vpop.f32.mrb[0].mxu0
      %v3006 = vadd.f32 0.0, %v3005
      %v3007 = vpop.f32.mrb[0].mxu0
      %3008 = vmatprep.mubr.f32.mxu0 0.0
      %3009 = vmatmul.mubr.f32.gmra.mrb[0].mxu0 %v2788
      %v3010 = vpop.f32.mrb[0].mxu0
      %v3011 = vadd.f32 0.0, %v3010
      %v3012 = vpop.f32.mrb[0].mxu0
      %3013 = vmatprep.mubr.f32.mxu0 0.0
      %3014 = vmatmul.mubr.f32.gmra.mrb[0].mxu0 %v2791
      %v3015 = vpop.f32.mrb[0].mxu0
      %v3016 = vadd.f32 0.0, %v3015
      %v3017 = vpop.f32.mrb[0].mxu0
      %3018 = vmatprep.mubr.f32.mxu0 0.0
      %3019 = vmatmul.mubr.f32.gmra.mrb[0].mxu0 %v2794
      %v3020 = vpop.f32.mrb[0].mxu0
      %v3021 = vadd.f32 0.0, %v3020
      %v3022 = vpop.f32.mrb[0].mxu0
      %3023 = vdwg.mxu0
      %v3024 = vadd.f32 %v2634, %v2866
      %v3025 = vadd.f32 %v2635, %v2871
      %v3026 = vadd.f32 %v2636, %v2876
      %v3027 = vadd.f32 %v2637, %v2881
      %v3028 = vadd.f32 %v2638, %v2886
      %v3029 = vadd.f32 %v2639, %v2891
      %v3030 = vadd.f32 %v2640, %v2896
      %v3031 = vadd.f32 %v2641, %v2901
      %v3032 = vadd.f32 %v2642, %v2906
      %v3033 = vadd.f32 %v2643, %v2911
      %v3034 = vadd.f32 %v2644, %v2916
      %v3035 = vadd.f32 %v2645, %v2921
      %v3036 = vadd.f32 %v2646, %v2926
      %v3037 = vadd.f32 %v2647, %v2931
      %v3038 = vadd.f32 %v2648, %v2936
      %v3039 = vadd.f32 %v2649, %v2941
      %v3040 = vadd.f32 %v2650, %v2946
      %v3041 = vadd.f32 %v2651, %v2951
      %v3042 = vadd.f32 %v2652, %v2956
      %v3043 = vadd.f32 %v2653, %v2961
      %v3044 = vadd.f32 %v2654, %v2966
      %v3045 = vadd.f32 %v2655, %v2971
      %v3046 = vadd.f32 %v2656, %v2976
      %v3047 = vadd.f32 %v2657, %v2981
      %v3048 = vadd.f32 %v2658, %v2986
      %v3049 = vadd.f32 %v2659, %v2991
      %v3050 = vadd.f32 %v2660, %v2996
      %v3051 = vadd.f32 %v2661, %v3001
      %v3052 = vadd.f32 %v2662, %v3006
      %v3053 = vadd.f32 %v2663, %v3011
      %v3054 = vadd.f32 %v2664, %v3016
      %v3055 = vadd.f32 %v2665, %v3021
      %v3056 = vld [vmem:[#allocation2 + $0x12] sm:$0xff]
      %v3057 = vld [vmem:[#allocation2 + $0x1a] sm:$0xff]
      %v3058 = vld [vmem:[#allocation2 + $0x22] sm:$0xff]
      %v3059 = vld [vmem:[#allocation2 + $0x2a] sm:$0xff]
      %v3060 = vld [vmem:[#allocation2 + $0x32] sm:$0xff]
      %v3061 = vld [vmem:[#allocation2 + $0x3a] sm:$0xff]
      %v3062 = vld [vmem:[#allocation2 + $0x42] sm:$0xff]
      %v3063 = vld [vmem:[#allocation2 + $0x4a] sm:$0xff]
      %v3064 = vld [vmem:[#allocation2 + $0x52] sm:$0xff]
      %v3065 = vld [vmem:[#allocation2 + $0x5a] sm:$0xff]
      %v3066 = vld [vmem:[#allocation2 + $0x62] sm:$0xff]
      %v3067 = vld [vmem:[#allocation2 + $0x6a] sm:$0xff]
      %v3068 = vld [vmem:[#allocation2 + $0x72] sm:$0xff]
      %v3069 = vld [vmem:[#allocation2 + $0x7a] sm:$0xff]
      %v3070 = vld [vmem:[#allocation2 + $0x82] sm:$0xff]
      %v3071 = vld [vmem:[#allocation2 + $0x8a] sm:$0xff]
      %v3072 = vld [vmem:[#allocation2 + $0x92] sm:$0xff]
      %v3073 = vld [vmem:[#allocation2 + $0x9a] sm:$0xff]
      %v3074 = vld [vmem:[#allocation2 + $0xa2] sm:$0xff]
      %v3075 = vld [vmem:[#allocation2 + $0xaa] sm:$0xff]
      %v3076 = vld [vmem:[#allocation2 + $0xb2] sm:$0xff]
      %v3077 = vld [vmem:[#allocation2 + $0xba] sm:$0xff]
      %v3078 = vld [vmem:[#allocation2 + $0xc2] sm:$0xff]
      %v3079 = vld [vmem:[#allocation2 + $0xca] sm:$0xff]
      %v3080 = vld [vmem:[#allocation2 + $0xd2] sm:$0xff]
      %v3081 = vld [vmem:[#allocation2 + $0xda] sm:$0xff]
      %v3082 = vld [vmem:[#allocation2 + $0xe2] sm:$0xff]
      %v3083 = vld [vmem:[#allocation2 + $0xea] sm:$0xff]
      %v3084 = vld [vmem:[#allocation2 + $0xf2] sm:$0xff]
      %v3085 = vld [vmem:[#allocation2 + $0xfa] sm:$0xff]
      %v3086 = vld [vmem:[#allocation2 + $0x102] sm:$0xff]
      %v3087 = vld [vmem:[#allocation2 + $0x10a] sm:$0xff]
      %v3088 = vsel %vm1822, %v3056, 0.0
      %v3089 = vsel %vm1823, %v3057, 0.0
      %v3090 = vsel %vm1824, %v3058, 0.0
      %v3091 = vsel %vm1825, %v3059, 0.0
      %v3092 = vsel %vm1826, %v3060, 0.0
      %v3093 = vsel %vm1827, %v3061, 0.0
      %v3094 = vsel %vm1828, %v3062, 0.0
      %v3095 = vsel %vm1829, %v3063, 0.0
      %v3096 = vsel %vm1830, %v3064, 0.0
      %v3097 = vsel %vm1831, %v3065, 0.0
      %v3098 = vsel %vm1832, %v3066, 0.0
      %v3099 = vsel %vm1833, %v3067, 0.0
      %v3100 = vsel %vm1834, %v3068, 0.0
      %v3101 = vsel %vm1835, %v3069, 0.0
      %v3102 = vsel %vm1836, %v3070, 0.0
      %v3103 = vsel %vm1837, %v3071, 0.0
      %v3104 = vsel %vm1838, %v3072, 0.0
      %v3105 = vsel %vm1839, %v3073, 0.0
      %v3106 = vsel %vm1840, %v3074, 0.0
      %v3107 = vsel %vm1841, %v3075, 0.0
      %v3108 = vsel %vm1842, %v3076, 0.0
      %v3109 = vsel %vm1843, %v3077, 0.0
      %v3110 = vsel %vm1844, %v3078, 0.0
      %v3111 = vsel %vm1845, %v3079, 0.0
      %v3112 = vsel %vm1846, %v3080, 0.0
      %v3113 = vsel %vm1847, %v3081, 0.0
      %v3114 = vsel %vm1848, %v3082, 0.0
      %v3115 = vsel %vm1849, %v3083, 0.0
      %v3116 = vsel %vm1850, %v3084, 0.0
      %v3117 = vsel %vm1851, %v3085, 0.0
      %v3118 = vsel %vm1852, %v3086, 0.0
      %v3119 = vsel %vm1853, %v3087, 0.0
      %s3120 = scalar_lea.vmem %s2, 10
      %v3121 = vld [vmem:[%s3120] sm:$0x3]
      %v3123 = vsel %vm737, %v3088, 0
      %v3126 = vsel %vm737, %v3089, 0
      %v3129 = vsel %vm737, %v3090, 0
      %v3132 = vsel %vm737, %v3091, 0
      %v3135 = vsel %vm737, %v3092, 0
      %v3138 = vsel %vm737, %v3093, 0
      %v3141 = vsel %vm737, %v3094, 0
      %v3144 = vsel %vm737, %v3095, 0
      %v3147 = vsel %vm737, %v3096, 0
      %v3150 = vsel %vm737, %v3097, 0
      %v3153 = vsel %vm737, %v3098, 0
      %v3156 = vsel %vm737, %v3099, 0
      %v3159 = vsel %vm737, %v3100, 0
      %v3162 = vsel %vm737, %v3101, 0
      %v3165 = vsel %vm737, %v3102, 0
      %v3168 = vsel %vm737, %v3103, 0
      %v3171 = vsel %vm737, %v3104, 0
      %v3174 = vsel %vm737, %v3105, 0
      %v3177 = vsel %vm737, %v3106, 0
      %v3180 = vsel %vm737, %v3107, 0
      %v3183 = vsel %vm737, %v3108, 0
      %v3186 = vsel %vm737, %v3109, 0
      %v3189 = vsel %vm737, %v3110, 0
      %v3192 = vsel %vm737, %v3111, 0
      %v3195 = vsel %vm737, %v3112, 0
      %v3198 = vsel %vm737, %v3113, 0
      %v3201 = vsel %vm737, %v3114, 0
      %v3204 = vsel %vm737, %v3115, 0
      %v3207 = vsel %vm737, %v3116, 0
      %v3210 = vsel %vm737, %v3117, 0
      %v3213 = vsel %vm737, %v3118, 0
      %v3216 = vsel %vm737, %v3119, 0
      %v3219 = vsel %vm1107, %v3121, 0
      %3221 = vmatprep.subr.mxu0 0.0
      %3222 = vmatpush1.msra.mxu0 %v3219
      %3223 = vmatprep.subr.mxu0 0.0
      %3224 = vmatpush1.msra.mxu0 0.0
      %3225 = vmatprep.subr.mxu0 0.0
      %3226 = vmatpush1.msra.mxu0 0.0
      %3227 = vmatprep.subr.mxu0 0.0
      %3228 = vmatpush1.msra.mxu0 0.0
      %3229 = vmatprep.subr.mxu0 0.0
      %3230 = vmatpush1.msra.mxu0 0.0
      %3231 = vmatprep.subr.mxu0 0.0
      %3232 = vmatpush1.msra.mxu0 0.0
      %3233 = vmatprep.subr.mxu0 0.0
      %3234 = vmatpush1.msra.mxu0 0.0
      %3235 = vmatprep.subr.mxu0 0.0
      %3236 = vmatpush1.msra.mxu0 0.0
      %3237 = vmatprep.subr.mxu0 0.0
      %3238 = vmatpush1.msra.mxu0 0.0
      %3239 = vmatprep.subr.mxu0 0.0
      %3240 = vmatpush1.msra.mxu0 0.0
      %3241 = vmatprep.subr.mxu0 0.0
      %3242 = vmatpush1.msra.mxu0 0.0
      %3243 = vmatprep.subr.mxu0 0.0
      %3244 = vmatpush1.msra.mxu0 0.0
      %3245 = vmatprep.subr.mxu0 0.0
      %3246 = vmatpush1.msra.mxu0 0.0
      %3247 = vmatprep.subr.mxu0 0.0
      %3248 = vmatpush1.msra.mxu0 0.0
      %3249 = vmatprep.subr.mxu0 0.0
      %3250 = vmatpush1.msra.mxu0 0.0
      %3251 = vmatprep.subr.mxu0 0.0
      %3252 = vmatpush1.msra.mxu0 0.0
      %3253 = vmatprep.subr.mxu0 0.0
      %3254 = vmatpush1.msra.mxu0 0.0
      %3255 = vmatprep.subr.mxu0 0.0
      %3256 = vmatpush1.msra.mxu0 0.0
      %3257 = vmatprep.subr.mxu0 0.0
      %3258 = vmatpush1.msra.mxu0 0.0
      %3259 = vmatprep.subr.mxu0 0.0
      %3260 = vmatpush1.msra.mxu0 0.0
      %3261 = vmatprep.subr.mxu0 0.0
      %3262 = vmatpush1.msra.mxu0 0.0
      %3263 = vmatprep.subr.mxu0 0.0
      %3264 = vmatpush1.msra.mxu0 0.0
      %3265 = vmatprep.subr.mxu0 0.0
      %3266 = vmatpush1.msra.mxu0 0.0
      %3267 = vmatprep.subr.mxu0 0.0
      %3268 = vmatpush1.msra.mxu0 0.0
      %3269 = vmatprep.subr.mxu0 0.0
      %3270 = vmatpush1.msra.mxu0 0.0
      %3271 = vmatprep.subr.mxu0 0.0
      %3272 = vmatpush1.msra.mxu0 0.0
      %3273 = vmatprep.subr.mxu0 0.0
      %3274 = vmatpush1.msra.mxu0 0.0
      %3275 = vmatprep.subr.mxu0 0.0
      %3276 = vmatpush1.msra.mxu0 0.0
      %3277 = vmatprep.subr.mxu0 0.0
      %3278 = vmatpush1.msra.mxu0 0.0
      %3279 = vmatprep.subr.mxu0 0.0
      %3280 = vmatpush1.msra.mxu0 0.0
      %3281 = vmatprep.subr.mxu0 0.0
      %3282 = vmatpush1.msra.mxu0 0.0
      %3283 = vmatprep.subr.mxu0 0.0
      %3284 = vmatpush1.msra.mxu0 0.0
      %3285 = vmatprep.mubr.f32.mxu0 0.0
      %3286 = vmatmul.mubr.f32.gmra.mrb[0].mxu0 %v3123
      %v3287 = vpop.f32.mrb[0].mxu0
      %v3288 = vadd.f32 0.0, %v3287
      %v3289 = vpop.f32.mrb[0].mxu0
      %3290 = vmatprep.mubr.f32.mxu0 0.0
      %3291 = vmatmul.mubr.f32.gmra.mrb[0].mxu0 %v3126
      %v3292 = vpop.f32.mrb[0].mxu0
      %v3293 = vadd.f32 0.0, %v3292
      %v3294 = vpop.f32.mrb[0].mxu0
      %3295 = vmatprep.mubr.f32.mxu0 0.0
      %3296 = vmatmul.mubr.f32.gmra.mrb[0].mxu0 %v3129
      %v3297 = vpop.f32.mrb[0].mxu0
      %v3298 = vadd.f32 0.0, %v3297
      %v3299 = vpop.f32.mrb[0].mxu0
      %3300 = vmatprep.mubr.f32.mxu0 0.0
      %3301 = vmatmul.mubr.f32.gmra.mrb[0].mxu0 %v3132
      %v3302 = vpop.f32.mrb[0].mxu0
      %v3303 = vadd.f32 0.0, %v3302
      %v3304 = vpop.f32.mrb[0].mxu0
      %3305 = vmatprep.mubr.f32.mxu0 0.0
      %3306 = vmatmul.mubr.f32.gmra.mrb[0].mxu0 %v3135
      %v3307 = vpop.f32.mrb[0].mxu0
      %v3308 = vadd.f32 0.0, %v3307
      %v3309 = vpop.f32.mrb[0].mxu0
      %3310 = vmatprep.mubr.f32.mxu0 0.0
      %3311 = vmatmul.mubr.f32.gmra.mrb[0].mxu0 %v3138
      %v3312 = vpop.f32.mrb[0].mxu0
      %v3313 = vadd.f32 0.0, %v3312
      %v3314 = vpop.f32.mrb[0].mxu0
      %3315 = vmatprep.mubr.f32.mxu0 0.0
      %3316 = vmatmul.mubr.f32.gmra.mrb[0].mxu0 %v3141
      %v3317 = vpop.f32.mrb[0].mxu0
      %v3318 = vadd.f32 0.0, %v3317
      %v3319 = vpop.f32.mrb[0].mxu0
      %3320 = vmatprep.mubr.f32.mxu0 0.0
      %3321 = vmatmul.mubr.f32.gmra.mrb[0].mxu0 %v3144
      %v3322 = vpop.f32.mrb[0].mxu0
      %v3323 = vadd.f32 0.0, %v3322
      %v3324 = vpop.f32.mrb[0].mxu0
      %3325 = vmatprep.mubr.f32.mxu0 0.0
      %3326 = vmatmul.mubr.f32.gmra.mrb[0].mxu0 %v3147
      %v3327 = vpop.f32.mrb[0].mxu0
      %v3328 = vadd.f32 0.0, %v3327
      %v3329 = vpop.f32.mrb[0].mxu0
      %3330 = vmatprep.mubr.f32.mxu0 0.0
      %3331 = vmatmul.mubr.f32.gmra.mrb[0].mxu0 %v3150
      %v3332 = vpop.f32.mrb[0].mxu0
      %v3333 = vadd.f32 0.0, %v3332
      %v3334 = vpop.f32.mrb[0].mxu0
      %3335 = vmatprep.mubr.f32.mxu0 0.0
      %3336 = vmatmul.mubr.f32.gmra.mrb[0].mxu0 %v3153
      %v3337 = vpop.f32.mrb[0].mxu0
      %v3338 = vadd.f32 0.0, %v3337
      %v3339 = vpop.f32.mrb[0].mxu0
      %3340 = vmatprep.mubr.f32.mxu0 0.0
      %3341 = vmatmul.mubr.f32.gmra.mrb[0].mxu0 %v3156
      %v3342 = vpop.f32.mrb[0].mxu0
      %v3343 = vadd.f32 0.0, %v3342
      %v3344 = vpop.f32.mrb[0].mxu0
      %3345 = vmatprep.mubr.f32.mxu0 0.0
      %3346 = vmatmul.mubr.f32.gmra.mrb[0].mxu0 %v3159
      %v3347 = vpop.f32.mrb[0].mxu0
      %v3348 = vadd.f32 0.0, %v3347
      %v3349 = vpop.f32.mrb[0].mxu0
      %3350 = vmatprep.mubr.f32.mxu0 0.0
      %3351 = vmatmul.mubr.f32.gmra.mrb[0].mxu0 %v3162
      %v3352 = vpop.f32.mrb[0].mxu0
      %v3353 = vadd.f32 0.0, %v3352
      %v3354 = vpop.f32.mrb[0].mxu0
      %3355 = vmatprep.mubr.f32.mxu0 0.0
      %3356 = vmatmul.mubr.f32.gmra.mrb[0].mxu0 %v3165
      %v3357 = vpop.f32.mrb[0].mxu0
      %v3358 = vadd.f32 0.0, %v3357
      %v3359 = vpop.f32.mrb[0].mxu0
      %3360 = vmatprep.mubr.f32.mxu0 0.0
      %3361 = vmatmul.mubr.f32.gmra.mrb[0].mxu0 %v3168
      %v3362 = vpop.f32.mrb[0].mxu0
      %v3363 = vadd.f32 0.0, %v3362
      %v3364 = vpop.f32.mrb[0].mxu0
      %3365 = vmatprep.mubr.f32.mxu0 0.0
      %3366 = vmatmul.mubr.f32.gmra.mrb[0].mxu0 %v3171
      %v3367 = vpop.f32.mrb[0].mxu0
      %v3368 = vadd.f32 0.0, %v3367
      %v3369 = vpop.f32.mrb[0].mxu0
      %3370 = vmatprep.mubr.f32.mxu0 0.0
      %3371 = vmatmul.mubr.f32.gmra.mrb[0].mxu0 %v3174
      %v3372 = vpop.f32.mrb[0].mxu0
      %v3373 = vadd.f32 0.0, %v3372
      %v3374 = vpop.f32.mrb[0].mxu0
      %3375 = vmatprep.mubr.f32.mxu0 0.0
      %3376 = vmatmul.mubr.f32.gmra.mrb[0].mxu0 %v3177
      %v3377 = vpop.f32.mrb[0].mxu0
      %v3378 = vadd.f32 0.0, %v3377
      %v3379 = vpop.f32.mrb[0].mxu0
      %3380 = vmatprep.mubr.f32.mxu0 0.0
      %3381 = vmatmul.mubr.f32.gmra.mrb[0].mxu0 %v3180
      %v3382 = vpop.f32.mrb[0].mxu0
      %v3383 = vadd.f32 0.0, %v3382
      %v3384 = vpop.f32.mrb[0].mxu0
      %3385 = vmatprep.mubr.f32.mxu0 0.0
      %3386 = vmatmul.mubr.f32.gmra.mrb[0].mxu0 %v3183
      %v3387 = vpop.f32.mrb[0].mxu0
      %v3388 = vadd.f32 0.0, %v3387
      %v3389 = vpop.f32.mrb[0].mxu0
      %3390 = vmatprep.mubr.f32.mxu0 0.0
      %3391 = vmatmul.mubr.f32.gmra.mrb[0].mxu0 %v3186
      %v3392 = vpop.f32.mrb[0].mxu0
      %v3393 = vadd.f32 0.0, %v3392
      %v3394 = vpop.f32.mrb[0].mxu0
      %3395 = vmatprep.mubr.f32.mxu0 0.0
      %3396 = vmatmul.mubr.f32.gmra.mrb[0].mxu0 %v3189
      %v3397 = vpop.f32.mrb[0].mxu0
      %v3398 = vadd.f32 0.0, %v3397
      %v3399 = vpop.f32.mrb[0].mxu0
      %3400 = vmatprep.mubr.f32.mxu0 0.0
      %3401 = vmatmul.mubr.f32.gmra.mrb[0].mxu0 %v3192
      %v3402 = vpop.f32.mrb[0].mxu0
      %v3403 = vadd.f32 0.0, %v3402
      %v3404 = vpop.f32.mrb[0].mxu0
      %3405 = vmatprep.mubr.f32.mxu0 0.0
      %3406 = vmatmul.mubr.f32.gmra.mrb[0].mxu0 %v3195
      %v3407 = vpop.f32.mrb[0].mxu0
      %v3408 = vadd.f32 0.0, %v3407
      %v3409 = vpop.f32.mrb[0].mxu0
      %3410 = vmatprep.mubr.f32.mxu0 0.0
      %3411 = vmatmul.mubr.f32.gmra.mrb[0].mxu0 %v3198
      %v3412 = vpop.f32.mrb[0].mxu0
      %v3413 = vadd.f32 0.0, %v3412
      %v3414 = vpop.f32.mrb[0].mxu0
      %3415 = vmatprep.mubr.f32.mxu0 0.0
      %3416 = vmatmul.mubr.f32.gmra.mrb[0].mxu0 %v3201
      %v3417 = vpop.f32.mrb[0].mxu0
      %v3418 = vadd.f32 0.0, %v3417
      %v3419 = vpop.f32.mrb[0].mxu0
      %3420 = vmatprep.mubr.f32.mxu0 0.0
      %3421 = vmatmul.mubr.f32.gmra.mrb[0].mxu0 %v3204
      %v3422 = vpop.f32.mrb[0].mxu0
      %v3423 = vadd.f32 0.0, %v3422
      %v3424 = vpop.f32.mrb[0].mxu0
      %3425 = vmatprep.mubr.f32.mxu0 0.0
      %3426 = vmatmul.mubr.f32.gmra.mrb[0].mxu0 %v3207
      %v3427 = vpop.f32.mrb[0].mxu0
      %v3428 = vadd.f32 0.0, %v3427
      %v3429 = vpop.f32.mrb[0].mxu0
      %3430 = vmatprep.mubr.f32.mxu0 0.0
      %3431 = vmatmul.mubr.f32.gmra.mrb[0].mxu0 %v3210
      %v3432 = vpop.f32.mrb[0].mxu0
      %v3433 = vadd.f32 0.0, %v3432
      %v3434 = vpop.f32.mrb[0].mxu0
      %3435 = vmatprep.mubr.f32.mxu0 0.0
      %3436 = vmatmul.mubr.f32.gmra.mrb[0].mxu0 %v3213
      %v3437 = vpop.f32.mrb[0].mxu0
      %v3438 = vadd.f32 0.0, %v3437
      %v3439 = vpop.f32.mrb[0].mxu0
      %3440 = vmatprep.mubr.f32.mxu0 0.0
      %3441 = vmatmul.mubr.f32.gmra.mrb[0].mxu0 %v3216
      %v3442 = vpop.f32.mrb[0].mxu0
      %v3443 = vadd.f32 0.0, %v3442
      %v3444 = vpop.f32.mrb[0].mxu0
      %3445 = vdwg.mxu0
      %v3446 = vadd.f32 %v3024, %v3288
      %v3447 = vadd.f32 %v3025, %v3293
      %v3448 = vadd.f32 %v3026, %v3298
      %v3449 = vadd.f32 %v3027, %v3303
      %v3450 = vadd.f32 %v3028, %v3308
      %v3451 = vadd.f32 %v3029, %v3313
      %v3452 = vadd.f32 %v3030, %v3318
      %v3453 = vadd.f32 %v3031, %v3323
      %v3454 = vadd.f32 %v3032, %v3328
      %v3455 = vadd.f32 %v3033, %v3333
      %v3456 = vadd.f32 %v3034, %v3338
      %v3457 = vadd.f32 %v3035, %v3343
      %v3458 = vadd.f32 %v3036, %v3348
      %v3459 = vadd.f32 %v3037, %v3353
      %v3460 = vadd.f32 %v3038, %v3358
      %v3461 = vadd.f32 %v3039, %v3363
      %v3462 = vadd.f32 %v3040, %v3368
      %v3463 = vadd.f32 %v3041, %v3373
      %v3464 = vadd.f32 %v3042, %v3378
      %v3465 = vadd.f32 %v3043, %v3383
      %v3466 = vadd.f32 %v3044, %v3388
      %v3467 = vadd.f32 %v3045, %v3393
      %v3468 = vadd.f32 %v3046, %v3398
      %v3469 = vadd.f32 %v3047, %v3403
      %v3470 = vadd.f32 %v3048, %v3408
      %v3471 = vadd.f32 %v3049, %v3413
      %v3472 = vadd.f32 %v3050, %v3418
      %v3473 = vadd.f32 %v3051, %v3423
      %v3474 = vadd.f32 %v3052, %v3428
      %v3475 = vadd.f32 %v3053, %v3433
      %v3476 = vadd.f32 %v3054, %v3438
      %v3477 = vadd.f32 %v3055, %v3443
      %v3478 = vld [vmem:[#allocation2 + $0x20] sm:$0xff]
      %v3479 = vld [vmem:[#allocation2 + $0x28] sm:$0xff]
      %v3480 = vld [vmem:[#allocation2 + $0x30] sm:$0xff]
      %v3481 = vld [vmem:[#allocation2 + $0x38] sm:$0xff]
      %v3482 = vld [vmem:[#allocation2 + $0x40] sm:$0xff]
      %v3483 = vld [vmem:[#allocation2 + $0x48] sm:$0xff]
      %v3484 = vld [vmem:[#allocation2 + $0x50] sm:$0xff]
      %v3485 = vld [vmem:[#allocation2 + $0x58] sm:$0xff]
      %v3486 = vld [vmem:[#allocation2 + $0x60] sm:$0xff]
      %v3487 = vld [vmem:[#allocation2 + $0x68] sm:$0xff]
      %v3488 = vld [vmem:[#allocation2 + $0x70] sm:$0xff]
      %v3489 = vld [vmem:[#allocation2 + $0x78] sm:$0xff]
      %v3490 = vld [vmem:[#allocation2 + $0x80] sm:$0xff]
      %v3491 = vld [vmem:[#allocation2 + $0x88] sm:$0xff]
      %v3492 = vld [vmem:[#allocation2 + $0x90] sm:$0xff]
      %v3493 = vld [vmem:[#allocation2 + $0x98] sm:$0xff]
      %v3494 = vld [vmem:[#allocation2 + $0xa0] sm:$0xff]
      %v3495 = vld [vmem:[#allocation2 + $0xa8] sm:$0xff]
      %v3496 = vld [vmem:[#allocation2 + $0xb0] sm:$0xff]
      %v3497 = vld [vmem:[#allocation2 + $0xb8] sm:$0xff]
      %v3498 = vld [vmem:[#allocation2 + $0xc0] sm:$0xff]
      %v3499 = vld [vmem:[#allocation2 + $0xc8] sm:$0xff]
      %v3500 = vld [vmem:[#allocation2 + $0xd0] sm:$0xff]
      %v3501 = vld [vmem:[#allocation2 + $0xd8] sm:$0xff]
      %v3502 = vld [vmem:[#allocation2 + $0xe0] sm:$0xff]
      %v3503 = vld [vmem:[#allocation2 + $0xe8] sm:$0xff]
      %v3504 = vld [vmem:[#allocation2 + $0xf0] sm:$0xff]
      %v3505 = vld [vmem:[#allocation2 + $0xf8] sm:$0xff]
      %v3506 = vld [vmem:[#allocation2 + $0x100] sm:$0xff]
      %v3507 = vld [vmem:[#allocation2 + $0x108] sm:$0xff]
      %v3508 = vld [vmem:[#allocation2 + $0x110] sm:$0xff]
      %v3509 = vld [vmem:[#allocation2 + $0x118] sm:$0xff]
      %v3510 = vsel %vm946, %v3478, 0.0
      %v3511 = vsel %vm947, %v3479, 0.0
      %v3512 = vsel %vm948, %v3480, 0.0
      %v3513 = vsel %vm949, %v3481, 0.0
      %v3514 = vsel %vm950, %v3482, 0.0
      %v3515 = vsel %vm951, %v3483, 0.0
      %v3516 = vsel %vm952, %v3484, 0.0
      %v3517 = vsel %vm953, %v3485, 0.0
      %v3518 = vsel %vm954, %v3486, 0.0
      %v3519 = vsel %vm955, %v3487, 0.0
      %v3520 = vsel %vm956, %v3488, 0.0
      %v3521 = vsel %vm957, %v3489, 0.0
      %v3522 = vsel %vm958, %v3490, 0.0
      %v3523 = vsel %vm959, %v3491, 0.0
      %v3524 = vsel %vm960, %v3492, 0.0
      %v3525 = vsel %vm961, %v3493, 0.0
      %v3526 = vsel %vm962, %v3494, 0.0
      %v3527 = vsel %vm963, %v3495, 0.0
      %v3528 = vsel %vm964, %v3496, 0.0
      %v3529 = vsel %vm965, %v3497, 0.0
      %v3530 = vsel %vm966, %v3498, 0.0
      %v3531 = vsel %vm967, %v3499, 0.0
      %v3532 = vsel %vm968, %v3500, 0.0
      %v3533 = vsel %vm969, %v3501, 0.0
      %v3534 = vsel %vm970, %v3502, 0.0
      %v3535 = vsel %vm971, %v3503, 0.0
      %v3536 = vsel %vm972, %v3504, 0.0
      %v3537 = vsel %vm973, %v3505, 0.0
      %v3538 = vsel %vm974, %v3506, 0.0
      %v3539 = vsel %vm975, %v3507, 0.0
      %v3540 = vsel %vm976, %v3508, 0.0
      %v3541 = vsel %vm977, %v3509, 0.0
      %s3542 = scalar_lea.vmem %s2, 12
      %v3543 = vld [vmem:[%s3542] sm:$0x3]
      %v3545 = vsel %vm737, %v3510, 0
      %v3548 = vsel %vm737, %v3511, 0
      %v3551 = vsel %vm737, %v3512, 0
      %v3554 = vsel %vm737, %v3513, 0
      %v3557 = vsel %vm737, %v3514, 0
      %v3560 = vsel %vm737, %v3515, 0
      %v3563 = vsel %vm737, %v3516, 0
      %v3566 = vsel %vm737, %v3517, 0
      %v3569 = vsel %vm737, %v3518, 0
      %v3572 = vsel %vm737, %v3519, 0
      %v3575 = vsel %vm737, %v3520, 0
      %v3578 = vsel %vm737, %v3521, 0
      %v3581 = vsel %vm737, %v3522, 0
      %v3584 = vsel %vm737, %v3523, 0
      %v3587 = vsel %vm737, %v3524, 0
      %v3590 = vsel %vm737, %v3525, 0
      %v3593 = vsel %vm737, %v3526, 0
      %v3596 = vsel %vm737, %v3527, 0
      %v3599 = vsel %vm737, %v3528, 0
      %v3602 = vsel %vm737, %v3529, 0
      %v3605 = vsel %vm737, %v3530, 0
      %v3608 = vsel %vm737, %v3531, 0
      %v3611 = vsel %vm737, %v3532, 0
      %v3614 = vsel %vm737, %v3533, 0
      %v3617 = vsel %vm737, %v3534, 0
      %v3620 = vsel %vm737, %v3535, 0
      %v3623 = vsel %vm737, %v3536, 0
      %v3626 = vsel %vm737, %v3537, 0
      %v3629 = vsel %vm737, %v3538, 0
      %v3632 = vsel %vm737, %v3539, 0
      %v3635 = vsel %vm737, %v3540, 0
      %v3638 = vsel %vm737, %v3541, 0
      %v3641 = vsel %vm1107, %v3543, 0
      %3643 = vmatprep.subr.mxu0 0.0
      %3644 = vmatpush1.msra.mxu0 %v3641
      %3645 = vmatprep.subr.mxu0 0.0
      %3646 = vmatpush1.msra.mxu0 0.0
      %3647 = vmatprep.subr.mxu0 0.0
      %3648 = vmatpush1.msra.mxu0 0.0
      %3649 = vmatprep.subr.mxu0 0.0
      %3650 = vmatpush1.msra.mxu0 0.0
      %3651 = vmatprep.subr.mxu0 0.0
      %3652 = vmatpush1.msra.mxu0 0.0
      %3653 = vmatprep.subr.mxu0 0.0
      %3654 = vmatpush1.msra.mxu0 0.0
      %3655 = vmatprep.subr.mxu0 0.0
      %3656 = vmatpush1.msra.mxu0 0.0
      %3657 = vmatprep.subr.mxu0 0.0
      %3658 = vmatpush1.msra.mxu0 0.0
      %3659 = vmatprep.subr.mxu0 0.0
      %3660 = vmatpush1.msra.mxu0 0.0
      %3661 = vmatprep.subr.mxu0 0.0
      %3662 = vmatpush1.msra.mxu0 0.0
      %3663 = vmatprep.subr.mxu0 0.0
      %3664 = vmatpush1.msra.mxu0 0.0
      %3665 = vmatprep.subr.mxu0 0.0
      %3666 = vmatpush1.msra.mxu0 0.0
      %3667 = vmatprep.subr.mxu0 0.0
      %3668 = vmatpush1.msra.mxu0 0.0
      %3669 = vmatprep.subr.mxu0 0.0
      %3670 = vmatpush1.msra.mxu0 0.0
      %3671 = vmatprep.subr.mxu0 0.0
      %3672 = vmatpush1.msra.mxu0 0.0
      %3673 = vmatprep.subr.mxu0 0.0
      %3674 = vmatpush1.msra.mxu0 0.0
      %3675 = vmatprep.subr.mxu0 0.0
      %3676 = vmatpush1.msra.mxu0 0.0
      %3677 = vmatprep.subr.mxu0 0.0
      %3678 = vmatpush1.msra.mxu0 0.0
      %3679 = vmatprep.subr.mxu0 0.0
      %3680 = vmatpush1.msra.mxu0 0.0
      %3681 = vmatprep.subr.mxu0 0.0
      %3682 = vmatpush1.msra.mxu0 0.0
      %3683 = vmatprep.subr.mxu0 0.0
      %3684 = vmatpush1.msra.mxu0 0.0
      %3685 = vmatprep.subr.mxu0 0.0
      %3686 = vmatpush1.msra.mxu0 0.0
      %3687 = vmatprep.subr.mxu0 0.0
      %3688 = vmatpush1.msra.mxu0 0.0
      %3689 = vmatprep.subr.mxu0 0.0
      %3690 = vmatpush1.msra.mxu0 0.0
      %3691 = vmatprep.subr.mxu0 0.0
      %3692 = vmatpush1.msra.mxu0 0.0
      %3693 = vmatprep.subr.mxu0 0.0
      %3694 = vmatpush1.msra.mxu0 0.0
      %3695 = vmatprep.subr.mxu0 0.0
      %3696 = vmatpush1.msra.mxu0 0.0
      %3697 = vmatprep.subr.mxu0 0.0
      %3698 = vmatpush1.msra.mxu0 0.0
      %3699 = vmatprep.subr.mxu0 0.0
      %3700 = vmatpush1.msra.mxu0 0.0
      %3701 = vmatprep.subr.mxu0 0.0
      %3702 = vmatpush1.msra.mxu0 0.0
      %3703 = vmatprep.subr.mxu0 0.0
      %3704 = vmatpush1.msra.mxu0 0.0
      %3705 = vmatprep.subr.mxu0 0.0
      %3706 = vmatpush1.msra.mxu0 0.0
      %3707 = vmatprep.mubr.f32.mxu0 0.0
      %3708 = vmatmul.mubr.f32.gmra.mrb[0].mxu0 %v3545
      %v3709 = vpop.f32.mrb[0].mxu0
      %v3710 = vadd.f32 0.0, %v3709
      %v3711 = vpop.f32.mrb[0].mxu0
      %3712 = vmatprep.mubr.f32.mxu0 0.0
      %3713 = vmatmul.mubr.f32.gmra.mrb[0].mxu0 %v3548
      %v3714 = vpop.f32.mrb[0].mxu0
      %v3715 = vadd.f32 0.0, %v3714
      %v3716 = vpop.f32.mrb[0].mxu0
      %3717 = vmatprep.mubr.f32.mxu0 0.0
      %3718 = vmatmul.mubr.f32.gmra.mrb[0].mxu0 %v3551
      %v3719 = vpop.f32.mrb[0].mxu0
      %v3720 = vadd.f32 0.0, %v3719
      %v3721 = vpop.f32.mrb[0].mxu0
      %3722 = vmatprep.mubr.f32.mxu0 0.0
      %3723 = vmatmul.mubr.f32.gmra.mrb[0].mxu0 %v3554
      %v3724 = vpop.f32.mrb[0].mxu0
      %v3725 = vadd.f32 0.0, %v3724
      %v3726 = vpop.f32.mrb[0].mxu0
      %3727 = vmatprep.mubr.f32.mxu0 0.0
      %3728 = vmatmul.mubr.f32.gmra.mrb[0].mxu0 %v3557
      %v3729 = vpop.f32.mrb[0].mxu0
      %v3730 = vadd.f32 0.0, %v3729
      %v3731 = vpop.f32.mrb[0].mxu0
      %3732 = vmatprep.mubr.f32.mxu0 0.0
      %3733 = vmatmul.mubr.f32.gmra.mrb[0].mxu0 %v3560
      %v3734 = vpop.f32.mrb[0].mxu0
      %v3735 = vadd.f32 0.0, %v3734
      %v3736 = vpop.f32.mrb[0].mxu0
      %3737 = vmatprep.mubr.f32.mxu0 0.0
      %3738 = vmatmul.mubr.f32.gmra.mrb[0].mxu0 %v3563
      %v3739 = vpop.f32.mrb[0].mxu0
      %v3740 = vadd.f32 0.0, %v3739
      %v3741 = vpop.f32.mrb[0].mxu0
      %3742 = vmatprep.mubr.f32.mxu0 0.0
      %3743 = vmatmul.mubr.f32.gmra.mrb[0].mxu0 %v3566
      %v3744 = vpop.f32.mrb[0].mxu0
      %v3745 = vadd.f32 0.0, %v3744
      %v3746 = vpop.f32.mrb[0].mxu0
      %3747 = vmatprep.mubr.f32.mxu0 0.0
      %3748 = vmatmul.mubr.f32.gmra.mrb[0].mxu0 %v3569
      %v3749 = vpop.f32.mrb[0].mxu0
      %v3750 = vadd.f32 0.0, %v3749
      %v3751 = vpop.f32.mrb[0].mxu0
      %3752 = vmatprep.mubr.f32.mxu0 0.0
      %3753 = vmatmul.mubr.f32.gmra.mrb[0].mxu0 %v3572
      %v3754 = vpop.f32.mrb[0].mxu0
      %v3755 = vadd.f32 0.0, %v3754
      %v3756 = vpop.f32.mrb[0].mxu0
      %3757 = vmatprep.mubr.f32.mxu0 0.0
      %3758 = vmatmul.mubr.f32.gmra.mrb[0].mxu0 %v3575
      %v3759 = vpop.f32.mrb[0].mxu0
      %v3760 = vadd.f32 0.0, %v3759
      %v3761 = vpop.f32.mrb[0].mxu0
      %3762 = vmatprep.mubr.f32.mxu0 0.0
      %3763 = vmatmul.mubr.f32.gmra.mrb[0].mxu0 %v3578
      %v3764 = vpop.f32.mrb[0].mxu0
      %v3765 = vadd.f32 0.0, %v3764
      %v3766 = vpop.f32.mrb[0].mxu0
      %3767 = vmatprep.mubr.f32.mxu0 0.0
      %3768 = vmatmul.mubr.f32.gmra.mrb[0].mxu0 %v3581
      %v3769 = vpop.f32.mrb[0].mxu0
      %v3770 = vadd.f32 0.0, %v3769
      %v3771 = vpop.f32.mrb[0].mxu0
      %3772 = vmatprep.mubr.f32.mxu0 0.0
      %3773 = vmatmul.mubr.f32.gmra.mrb[0].mxu0 %v3584
      %v3774 = vpop.f32.mrb[0].mxu0
      %v3775 = vadd.f32 0.0, %v3774
      %v3776 = vpop.f32.mrb[0].mxu0
      %3777 = vmatprep.mubr.f32.mxu0 0.0
      %3778 = vmatmul.mubr.f32.gmra.mrb[0].mxu0 %v3587
      %v3779 = vpop.f32.mrb[0].mxu0
      %v3780 = vadd.f32 0.0, %v3779
      %v3781 = vpop.f32.mrb[0].mxu0
      %3782 = vmatprep.mubr.f32.mxu0 0.0
      %3783 = vmatmul.mubr.f32.gmra.mrb[0].mxu0 %v3590
      %v3784 = vpop.f32.mrb[0].mxu0
      %v3785 = vadd.f32 0.0, %v3784
      %v3786 = vpop.f32.mrb[0].mxu0
      %3787 = vmatprep.mubr.f32.mxu0 0.0
      %3788 = vmatmul.mubr.f32.gmra.mrb[0].mxu0 %v3593
      %v3789 = vpop.f32.mrb[0].mxu0
      %v3790 = vadd.f32 0.0, %v3789
      %v3791 = vpop.f32.mrb[0].mxu0
      %3792 = vmatprep.mubr.f32.mxu0 0.0
      %3793 = vmatmul.mubr.f32.gmra.mrb[0].mxu0 %v3596
      %v3794 = vpop.f32.mrb[0].mxu0
      %v3795 = vadd.f32 0.0, %v3794
      %v3796 = vpop.f32.mrb[0].mxu0
      %3797 = vmatprep.mubr.f32.mxu0 0.0
      %3798 = vmatmul.mubr.f32.gmra.mrb[0].mxu0 %v3599
      %v3799 = vpop.f32.mrb[0].mxu0
      %v3800 = vadd.f32 0.0, %v3799
      %v3801 = vpop.f32.mrb[0].mxu0
      %3802 = vmatprep.mubr.f32.mxu0 0.0
      %3803 = vmatmul.mubr.f32.gmra.mrb[0].mxu0 %v3602
      %v3804 = vpop.f32.mrb[0].mxu0
      %v3805 = vadd.f32 0.0, %v3804
      %v3806 = vpop.f32.mrb[0].mxu0
      %3807 = vmatprep.mubr.f32.mxu0 0.0
      %3808 = vmatmul.mubr.f32.gmra.mrb[0].mxu0 %v3605
      %v3809 = vpop.f32.mrb[0].mxu0
      %v3810 = vadd.f32 0.0, %v3809
      %v3811 = vpop.f32.mrb[0].mxu0
      %3812 = vmatprep.mubr.f32.mxu0 0.0
      %3813 = vmatmul.mubr.f32.gmra.mrb[0].mxu0 %v3608
      %v3814 = vpop.f32.mrb[0].mxu0
      %v3815 = vadd.f32 0.0, %v3814
      %v3816 = vpop.f32.mrb[0].mxu0
      %3817 = vmatprep.mubr.f32.mxu0 0.0
      %3818 = vmatmul.mubr.f32.gmra.mrb[0].mxu0 %v3611
      %v3819 = vpop.f32.mrb[0].mxu0
      %v3820 = vadd.f32 0.0, %v3819
      %v3821 = vpop.f32.mrb[0].mxu0
      %3822 = vmatprep.mubr.f32.mxu0 0.0
      %3823 = vmatmul.mubr.f32.gmra.mrb[0].mxu0 %v3614
      %v3824 = vpop.f32.mrb[0].mxu0
      %v3825 = vadd.f32 0.0, %v3824
      %v3826 = vpop.f32.mrb[0].mxu0
      %3827 = vmatprep.mubr.f32.mxu0 0.0
      %3828 = vmatmul.mubr.f32.gmra.mrb[0].mxu0 %v3617
      %v3829 = vpop.f32.mrb[0].mxu0
      %v3830 = vadd.f32 0.0, %v3829
      %v3831 = vpop.f32.mrb[0].mxu0
      %3832 = vmatprep.mubr.f32.mxu0 0.0
      %3833 = vmatmul.mubr.f32.gmra.mrb[0].mxu0 %v3620
      %v3834 = vpop.f32.mrb[0].mxu0
      %v3835 = vadd.f32 0.0, %v3834
      %v3836 = vpop.f32.mrb[0].mxu0
      %3837 = vmatprep.mubr.f32.mxu0 0.0
      %3838 = vmatmul.mubr.f32.gmra.mrb[0].mxu0 %v3623
      %v3839 = vpop.f32.mrb[0].mxu0
      %v3840 = vadd.f32 0.0, %v3839
      %v3841 = vpop.f32.mrb[0].mxu0
      %3842 = vmatprep.mubr.f32.mxu0 0.0
      %3843 = vmatmul.mubr.f32.gmra.mrb[0].mxu0 %v3626
      %v3844 = vpop.f32.mrb[0].mxu0
      %v3845 = vadd.f32 0.0, %v3844
      %v3846 = vpop.f32.mrb[0].mxu0
      %3847 = vmatprep.mubr.f32.mxu0 0.0
      %3848 = vmatmul.mubr.f32.gmra.mrb[0].mxu0 %v3629
      %v3849 = vpop.f32.mrb[0].mxu0
      %v3850 = vadd.f32 0.0, %v3849
      %v3851 = vpop.f32.mrb[0].mxu0
      %3852 = vmatprep.mubr.f32.mxu0 0.0
      %3853 = vmatmul.mubr.f32.gmra.mrb[0].mxu0 %v3632
      %v3854 = vpop.f32.mrb[0].mxu0
      %v3855 = vadd.f32 0.0, %v3854
      %v3856 = vpop.f32.mrb[0].mxu0
      %3857 = vmatprep.mubr.f32.mxu0 0.0
      %3858 = vmatmul.mubr.f32.gmra.mrb[0].mxu0 %v3635
      %v3859 = vpop.f32.mrb[0].mxu0
      %v3860 = vadd.f32 0.0, %v3859
      %v3861 = vpop.f32.mrb[0].mxu0
      %3862 = vmatprep.mubr.f32.mxu0 0.0
      %3863 = vmatmul.mubr.f32.gmra.mrb[0].mxu0 %v3638
      %v3864 = vpop.f32.mrb[0].mxu0
      %v3865 = vadd.f32 0.0, %v3864
      %v3866 = vpop.f32.mrb[0].mxu0
      %3867 = vdwg.mxu0
      %v3868 = vadd.f32 %v3446, %v3710
      %v3869 = vadd.f32 %v3447, %v3715
      %v3870 = vadd.f32 %v3448, %v3720
      %v3871 = vadd.f32 %v3449, %v3725
      %v3872 = vadd.f32 %v3450, %v3730
      %v3873 = vadd.f32 %v3451, %v3735
      %v3874 = vadd.f32 %v3452, %v3740
      %v3875 = vadd.f32 %v3453, %v3745
      %v3876 = vadd.f32 %v3454, %v3750
      %v3877 = vadd.f32 %v3455, %v3755
      %v3878 = vadd.f32 %v3456, %v3760
      %v3879 = vadd.f32 %v3457, %v3765
      %v3880 = vadd.f32 %v3458, %v3770
      %v3881 = vadd.f32 %v3459, %v3775
      %v3882 = vadd.f32 %v3460, %v3780
      %v3883 = vadd.f32 %v3461, %v3785
      %v3884 = vadd.f32 %v3462, %v3790
      %v3885 = vadd.f32 %v3463, %v3795
      %v3886 = vadd.f32 %v3464, %v3800
      %v3887 = vadd.f32 %v3465, %v3805
      %v3888 = vadd.f32 %v3466, %v3810
      %v3889 = vadd.f32 %v3467, %v3815
      %v3890 = vadd.f32 %v3468, %v3820
      %v3891 = vadd.f32 %v3469, %v3825
      %v3892 = vadd.f32 %v3470, %v3830
      %v3893 = vadd.f32 %v3471, %v3835
      %v3894 = vadd.f32 %v3472, %v3840
      %v3895 = vadd.f32 %v3473, %v3845
      %v3896 = vadd.f32 %v3474, %v3850
      %v3897 = vadd.f32 %v3475, %v3855
      %v3898 = vadd.f32 %v3476, %v3860
      %v3899 = vadd.f32 %v3477, %v3865
      %v3900 = vld [vmem:[#allocation2 + $0x21] sm:$0xff]
      %v3901 = vld [vmem:[#allocation2 + $0x29] sm:$0xff]
      %v3902 = vld [vmem:[#allocation2 + $0x31] sm:$0xff]
      %v3903 = vld [vmem:[#allocation2 + $0x39] sm:$0xff]
      %v3904 = vld [vmem:[#allocation2 + $0x41] sm:$0xff]
      %v3905 = vld [vmem:[#allocation2 + $0x49] sm:$0xff]
      %v3906 = vld [vmem:[#allocation2 + $0x51] sm:$0xff]
      %v3907 = vld [vmem:[#allocation2 + $0x59] sm:$0xff]
      %v3908 = vld [vmem:[#allocation2 + $0x61] sm:$0xff]
      %v3909 = vld [vmem:[#allocation2 + $0x69] sm:$0xff]
      %v3910 = vld [vmem:[#allocation2 + $0x71] sm:$0xff]
      %v3911 = vld [vmem:[#allocation2 + $0x79] sm:$0xff]
      %v3912 = vld [vmem:[#allocation2 + $0x81] sm:$0xff]
      %v3913 = vld [vmem:[#allocation2 + $0x89] sm:$0xff]
      %v3914 = vld [vmem:[#allocation2 + $0x91] sm:$0xff]
      %v3915 = vld [vmem:[#allocation2 + $0x99] sm:$0xff]
      %v3916 = vld [vmem:[#allocation2 + $0xa1] sm:$0xff]
      %v3917 = vld [vmem:[#allocation2 + $0xa9] sm:$0xff]
      %v3918 = vld [vmem:[#allocation2 + $0xb1] sm:$0xff]
      %v3919 = vld [vmem:[#allocation2 + $0xb9] sm:$0xff]
      %v3920 = vld [vmem:[#allocation2 + $0xc1] sm:$0xff]
      %v3921 = vld [vmem:[#allocation2 + $0xc9] sm:$0xff]
      %v3922 = vld [vmem:[#allocation2 + $0xd1] sm:$0xff]
      %v3923 = vld [vmem:[#allocation2 + $0xd9] sm:$0xff]
      %v3924 = vld [vmem:[#allocation2 + $0xe1] sm:$0xff]
      %v3925 = vld [vmem:[#allocation2 + $0xe9] sm:$0xff]
      %v3926 = vld [vmem:[#allocation2 + $0xf1] sm:$0xff]
      %v3927 = vld [vmem:[#allocation2 + $0xf9] sm:$0xff]
      %v3928 = vld [vmem:[#allocation2 + $0x101] sm:$0xff]
      %v3929 = vld [vmem:[#allocation2 + $0x109] sm:$0xff]
      %v3930 = vld [vmem:[#allocation2 + $0x111] sm:$0xff]
      %v3931 = vld [vmem:[#allocation2 + $0x119] sm:$0xff]
      %s3932 = scalar_lea.vmem %s2, 14
      %v3933 = vld [vmem:[%s3932] sm:$0x3]
      %v3935 = vsel %vm737, %v3900, 0
      %v3938 = vsel %vm737, %v3901, 0
      %v3941 = vsel %vm737, %v3902, 0
      %v3944 = vsel %vm737, %v3903, 0
      %v3947 = vsel %vm737, %v3904, 0
      %v3950 = vsel %vm737, %v3905, 0
      %v3953 = vsel %vm737, %v3906, 0
      %v3956 = vsel %vm737, %v3907, 0
      %v3959 = vsel %vm737, %v3908, 0
      %v3962 = vsel %vm737, %v3909, 0
      %v3965 = vsel %vm737, %v3910, 0
      %v3968 = vsel %vm737, %v3911, 0
      %v3971 = vsel %vm737, %v3912, 0
      %v3974 = vsel %vm737, %v3913, 0
      %v3977 = vsel %vm737, %v3914, 0
      %v3980 = vsel %vm737, %v3915, 0
      %v3983 = vsel %vm737, %v3916, 0
      %v3986 = vsel %vm737, %v3917, 0
      %v3989 = vsel %vm737, %v3918, 0
      %v3992 = vsel %vm737, %v3919, 0
      %v3995 = vsel %vm737, %v3920, 0
      %v3998 = vsel %vm737, %v3921, 0
      %v4001 = vsel %vm737, %v3922, 0
      %v4004 = vsel %vm737, %v3923, 0
      %v4007 = vsel %vm737, %v3924, 0
      %v4010 = vsel %vm737, %v3925, 0
      %v4013 = vsel %vm737, %v3926, 0
      %v4016 = vsel %vm737, %v3927, 0
      %v4019 = vsel %vm737, %v3928, 0
      %v4022 = vsel %vm737, %v3929, 0
      %v4025 = vsel %vm737, %v3930, 0
      %v4028 = vsel %vm737, %v3931, 0
      %v4031 = vsel %vm1107, %v3933, 0
      %4033 = vmatprep.subr.mxu0 0.0
      %4034 = vmatpush1.msra.mxu0 %v4031
      %4035 = vmatprep.subr.mxu0 0.0
      %4036 = vmatpush1.msra.mxu0 0.0
      %4037 = vmatprep.subr.mxu0 0.0
      %4038 = vmatpush1.msra.mxu0 0.0
      %4039 = vmatprep.subr.mxu0 0.0
      %4040 = vmatpush1.msra.mxu0 0.0
      %4041 = vmatprep.subr.mxu0 0.0
      %4042 = vmatpush1.msra.mxu0 0.0
      %4043 = vmatprep.subr.mxu0 0.0
      %4044 = vmatpush1.msra.mxu0 0.0
      %4045 = vmatprep.subr.mxu0 0.0
      %4046 = vmatpush1.msra.mxu0 0.0
      %4047 = vmatprep.subr.mxu0 0.0
      %4048 = vmatpush1.msra.mxu0 0.0
      %4049 = vmatprep.subr.mxu0 0.0
      %4050 = vmatpush1.msra.mxu0 0.0
      %4051 = vmatprep.subr.mxu0 0.0
      %4052 = vmatpush1.msra.mxu0 0.0
      %4053 = vmatprep.subr.mxu0 0.0
      %4054 = vmatpush1.msra.mxu0 0.0
      %4055 = vmatprep.subr.mxu0 0.0
      %4056 = vmatpush1.msra.mxu0 0.0
      %4057 = vmatprep.subr.mxu0 0.0
      %4058 = vmatpush1.msra.mxu0 0.0
      %4059 = vmatprep.subr.mxu0 0.0
      %4060 = vmatpush1.msra.mxu0 0.0
      %4061 = vmatprep.subr.mxu0 0.0
      %4062 = vmatpush1.msra.mxu0 0.0
      %4063 = vmatprep.subr.mxu0 0.0
      %4064 = vmatpush1.msra.mxu0 0.0
      %4065 = vmatprep.subr.mxu0 0.0
      %4066 = vmatpush1.msra.mxu0 0.0
      %4067 = vmatprep.subr.mxu0 0.0
      %4068 = vmatpush1.msra.mxu0 0.0
      %4069 = vmatprep.subr.mxu0 0.0
      %4070 = vmatpush1.msra.mxu0 0.0
      %4071 = vmatprep.subr.mxu0 0.0
      %4072 = vmatpush1.msra.mxu0 0.0
      %4073 = vmatprep.subr.mxu0 0.0
      %4074 = vmatpush1.msra.mxu0 0.0
      %4075 = vmatprep.subr.mxu0 0.0
      %4076 = vmatpush1.msra.mxu0 0.0
      %4077 = vmatprep.subr.mxu0 0.0
      %4078 = vmatpush1.msra.mxu0 0.0
      %4079 = vmatprep.subr.mxu0 0.0
      %4080 = vmatpush1.msra.mxu0 0.0
      %4081 = vmatprep.subr.mxu0 0.0
      %4082 = vmatpush1.msra.mxu0 0.0
      %4083 = vmatprep.subr.mxu0 0.0
      %4084 = vmatpush1.msra.mxu0 0.0
      %4085 = vmatprep.subr.mxu0 0.0
      %4086 = vmatpush1.msra.mxu0 0.0
      %4087 = vmatprep.subr.mxu0 0.0
      %4088 = vmatpush1.msra.mxu0 0.0
      %4089 = vmatprep.subr.mxu0 0.0
      %4090 = vmatpush1.msra.mxu0 0.0
      %4091 = vmatprep.subr.mxu0 0.0
      %4092 = vmatpush1.msra.mxu0 0.0
      %4093 = vmatprep.subr.mxu0 0.0
      %4094 = vmatpush1.msra.mxu0 0.0
      %4095 = vmatprep.subr.mxu0 0.0
      %4096 = vmatpush1.msra.mxu0 0.0
      %4097 = vmatprep.mubr.f32.mxu0 0.0
      %4098 = vmatmul.mubr.f32.gmra.mrb[0].mxu0 %v3935
      %v4099 = vpop.f32.mrb[0].mxu0
      %v4100 = vadd.f32 0.0, %v4099
      %v4101 = vpop.f32.mrb[0].mxu0
      %4102 = vmatprep.mubr.f32.mxu0 0.0
      %4103 = vmatmul.mubr.f32.gmra.mrb[0].mxu0 %v3938
      %v4104 = vpop.f32.mrb[0].mxu0
      %v4105 = vadd.f32 0.0, %v4104
      %v4106 = vpop.f32.mrb[0].mxu0
      %4107 = vmatprep.mubr.f32.mxu0 0.0
      %4108 = vmatmul.mubr.f32.gmra.mrb[0].mxu0 %v3941
      %v4109 = vpop.f32.mrb[0].mxu0
      %v4110 = vadd.f32 0.0, %v4109
      %v4111 = vpop.f32.mrb[0].mxu0
      %4112 = vmatprep.mubr.f32.mxu0 0.0
      %4113 = vmatmul.mubr.f32.gmra.mrb[0].mxu0 %v3944
      %v4114 = vpop.f32.mrb[0].mxu0
      %v4115 = vadd.f32 0.0, %v4114
      %v4116 = vpop.f32.mrb[0].mxu0
      %4117 = vmatprep.mubr.f32.mxu0 0.0
      %4118 = vmatmul.mubr.f32.gmra.mrb[0].mxu0 %v3947
      %v4119 = vpop.f32.mrb[0].mxu0
      %v4120 = vadd.f32 0.0, %v4119
      %v4121 = vpop.f32.mrb[0].mxu0
      %4122 = vmatprep.mubr.f32.mxu0 0.0
      %4123 = vmatmul.mubr.f32.gmra.mrb[0].mxu0 %v3950
      %v4124 = vpop.f32.mrb[0].mxu0
      %v4125 = vadd.f32 0.0, %v4124
      %v4126 = vpop.f32.mrb[0].mxu0
      %4127 = vmatprep.mubr.f32.mxu0 0.0
      %4128 = vmatmul.mubr.f32.gmra.mrb[0].mxu0 %v3953
      %v4129 = vpop.f32.mrb[0].mxu0
      %v4130 = vadd.f32 0.0, %v4129
      %v4131 = vpop.f32.mrb[0].mxu0
      %4132 = vmatprep.mubr.f32.mxu0 0.0
      %4133 = vmatmul.mubr.f32.gmra.mrb[0].mxu0 %v3956
      %v4134 = vpop.f32.mrb[0].mxu0
      %v4135 = vadd.f32 0.0, %v4134
      %v4136 = vpop.f32.mrb[0].mxu0
      %4137 = vmatprep.mubr.f32.mxu0 0.0
      %4138 = vmatmul.mubr.f32.gmra.mrb[0].mxu0 %v3959
      %v4139 = vpop.f32.mrb[0].mxu0
      %v4140 = vadd.f32 0.0, %v4139
      %v4141 = vpop.f32.mrb[0].mxu0
      %4142 = vmatprep.mubr.f32.mxu0 0.0
      %4143 = vmatmul.mubr.f32.gmra.mrb[0].mxu0 %v3962
      %v4144 = vpop.f32.mrb[0].mxu0
      %v4145 = vadd.f32 0.0, %v4144
      %v4146 = vpop.f32.mrb[0].mxu0
      %4147 = vmatprep.mubr.f32.mxu0 0.0
      %4148 = vmatmul.mubr.f32.gmra.mrb[0].mxu0 %v3965
      %v4149 = vpop.f32.mrb[0].mxu0
      %v4150 = vadd.f32 0.0, %v4149
      %v4151 = vpop.f32.mrb[0].mxu0
      %4152 = vmatprep.mubr.f32.mxu0 0.0
      %4153 = vmatmul.mubr.f32.gmra.mrb[0].mxu0 %v3968
      %v4154 = vpop.f32.mrb[0].mxu0
      %v4155 = vadd.f32 0.0, %v4154
      %v4156 = vpop.f32.mrb[0].mxu0
      %4157 = vmatprep.mubr.f32.mxu0 0.0
      %4158 = vmatmul.mubr.f32.gmra.mrb[0].mxu0 %v3971
      %v4159 = vpop.f32.mrb[0].mxu0
      %v4160 = vadd.f32 0.0, %v4159
      %v4161 = vpop.f32.mrb[0].mxu0
      %4162 = vmatprep.mubr.f32.mxu0 0.0
      %4163 = vmatmul.mubr.f32.gmra.mrb[0].mxu0 %v3974
      %v4164 = vpop.f32.mrb[0].mxu0
      %v4165 = vadd.f32 0.0, %v4164
      %v4166 = vpop.f32.mrb[0].mxu0
      %4167 = vmatprep.mubr.f32.mxu0 0.0
      %4168 = vmatmul.mubr.f32.gmra.mrb[0].mxu0 %v3977
      %v4169 = vpop.f32.mrb[0].mxu0
      %v4170 = vadd.f32 0.0, %v4169
      %v4171 = vpop.f32.mrb[0].mxu0
      %4172 = vmatprep.mubr.f32.mxu0 0.0
      %4173 = vmatmul.mubr.f32.gmra.mrb[0].mxu0 %v3980
      %v4174 = vpop.f32.mrb[0].mxu0
      %v4175 = vadd.f32 0.0, %v4174
      %v4176 = vpop.f32.mrb[0].mxu0
      %4177 = vmatprep.mubr.f32.mxu0 0.0
      %4178 = vmatmul.mubr.f32.gmra.mrb[0].mxu0 %v3983
      %v4179 = vpop.f32.mrb[0].mxu0
      %v4180 = vadd.f32 0.0, %v4179
      %v4181 = vpop.f32.mrb[0].mxu0
      %4182 = vmatprep.mubr.f32.mxu0 0.0
      %4183 = vmatmul.mubr.f32.gmra.mrb[0].mxu0 %v3986
      %v4184 = vpop.f32.mrb[0].mxu0
      %v4185 = vadd.f32 0.0, %v4184
      %v4186 = vpop.f32.mrb[0].mxu0
      %4187 = vmatprep.mubr.f32.mxu0 0.0
      %4188 = vmatmul.mubr.f32.gmra.mrb[0].mxu0 %v3989
      %v4189 = vpop.f32.mrb[0].mxu0
      %v4190 = vadd.f32 0.0, %v4189
      %v4191 = vpop.f32.mrb[0].mxu0
      %4192 = vmatprep.mubr.f32.mxu0 0.0
      %4193 = vmatmul.mubr.f32.gmra.mrb[0].mxu0 %v3992
      %v4194 = vpop.f32.mrb[0].mxu0
      %v4195 = vadd.f32 0.0, %v4194
      %v4196 = vpop.f32.mrb[0].mxu0
      %4197 = vmatprep.mubr.f32.mxu0 0.0
      %4198 = vmatmul.mubr.f32.gmra.mrb[0].mxu0 %v3995
      %v4199 = vpop.f32.mrb[0].mxu0
      %v4200 = vadd.f32 0.0, %v4199
      %v4201 = vpop.f32.mrb[0].mxu0
      %4202 = vmatprep.mubr.f32.mxu0 0.0
      %4203 = vmatmul.mubr.f32.gmra.mrb[0].mxu0 %v3998
      %v4204 = vpop.f32.mrb[0].mxu0
      %v4205 = vadd.f32 0.0, %v4204
      %v4206 = vpop.f32.mrb[0].mxu0
      %4207 = vmatprep.mubr.f32.mxu0 0.0
      %4208 = vmatmul.mubr.f32.gmra.mrb[0].mxu0 %v4001
      %v4209 = vpop.f32.mrb[0].mxu0
      %v4210 = vadd.f32 0.0, %v4209
      %v4211 = vpop.f32.mrb[0].mxu0
      %4212 = vmatprep.mubr.f32.mxu0 0.0
      %4213 = vmatmul.mubr.f32.gmra.mrb[0].mxu0 %v4004
      %v4214 = vpop.f32.mrb[0].mxu0
      %v4215 = vadd.f32 0.0, %v4214
      %v4216 = vpop.f32.mrb[0].mxu0
      %4217 = vmatprep.mubr.f32.mxu0 0.0
      %4218 = vmatmul.mubr.f32.gmra.mrb[0].mxu0 %v4007
      %v4219 = vpop.f32.mrb[0].mxu0
      %v4220 = vadd.f32 0.0, %v4219
      %v4221 = vpop.f32.mrb[0].mxu0
      %4222 = vmatprep.mubr.f32.mxu0 0.0
      %4223 = vmatmul.mubr.f32.gmra.mrb[0].mxu0 %v4010
      %v4224 = vpop.f32.mrb[0].mxu0
      %v4225 = vadd.f32 0.0, %v4224
      %v4226 = vpop.f32.mrb[0].mxu0
      %4227 = vmatprep.mubr.f32.mxu0 0.0
      %4228 = vmatmul.mubr.f32.gmra.mrb[0].mxu0 %v4013
      %v4229 = vpop.f32.mrb[0].mxu0
      %v4230 = vadd.f32 0.0, %v4229
      %v4231 = vpop.f32.mrb[0].mxu0
      %4232 = vmatprep.mubr.f32.mxu0 0.0
      %4233 = vmatmul.mubr.f32.gmra.mrb[0].mxu0 %v4016
      %v4234 = vpop.f32.mrb[0].mxu0
      %v4235 = vadd.f32 0.0, %v4234
      %v4236 = vpop.f32.mrb[0].mxu0
      %4237 = vmatprep.mubr.f32.mxu0 0.0
      %4238 = vmatmul.mubr.f32.gmra.mrb[0].mxu0 %v4019
      %v4239 = vpop.f32.mrb[0].mxu0
      %v4240 = vadd.f32 0.0, %v4239
      %v4241 = vpop.f32.mrb[0].mxu0
      %4242 = vmatprep.mubr.f32.mxu0 0.0
      %4243 = vmatmul.mubr.f32.gmra.mrb[0].mxu0 %v4022
      %v4244 = vpop.f32.mrb[0].mxu0
      %v4245 = vadd.f32 0.0, %v4244
      %v4246 = vpop.f32.mrb[0].mxu0
      %4247 = vmatprep.mubr.f32.mxu0 0.0
      %4248 = vmatmul.mubr.f32.gmra.mrb[0].mxu0 %v4025
      %v4249 = vpop.f32.mrb[0].mxu0
      %v4250 = vadd.f32 0.0, %v4249
      %v4251 = vpop.f32.mrb[0].mxu0
      %4252 = vmatprep.mubr.f32.mxu0 0.0
      %4253 = vmatmul.mubr.f32.gmra.mrb[0].mxu0 %v4028
      %v4254 = vpop.f32.mrb[0].mxu0
      %v4255 = vadd.f32 0.0, %v4254
      %v4256 = vpop.f32.mrb[0].mxu0
      %4257 = vdwg.mxu0
      %v4258 = vadd.f32 %v3868, %v4100
      %v4259 = vadd.f32 %v3869, %v4105
      %v4260 = vadd.f32 %v3870, %v4110
      %v4261 = vadd.f32 %v3871, %v4115
      %v4262 = vadd.f32 %v3872, %v4120
      %v4263 = vadd.f32 %v3873, %v4125
      %v4264 = vadd.f32 %v3874, %v4130
      %v4265 = vadd.f32 %v3875, %v4135
      %v4266 = vadd.f32 %v3876, %v4140
      %v4267 = vadd.f32 %v3877, %v4145
      %v4268 = vadd.f32 %v3878, %v4150
      %v4269 = vadd.f32 %v3879, %v4155
      %v4270 = vadd.f32 %v3880, %v4160
      %v4271 = vadd.f32 %v3881, %v4165
      %v4272 = vadd.f32 %v3882, %v4170
      %v4273 = vadd.f32 %v3883, %v4175
      %v4274 = vadd.f32 %v3884, %v4180
      %v4275 = vadd.f32 %v3885, %v4185
      %v4276 = vadd.f32 %v3886, %v4190
      %v4277 = vadd.f32 %v3887, %v4195
      %v4278 = vadd.f32 %v3888, %v4200
      %v4279 = vadd.f32 %v3889, %v4205
      %v4280 = vadd.f32 %v3890, %v4210
      %v4281 = vadd.f32 %v3891, %v4215
      %v4282 = vadd.f32 %v3892, %v4220
      %v4283 = vadd.f32 %v3893, %v4225
      %v4284 = vadd.f32 %v3894, %v4230
      %v4285 = vadd.f32 %v3895, %v4235
      %v4286 = vadd.f32 %v3896, %v4240
      %v4287 = vadd.f32 %v3897, %v4245
      %v4288 = vadd.f32 %v3898, %v4250
      %v4289 = vadd.f32 %v3899, %v4255
      %v4290 = vld [vmem:[#allocation2 + $0x22] sm:$0xff]
      %v4291 = vld [vmem:[#allocation2 + $0x2a] sm:$0xff]
      %v4292 = vld [vmem:[#allocation2 + $0x32] sm:$0xff]
      %v4293 = vld [vmem:[#allocation2 + $0x3a] sm:$0xff]
      %v4294 = vld [vmem:[#allocation2 + $0x42] sm:$0xff]
      %v4295 = vld [vmem:[#allocation2 + $0x4a] sm:$0xff]
      %v4296 = vld [vmem:[#allocation2 + $0x52] sm:$0xff]
      %v4297 = vld [vmem:[#allocation2 + $0x5a] sm:$0xff]
      %v4298 = vld [vmem:[#allocation2 + $0x62] sm:$0xff]
      %v4299 = vld [vmem:[#allocation2 + $0x6a] sm:$0xff]
      %v4300 = vld [vmem:[#allocation2 + $0x72] sm:$0xff]
      %v4301 = vld [vmem:[#allocation2 + $0x7a] sm:$0xff]
      %v4302 = vld [vmem:[#allocation2 + $0x82] sm:$0xff]
      %v4303 = vld [vmem:[#allocation2 + $0x8a] sm:$0xff]
      %v4304 = vld [vmem:[#allocation2 + $0x92] sm:$0xff]
      %v4305 = vld [vmem:[#allocation2 + $0x9a] sm:$0xff]
      %v4306 = vld [vmem:[#allocation2 + $0xa2] sm:$0xff]
      %v4307 = vld [vmem:[#allocation2 + $0xaa] sm:$0xff]
      %v4308 = vld [vmem:[#allocation2 + $0xb2] sm:$0xff]
      %v4309 = vld [vmem:[#allocation2 + $0xba] sm:$0xff]
      %v4310 = vld [vmem:[#allocation2 + $0xc2] sm:$0xff]
      %v4311 = vld [vmem:[#allocation2 + $0xca] sm:$0xff]
      %v4312 = vld [vmem:[#allocation2 + $0xd2] sm:$0xff]
      %v4313 = vld [vmem:[#allocation2 + $0xda] sm:$0xff]
      %v4314 = vld [vmem:[#allocation2 + $0xe2] sm:$0xff]
      %v4315 = vld [vmem:[#allocation2 + $0xea] sm:$0xff]
      %v4316 = vld [vmem:[#allocation2 + $0xf2] sm:$0xff]
      %v4317 = vld [vmem:[#allocation2 + $0xfa] sm:$0xff]
      %v4318 = vld [vmem:[#allocation2 + $0x102] sm:$0xff]
      %v4319 = vld [vmem:[#allocation2 + $0x10a] sm:$0xff]
      %v4320 = vld [vmem:[#allocation2 + $0x112] sm:$0xff]
      %v4321 = vld [vmem:[#allocation2 + $0x11a] sm:$0xff]
      %v4322 = vsel %vm1822, %v4290, 0.0
      %v4323 = vsel %vm1823, %v4291, 0.0
      %v4324 = vsel %vm1824, %v4292, 0.0
      %v4325 = vsel %vm1825, %v4293, 0.0
      %v4326 = vsel %vm1826, %v4294, 0.0
      %v4327 = vsel %vm1827, %v4295, 0.0
      %v4328 = vsel %vm1828, %v4296, 0.0
      %v4329 = vsel %vm1829, %v4297, 0.0
      %v4330 = vsel %vm1830, %v4298, 0.0
      %v4331 = vsel %vm1831, %v4299, 0.0
      %v4332 = vsel %vm1832, %v4300, 0.0
      %v4333 = vsel %vm1833, %v4301, 0.0
      %v4334 = vsel %vm1834, %v4302, 0.0
      %v4335 = vsel %vm1835, %v4303, 0.0
      %v4336 = vsel %vm1836, %v4304, 0.0
      %v4337 = vsel %vm1837, %v4305, 0.0
      %v4338 = vsel %vm1838, %v4306, 0.0
      %v4339 = vsel %vm1839, %v4307, 0.0
      %v4340 = vsel %vm1840, %v4308, 0.0
      %v4341 = vsel %vm1841, %v4309, 0.0
      %v4342 = vsel %vm1842, %v4310, 0.0
      %v4343 = vsel %vm1843, %v4311, 0.0
      %v4344 = vsel %vm1844, %v4312, 0.0
      %v4345 = vsel %vm1845, %v4313, 0.0
      %v4346 = vsel %vm1846, %v4314, 0.0
      %v4347 = vsel %vm1847, %v4315, 0.0
      %v4348 = vsel %vm1848, %v4316, 0.0
      %v4349 = vsel %vm1849, %v4317, 0.0
      %v4350 = vsel %vm1850, %v4318, 0.0
      %v4351 = vsel %vm1851, %v4319, 0.0
      %v4352 = vsel %vm1852, %v4320, 0.0
      %v4353 = vsel %vm1853, %v4321, 0.0
      %s4354 = scalar_lea.vmem %s2, 16
      %v4355 = vld [vmem:[%s4354] sm:$0x3]
      %v4357 = vsel %vm737, %v4322, 0
      %v4360 = vsel %vm737, %v4323, 0
      %v4363 = vsel %vm737, %v4324, 0
      %v4366 = vsel %vm737, %v4325, 0
      %v4369 = vsel %vm737, %v4326, 0
      %v4372 = vsel %vm737, %v4327, 0
      %v4375 = vsel %vm737, %v4328, 0
      %v4378 = vsel %vm737, %v4329, 0
      %v4381 = vsel %vm737, %v4330, 0
      %v4384 = vsel %vm737, %v4331, 0
      %v4387 = vsel %vm737, %v4332, 0
      %v4390 = vsel %vm737, %v4333, 0
      %v4393 = vsel %vm737, %v4334, 0
      %v4396 = vsel %vm737, %v4335, 0
      %v4399 = vsel %vm737, %v4336, 0
      %v4402 = vsel %vm737, %v4337, 0
      %v4405 = vsel %vm737, %v4338, 0
      %v4408 = vsel %vm737, %v4339, 0
      %v4411 = vsel %vm737, %v4340, 0
      %v4414 = vsel %vm737, %v4341, 0
      %v4417 = vsel %vm737, %v4342, 0
      %v4420 = vsel %vm737, %v4343, 0
      %v4423 = vsel %vm737, %v4344, 0
      %v4426 = vsel %vm737, %v4345, 0
      %v4429 = vsel %vm737, %v4346, 0
      %v4432 = vsel %vm737, %v4347, 0
      %v4435 = vsel %vm737, %v4348, 0
      %v4438 = vsel %vm737, %v4349, 0
      %v4441 = vsel %vm737, %v4350, 0
      %v4444 = vsel %vm737, %v4351, 0
      %v4447 = vsel %vm737, %v4352, 0
      %v4450 = vsel %vm737, %v4353, 0
      %v4453 = vsel %vm1107, %v4355, 0
      %4455 = vmatprep.subr.mxu0 0.0
      %4456 = vmatpush1.msra.mxu0 %v4453
      %4457 = vmatprep.subr.mxu0 0.0
      %4458 = vmatpush1.msra.mxu0 0.0
      %4459 = vmatprep.subr.mxu0 0.0
      %4460 = vmatpush1.msra.mxu0 0.0
      %4461 = vmatprep.subr.mxu0 0.0
      %4462 = vmatpush1.msra.mxu0 0.0
      %4463 = vmatprep.subr.mxu0 0.0
      %4464 = vmatpush1.msra.mxu0 0.0
      %4465 = vmatprep.subr.mxu0 0.0
      %4466 = vmatpush1.msra.mxu0 0.0
      %4467 = vmatprep.subr.mxu0 0.0
      %4468 = vmatpush1.msra.mxu0 0.0
      %4469 = vmatprep.subr.mxu0 0.0
      %4470 = vmatpush1.msra.mxu0 0.0
      %4471 = vmatprep.subr.mxu0 0.0
      %4472 = vmatpush1.msra.mxu0 0.0
      %4473 = vmatprep.subr.mxu0 0.0
      %4474 = vmatpush1.msra.mxu0 0.0
      %4475 = vmatprep.subr.mxu0 0.0
      %4476 = vmatpush1.msra.mxu0 0.0
      %4477 = vmatprep.subr.mxu0 0.0
      %4478 = vmatpush1.msra.mxu0 0.0
      %4479 = vmatprep.subr.mxu0 0.0
      %4480 = vmatpush1.msra.mxu0 0.0
      %4481 = vmatprep.subr.mxu0 0.0
      %4482 = vmatpush1.msra.mxu0 0.0
      %4483 = vmatprep.subr.mxu0 0.0
      %4484 = vmatpush1.msra.mxu0 0.0
      %4485 = vmatprep.subr.mxu0 0.0
      %4486 = vmatpush1.msra.mxu0 0.0
      %4487 = vmatprep.subr.mxu0 0.0
      %4488 = vmatpush1.msra.mxu0 0.0
      %4489 = vmatprep.subr.mxu0 0.0
      %4490 = vmatpush1.msra.mxu0 0.0
      %4491 = vmatprep.subr.mxu0 0.0
      %4492 = vmatpush1.msra.mxu0 0.0
      %4493 = vmatprep.subr.mxu0 0.0
      %4494 = vmatpush1.msra.mxu0 0.0
      %4495 = vmatprep.subr.mxu0 0.0
      %4496 = vmatpush1.msra.mxu0 0.0
      %4497 = vmatprep.subr.mxu0 0.0
      %4498 = vmatpush1.msra.mxu0 0.0
      %4499 = vmatprep.subr.mxu0 0.0
      %4500 = vmatpush1.msra.mxu0 0.0
      %4501 = vmatprep.subr.mxu0 0.0
      %4502 = vmatpush1.msra.mxu0 0.0
      %4503 = vmatprep.subr.mxu0 0.0
      %4504 = vmatpush1.msra.mxu0 0.0
      %4505 = vmatprep.subr.mxu0 0.0
      %4506 = vmatpush1.msra.mxu0 0.0
      %4507 = vmatprep.subr.mxu0 0.0
      %4508 = vmatpush1.msra.mxu0 0.0
      %4509 = vmatprep.subr.mxu0 0.0
      %4510 = vmatpush1.msra.mxu0 0.0
      %4511 = vmatprep.subr.mxu0 0.0
      %4512 = vmatpush1.msra.mxu0 0.0
      %4513 = vmatprep.subr.mxu0 0.0
      %4514 = vmatpush1.msra.mxu0 0.0
      %4515 = vmatprep.subr.mxu0 0.0
      %4516 = vmatpush1.msra.mxu0 0.0
      %4517 = vmatprep.subr.mxu0 0.0
      %4518 = vmatpush1.msra.mxu0 0.0
      %4519 = vmatprep.mubr.f32.mxu0 0.0
      %4520 = vmatmul.mubr.f32.gmra.mrb[0].mxu0 %v4357
      %v4521 = vpop.f32.mrb[0].mxu0
      %v4522 = vadd.f32 0.0, %v4521
      %v4523 = vpop.f32.mrb[0].mxu0
      %4524 = vmatprep.mubr.f32.mxu0 0.0
      %4525 = vmatmul.mubr.f32.gmra.mrb[0].mxu0 %v4360
      %v4526 = vpop.f32.mrb[0].mxu0
      %v4527 = vadd.f32 0.0, %v4526
      %v4528 = vpop.f32.mrb[0].mxu0
      %4529 = vmatprep.mubr.f32.mxu0 0.0
      %4530 = vmatmul.mubr.f32.gmra.mrb[0].mxu0 %v4363
      %v4531 = vpop.f32.mrb[0].mxu0
      %v4532 = vadd.f32 0.0, %v4531
      %v4533 = vpop.f32.mrb[0].mxu0
      %4534 = vmatprep.mubr.f32.mxu0 0.0
      %4535 = vmatmul.mubr.f32.gmra.mrb[0].mxu0 %v4366
      %v4536 = vpop.f32.mrb[0].mxu0
      %v4537 = vadd.f32 0.0, %v4536
      %v4538 = vpop.f32.mrb[0].mxu0
      %4539 = vmatprep.mubr.f32.mxu0 0.0
      %4540 = vmatmul.mubr.f32.gmra.mrb[0].mxu0 %v4369
      %v4541 = vpop.f32.mrb[0].mxu0
      %v4542 = vadd.f32 0.0, %v4541
      %v4543 = vpop.f32.mrb[0].mxu0
      %4544 = vmatprep.mubr.f32.mxu0 0.0
      %4545 = vmatmul.mubr.f32.gmra.mrb[0].mxu0 %v4372
      %v4546 = vpop.f32.mrb[0].mxu0
      %v4547 = vadd.f32 0.0, %v4546
      %v4548 = vpop.f32.mrb[0].mxu0
      %4549 = vmatprep.mubr.f32.mxu0 0.0
      %4550 = vmatmul.mubr.f32.gmra.mrb[0].mxu0 %v4375
      %v4551 = vpop.f32.mrb[0].mxu0
      %v4552 = vadd.f32 0.0, %v4551
      %v4553 = vpop.f32.mrb[0].mxu0
      %4554 = vmatprep.mubr.f32.mxu0 0.0
      %4555 = vmatmul.mubr.f32.gmra.mrb[0].mxu0 %v4378
      %v4556 = vpop.f32.mrb[0].mxu0
      %v4557 = vadd.f32 0.0, %v4556
      %v4558 = vpop.f32.mrb[0].mxu0
      %4559 = vmatprep.mubr.f32.mxu0 0.0
      %4560 = vmatmul.mubr.f32.gmra.mrb[0].mxu0 %v4381
      %v4561 = vpop.f32.mrb[0].mxu0
      %v4562 = vadd.f32 0.0, %v4561
      %v4563 = vpop.f32.mrb[0].mxu0
      %4564 = vmatprep.mubr.f32.mxu0 0.0
      %4565 = vmatmul.mubr.f32.gmra.mrb[0].mxu0 %v4384
      %v4566 = vpop.f32.mrb[0].mxu0
      %v4567 = vadd.f32 0.0, %v4566
      %v4568 = vpop.f32.mrb[0].mxu0
      %4569 = vmatprep.mubr.f32.mxu0 0.0
      %4570 = vmatmul.mubr.f32.gmra.mrb[0].mxu0 %v4387
      %v4571 = vpop.f32.mrb[0].mxu0
      %v4572 = vadd.f32 0.0, %v4571
      %v4573 = vpop.f32.mrb[0].mxu0
      %4574 = vmatprep.mubr.f32.mxu0 0.0
      %4575 = vmatmul.mubr.f32.gmra.mrb[0].mxu0 %v4390
      %v4576 = vpop.f32.mrb[0].mxu0
      %v4577 = vadd.f32 0.0, %v4576
      %v4578 = vpop.f32.mrb[0].mxu0
      %4579 = vmatprep.mubr.f32.mxu0 0.0
      %4580 = vmatmul.mubr.f32.gmra.mrb[0].mxu0 %v4393
      %v4581 = vpop.f32.mrb[0].mxu0
      %v4582 = vadd.f32 0.0, %v4581
      %v4583 = vpop.f32.mrb[0].mxu0
      %4584 = vmatprep.mubr.f32.mxu0 0.0
      %4585 = vmatmul.mubr.f32.gmra.mrb[0].mxu0 %v4396
      %v4586 = vpop.f32.mrb[0].mxu0
      %v4587 = vadd.f32 0.0, %v4586
      %v4588 = vpop.f32.mrb[0].mxu0
      %4589 = vmatprep.mubr.f32.mxu0 0.0
      %4590 = vmatmul.mubr.f32.gmra.mrb[0].mxu0 %v4399
      %v4591 = vpop.f32.mrb[0].mxu0
      %v4592 = vadd.f32 0.0, %v4591
      %v4593 = vpop.f32.mrb[0].mxu0
      %4594 = vmatprep.mubr.f32.mxu0 0.0
      %4595 = vmatmul.mubr.f32.gmra.mrb[0].mxu0 %v4402
      %v4596 = vpop.f32.mrb[0].mxu0
      %v4597 = vadd.f32 0.0, %v4596
      %v4598 = vpop.f32.mrb[0].mxu0
      %4599 = vmatprep.mubr.f32.mxu0 0.0
      %4600 = vmatmul.mubr.f32.gmra.mrb[0].mxu0 %v4405
      %v4601 = vpop.f32.mrb[0].mxu0
      %v4602 = vadd.f32 0.0, %v4601
      %v4603 = vpop.f32.mrb[0].mxu0
      %4604 = vmatprep.mubr.f32.mxu0 0.0
      %4605 = vmatmul.mubr.f32.gmra.mrb[0].mxu0 %v4408
      %v4606 = vpop.f32.mrb[0].mxu0
      %v4607 = vadd.f32 0.0, %v4606
      %v4608 = vpop.f32.mrb[0].mxu0
      %4609 = vmatprep.mubr.f32.mxu0 0.0
      %4610 = vmatmul.mubr.f32.gmra.mrb[0].mxu0 %v4411
      %v4611 = vpop.f32.mrb[0].mxu0
      %v4612 = vadd.f32 0.0, %v4611
      %v4613 = vpop.f32.mrb[0].mxu0
      %4614 = vmatprep.mubr.f32.mxu0 0.0
      %4615 = vmatmul.mubr.f32.gmra.mrb[0].mxu0 %v4414
      %v4616 = vpop.f32.mrb[0].mxu0
      %v4617 = vadd.f32 0.0, %v4616
      %v4618 = vpop.f32.mrb[0].mxu0
      %4619 = vmatprep.mubr.f32.mxu0 0.0
      %4620 = vmatmul.mubr.f32.gmra.mrb[0].mxu0 %v4417
      %v4621 = vpop.f32.mrb[0].mxu0
      %v4622 = vadd.f32 0.0, %v4621
      %v4623 = vpop.f32.mrb[0].mxu0
      %4624 = vmatprep.mubr.f32.mxu0 0.0
      %4625 = vmatmul.mubr.f32.gmra.mrb[0].mxu0 %v4420
      %v4626 = vpop.f32.mrb[0].mxu0
      %v4627 = vadd.f32 0.0, %v4626
      %v4628 = vpop.f32.mrb[0].mxu0
      %4629 = vmatprep.mubr.f32.mxu0 0.0
      %4630 = vmatmul.mubr.f32.gmra.mrb[0].mxu0 %v4423
      %v4631 = vpop.f32.mrb[0].mxu0
      %v4632 = vadd.f32 0.0, %v4631
      %v4633 = vpop.f32.mrb[0].mxu0
      %4634 = vmatprep.mubr.f32.mxu0 0.0
      %4635 = vmatmul.mubr.f32.gmra.mrb[0].mxu0 %v4426
      %v4636 = vpop.f32.mrb[0].mxu0
      %v4637 = vadd.f32 0.0, %v4636
      %v4638 = vpop.f32.mrb[0].mxu0
      %4639 = vmatprep.mubr.f32.mxu0 0.0
      %4640 = vmatmul.mubr.f32.gmra.mrb[0].mxu0 %v4429
      %v4641 = vpop.f32.mrb[0].mxu0
      %v4642 = vadd.f32 0.0, %v4641
      %v4643 = vpop.f32.mrb[0].mxu0
      %4644 = vmatprep.mubr.f32.mxu0 0.0
      %4645 = vmatmul.mubr.f32.gmra.mrb[0].mxu0 %v4432
      %v4646 = vpop.f32.mrb[0].mxu0
      %v4647 = vadd.f32 0.0, %v4646
      %v4648 = vpop.f32.mrb[0].mxu0
      %4649 = vmatprep.mubr.f32.mxu0 0.0
      %4650 = vmatmul.mubr.f32.gmra.mrb[0].mxu0 %v4435
      %v4651 = vpop.f32.mrb[0].mxu0
      %v4652 = vadd.f32 0.0, %v4651
      %v4653 = vpop.f32.mrb[0].mxu0
      %4654 = vmatprep.mubr.f32.mxu0 0.0
      %4655 = vmatmul.mubr.f32.gmra.mrb[0].mxu0 %v4438
      %v4656 = vpop.f32.mrb[0].mxu0
      %v4657 = vadd.f32 0.0, %v4656
      %v4658 = vpop.f32.mrb[0].mxu0
      %4659 = vmatprep.mubr.f32.mxu0 0.0
      %4660 = vmatmul.mubr.f32.gmra.mrb[0].mxu0 %v4441
      %v4661 = vpop.f32.mrb[0].mxu0
      %v4662 = vadd.f32 0.0, %v4661
      %v4663 = vpop.f32.mrb[0].mxu0
      %4664 = vmatprep.mubr.f32.mxu0 0.0
      %4665 = vmatmul.mubr.f32.gmra.mrb[0].mxu0 %v4444
      %v4666 = vpop.f32.mrb[0].mxu0
      %v4667 = vadd.f32 0.0, %v4666
      %v4668 = vpop.f32.mrb[0].mxu0
      %4669 = vmatprep.mubr.f32.mxu0 0.0
      %4670 = vmatmul.mubr.f32.gmra.mrb[0].mxu0 %v4447
      %v4671 = vpop.f32.mrb[0].mxu0
      %v4672 = vadd.f32 0.0, %v4671
      %v4673 = vpop.f32.mrb[0].mxu0
      %4674 = vmatprep.mubr.f32.mxu0 0.0
      %4675 = vmatmul.mubr.f32.gmra.mrb[0].mxu0 %v4450
      %v4676 = vpop.f32.mrb[0].mxu0
      %v4677 = vadd.f32 0.0, %v4676
      %v4678 = vpop.f32.mrb[0].mxu0
      %4679 = vdwg.mxu0
      %v4680 = vadd.f32 %v4258, %v4522
      %v4681 = vadd.f32 %v4259, %v4527
      %v4682 = vadd.f32 %v4260, %v4532
      %v4683 = vadd.f32 %v4261, %v4537
      %v4684 = vadd.f32 %v4262, %v4542
      %v4685 = vadd.f32 %v4263, %v4547
      %v4686 = vadd.f32 %v4264, %v4552
      %v4687 = vadd.f32 %v4265, %v4557
      %v4688 = vadd.f32 %v4266, %v4562
      %v4689 = vadd.f32 %v4267, %v4567
      %v4690 = vadd.f32 %v4268, %v4572
      %v4691 = vadd.f32 %v4269, %v4577
      %v4692 = vadd.f32 %v4270, %v4582
      %v4693 = vadd.f32 %v4271, %v4587
      %v4694 = vadd.f32 %v4272, %v4592
      %v4695 = vadd.f32 %v4273, %v4597
      %v4696 = vadd.f32 %v4274, %v4602
      %v4697 = vadd.f32 %v4275, %v4607
      %v4698 = vadd.f32 %v4276, %v4612
      %v4699 = vadd.f32 %v4277, %v4617
      %v4700 = vadd.f32 %v4278, %v4622
      %v4701 = vadd.f32 %v4279, %v4627
      %v4702 = vadd.f32 %v4280, %v4632
      %v4703 = vadd.f32 %v4281, %v4637
      %v4704 = vadd.f32 %v4282, %v4642
      %v4705 = vadd.f32 %v4283, %v4647
      %v4706 = vadd.f32 %v4284, %v4652
      %v4707 = vadd.f32 %v4285, %v4657
      %v4708 = vadd.f32 %v4286, %v4662
      %v4709 = vadd.f32 %v4287, %v4667
      %v4710 = vadd.f32 %v4288, %v4672
      %v4711 = vadd.f32 %v4289, %v4677
      %vm4712 = vcmask 531456
      %4713 = vst.msk [vmem:[#allocation3] sm:$0xff] %vm4712, 0.0
      %4714 = vst.msk [vmem:[#allocation3 + $0x8] sm:$0xff] %vm4712, 0.0
      %4715 = vst.msk [vmem:[#allocation3 + $0x10] sm:$0xff] %vm4712, 0.0
      %4716 = vst.msk [vmem:[#allocation3 + $0x18] sm:$0xff] %vm4712, 0.0
      %4717 = vst.msk [vmem:[#allocation3 + $0x20] sm:$0xff] %vm4712, 0.0
      %4718 = vst.msk [vmem:[#allocation3 + $0x28] sm:$0xff] %vm4712, 0.0
      %4719 = vst.msk [vmem:[#allocation3 + $0x30] sm:$0xff] %vm4712, 0.0
      %4720 = vst.msk [vmem:[#allocation3 + $0x38] sm:$0xff] %vm4712, 0.0
      %4721 = vst.msk [vmem:[#allocation3 + $0x40] sm:$0xff] %vm4712, 0.0
      %4722 = vst.msk [vmem:[#allocation3 + $0x48] sm:$0xff] %vm4712, 0.0
      %4723 = vst.msk [vmem:[#allocation3 + $0x50] sm:$0xff] %vm4712, 0.0
      %4724 = vst.msk [vmem:[#allocation3 + $0x58] sm:$0xff] %vm4712, 0.0
      %4725 = vst.msk [vmem:[#allocation3 + $0x60] sm:$0xff] %vm4712, 0.0
      %4726 = vst.msk [vmem:[#allocation3 + $0x68] sm:$0xff] %vm4712, 0.0
      %4727 = vst.msk [vmem:[#allocation3 + $0x70] sm:$0xff] %vm4712, 0.0
      %4728 = vst.msk [vmem:[#allocation3 + $0x78] sm:$0xff] %vm4712, 0.0
      %4729 = vst.msk [vmem:[#allocation3 + $0x80] sm:$0xff] %vm4712, 0.0
      %4730 = vst.msk [vmem:[#allocation3 + $0x88] sm:$0xff] %vm4712, 0.0
      %4731 = vst.msk [vmem:[#allocation3 + $0x90] sm:$0xff] %vm4712, 0.0
      %4732 = vst.msk [vmem:[#allocation3 + $0x98] sm:$0xff] %vm4712, 0.0
      %4733 = vst.msk [vmem:[#allocation3 + $0xa0] sm:$0xff] %vm4712, 0.0
      %4734 = vst.msk [vmem:[#allocation3 + $0xa8] sm:$0xff] %vm4712, 0.0
      %4735 = vst.msk [vmem:[#allocation3 + $0xb0] sm:$0xff] %vm4712, 0.0
      %4736 = vst.msk [vmem:[#allocation3 + $0xb8] sm:$0xff] %vm4712, 0.0
      %4737 = vst.msk [vmem:[#allocation3 + $0xc0] sm:$0xff] %vm4712, 0.0
      %4738 = vst.msk [vmem:[#allocation3 + $0xc8] sm:$0xff] %vm4712, 0.0
      %4739 = vst.msk [vmem:[#allocation3 + $0xd0] sm:$0xff] %vm4712, 0.0
      %4740 = vst.msk [vmem:[#allocation3 + $0xd8] sm:$0xff] %vm4712, 0.0
      %4741 = vst.msk [vmem:[#allocation3 + $0xe0] sm:$0xff] %vm4712, 0.0
      %4742 = vst.msk [vmem:[#allocation3 + $0xe8] sm:$0xff] %vm4712, 0.0
      %4743 = vst.msk [vmem:[#allocation3 + $0xf0] sm:$0xff] %vm4712, 0.0
      %4744 = vst.msk [vmem:[#allocation3 + $0xf8] sm:$0xff] %vm4712, 0.0
      %4745 = vst.msk [vmem:[#allocation3 + $0x100] sm:$0xff] %vm4712, 0.0
      %4746 = vst.msk [vmem:[#allocation3 + $0x108] sm:$0xff] %vm4712, 0.0
      %4747 = vst.msk [vmem:[#allocation3 + $0x110] sm:$0xff] %vm4712, 0.0
      %4748 = vst.msk [vmem:[#allocation3 + $0x118] sm:$0xff] %vm4712, 0.0
      %vm4749 = vcmask 525312
      %4750 = vst.msk [vmem:[#allocation3 + $0x120] sm:$0x3] %vm4749, 0.0
      %vm4751 = vcmask 523264
      %4752 = vst.msk [vmem:[#allocation3 + $0x11] sm:$0xff] %vm4751, %v4680
      %4753 = vst.msk [vmem:[#allocation3 + $0x19] sm:$0xff] %vm4751, %v4681
      %4754 = vst.msk [vmem:[#allocation3 + $0x21] sm:$0xff] %vm4751, %v4682
      %4755 = vst.msk [vmem:[#allocation3 + $0x29] sm:$0xff] %vm4751, %v4683
      %4756 = vst.msk [vmem:[#allocation3 + $0x31] sm:$0xff] %vm4751, %v4684
      %4757 = vst.msk [vmem:[#allocation3 + $0x39] sm:$0xff] %vm4751, %v4685
      %4758 = vst.msk [vmem:[#allocation3 + $0x41] sm:$0xff] %vm4751, %v4686
      %4759 = vst.msk [vmem:[#allocation3 + $0x49] sm:$0xff] %vm4751, %v4687
      %4760 = vst.msk [vmem:[#allocation3 + $0x51] sm:$0xff] %vm4751, %v4688
      %4761 = vst.msk [vmem:[#allocation3 + $0x59] sm:$0xff] %vm4751, %v4689
      %4762 = vst.msk [vmem:[#allocation3 + $0x61] sm:$0xff] %vm4751, %v4690
      %4763 = vst.msk [vmem:[#allocation3 + $0x69] sm:$0xff] %vm4751, %v4691
      %4764 = vst.msk [vmem:[#allocation3 + $0x71] sm:$0xff] %vm4751, %v4692
      %4765 = vst.msk [vmem:[#allocation3 + $0x79] sm:$0xff] %vm4751, %v4693
      %4766 = vst.msk [vmem:[#allocation3 + $0x81] sm:$0xff] %vm4751, %v4694
      %4767 = vst.msk [vmem:[#allocation3 + $0x89] sm:$0xff] %vm4751, %v4695
      %4768 = vst.msk [vmem:[#allocation3 + $0x91] sm:$0xff] %vm4751, %v4696
      %4769 = vst.msk [vmem:[#allocation3 + $0x99] sm:$0xff] %vm4751, %v4697
      %4770 = vst.msk [vmem:[#allocation3 + $0xa1] sm:$0xff] %vm4751, %v4698
      %4771 = vst.msk [vmem:[#allocation3 + $0xa9] sm:$0xff] %vm4751, %v4699
      %4772 = vst.msk [vmem:[#allocation3 + $0xb1] sm:$0xff] %vm4751, %v4700
      %4773 = vst.msk [vmem:[#allocation3 + $0xb9] sm:$0xff] %vm4751, %v4701
      %4774 = vst.msk [vmem:[#allocation3 + $0xc1] sm:$0xff] %vm4751, %v4702
      %4775 = vst.msk [vmem:[#allocation3 + $0xc9] sm:$0xff] %vm4751, %v4703
      %4776 = vst.msk [vmem:[#allocation3 + $0xd1] sm:$0xff] %vm4751, %v4704
      %4777 = vst.msk [vmem:[#allocation3 + $0xd9] sm:$0xff] %vm4751, %v4705
      %4778 = vst.msk [vmem:[#allocation3 + $0xe1] sm:$0xff] %vm4751, %v4706
      %4779 = vst.msk [vmem:[#allocation3 + $0xe9] sm:$0xff] %vm4751, %v4707
      %4780 = vst.msk [vmem:[#allocation3 + $0xf1] sm:$0xff] %vm4751, %v4708
      %4781 = vst.msk [vmem:[#allocation3 + $0xf9] sm:$0xff] %vm4751, %v4709
      %4782 = vst.msk [vmem:[#allocation3 + $0x101] sm:$0xff] %vm4751, %v4710
      %4783 = vst.msk [vmem:[#allocation3 + $0x109] sm:$0xff] %vm4751, %v4711
      %vm4784 = vcmask 531968
      %4785 = vst.msk [vmem:[#allocation3 + $0x11] sm:$0xff] %vm4784, %v841
      %4786 = vst.msk [vmem:[#allocation3 + $0x19] sm:$0xff] %vm4784, %v841
      %4787 = vst.msk [vmem:[#allocation3 + $0x21] sm:$0xff] %vm4784, %v841
      %4788 = vst.msk [vmem:[#allocation3 + $0x29] sm:$0xff] %vm4784, %v841
      %4789 = vst.msk [vmem:[#allocation3 + $0x31] sm:$0xff] %vm4784, %v841
      %4790 = vst.msk [vmem:[#allocation3 + $0x39] sm:$0xff] %vm4784, %v841
      %4791 = vst.msk [vmem:[#allocation3 + $0x41] sm:$0xff] %vm4784, %v841
      %4792 = vst.msk [vmem:[#allocation3 + $0x49] sm:$0xff] %vm4784, %v841
      %4793 = vst.msk [vmem:[#allocation3 + $0x51] sm:$0xff] %vm4784, %v841
      %4794 = vst.msk [vmem:[#allocation3 + $0x59] sm:$0xff] %vm4784, %v841
      %4795 = vst.msk [vmem:[#allocation3 + $0x61] sm:$0xff] %vm4784, %v841
      %4796 = vst.msk [vmem:[#allocation3 + $0x69] sm:$0xff] %vm4784, %v841
      %4797 = vst.msk [vmem:[#allocation3 + $0x71] sm:$0xff] %vm4784, %v841
      %4798 = vst.msk [vmem:[#allocation3 + $0x79] sm:$0xff] %vm4784, %v841
      %4799 = vst.msk [vmem:[#allocation3 + $0x81] sm:$0xff] %vm4784, %v841
      %4800 = vst.msk [vmem:[#allocation3 + $0x89] sm:$0xff] %vm4784, %v841
      %4801 = vst.msk [vmem:[#allocation3 + $0x91] sm:$0xff] %vm4784, %v841
      %4802 = vst.msk [vmem:[#allocation3 + $0x99] sm:$0xff] %vm4784, %v841
      %4803 = vst.msk [vmem:[#allocation3 + $0xa1] sm:$0xff] %vm4784, %v841
      %4804 = vst.msk [vmem:[#allocation3 + $0xa9] sm:$0xff] %vm4784, %v841
      %4805 = vst.msk [vmem:[#allocation3 + $0xb1] sm:$0xff] %vm4784, %v841
      %4806 = vst.msk [vmem:[#allocation3 + $0xb9] sm:$0xff] %vm4784, %v841
      %4807 = vst.msk [vmem:[#allocation3 + $0xc1] sm:$0xff] %vm4784, %v841
      %4808 = vst.msk [vmem:[#allocation3 + $0xc9] sm:$0xff] %vm4784, %v841
      %4809 = vst.msk [vmem:[#allocation3 + $0xd1] sm:$0xff] %vm4784, %v841
      %4810 = vst.msk [vmem:[#allocation3 + $0xd9] sm:$0xff] %vm4784, %v841
      %4811 = vst.msk [vmem:[#allocation3 + $0xe1] sm:$0xff] %vm4784, %v841
      %4812 = vst.msk [vmem:[#allocation3 + $0xe9] sm:$0xff] %vm4784, %v841
      %4813 = vst.msk [vmem:[#allocation3 + $0xf1] sm:$0xff] %vm4784, %v841
      %4814 = vst.msk [vmem:[#allocation3 + $0xf9] sm:$0xff] %vm4784, %v841
      %4815 = vst.msk [vmem:[#allocation3 + $0x101] sm:$0xff] %vm4784, %v841
      %4816 = vst.msk [vmem:[#allocation3 + $0x109] sm:$0xff] %vm4784, %v841
      %v4817 = vld [vmem:[#allocation5] sm:$0x1]
      %v4819 = vlaneseq
      %v4820 = vshrl.u32 %v4819, 7
      %v4821 = vsub.s32 0, %v4820
      %v4822 = vrot.slane %v4817, %v4821
      %4824 = vst.msk [vmem:[%s254] sm:$0xff] %vm808, %v4822
      %4825 = vst.msk [vmem:[%s254 + $0x8] sm:$0xff] %vm808, %v4822
      %4826 = vst.msk [vmem:[%s254 + $0x10] sm:$0xff] %vm808, %v4822
      %4827 = vst.msk [vmem:[%s254 + $0x18] sm:$0xff] %vm808, %v4822
      %4828 = vst.msk [vmem:[%s254 + $0x20] sm:$0xff] %vm808, %v4822
      %4829 = vst.msk [vmem:[%s254 + $0x28] sm:$0xff] %vm808, %v4822
      %4830 = vst.msk [vmem:[%s254 + $0x30] sm:$0xff] %vm808, %v4822
      %4831 = vst.msk [vmem:[%s254 + $0x38] sm:$0xff] %vm808, %v4822
      %4832 = vst.msk [vmem:[%s254 + $0x40] sm:$0xff] %vm808, %v4822
      %4833 = vst.msk [vmem:[%s254 + $0x48] sm:$0xff] %vm808, %v4822
      %4834 = vst.msk [vmem:[%s254 + $0x50] sm:$0xff] %vm808, %v4822
      %4835 = vst.msk [vmem:[%s254 + $0x58] sm:$0xff] %vm808, %v4822
      %4836 = vst.msk [vmem:[%s254 + $0x60] sm:$0xff] %vm808, %v4822
      %4837 = vst.msk [vmem:[%s254 + $0x68] sm:$0xff] %vm808, %v4822
      %4838 = vst.msk [vmem:[%s254 + $0x70] sm:$0xff] %vm808, %v4822
      %4839 = vst.msk [vmem:[%s254 + $0x78] sm:$0xff] %vm808, %v4822
      %4840 = vst.msk [vmem:[%s254 + $0x80] sm:$0xff] %vm808, %v4822
      %4841 = vst.msk [vmem:[%s254 + $0x88] sm:$0xff] %vm808, %v4822
      %4842 = vst.msk [vmem:[%s254 + $0x90] sm:$0xff] %vm808, %v4822
      %4843 = vst.msk [vmem:[%s254 + $0x98] sm:$0xff] %vm808, %v4822
      %4844 = vst.msk [vmem:[%s254 + $0xa0] sm:$0xff] %vm808, %v4822
      %4845 = vst.msk [vmem:[%s254 + $0xa8] sm:$0xff] %vm808, %v4822
      %4846 = vst.msk [vmem:[%s254 + $0xb0] sm:$0xff] %vm808, %v4822
      %4847 = vst.msk [vmem:[%s254 + $0xb8] sm:$0xff] %vm808, %v4822
      %4848 = vst.msk [vmem:[%s254 + $0xc0] sm:$0xff] %vm808, %v4822
      %4849 = vst.msk [vmem:[%s254 + $0xc8] sm:$0xff] %vm808, %v4822
      %4850 = vst.msk [vmem:[%s254 + $0xd0] sm:$0xff] %vm808, %v4822
      %4851 = vst.msk [vmem:[%s254 + $0xd8] sm:$0xff] %vm808, %v4822
      %4852 = vst.msk [vmem:[%s254 + $0xe0] sm:$0xff] %vm808, %v4822
      %4853 = vst.msk [vmem:[%s254 + $0xe8] sm:$0xff] %vm808, %v4822
      %4854 = vst.msk [vmem:[%s254 + $0xf0] sm:$0xff] %vm808, %v4822
      %4855 = vst.msk [vmem:[%s254 + $0xf8] sm:$0xff] %vm808, %v4822
      %v4856 = vld [vmem:[%s254] sm:$0xff]
      %v4857 = vld [vmem:[%s254 + $0x8] sm:$0xff]
      %v4858 = vld [vmem:[%s254 + $0x10] sm:$0xff]
      %v4859 = vld [vmem:[%s254 + $0x18] sm:$0xff]
      %v4860 = vld [vmem:[%s254 + $0x20] sm:$0xff]
      %v4861 = vld [vmem:[%s254 + $0x28] sm:$0xff]
      %v4862 = vld [vmem:[%s254 + $0x30] sm:$0xff]
      %v4863 = vld [vmem:[%s254 + $0x38] sm:$0xff]
      %v4864 = vld [vmem:[%s254 + $0x40] sm:$0xff]
      %v4865 = vld [vmem:[%s254 + $0x48] sm:$0xff]
      %v4866 = vld [vmem:[%s254 + $0x50] sm:$0xff]
      %v4867 = vld [vmem:[%s254 + $0x58] sm:$0xff]
      %v4868 = vld [vmem:[%s254 + $0x60] sm:$0xff]
      %v4869 = vld [vmem:[%s254 + $0x68] sm:$0xff]
      %v4870 = vld [vmem:[%s254 + $0x70] sm:$0xff]
      %v4871 = vld [vmem:[%s254 + $0x78] sm:$0xff]
      %v4872 = vld [vmem:[%s254 + $0x80] sm:$0xff]
      %v4873 = vld [vmem:[%s254 + $0x88] sm:$0xff]
      %v4874 = vld [vmem:[%s254 + $0x90] sm:$0xff]
      %v4875 = vld [vmem:[%s254 + $0x98] sm:$0xff]
      %v4876 = vld [vmem:[%s254 + $0xa0] sm:$0xff]
      %v4877 = vld [vmem:[%s254 + $0xa8] sm:$0xff]
      %v4878 = vld [vmem:[%s254 + $0xb0] sm:$0xff]
      %v4879 = vld [vmem:[%s254 + $0xb8] sm:$0xff]
      %v4880 = vld [vmem:[%s254 + $0xc0] sm:$0xff]
      %v4881 = vld [vmem:[%s254 + $0xc8] sm:$0xff]
      %v4882 = vld [vmem:[%s254 + $0xd0] sm:$0xff]
      %v4883 = vld [vmem:[%s254 + $0xd8] sm:$0xff]
      %v4884 = vld [vmem:[%s254 + $0xe0] sm:$0xff]
      %v4885 = vld [vmem:[%s254 + $0xe8] sm:$0xff]
      %v4886 = vld [vmem:[%s254 + $0xf0] sm:$0xff]
      %v4887 = vld [vmem:[%s254 + $0xf8] sm:$0xff]
      %v4888 = vld [vmem:[#allocation3] sm:$0xff]
      %v4889 = vld [vmem:[#allocation3 + $0x8] sm:$0xff]
      %v4890 = vld [vmem:[#allocation3 + $0x10] sm:$0xff]
      %v4891 = vld [vmem:[#allocation3 + $0x18] sm:$0xff]
      %v4892 = vld [vmem:[#allocation3 + $0x20] sm:$0xff]
      %v4893 = vld [vmem:[#allocation3 + $0x28] sm:$0xff]
      %v4894 = vld [vmem:[#allocation3 + $0x30] sm:$0xff]
      %v4895 = vld [vmem:[#allocation3 + $0x38] sm:$0xff]
      %v4896 = vld [vmem:[#allocation3 + $0x40] sm:$0xff]
      %v4897 = vld [vmem:[#allocation3 + $0x48] sm:$0xff]
      %v4898 = vld [vmem:[#allocation3 + $0x50] sm:$0xff]
      %v4899 = vld [vmem:[#allocation3 + $0x58] sm:$0xff]
      %v4900 = vld [vmem:[#allocation3 + $0x60] sm:$0xff]
      %v4901 = vld [vmem:[#allocation3 + $0x68] sm:$0xff]
      %v4902 = vld [vmem:[#allocation3 + $0x70] sm:$0xff]
      %v4903 = vld [vmem:[#allocation3 + $0x78] sm:$0xff]
      %v4904 = vld [vmem:[#allocation3 + $0x80] sm:$0xff]
      %v4905 = vld [vmem:[#allocation3 + $0x88] sm:$0xff]
      %v4906 = vld [vmem:[#allocation3 + $0x90] sm:$0xff]
      %v4907 = vld [vmem:[#allocation3 + $0x98] sm:$0xff]
      %v4908 = vld [vmem:[#allocation3 + $0xa0] sm:$0xff]
      %v4909 = vld [vmem:[#allocation3 + $0xa8] sm:$0xff]
      %v4910 = vld [vmem:[#allocation3 + $0xb0] sm:$0xff]
      %v4911 = vld [vmem:[#allocation3 + $0xb8] sm:$0xff]
      %v4912 = vld [vmem:[#allocation3 + $0xc0] sm:$0xff]
      %v4913 = vld [vmem:[#allocation3 + $0xc8] sm:$0xff]
      %v4914 = vld [vmem:[#allocation3 + $0xd0] sm:$0xff]
      %v4915 = vld [vmem:[#allocation3 + $0xd8] sm:$0xff]
      %v4916 = vld [vmem:[#allocation3 + $0xe0] sm:$0xff]
      %v4917 = vld [vmem:[#allocation3 + $0xe8] sm:$0xff]
      %v4918 = vld [vmem:[#allocation3 + $0xf0] sm:$0xff]
      %v4919 = vld [vmem:[#allocation3 + $0xf8] sm:$0xff]
      %v4920 = vsel %vm946, %v4888, 0.0
      %v4921 = vsel %vm947, %v4889, 0.0
      %v4922 = vsel %vm948, %v4890, 0.0
      %v4923 = vsel %vm949, %v4891, 0.0
      %v4924 = vsel %vm950, %v4892, 0.0
      %v4925 = vsel %vm951, %v4893, 0.0
      %v4926 = vsel %vm952, %v4894, 0.0
      %v4927 = vsel %vm953, %v4895, 0.0
      %v4928 = vsel %vm954, %v4896, 0.0
      %v4929 = vsel %vm955, %v4897, 0.0
      %v4930 = vsel %vm956, %v4898, 0.0
      %v4931 = vsel %vm957, %v4899, 0.0
      %v4932 = vsel %vm958, %v4900, 0.0
      %v4933 = vsel %vm959, %v4901, 0.0
      %v4934 = vsel %vm960, %v4902, 0.0
      %v4935 = vsel %vm961, %v4903, 0.0
      %v4936 = vsel %vm962, %v4904, 0.0
      %v4937 = vsel %vm963, %v4905, 0.0
      %v4938 = vsel %vm964, %v4906, 0.0
      %v4939 = vsel %vm965, %v4907, 0.0
      %v4940 = vsel %vm966, %v4908, 0.0
      %v4941 = vsel %vm967, %v4909, 0.0
      %v4942 = vsel %vm968, %v4910, 0.0
      %v4943 = vsel %vm969, %v4911, 0.0
      %v4944 = vsel %vm970, %v4912, 0.0
      %v4945 = vsel %vm971, %v4913, 0.0
      %v4946 = vsel %vm972, %v4914, 0.0
      %v4947 = vsel %vm973, %v4915, 0.0
      %v4948 = vsel %vm974, %v4916, 0.0
      %v4949 = vsel %vm975, %v4917, 0.0
      %v4950 = vsel %vm976, %v4918, 0.0
      %v4951 = vsel %vm977, %v4919, 0.0
      %v4952 = vld [vmem:[%s4] sm:$0xff]
      %v4953 = vld [vmem:[%s4 + $0x8] sm:$0xff]
      %v4954 = vld [vmem:[%s4 + $0x10] sm:$0xff]
      %v4955 = vld [vmem:[%s4 + $0x18] sm:$0xff]
      %v4956 = vld [vmem:[%s4 + $0x20] sm:$0xff]
      %v4957 = vld [vmem:[%s4 + $0x28] sm:$0xff]
      %v4958 = vld [vmem:[%s4 + $0x30] sm:$0xff]
      %v4959 = vld [vmem:[%s4 + $0x38] sm:$0xff]
      %v4960 = vld [vmem:[%s4 + $0x40] sm:$0x1]
      %v4962 = vsel %vm4712, %v4920, 0
      %v4965 = vsel %vm4712, %v4921, 0
      %v4968 = vsel %vm4712, %v4922, 0
      %v4971 = vsel %vm4712, %v4923, 0
      %v4974 = vsel %vm4712, %v4924, 0
      %v4977 = vsel %vm4712, %v4925, 0
      %v4980 = vsel %vm4712, %v4926, 0
      %v4983 = vsel %vm4712, %v4927, 0
      %v4986 = vsel %vm4712, %v4928, 0
      %v4989 = vsel %vm4712, %v4929, 0
      %v4992 = vsel %vm4712, %v4930, 0
      %v4995 = vsel %vm4712, %v4931, 0
      %v4998 = vsel %vm4712, %v4932, 0
      %v5001 = vsel %vm4712, %v4933, 0
      %v5004 = vsel %vm4712, %v4934, 0
      %v5007 = vsel %vm4712, %v4935, 0
      %v5010 = vsel %vm4712, %v4936, 0
      %v5013 = vsel %vm4712, %v4937, 0
      %v5016 = vsel %vm4712, %v4938, 0
      %v5019 = vsel %vm4712, %v4939, 0
      %v5022 = vsel %vm4712, %v4940, 0
      %v5025 = vsel %vm4712, %v4941, 0
      %v5028 = vsel %vm4712, %v4942, 0
      %v5031 = vsel %vm4712, %v4943, 0
      %v5034 = vsel %vm4712, %v4944, 0
      %v5037 = vsel %vm4712, %v4945, 0
      %v5040 = vsel %vm4712, %v4946, 0
      %v5043 = vsel %vm4712, %v4947, 0
      %v5046 = vsel %vm4712, %v4948, 0
      %v5049 = vsel %vm4712, %v4949, 0
      %v5052 = vsel %vm4712, %v4950, 0
      %v5055 = vsel %vm4712, %v4951, 0
      %vm5057 = vcmask 1040384
      %v5059 = vsel %vm5057, %v4960, 0
      %5061 = vmatprep.subr.mxu0 0.0
      %5062 = vmatpush1.msra.mxu0 %v4952
      %5063 = vmatprep.subr.mxu0 0.0
      %5064 = vmatpush1.msra.mxu0 %v4953
      %5065 = vmatprep.subr.mxu0 0.0
      %5066 = vmatpush1.msra.mxu0 %v4954
      %5067 = vmatprep.subr.mxu0 0.0
      %5068 = vmatpush1.msra.mxu0 %v4955
      %5069 = vmatprep.subr.mxu0 0.0
      %5070 = vmatpush1.msra.mxu0 %v4956
      %5071 = vmatprep.subr.mxu0 0.0
      %5072 = vmatpush1.msra.mxu0 %v4957
      %5073 = vmatprep.subr.mxu0 0.0
      %5074 = vmatpush1.msra.mxu0 %v4958
      %5075 = vmatprep.subr.mxu0 0.0
      %5076 = vmatpush1.msra.mxu0 %v4959
      %5077 = vmatprep.subr.mxu0 0.0
      %5078 = vmatpush1.msra.mxu0 %v5059
      %5079 = vmatprep.subr.mxu0 0.0
      %5080 = vmatpush1.msra.mxu0 0.0
      %5081 = vmatprep.subr.mxu0 0.0
      %5082 = vmatpush1.msra.mxu0 0.0
      %5083 = vmatprep.subr.mxu0 0.0
      %5084 = vmatpush1.msra.mxu0 0.0
      %5085 = vmatprep.subr.mxu0 0.0
      %5086 = vmatpush1.msra.mxu0 0.0
      %5087 = vmatprep.subr.mxu0 0.0
      %5088 = vmatpush1.msra.mxu0 0.0
      %5089 = vmatprep.subr.mxu0 0.0
      %5090 = vmatpush1.msra.mxu0 0.0
      %5091 = vmatprep.subr.mxu0 0.0
      %5092 = vmatpush1.msra.mxu0 0.0
      %5093 = vmatprep.subr.mxu0 0.0
      %5094 = vmatpush1.msra.mxu0 0.0
      %5095 = vmatprep.subr.mxu0 0.0
      %5096 = vmatpush1.msra.mxu0 0.0
      %5097 = vmatprep.subr.mxu0 0.0
      %5098 = vmatpush1.msra.mxu0 0.0
      %5099 = vmatprep.subr.mxu0 0.0
      %5100 = vmatpush1.msra.mxu0 0.0
      %5101 = vmatprep.subr.mxu0 0.0
      %5102 = vmatpush1.msra.mxu0 0.0
      %5103 = vmatprep.subr.mxu0 0.0
      %5104 = vmatpush1.msra.mxu0 0.0
      %5105 = vmatprep.subr.mxu0 0.0
      %5106 = vmatpush1.msra.mxu0 0.0
      %5107 = vmatprep.subr.mxu0 0.0
      %5108 = vmatpush1.msra.mxu0 0.0
      %5109 = vmatprep.subr.mxu0 0.0
      %5110 = vmatpush1.msra.mxu0 0.0
      %5111 = vmatprep.subr.mxu0 0.0
      %5112 = vmatpush1.msra.mxu0 0.0
      %5113 = vmatprep.subr.mxu0 0.0
      %5114 = vmatpush1.msra.mxu0 0.0
      %5115 = vmatprep.subr.mxu0 0.0
      %5116 = vmatpush1.msra.mxu0 0.0
      %5117 = vmatprep.subr.mxu0 0.0
      %5118 = vmatpush1.msra.mxu0 0.0
      %5119 = vmatprep.subr.mxu0 0.0
      %5120 = vmatpush1.msra.mxu0 0.0
      %5121 = vmatprep.subr.mxu0 0.0
      %5122 = vmatpush1.msra.mxu0 0.0
      %5123 = vmatprep.subr.mxu0 0.0
      %5124 = vmatpush1.msra.mxu0 0.0
      %5125 = vmatprep.mubr.f32.mxu0 0.0
      %5126 = vmatmul.mubr.f32.gmra.mrb[0].mxu0 %v4962
      %v5127 = vpop.f32.mrb[0].mxu0
      %v5128 = vadd.f32 0.0, %v5127
      %v5129 = vpop.f32.mrb[0].mxu0
      %5130 = vmatprep.mubr.f32.mxu0 0.0
      %5131 = vmatmul.mubr.f32.gmra.mrb[0].mxu0 %v4965
      %v5132 = vpop.f32.mrb[0].mxu0
      %v5133 = vadd.f32 0.0, %v5132
      %v5134 = vpop.f32.mrb[0].mxu0
      %5135 = vmatprep.mubr.f32.mxu0 0.0
      %5136 = vmatmul.mubr.f32.gmra.mrb[0].mxu0 %v4968
      %v5137 = vpop.f32.mrb[0].mxu0
      %v5138 = vadd.f32 0.0, %v5137
      %v5139 = vpop.f32.mrb[0].mxu0
      %5140 = vmatprep.mubr.f32.mxu0 0.0
      %5141 = vmatmul.mubr.f32.gmra.mrb[0].mxu0 %v4971
      %v5142 = vpop.f32.mrb[0].mxu0
      %v5143 = vadd.f32 0.0, %v5142
      %v5144 = vpop.f32.mrb[0].mxu0
      %5145 = vmatprep.mubr.f32.mxu0 0.0
      %5146 = vmatmul.mubr.f32.gmra.mrb[0].mxu0 %v4974
      %v5147 = vpop.f32.mrb[0].mxu0
      %v5148 = vadd.f32 0.0, %v5147
      %v5149 = vpop.f32.mrb[0].mxu0
      %5150 = vmatprep.mubr.f32.mxu0 0.0
      %5151 = vmatmul.mubr.f32.gmra.mrb[0].mxu0 %v4977
      %v5152 = vpop.f32.mrb[0].mxu0
      %v5153 = vadd.f32 0.0, %v5152
      %v5154 = vpop.f32.mrb[0].mxu0
      %5155 = vmatprep.mubr.f32.mxu0 0.0
      %5156 = vmatmul.mubr.f32.gmra.mrb[0].mxu0 %v4980
      %v5157 = vpop.f32.mrb[0].mxu0
      %v5158 = vadd.f32 0.0, %v5157
      %v5159 = vpop.f32.mrb[0].mxu0
      %5160 = vmatprep.mubr.f32.mxu0 0.0
      %5161 = vmatmul.mubr.f32.gmra.mrb[0].mxu0 %v4983
      %v5162 = vpop.f32.mrb[0].mxu0
      %v5163 = vadd.f32 0.0, %v5162
      %v5164 = vpop.f32.mrb[0].mxu0
      %5165 = vmatprep.mubr.f32.mxu0 0.0
      %5166 = vmatmul.mubr.f32.gmra.mrb[0].mxu0 %v4986
      %v5167 = vpop.f32.mrb[0].mxu0
      %v5168 = vadd.f32 0.0, %v5167
      %v5169 = vpop.f32.mrb[0].mxu0
      %5170 = vmatprep.mubr.f32.mxu0 0.0
      %5171 = vmatmul.mubr.f32.gmra.mrb[0].mxu0 %v4989
      %v5172 = vpop.f32.mrb[0].mxu0
      %v5173 = vadd.f32 0.0, %v5172
      %v5174 = vpop.f32.mrb[0].mxu0
      %5175 = vmatprep.mubr.f32.mxu0 0.0
      %5176 = vmatmul.mubr.f32.gmra.mrb[0].mxu0 %v4992
      %v5177 = vpop.f32.mrb[0].mxu0
      %v5178 = vadd.f32 0.0, %v5177
      %v5179 = vpop.f32.mrb[0].mxu0
      %5180 = vmatprep.mubr.f32.mxu0 0.0
      %5181 = vmatmul.mubr.f32.gmra.mrb[0].mxu0 %v4995
      %v5182 = vpop.f32.mrb[0].mxu0
      %v5183 = vadd.f32 0.0, %v5182
      %v5184 = vpop.f32.mrb[0].mxu0
      %5185 = vmatprep.mubr.f32.mxu0 0.0
      %5186 = vmatmul.mubr.f32.gmra.mrb[0].mxu0 %v4998
      %v5187 = vpop.f32.mrb[0].mxu0
      %v5188 = vadd.f32 0.0, %v5187
      %v5189 = vpop.f32.mrb[0].mxu0
      %5190 = vmatprep.mubr.f32.mxu0 0.0
      %5191 = vmatmul.mubr.f32.gmra.mrb[0].mxu0 %v5001
      %v5192 = vpop.f32.mrb[0].mxu0
      %v5193 = vadd.f32 0.0, %v5192
      %v5194 = vpop.f32.mrb[0].mxu0
      %5195 = vmatprep.mubr.f32.mxu0 0.0
      %5196 = vmatmul.mubr.f32.gmra.mrb[0].mxu0 %v5004
      %v5197 = vpop.f32.mrb[0].mxu0
      %v5198 = vadd.f32 0.0, %v5197
      %v5199 = vpop.f32.mrb[0].mxu0
      %5200 = vmatprep.mubr.f32.mxu0 0.0
      %5201 = vmatmul.mubr.f32.gmra.mrb[0].mxu0 %v5007
      %v5202 = vpop.f32.mrb[0].mxu0
      %v5203 = vadd.f32 0.0, %v5202
      %v5204 = vpop.f32.mrb[0].mxu0
      %5205 = vmatprep.mubr.f32.mxu0 0.0
      %5206 = vmatmul.mubr.f32.gmra.mrb[0].mxu0 %v5010
      %v5207 = vpop.f32.mrb[0].mxu0
      %v5208 = vadd.f32 0.0, %v5207
      %v5209 = vpop.f32.mrb[0].mxu0
      %5210 = vmatprep.mubr.f32.mxu0 0.0
      %5211 = vmatmul.mubr.f32.gmra.mrb[0].mxu0 %v5013
      %v5212 = vpop.f32.mrb[0].mxu0
      %v5213 = vadd.f32 0.0, %v5212
      %v5214 = vpop.f32.mrb[0].mxu0
      %5215 = vmatprep.mubr.f32.mxu0 0.0
      %5216 = vmatmul.mubr.f32.gmra.mrb[0].mxu0 %v5016
      %v5217 = vpop.f32.mrb[0].mxu0
      %v5218 = vadd.f32 0.0, %v5217
      %v5219 = vpop.f32.mrb[0].mxu0
      %5220 = vmatprep.mubr.f32.mxu0 0.0
      %5221 = vmatmul.mubr.f32.gmra.mrb[0].mxu0 %v5019
      %v5222 = vpop.f32.mrb[0].mxu0
      %v5223 = vadd.f32 0.0, %v5222
      %v5224 = vpop.f32.mrb[0].mxu0
      %5225 = vmatprep.mubr.f32.mxu0 0.0
      %5226 = vmatmul.mubr.f32.gmra.mrb[0].mxu0 %v5022
      %v5227 = vpop.f32.mrb[0].mxu0
      %v5228 = vadd.f32 0.0, %v5227
      %v5229 = vpop.f32.mrb[0].mxu0
      %5230 = vmatprep.mubr.f32.mxu0 0.0
      %5231 = vmatmul.mubr.f32.gmra.mrb[0].mxu0 %v5025
      %v5232 = vpop.f32.mrb[0].mxu0
      %v5233 = vadd.f32 0.0, %v5232
      %v5234 = vpop.f32.mrb[0].mxu0
      %5235 = vmatprep.mubr.f32.mxu0 0.0
      %5236 = vmatmul.mubr.f32.gmra.mrb[0].mxu0 %v5028
      %v5237 = vpop.f32.mrb[0].mxu0
      %v5238 = vadd.f32 0.0, %v5237
      %v5239 = vpop.f32.mrb[0].mxu0
      %5240 = vmatprep.mubr.f32.mxu0 0.0
      %5241 = vmatmul.mubr.f32.gmra.mrb[0].mxu0 %v5031
      %v5242 = vpop.f32.mrb[0].mxu0
      %v5243 = vadd.f32 0.0, %v5242
      %v5244 = vpop.f32.mrb[0].mxu0
      %5245 = vmatprep.mubr.f32.mxu0 0.0
      %5246 = vmatmul.mubr.f32.gmra.mrb[0].mxu0 %v5034
      %v5247 = vpop.f32.mrb[0].mxu0
      %v5248 = vadd.f32 0.0, %v5247
      %v5249 = vpop.f32.mrb[0].mxu0
      %5250 = vmatprep.mubr.f32.mxu0 0.0
      %5251 = vmatmul.mubr.f32.gmra.mrb[0].mxu0 %v5037
      %v5252 = vpop.f32.mrb[0].mxu0
      %v5253 = vadd.f32 0.0, %v5252
      %v5254 = vpop.f32.mrb[0].mxu0
      %5255 = vmatprep.mubr.f32.mxu0 0.0
      %5256 = vmatmul.mubr.f32.gmra.mrb[0].mxu0 %v5040
      %v5257 = vpop.f32.mrb[0].mxu0
      %v5258 = vadd.f32 0.0, %v5257
      %v5259 = vpop.f32.mrb[0].mxu0
      %5260 = vmatprep.mubr.f32.mxu0 0.0
      %5261 = vmatmul.mubr.f32.gmra.mrb[0].mxu0 %v5043
      %v5262 = vpop.f32.mrb[0].mxu0
      %v5263 = vadd.f32 0.0, %v5262
      %v5264 = vpop.f32.mrb[0].mxu0
      %5265 = vmatprep.mubr.f32.mxu0 0.0
      %5266 = vmatmul.mubr.f32.gmra.mrb[0].mxu0 %v5046
      %v5267 = vpop.f32.mrb[0].mxu0
      %v5268 = vadd.f32 0.0, %v5267
      %v5269 = vpop.f32.mrb[0].mxu0
      %5270 = vmatprep.mubr.f32.mxu0 0.0
      %5271 = vmatmul.mubr.f32.gmra.mrb[0].mxu0 %v5049
      %v5272 = vpop.f32.mrb[0].mxu0
      %v5273 = vadd.f32 0.0, %v5272
      %v5274 = vpop.f32.mrb[0].mxu0
      %5275 = vmatprep.mubr.f32.mxu0 0.0
      %5276 = vmatmul.mubr.f32.gmra.mrb[0].mxu0 %v5052
      %v5277 = vpop.f32.mrb[0].mxu0
      %v5278 = vadd.f32 0.0, %v5277
      %v5279 = vpop.f32.mrb[0].mxu0
      %5280 = vmatprep.mubr.f32.mxu0 0.0
      %5281 = vmatmul.mubr.f32.gmra.mrb[0].mxu0 %v5055
      %v5282 = vpop.f32.mrb[0].mxu0
      %v5283 = vadd.f32 0.0, %v5282
      %v5284 = vpop.f32.mrb[0].mxu0
      %5285 = vdwg.mxu0
      %v5286 = vadd.f32 %v4856, %v5128
      %v5287 = vadd.f32 %v4857, %v5133
      %v5288 = vadd.f32 %v4858, %v5138
      %v5289 = vadd.f32 %v4859, %v5143
      %v5290 = vadd.f32 %v4860, %v5148
      %v5291 = vadd.f32 %v4861, %v5153
      %v5292 = vadd.f32 %v4862, %v5158
      %v5293 = vadd.f32 %v4863, %v5163
      %v5294 = vadd.f32 %v4864, %v5168
      %v5295 = vadd.f32 %v4865, %v5173
      %v5296 = vadd.f32 %v4866, %v5178
      %v5297 = vadd.f32 %v4867, %v5183
      %v5298 = vadd.f32 %v4868, %v5188
      %v5299 = vadd.f32 %v4869, %v5193
      %v5300 = vadd.f32 %v4870, %v5198
      %v5301 = vadd.f32 %v4871, %v5203
      %v5302 = vadd.f32 %v4872, %v5208
      %v5303 = vadd.f32 %v4873, %v5213
      %v5304 = vadd.f32 %v4874, %v5218
      %v5305 = vadd.f32 %v4875, %v5223
      %v5306 = vadd.f32 %v4876, %v5228
      %v5307 = vadd.f32 %v4877, %v5233
      %v5308 = vadd.f32 %v4878, %v5238
      %v5309 = vadd.f32 %v4879, %v5243
      %v5310 = vadd.f32 %v4880, %v5248
      %v5311 = vadd.f32 %v4881, %v5253
      %v5312 = vadd.f32 %v4882, %v5258
      %v5313 = vadd.f32 %v4883, %v5263
      %v5314 = vadd.f32 %v4884, %v5268
      %v5315 = vadd.f32 %v4885, %v5273
      %v5316 = vadd.f32 %v4886, %v5278
      %v5317 = vadd.f32 %v4887, %v5283
      %5318 = vst.msk [vmem:[%s254] sm:$0xff] %vm808, %v5286
      %5319 = vst.msk [vmem:[%s254 + $0x8] sm:$0xff] %vm808, %v5287
      %5320 = vst.msk [vmem:[%s254 + $0x10] sm:$0xff] %vm808, %v5288
      %5321 = vst.msk [vmem:[%s254 + $0x18] sm:$0xff] %vm808, %v5289
      %5322 = vst.msk [vmem:[%s254 + $0x20] sm:$0xff] %vm808, %v5290
      %5323 = vst.msk [vmem:[%s254 + $0x28] sm:$0xff] %vm808, %v5291
      %5324 = vst.msk [vmem:[%s254 + $0x30] sm:$0xff] %vm808, %v5292
      %5325 = vst.msk [vmem:[%s254 + $0x38] sm:$0xff] %vm808, %v5293
      %5326 = vst.msk [vmem:[%s254 + $0x40] sm:$0xff] %vm808, %v5294
      %5327 = vst.msk [vmem:[%s254 + $0x48] sm:$0xff] %vm808, %v5295
      %5328 = vst.msk [vmem:[%s254 + $0x50] sm:$0xff] %vm808, %v5296
      %5329 = vst.msk [vmem:[%s254 + $0x58] sm:$0xff] %vm808, %v5297
      %5330 = vst.msk [vmem:[%s254 + $0x60] sm:$0xff] %vm808, %v5298
      %5331 = vst.msk [vmem:[%s254 + $0x68] sm:$0xff] %vm808, %v5299
      %5332 = vst.msk [vmem:[%s254 + $0x70] sm:$0xff] %vm808, %v5300
      %5333 = vst.msk [vmem:[%s254 + $0x78] sm:$0xff] %vm808, %v5301
      %5334 = vst.msk [vmem:[%s254 + $0x80] sm:$0xff] %vm808, %v5302
      %5335 = vst.msk [vmem:[%s254 + $0x88] sm:$0xff] %vm808, %v5303
      %5336 = vst.msk [vmem:[%s254 + $0x90] sm:$0xff] %vm808, %v5304
      %5337 = vst.msk [vmem:[%s254 + $0x98] sm:$0xff] %vm808, %v5305
      %5338 = vst.msk [vmem:[%s254 + $0xa0] sm:$0xff] %vm808, %v5306
      %5339 = vst.msk [vmem:[%s254 + $0xa8] sm:$0xff] %vm808, %v5307
      %5340 = vst.msk [vmem:[%s254 + $0xb0] sm:$0xff] %vm808, %v5308
      %5341 = vst.msk [vmem:[%s254 + $0xb8] sm:$0xff] %vm808, %v5309
      %5342 = vst.msk [vmem:[%s254 + $0xc0] sm:$0xff] %vm808, %v5310
      %5343 = vst.msk [vmem:[%s254 + $0xc8] sm:$0xff] %vm808, %v5311
      %5344 = vst.msk [vmem:[%s254 + $0xd0] sm:$0xff] %vm808, %v5312
      %5345 = vst.msk [vmem:[%s254 + $0xd8] sm:$0xff] %vm808, %v5313
      %5346 = vst.msk [vmem:[%s254 + $0xe0] sm:$0xff] %vm808, %v5314
      %5347 = vst.msk [vmem:[%s254 + $0xe8] sm:$0xff] %vm808, %v5315
      %5348 = vst.msk [vmem:[%s254 + $0xf0] sm:$0xff] %vm808, %v5316
      %5349 = vst.msk [vmem:[%s254 + $0xf8] sm:$0xff] %vm808, %v5317
      %v5350 = vld [vmem:[%s254] sm:$0xff]
      %v5351 = vld [vmem:[%s254 + $0x8] sm:$0xff]
      %v5352 = vld [vmem:[%s254 + $0x10] sm:$0xff]
      %v5353 = vld [vmem:[%s254 + $0x18] sm:$0xff]
      %v5354 = vld [vmem:[%s254 + $0x20] sm:$0xff]
      %v5355 = vld [vmem:[%s254 + $0x28] sm:$0xff]
      %v5356 = vld [vmem:[%s254 + $0x30] sm:$0xff]
      %v5357 = vld [vmem:[%s254 + $0x38] sm:$0xff]
      %v5358 = vld [vmem:[%s254 + $0x40] sm:$0xff]
      %v5359 = vld [vmem:[%s254 + $0x48] sm:$0xff]
      %v5360 = vld [vmem:[%s254 + $0x50] sm:$0xff]
      %v5361 = vld [vmem:[%s254 + $0x58] sm:$0xff]
      %v5362 = vld [vmem:[%s254 + $0x60] sm:$0xff]
      %v5363 = vld [vmem:[%s254 + $0x68] sm:$0xff]
      %v5364 = vld [vmem:[%s254 + $0x70] sm:$0xff]
      %v5365 = vld [vmem:[%s254 + $0x78] sm:$0xff]
      %v5366 = vld [vmem:[%s254 + $0x80] sm:$0xff]
      %v5367 = vld [vmem:[%s254 + $0x88] sm:$0xff]
      %v5368 = vld [vmem:[%s254 + $0x90] sm:$0xff]
      %v5369 = vld [vmem:[%s254 + $0x98] sm:$0xff]
      %v5370 = vld [vmem:[%s254 + $0xa0] sm:$0xff]
      %v5371 = vld [vmem:[%s254 + $0xa8] sm:$0xff]
      %v5372 = vld [vmem:[%s254 + $0xb0] sm:$0xff]
      %v5373 = vld [vmem:[%s254 + $0xb8] sm:$0xff]
      %v5374 = vld [vmem:[%s254 + $0xc0] sm:$0xff]
      %v5375 = vld [vmem:[%s254 + $0xc8] sm:$0xff]
      %v5376 = vld [vmem:[%s254 + $0xd0] sm:$0xff]
      %v5377 = vld [vmem:[%s254 + $0xd8] sm:$0xff]
      %v5378 = vld [vmem:[%s254 + $0xe0] sm:$0xff]
      %v5379 = vld [vmem:[%s254 + $0xe8] sm:$0xff]
      %v5380 = vld [vmem:[%s254 + $0xf0] sm:$0xff]
      %v5381 = vld [vmem:[%s254 + $0xf8] sm:$0xff]
      %v5382 = vld [vmem:[#allocation3 + $0x1] sm:$0xff]
      %v5383 = vld [vmem:[#allocation3 + $0x9] sm:$0xff]
      %v5384 = vld [vmem:[#allocation3 + $0x11] sm:$0xff]
      %v5385 = vld [vmem:[#allocation3 + $0x19] sm:$0xff]
      %v5386 = vld [vmem:[#allocation3 + $0x21] sm:$0xff]
      %v5387 = vld [vmem:[#allocation3 + $0x29] sm:$0xff]
      %v5388 = vld [vmem:[#allocation3 + $0x31] sm:$0xff]
      %v5389 = vld [vmem:[#allocation3 + $0x39] sm:$0xff]
      %v5390 = vld [vmem:[#allocation3 + $0x41] sm:$0xff]
      %v5391 = vld [vmem:[#allocation3 + $0x49] sm:$0xff]
      %v5392 = vld [vmem:[#allocation3 + $0x51] sm:$0xff]
      %v5393 = vld [vmem:[#allocation3 + $0x59] sm:$0xff]
      %v5394 = vld [vmem:[#allocation3 + $0x61] sm:$0xff]
      %v5395 = vld [vmem:[#allocation3 + $0x69] sm:$0xff]
      %v5396 = vld [vmem:[#allocation3 + $0x71] sm:$0xff]
      %v5397 = vld [vmem:[#allocation3 + $0x79] sm:$0xff]
      %v5398 = vld [vmem:[#allocation3 + $0x81] sm:$0xff]
      %v5399 = vld [vmem:[#allocation3 + $0x89] sm:$0xff]
      %v5400 = vld [vmem:[#allocation3 + $0x91] sm:$0xff]
      %v5401 = vld [vmem:[#allocation3 + $0x99] sm:$0xff]
      %v5402 = vld [vmem:[#allocation3 + $0xa1] sm:$0xff]
      %v5403 = vld [vmem:[#allocation3 + $0xa9] sm:$0xff]
      %v5404 = vld [vmem:[#allocation3 + $0xb1] sm:$0xff]
      %v5405 = vld [vmem:[#allocation3 + $0xb9] sm:$0xff]
      %v5406 = vld [vmem:[#allocation3 + $0xc1] sm:$0xff]
      %v5407 = vld [vmem:[#allocation3 + $0xc9] sm:$0xff]
      %v5408 = vld [vmem:[#allocation3 + $0xd1] sm:$0xff]
      %v5409 = vld [vmem:[#allocation3 + $0xd9] sm:$0xff]
      %v5410 = vld [vmem:[#allocation3 + $0xe1] sm:$0xff]
      %v5411 = vld [vmem:[#allocation3 + $0xe9] sm:$0xff]
      %v5412 = vld [vmem:[#allocation3 + $0xf1] sm:$0xff]
      %v5413 = vld [vmem:[#allocation3 + $0xf9] sm:$0xff]
      %s5414 = scalar_lea.vmem %s4, 72
      %v5415 = vld [vmem:[%s5414] sm:$0xff]
      %v5416 = vld [vmem:[%s5414 + $0x8] sm:$0xff]
      %v5417 = vld [vmem:[%s5414 + $0x10] sm:$0xff]
      %v5418 = vld [vmem:[%s5414 + $0x18] sm:$0xff]
      %v5419 = vld [vmem:[%s5414 + $0x20] sm:$0xff]
      %v5420 = vld [vmem:[%s5414 + $0x28] sm:$0xff]
      %v5421 = vld [vmem:[%s5414 + $0x30] sm:$0xff]
      %v5422 = vld [vmem:[%s5414 + $0x38] sm:$0xff]
      %v5423 = vld [vmem:[%s5414 + $0x40] sm:$0x1]
      %v5425 = vsel %vm4712, %v5382, 0
      %v5428 = vsel %vm4712, %v5383, 0
      %v5431 = vsel %vm4712, %v5384, 0
      %v5434 = vsel %vm4712, %v5385, 0
      %v5437 = vsel %vm4712, %v5386, 0
      %v5440 = vsel %vm4712, %v5387, 0
      %v5443 = vsel %vm4712, %v5388, 0
      %v5446 = vsel %vm4712, %v5389, 0
      %v5449 = vsel %vm4712, %v5390, 0
      %v5452 = vsel %vm4712, %v5391, 0
      %v5455 = vsel %vm4712, %v5392, 0
      %v5458 = vsel %vm4712, %v5393, 0
      %v5461 = vsel %vm4712, %v5394, 0
      %v5464 = vsel %vm4712, %v5395, 0
      %v5467 = vsel %vm4712, %v5396, 0
      %v5470 = vsel %vm4712, %v5397, 0
      %v5473 = vsel %vm4712, %v5398, 0
      %v5476 = vsel %vm4712, %v5399, 0
      %v5479 = vsel %vm4712, %v5400, 0
      %v5482 = vsel %vm4712, %v5401, 0
      %v5485 = vsel %vm4712, %v5402, 0
      %v5488 = vsel %vm4712, %v5403, 0
      %v5491 = vsel %vm4712, %v5404, 0
      %v5494 = vsel %vm4712, %v5405, 0
      %v5497 = vsel %vm4712, %v5406, 0
      %v5500 = vsel %vm4712, %v5407, 0
      %v5503 = vsel %vm4712, %v5408, 0
      %v5506 = vsel %vm4712, %v5409, 0
      %v5509 = vsel %vm4712, %v5410, 0
      %v5512 = vsel %vm4712, %v5411, 0
      %v5515 = vsel %vm4712, %v5412, 0
      %v5518 = vsel %vm4712, %v5413, 0
      %v5521 = vsel %vm5057, %v5423, 0
      %5523 = vmatprep.subr.mxu0 0.0
      %5524 = vmatpush1.msra.mxu0 %v5415
      %5525 = vmatprep.subr.mxu0 0.0
      %5526 = vmatpush1.msra.mxu0 %v5416
      %5527 = vmatprep.subr.mxu0 0.0
      %5528 = vmatpush1.msra.mxu0 %v5417
      %5529 = vmatprep.subr.mxu0 0.0
      %5530 = vmatpush1.msra.mxu0 %v5418
      %5531 = vmatprep.subr.mxu0 0.0
      %5532 = vmatpush1.msra.mxu0 %v5419
      %5533 = vmatprep.subr.mxu0 0.0
      %5534 = vmatpush1.msra.mxu0 %v5420
      %5535 = vmatprep.subr.mxu0 0.0
      %5536 = vmatpush1.msra.mxu0 %v5421
      %5537 = vmatprep.subr.mxu0 0.0
      %5538 = vmatpush1.msra.mxu0 %v5422
      %5539 = vmatprep.subr.mxu0 0.0
      %5540 = vmatpush1.msra.mxu0 %v5521
      %5541 = vmatprep.subr.mxu0 0.0
      %5542 = vmatpush1.msra.mxu0 0.0
      %5543 = vmatprep.subr.mxu0 0.0
      %5544 = vmatpush1.msra.mxu0 0.0
      %5545 = vmatprep.subr.mxu0 0.0
      %5546 = vmatpush1.msra.mxu0 0.0
      %5547 = vmatprep.subr.mxu0 0.0
      %5548 = vmatpush1.msra.mxu0 0.0
      %5549 = vmatprep.subr.mxu0 0.0
      %5550 = vmatpush1.msra.mxu0 0.0
      %5551 = vmatprep.subr.mxu0 0.0
      %5552 = vmatpush1.msra.mxu0 0.0
      %5553 = vmatprep.subr.mxu0 0.0
      %5554 = vmatpush1.msra.mxu0 0.0
      %5555 = vmatprep.subr.mxu0 0.0
      %5556 = vmatpush1.msra.mxu0 0.0
      %5557 = vmatprep.subr.mxu0 0.0
      %5558 = vmatpush1.msra.mxu0 0.0
      %5559 = vmatprep.subr.mxu0 0.0
      %5560 = vmatpush1.msra.mxu0 0.0
      %5561 = vmatprep.subr.mxu0 0.0
      %5562 = vmatpush1.msra.mxu0 0.0
      %5563 = vmatprep.subr.mxu0 0.0
      %5564 = vmatpush1.msra.mxu0 0.0
      %5565 = vmatprep.subr.mxu0 0.0
      %5566 = vmatpush1.msra.mxu0 0.0
      %5567 = vmatprep.subr.mxu0 0.0
      %5568 = vmatpush1.msra.mxu0 0.0
      %5569 = vmatprep.subr.mxu0 0.0
      %5570 = vmatpush1.msra.mxu0 0.0
      %5571 = vmatprep.subr.mxu0 0.0
      %5572 = vmatpush1.msra.mxu0 0.0
      %5573 = vmatprep.subr.mxu0 0.0
      %5574 = vmatpush1.msra.mxu0 0.0
      %5575 = vmatprep.subr.mxu0 0.0
      %5576 = vmatpush1.msra.mxu0 0.0
      %5577 = vmatprep.subr.mxu0 0.0
      %5578 = vmatpush1.msra.mxu0 0.0
      %5579 = vmatprep.subr.mxu0 0.0
      %5580 = vmatpush1.msra.mxu0 0.0
      %5581 = vmatprep.subr.mxu0 0.0
      %5582 = vmatpush1.msra.mxu0 0.0
      %5583 = vmatprep.subr.mxu0 0.0
      %5584 = vmatpush1.msra.mxu0 0.0
      %5585 = vmatprep.subr.mxu0 0.0
      %5586 = vmatpush1.msra.mxu0 0.0
      %5587 = vmatprep.mubr.f32.mxu0 0.0
      %5588 = vmatmul.mubr.f32.gmra.mrb[0].mxu0 %v5425
      %v5589 = vpop.f32.mrb[0].mxu0
      %v5590 = vadd.f32 0.0, %v5589
      %v5591 = vpop.f32.mrb[0].mxu0
      %5592 = vmatprep.mubr.f32.mxu0 0.0
      %5593 = vmatmul.mubr.f32.gmra.mrb[0].mxu0 %v5428
      %v5594 = vpop.f32.mrb[0].mxu0
      %v5595 = vadd.f32 0.0, %v5594
      %v5596 = vpop.f32.mrb[0].mxu0
      %5597 = vmatprep.mubr.f32.mxu0 0.0
      %5598 = vmatmul.mubr.f32.gmra.mrb[0].mxu0 %v5431
      %v5599 = vpop.f32.mrb[0].mxu0
      %v5600 = vadd.f32 0.0, %v5599
      %v5601 = vpop.f32.mrb[0].mxu0
      %5602 = vmatprep.mubr.f32.mxu0 0.0
      %5603 = vmatmul.mubr.f32.gmra.mrb[0].mxu0 %v5434
      %v5604 = vpop.f32.mrb[0].mxu0
      %v5605 = vadd.f32 0.0, %v5604
      %v5606 = vpop.f32.mrb[0].mxu0
      %5607 = vmatprep.mubr.f32.mxu0 0.0
      %5608 = vmatmul.mubr.f32.gmra.mrb[0].mxu0 %v5437
      %v5609 = vpop.f32.mrb[0].mxu0
      %v5610 = vadd.f32 0.0, %v5609
      %v5611 = vpop.f32.mrb[0].mxu0
      %5612 = vmatprep.mubr.f32.mxu0 0.0
      %5613 = vmatmul.mubr.f32.gmra.mrb[0].mxu0 %v5440
      %v5614 = vpop.f32.mrb[0].mxu0
      %v5615 = vadd.f32 0.0, %v5614
      %v5616 = vpop.f32.mrb[0].mxu0
      %5617 = vmatprep.mubr.f32.mxu0 0.0
      %5618 = vmatmul.mubr.f32.gmra.mrb[0].mxu0 %v5443
      %v5619 = vpop.f32.mrb[0].mxu0
      %v5620 = vadd.f32 0.0, %v5619
      %v5621 = vpop.f32.mrb[0].mxu0
      %5622 = vmatprep.mubr.f32.mxu0 0.0
      %5623 = vmatmul.mubr.f32.gmra.mrb[0].mxu0 %v5446
      %v5624 = vpop.f32.mrb[0].mxu0
      %v5625 = vadd.f32 0.0, %v5624
      %v5626 = vpop.f32.mrb[0].mxu0
      %5627 = vmatprep.mubr.f32.mxu0 0.0
      %5628 = vmatmul.mubr.f32.gmra.mrb[0].mxu0 %v5449
      %v5629 = vpop.f32.mrb[0].mxu0
      %v5630 = vadd.f32 0.0, %v5629
      %v5631 = vpop.f32.mrb[0].mxu0
      %5632 = vmatprep.mubr.f32.mxu0 0.0
      %5633 = vmatmul.mubr.f32.gmra.mrb[0].mxu0 %v5452
      %v5634 = vpop.f32.mrb[0].mxu0
      %v5635 = vadd.f32 0.0, %v5634
      %v5636 = vpop.f32.mrb[0].mxu0
      %5637 = vmatprep.mubr.f32.mxu0 0.0
      %5638 = vmatmul.mubr.f32.gmra.mrb[0].mxu0 %v5455
      %v5639 = vpop.f32.mrb[0].mxu0
      %v5640 = vadd.f32 0.0, %v5639
      %v5641 = vpop.f32.mrb[0].mxu0
      %5642 = vmatprep.mubr.f32.mxu0 0.0
      %5643 = vmatmul.mubr.f32.gmra.mrb[0].mxu0 %v5458
      %v5644 = vpop.f32.mrb[0].mxu0
      %v5645 = vadd.f32 0.0, %v5644
      %v5646 = vpop.f32.mrb[0].mxu0
      %5647 = vmatprep.mubr.f32.mxu0 0.0
      %5648 = vmatmul.mubr.f32.gmra.mrb[0].mxu0 %v5461
      %v5649 = vpop.f32.mrb[0].mxu0
      %v5650 = vadd.f32 0.0, %v5649
      %v5651 = vpop.f32.mrb[0].mxu0
      %5652 = vmatprep.mubr.f32.mxu0 0.0
      %5653 = vmatmul.mubr.f32.gmra.mrb[0].mxu0 %v5464
      %v5654 = vpop.f32.mrb[0].mxu0
      %v5655 = vadd.f32 0.0, %v5654
      %v5656 = vpop.f32.mrb[0].mxu0
      %5657 = vmatprep.mubr.f32.mxu0 0.0
      %5658 = vmatmul.mubr.f32.gmra.mrb[0].mxu0 %v5467
      %v5659 = vpop.f32.mrb[0].mxu0
      %v5660 = vadd.f32 0.0, %v5659
      %v5661 = vpop.f32.mrb[0].mxu0
      %5662 = vmatprep.mubr.f32.mxu0 0.0
      %5663 = vmatmul.mubr.f32.gmra.mrb[0].mxu0 %v5470
      %v5664 = vpop.f32.mrb[0].mxu0
      %v5665 = vadd.f32 0.0, %v5664
      %v5666 = vpop.f32.mrb[0].mxu0
      %5667 = vmatprep.mubr.f32.mxu0 0.0
      %5668 = vmatmul.mubr.f32.gmra.mrb[0].mxu0 %v5473
      %v5669 = vpop.f32.mrb[0].mxu0
      %v5670 = vadd.f32 0.0, %v5669
      %v5671 = vpop.f32.mrb[0].mxu0
      %5672 = vmatprep.mubr.f32.mxu0 0.0
      %5673 = vmatmul.mubr.f32.gmra.mrb[0].mxu0 %v5476
      %v5674 = vpop.f32.mrb[0].mxu0
      %v5675 = vadd.f32 0.0, %v5674
      %v5676 = vpop.f32.mrb[0].mxu0
      %5677 = vmatprep.mubr.f32.mxu0 0.0
      %5678 = vmatmul.mubr.f32.gmra.mrb[0].mxu0 %v5479
      %v5679 = vpop.f32.mrb[0].mxu0
      %v5680 = vadd.f32 0.0, %v5679
      %v5681 = vpop.f32.mrb[0].mxu0
      %5682 = vmatprep.mubr.f32.mxu0 0.0
      %5683 = vmatmul.mubr.f32.gmra.mrb[0].mxu0 %v5482
      %v5684 = vpop.f32.mrb[0].mxu0
      %v5685 = vadd.f32 0.0, %v5684
      %v5686 = vpop.f32.mrb[0].mxu0
      %5687 = vmatprep.mubr.f32.mxu0 0.0
      %5688 = vmatmul.mubr.f32.gmra.mrb[0].mxu0 %v5485
      %v5689 = vpop.f32.mrb[0].mxu0
      %v5690 = vadd.f32 0.0, %v5689
      %v5691 = vpop.f32.mrb[0].mxu0
      %5692 = vmatprep.mubr.f32.mxu0 0.0
      %5693 = vmatmul.mubr.f32.gmra.mrb[0].mxu0 %v5488
      %v5694 = vpop.f32.mrb[0].mxu0
      %v5695 = vadd.f32 0.0, %v5694
      %v5696 = vpop.f32.mrb[0].mxu0
      %5697 = vmatprep.mubr.f32.mxu0 0.0
      %5698 = vmatmul.mubr.f32.gmra.mrb[0].mxu0 %v5491
      %v5699 = vpop.f32.mrb[0].mxu0
      %v5700 = vadd.f32 0.0, %v5699
      %v5701 = vpop.f32.mrb[0].mxu0
      %5702 = vmatprep.mubr.f32.mxu0 0.0
      %5703 = vmatmul.mubr.f32.gmra.mrb[0].mxu0 %v5494
      %v5704 = vpop.f32.mrb[0].mxu0
      %v5705 = vadd.f32 0.0, %v5704
      %v5706 = vpop.f32.mrb[0].mxu0
      %5707 = vmatprep.mubr.f32.mxu0 0.0
      %5708 = vmatmul.mubr.f32.gmra.mrb[0].mxu0 %v5497
      %v5709 = vpop.f32.mrb[0].mxu0
      %v5710 = vadd.f32 0.0, %v5709
      %v5711 = vpop.f32.mrb[0].mxu0
      %5712 = vmatprep.mubr.f32.mxu0 0.0
      %5713 = vmatmul.mubr.f32.gmra.mrb[0].mxu0 %v5500
      %v5714 = vpop.f32.mrb[0].mxu0
      %v5715 = vadd.f32 0.0, %v5714
      %v5716 = vpop.f32.mrb[0].mxu0
      %5717 = vmatprep.mubr.f32.mxu0 0.0
      %5718 = vmatmul.mubr.f32.gmra.mrb[0].mxu0 %v5503
      %v5719 = vpop.f32.mrb[0].mxu0
      %v5720 = vadd.f32 0.0, %v5719
      %v5721 = vpop.f32.mrb[0].mxu0
      %5722 = vmatprep.mubr.f32.mxu0 0.0
      %5723 = vmatmul.mubr.f32.gmra.mrb[0].mxu0 %v5506
      %v5724 = vpop.f32.mrb[0].mxu0
      %v5725 = vadd.f32 0.0, %v5724
      %v5726 = vpop.f32.mrb[0].mxu0
      %5727 = vmatprep.mubr.f32.mxu0 0.0
      %5728 = vmatmul.mubr.f32.gmra.mrb[0].mxu0 %v5509
      %v5729 = vpop.f32.mrb[0].mxu0
      %v5730 = vadd.f32 0.0, %v5729
      %v5731 = vpop.f32.mrb[0].mxu0
      %5732 = vmatprep.mubr.f32.mxu0 0.0
      %5733 = vmatmul.mubr.f32.gmra.mrb[0].mxu0 %v5512
      %v5734 = vpop.f32.mrb[0].mxu0
      %v5735 = vadd.f32 0.0, %v5734
      %v5736 = vpop.f32.mrb[0].mxu0
      %5737 = vmatprep.mubr.f32.mxu0 0.0
      %5738 = vmatmul.mubr.f32.gmra.mrb[0].mxu0 %v5515
      %v5739 = vpop.f32.mrb[0].mxu0
      %v5740 = vadd.f32 0.0, %v5739
      %v5741 = vpop.f32.mrb[0].mxu0
      %5742 = vmatprep.mubr.f32.mxu0 0.0
      %5743 = vmatmul.mubr.f32.gmra.mrb[0].mxu0 %v5518
      %v5744 = vpop.f32.mrb[0].mxu0
      %v5745 = vadd.f32 0.0, %v5744
      %v5746 = vpop.f32.mrb[0].mxu0
      %5747 = vdwg.mxu0
      %v5748 = vadd.f32 %v5350, %v5590
      %v5749 = vadd.f32 %v5351, %v5595
      %v5750 = vadd.f32 %v5352, %v5600
      %v5751 = vadd.f32 %v5353, %v5605
      %v5752 = vadd.f32 %v5354, %v5610
      %v5753 = vadd.f32 %v5355, %v5615
      %v5754 = vadd.f32 %v5356, %v5620
      %v5755 = vadd.f32 %v5357, %v5625
      %v5756 = vadd.f32 %v5358, %v5630
      %v5757 = vadd.f32 %v5359, %v5635
      %v5758 = vadd.f32 %v5360, %v5640
      %v5759 = vadd.f32 %v5361, %v5645
      %v5760 = vadd.f32 %v5362, %v5650
      %v5761 = vadd.f32 %v5363, %v5655
      %v5762 = vadd.f32 %v5364, %v5660
      %v5763 = vadd.f32 %v5365, %v5665
      %v5764 = vadd.f32 %v5366, %v5670
      %v5765 = vadd.f32 %v5367, %v5675
      %v5766 = vadd.f32 %v5368, %v5680
      %v5767 = vadd.f32 %v5369, %v5685
      %v5768 = vadd.f32 %v5370, %v5690
      %v5769 = vadd.f32 %v5371, %v5695
      %v5770 = vadd.f32 %v5372, %v5700
      %v5771 = vadd.f32 %v5373, %v5705
      %v5772 = vadd.f32 %v5374, %v5710
      %v5773 = vadd.f32 %v5375, %v5715
      %v5774 = vadd.f32 %v5376, %v5720
      %v5775 = vadd.f32 %v5377, %v5725
      %v5776 = vadd.f32 %v5378, %v5730
      %v5777 = vadd.f32 %v5379, %v5735
      %v5778 = vadd.f32 %v5380, %v5740
      %v5779 = vadd.f32 %v5381, %v5745
      %5780 = vst.msk [vmem:[%s254] sm:$0xff] %vm808, %v5748
      %5781 = vst.msk [vmem:[%s254 + $0x8] sm:$0xff] %vm808, %v5749
      %5782 = vst.msk [vmem:[%s254 + $0x10] sm:$0xff] %vm808, %v5750
      %5783 = vst.msk [vmem:[%s254 + $0x18] sm:$0xff] %vm808, %v5751
      %5784 = vst.msk [vmem:[%s254 + $0x20] sm:$0xff] %vm808, %v5752
      %5785 = vst.msk [vmem:[%s254 + $0x28] sm:$0xff] %vm808, %v5753
      %5786 = vst.msk [vmem:[%s254 + $0x30] sm:$0xff] %vm808, %v5754
      %5787 = vst.msk [vmem:[%s254 + $0x38] sm:$0xff] %vm808, %v5755
      %5788 = vst.msk [vmem:[%s254 + $0x40] sm:$0xff] %vm808, %v5756
      %5789 = vst.msk [vmem:[%s254 + $0x48] sm:$0xff] %vm808, %v5757
      %5790 = vst.msk [vmem:[%s254 + $0x50] sm:$0xff] %vm808, %v5758
      %5791 = vst.msk [vmem:[%s254 + $0x58] sm:$0xff] %vm808, %v5759
      %5792 = vst.msk [vmem:[%s254 + $0x60] sm:$0xff] %vm808, %v5760
      %5793 = vst.msk [vmem:[%s254 + $0x68] sm:$0xff] %vm808, %v5761
      %5794 = vst.msk [vmem:[%s254 + $0x70] sm:$0xff] %vm808, %v5762
      %5795 = vst.msk [vmem:[%s254 + $0x78] sm:$0xff] %vm808, %v5763
      %5796 = vst.msk [vmem:[%s254 + $0x80] sm:$0xff] %vm808, %v5764
      %5797 = vst.msk [vmem:[%s254 + $0x88] sm:$0xff] %vm808, %v5765
      %5798 = vst.msk [vmem:[%s254 + $0x90] sm:$0xff] %vm808, %v5766
      %5799 = vst.msk [vmem:[%s254 + $0x98] sm:$0xff] %vm808, %v5767
      %5800 = vst.msk [vmem:[%s254 + $0xa0] sm:$0xff] %vm808, %v5768
      %5801 = vst.msk [vmem:[%s254 + $0xa8] sm:$0xff] %vm808, %v5769
      %5802 = vst.msk [vmem:[%s254 + $0xb0] sm:$0xff] %vm808, %v5770
      %5803 = vst.msk [vmem:[%s254 + $0xb8] sm:$0xff] %vm808, %v5771
      %5804 = vst.msk [vmem:[%s254 + $0xc0] sm:$0xff] %vm808, %v5772
      %5805 = vst.msk [vmem:[%s254 + $0xc8] sm:$0xff] %vm808, %v5773
      %5806 = vst.msk [vmem:[%s254 + $0xd0] sm:$0xff] %vm808, %v5774
      %5807 = vst.msk [vmem:[%s254 + $0xd8] sm:$0xff] %vm808, %v5775
      %5808 = vst.msk [vmem:[%s254 + $0xe0] sm:$0xff] %vm808, %v5776
      %5809 = vst.msk [vmem:[%s254 + $0xe8] sm:$0xff] %vm808, %v5777
      %5810 = vst.msk [vmem:[%s254 + $0xf0] sm:$0xff] %vm808, %v5778
      %5811 = vst.msk [vmem:[%s254 + $0xf8] sm:$0xff] %vm808, %v5779
      %v5812 = vld [vmem:[%s254] sm:$0xff]
      %v5813 = vld [vmem:[%s254 + $0x8] sm:$0xff]
      %v5814 = vld [vmem:[%s254 + $0x10] sm:$0xff]
      %v5815 = vld [vmem:[%s254 + $0x18] sm:$0xff]
      %v5816 = vld [vmem:[%s254 + $0x20] sm:$0xff]
      %v5817 = vld [vmem:[%s254 + $0x28] sm:$0xff]
      %v5818 = vld [vmem:[%s254 + $0x30] sm:$0xff]
      %v5819 = vld [vmem:[%s254 + $0x38] sm:$0xff]
      %v5820 = vld [vmem:[%s254 + $0x40] sm:$0xff]
      %v5821 = vld [vmem:[%s254 + $0x48] sm:$0xff]
      %v5822 = vld [vmem:[%s254 + $0x50] sm:$0xff]
      %v5823 = vld [vmem:[%s254 + $0x58] sm:$0xff]
      %v5824 = vld [vmem:[%s254 + $0x60] sm:$0xff]
      %v5825 = vld [vmem:[%s254 + $0x68] sm:$0xff]
      %v5826 = vld [vmem:[%s254 + $0x70] sm:$0xff]
      %v5827 = vld [vmem:[%s254 + $0x78] sm:$0xff]
      %v5828 = vld [vmem:[%s254 + $0x80] sm:$0xff]
      %v5829 = vld [vmem:[%s254 + $0x88] sm:$0xff]
      %v5830 = vld [vmem:[%s254 + $0x90] sm:$0xff]
      %v5831 = vld [vmem:[%s254 + $0x98] sm:$0xff]
      %v5832 = vld [vmem:[%s254 + $0xa0] sm:$0xff]
      %v5833 = vld [vmem:[%s254 + $0xa8] sm:$0xff]
      %v5834 = vld [vmem:[%s254 + $0xb0] sm:$0xff]
      %v5835 = vld [vmem:[%s254 + $0xb8] sm:$0xff]
      %v5836 = vld [vmem:[%s254 + $0xc0] sm:$0xff]
      %v5837 = vld [vmem:[%s254 + $0xc8] sm:$0xff]
      %v5838 = vld [vmem:[%s254 + $0xd0] sm:$0xff]
      %v5839 = vld [vmem:[%s254 + $0xd8] sm:$0xff]
      %v5840 = vld [vmem:[%s254 + $0xe0] sm:$0xff]
      %v5841 = vld [vmem:[%s254 + $0xe8] sm:$0xff]
      %v5842 = vld [vmem:[%s254 + $0xf0] sm:$0xff]
      %v5843 = vld [vmem:[%s254 + $0xf8] sm:$0xff]
      %v5844 = vld [vmem:[#allocation3 + $0x2] sm:$0xff]
      %v5845 = vld [vmem:[#allocation3 + $0xa] sm:$0xff]
      %v5846 = vld [vmem:[#allocation3 + $0x12] sm:$0xff]
      %v5847 = vld [vmem:[#allocation3 + $0x1a] sm:$0xff]
      %v5848 = vld [vmem:[#allocation3 + $0x22] sm:$0xff]
      %v5849 = vld [vmem:[#allocation3 + $0x2a] sm:$0xff]
      %v5850 = vld [vmem:[#allocation3 + $0x32] sm:$0xff]
      %v5851 = vld [vmem:[#allocation3 + $0x3a] sm:$0xff]
      %v5852 = vld [vmem:[#allocation3 + $0x42] sm:$0xff]
      %v5853 = vld [vmem:[#allocation3 + $0x4a] sm:$0xff]
      %v5854 = vld [vmem:[#allocation3 + $0x52] sm:$0xff]
      %v5855 = vld [vmem:[#allocation3 + $0x5a] sm:$0xff]
      %v5856 = vld [vmem:[#allocation3 + $0x62] sm:$0xff]
      %v5857 = vld [vmem:[#allocation3 + $0x6a] sm:$0xff]
      %v5858 = vld [vmem:[#allocation3 + $0x72] sm:$0xff]
      %v5859 = vld [vmem:[#allocation3 + $0x7a] sm:$0xff]
      %v5860 = vld [vmem:[#allocation3 + $0x82] sm:$0xff]
      %v5861 = vld [vmem:[#allocation3 + $0x8a] sm:$0xff]
      %v5862 = vld [vmem:[#allocation3 + $0x92] sm:$0xff]
      %v5863 = vld [vmem:[#allocation3 + $0x9a] sm:$0xff]
      %v5864 = vld [vmem:[#allocation3 + $0xa2] sm:$0xff]
      %v5865 = vld [vmem:[#allocation3 + $0xaa] sm:$0xff]
      %v5866 = vld [vmem:[#allocation3 + $0xb2] sm:$0xff]
      %v5867 = vld [vmem:[#allocation3 + $0xba] sm:$0xff]
      %v5868 = vld [vmem:[#allocation3 + $0xc2] sm:$0xff]
      %v5869 = vld [vmem:[#allocation3 + $0xca] sm:$0xff]
      %v5870 = vld [vmem:[#allocation3 + $0xd2] sm:$0xff]
      %v5871 = vld [vmem:[#allocation3 + $0xda] sm:$0xff]
      %v5872 = vld [vmem:[#allocation3 + $0xe2] sm:$0xff]
      %v5873 = vld [vmem:[#allocation3 + $0xea] sm:$0xff]
      %v5874 = vld [vmem:[#allocation3 + $0xf2] sm:$0xff]
      %v5875 = vld [vmem:[#allocation3 + $0xfa] sm:$0xff]
      %v5876 = vsel %vm1822, %v5844, 0.0
      %v5877 = vsel %vm1823, %v5845, 0.0
      %v5878 = vsel %vm1824, %v5846, 0.0
      %v5879 = vsel %vm1825, %v5847, 0.0
      %v5880 = vsel %vm1826, %v5848, 0.0
      %v5881 = vsel %vm1827, %v5849, 0.0
      %v5882 = vsel %vm1828, %v5850, 0.0
      %v5883 = vsel %vm1829, %v5851, 0.0
      %v5884 = vsel %vm1830, %v5852, 0.0
      %v5885 = vsel %vm1831, %v5853, 0.0
      %v5886 = vsel %vm1832, %v5854, 0.0
      %v5887 = vsel %vm1833, %v5855, 0.0
      %v5888 = vsel %vm1834, %v5856, 0.0
      %v5889 = vsel %vm1835, %v5857, 0.0
      %v5890 = vsel %vm1836, %v5858, 0.0
      %v5891 = vsel %vm1837, %v5859, 0.0
      %v5892 = vsel %vm1838, %v5860, 0.0
      %v5893 = vsel %vm1839, %v5861, 0.0
      %v5894 = vsel %vm1840, %v5862, 0.0
      %v5895 = vsel %vm1841, %v5863, 0.0
      %v5896 = vsel %vm1842, %v5864, 0.0
      %v5897 = vsel %vm1843, %v5865, 0.0
      %v5898 = vsel %vm1844, %v5866, 0.0
      %v5899 = vsel %vm1845, %v5867, 0.0
      %v5900 = vsel %vm1846, %v5868, 0.0
      %v5901 = vsel %vm1847, %v5869, 0.0
      %v5902 = vsel %vm1848, %v5870, 0.0
      %v5903 = vsel %vm1849, %v5871, 0.0
      %v5904 = vsel %vm1850, %v5872, 0.0
      %v5905 = vsel %vm1851, %v5873, 0.0
      %v5906 = vsel %vm1852, %v5874, 0.0
      %v5907 = vsel %vm1853, %v5875, 0.0
      %s5908 = scalar_lea.vmem %s4, 144
      %v5909 = vld [vmem:[%s5908] sm:$0xff]
      %v5910 = vld [vmem:[%s5908 + $0x8] sm:$0xff]
      %v5911 = vld [vmem:[%s5908 + $0x10] sm:$0xff]
      %v5912 = vld [vmem:[%s5908 + $0x18] sm:$0xff]
      %v5913 = vld [vmem:[%s5908 + $0x20] sm:$0xff]
      %v5914 = vld [vmem:[%s5908 + $0x28] sm:$0xff]
      %v5915 = vld [vmem:[%s5908 + $0x30] sm:$0xff]
      %v5916 = vld [vmem:[%s5908 + $0x38] sm:$0xff]
      %v5917 = vld [vmem:[%s5908 + $0x40] sm:$0x1]
      %v5919 = vsel %vm4712, %v5876, 0
      %v5922 = vsel %vm4712, %v5877, 0
      %v5925 = vsel %vm4712, %v5878, 0
      %v5928 = vsel %vm4712, %v5879, 0
      %v5931 = vsel %vm4712, %v5880, 0
      %v5934 = vsel %vm4712, %v5881, 0
      %v5937 = vsel %vm4712, %v5882, 0
      %v5940 = vsel %vm4712, %v5883, 0
      %v5943 = vsel %vm4712, %v5884, 0
      %v5946 = vsel %vm4712, %v5885, 0
      %v5949 = vsel %vm4712, %v5886, 0
      %v5952 = vsel %vm4712, %v5887, 0
      %v5955 = vsel %vm4712, %v5888, 0
      %v5958 = vsel %vm4712, %v5889, 0
      %v5961 = vsel %vm4712, %v5890, 0
      %v5964 = vsel %vm4712, %v5891, 0
      %v5967 = vsel %vm4712, %v5892, 0
      %v5970 = vsel %vm4712, %v5893, 0
      %v5973 = vsel %vm4712, %v5894, 0
      %v5976 = vsel %vm4712, %v5895, 0
      %v5979 = vsel %vm4712, %v5896, 0
      %v5982 = vsel %vm4712, %v5897, 0
      %v5985 = vsel %vm4712, %v5898, 0
      %v5988 = vsel %vm4712, %v5899, 0
      %v5991 = vsel %vm4712, %v5900, 0
      %v5994 = vsel %vm4712, %v5901, 0
      %v5997 = vsel %vm4712, %v5902, 0
      %v6000 = vsel %vm4712, %v5903, 0
      %v6003 = vsel %vm4712, %v5904, 0
      %v6006 = vsel %vm4712, %v5905, 0
      %v6009 = vsel %vm4712, %v5906, 0
      %v6012 = vsel %vm4712, %v5907, 0
      %v6015 = vsel %vm5057, %v5917, 0
      %6017 = vmatprep.subr.mxu0 0.0
      %6018 = vmatpush1.msra.mxu0 %v5909
      %6019 = vmatprep.subr.mxu0 0.0
      %6020 = vmatpush1.msra.mxu0 %v5910
      %6021 = vmatprep.subr.mxu0 0.0
      %6022 = vmatpush1.msra.mxu0 %v5911
      %6023 = vmatprep.subr.mxu0 0.0
      %6024 = vmatpush1.msra.mxu0 %v5912
      %6025 = vmatprep.subr.mxu0 0.0
      %6026 = vmatpush1.msra.mxu0 %v5913
      %6027 = vmatprep.subr.mxu0 0.0
      %6028 = vmatpush1.msra.mxu0 %v5914
      %6029 = vmatprep.subr.mxu0 0.0
      %6030 = vmatpush1.msra.mxu0 %v5915
      %6031 = vmatprep.subr.mxu0 0.0
      %6032 = vmatpush1.msra.mxu0 %v5916
      %6033 = vmatprep.subr.mxu0 0.0
      %6034 = vmatpush1.msra.mxu0 %v6015
      %6035 = vmatprep.subr.mxu0 0.0
      %6036 = vmatpush1.msra.mxu0 0.0
      %6037 = vmatprep.subr.mxu0 0.0
      %6038 = vmatpush1.msra.mxu0 0.0
      %6039 = vmatprep.subr.mxu0 0.0
      %6040 = vmatpush1.msra.mxu0 0.0
      %6041 = vmatprep.subr.mxu0 0.0
      %6042 = vmatpush1.msra.mxu0 0.0
      %6043 = vmatprep.subr.mxu0 0.0
      %6044 = vmatpush1.msra.mxu0 0.0
      %6045 = vmatprep.subr.mxu0 0.0
      %6046 = vmatpush1.msra.mxu0 0.0
      %6047 = vmatprep.subr.mxu0 0.0
      %6048 = vmatpush1.msra.mxu0 0.0
      %6049 = vmatprep.subr.mxu0 0.0
      %6050 = vmatpush1.msra.mxu0 0.0
      %6051 = vmatprep.subr.mxu0 0.0
      %6052 = vmatpush1.msra.mxu0 0.0
      %6053 = vmatprep.subr.mxu0 0.0
      %6054 = vmatpush1.msra.mxu0 0.0
      %6055 = vmatprep.subr.mxu0 0.0
      %6056 = vmatpush1.msra.mxu0 0.0
      %6057 = vmatprep.subr.mxu0 0.0
      %6058 = vmatpush1.msra.mxu0 0.0
      %6059 = vmatprep.subr.mxu0 0.0
      %6060 = vmatpush1.msra.mxu0 0.0
      %6061 = vmatprep.subr.mxu0 0.0
      %6062 = vmatpush1.msra.mxu0 0.0
      %6063 = vmatprep.subr.mxu0 0.0
      %6064 = vmatpush1.msra.mxu0 0.0
      %6065 = vmatprep.subr.mxu0 0.0
      %6066 = vmatpush1.msra.mxu0 0.0
      %6067 = vmatprep.subr.mxu0 0.0
      %6068 = vmatpush1.msra.mxu0 0.0
      %6069 = vmatprep.subr.mxu0 0.0
      %6070 = vmatpush1.msra.mxu0 0.0
      %6071 = vmatprep.subr.mxu0 0.0
      %6072 = vmatpush1.msra.mxu0 0.0
      %6073 = vmatprep.subr.mxu0 0.0
      %6074 = vmatpush1.msra.mxu0 0.0
      %6075 = vmatprep.subr.mxu0 0.0
      %6076 = vmatpush1.msra.mxu0 0.0
      %6077 = vmatprep.subr.mxu0 0.0
      %6078 = vmatpush1.msra.mxu0 0.0
      %6079 = vmatprep.subr.mxu0 0.0
      %6080 = vmatpush1.msra.mxu0 0.0
      %6081 = vmatprep.mubr.f32.mxu0 0.0
      %6082 = vmatmul.mubr.f32.gmra.mrb[0].mxu0 %v5919
      %v6083 = vpop.f32.mrb[0].mxu0
      %v6084 = vadd.f32 0.0, %v6083
      %v6085 = vpop.f32.mrb[0].mxu0
      %6086 = vmatprep.mubr.f32.mxu0 0.0
      %6087 = vmatmul.mubr.f32.gmra.mrb[0].mxu0 %v5922
      %v6088 = vpop.f32.mrb[0].mxu0
      %v6089 = vadd.f32 0.0, %v6088
      %v6090 = vpop.f32.mrb[0].mxu0
      %6091 = vmatprep.mubr.f32.mxu0 0.0
      %6092 = vmatmul.mubr.f32.gmra.mrb[0].mxu0 %v5925
      %v6093 = vpop.f32.mrb[0].mxu0
      %v6094 = vadd.f32 0.0, %v6093
      %v6095 = vpop.f32.mrb[0].mxu0
      %6096 = vmatprep.mubr.f32.mxu0 0.0
      %6097 = vmatmul.mubr.f32.gmra.mrb[0].mxu0 %v5928
      %v6098 = vpop.f32.mrb[0].mxu0
      %v6099 = vadd.f32 0.0, %v6098
      %v6100 = vpop.f32.mrb[0].mxu0
      %6101 = vmatprep.mubr.f32.mxu0 0.0
      %6102 = vmatmul.mubr.f32.gmra.mrb[0].mxu0 %v5931
      %v6103 = vpop.f32.mrb[0].mxu0
      %v6104 = vadd.f32 0.0, %v6103
      %v6105 = vpop.f32.mrb[0].mxu0
      %6106 = vmatprep.mubr.f32.mxu0 0.0
      %6107 = vmatmul.mubr.f32.gmra.mrb[0].mxu0 %v5934
      %v6108 = vpop.f32.mrb[0].mxu0
      %v6109 = vadd.f32 0.0, %v6108
      %v6110 = vpop.f32.mrb[0].mxu0
      %6111 = vmatprep.mubr.f32.mxu0 0.0
      %6112 = vmatmul.mubr.f32.gmra.mrb[0].mxu0 %v5937
      %v6113 = vpop.f32.mrb[0].mxu0
      %v6114 = vadd.f32 0.0, %v6113
      %v6115 = vpop.f32.mrb[0].mxu0
      %6116 = vmatprep.mubr.f32.mxu0 0.0
      %6117 = vmatmul.mubr.f32.gmra.mrb[0].mxu0 %v5940
      %v6118 = vpop.f32.mrb[0].mxu0
      %v6119 = vadd.f32 0.0, %v6118
      %v6120 = vpop.f32.mrb[0].mxu0
      %6121 = vmatprep.mubr.f32.mxu0 0.0
      %6122 = vmatmul.mubr.f32.gmra.mrb[0].mxu0 %v5943
      %v6123 = vpop.f32.mrb[0].mxu0
      %v6124 = vadd.f32 0.0, %v6123
      %v6125 = vpop.f32.mrb[0].mxu0
      %6126 = vmatprep.mubr.f32.mxu0 0.0
      %6127 = vmatmul.mubr.f32.gmra.mrb[0].mxu0 %v5946
      %v6128 = vpop.f32.mrb[0].mxu0
      %v6129 = vadd.f32 0.0, %v6128
      %v6130 = vpop.f32.mrb[0].mxu0
      %6131 = vmatprep.mubr.f32.mxu0 0.0
      %6132 = vmatmul.mubr.f32.gmra.mrb[0].mxu0 %v5949
      %v6133 = vpop.f32.mrb[0].mxu0
      %v6134 = vadd.f32 0.0, %v6133
      %v6135 = vpop.f32.mrb[0].mxu0
      %6136 = vmatprep.mubr.f32.mxu0 0.0
      %6137 = vmatmul.mubr.f32.gmra.mrb[0].mxu0 %v5952
      %v6138 = vpop.f32.mrb[0].mxu0
      %v6139 = vadd.f32 0.0, %v6138
      %v6140 = vpop.f32.mrb[0].mxu0
      %6141 = vmatprep.mubr.f32.mxu0 0.0
      %6142 = vmatmul.mubr.f32.gmra.mrb[0].mxu0 %v5955
      %v6143 = vpop.f32.mrb[0].mxu0
      %v6144 = vadd.f32 0.0, %v6143
      %v6145 = vpop.f32.mrb[0].mxu0
      %6146 = vmatprep.mubr.f32.mxu0 0.0
      %6147 = vmatmul.mubr.f32.gmra.mrb[0].mxu0 %v5958
      %v6148 = vpop.f32.mrb[0].mxu0
      %v6149 = vadd.f32 0.0, %v6148
      %v6150 = vpop.f32.mrb[0].mxu0
      %6151 = vmatprep.mubr.f32.mxu0 0.0
      %6152 = vmatmul.mubr.f32.gmra.mrb[0].mxu0 %v5961
      %v6153 = vpop.f32.mrb[0].mxu0
      %v6154 = vadd.f32 0.0, %v6153
      %v6155 = vpop.f32.mrb[0].mxu0
      %6156 = vmatprep.mubr.f32.mxu0 0.0
      %6157 = vmatmul.mubr.f32.gmra.mrb[0].mxu0 %v5964
      %v6158 = vpop.f32.mrb[0].mxu0
      %v6159 = vadd.f32 0.0, %v6158
      %v6160 = vpop.f32.mrb[0].mxu0
      %6161 = vmatprep.mubr.f32.mxu0 0.0
      %6162 = vmatmul.mubr.f32.gmra.mrb[0].mxu0 %v5967
      %v6163 = vpop.f32.mrb[0].mxu0
      %v6164 = vadd.f32 0.0, %v6163
      %v6165 = vpop.f32.mrb[0].mxu0
      %6166 = vmatprep.mubr.f32.mxu0 0.0
      %6167 = vmatmul.mubr.f32.gmra.mrb[0].mxu0 %v5970
      %v6168 = vpop.f32.mrb[0].mxu0
      %v6169 = vadd.f32 0.0, %v6168
      %v6170 = vpop.f32.mrb[0].mxu0
      %6171 = vmatprep.mubr.f32.mxu0 0.0
      %6172 = vmatmul.mubr.f32.gmra.mrb[0].mxu0 %v5973
      %v6173 = vpop.f32.mrb[0].mxu0
      %v6174 = vadd.f32 0.0, %v6173
      %v6175 = vpop.f32.mrb[0].mxu0
      %6176 = vmatprep.mubr.f32.mxu0 0.0
      %6177 = vmatmul.mubr.f32.gmra.mrb[0].mxu0 %v5976
      %v6178 = vpop.f32.mrb[0].mxu0
      %v6179 = vadd.f32 0.0, %v6178
      %v6180 = vpop.f32.mrb[0].mxu0
      %6181 = vmatprep.mubr.f32.mxu0 0.0
      %6182 = vmatmul.mubr.f32.gmra.mrb[0].mxu0 %v5979
      %v6183 = vpop.f32.mrb[0].mxu0
      %v6184 = vadd.f32 0.0, %v6183
      %v6185 = vpop.f32.mrb[0].mxu0
      %6186 = vmatprep.mubr.f32.mxu0 0.0
      %6187 = vmatmul.mubr.f32.gmra.mrb[0].mxu0 %v5982
      %v6188 = vpop.f32.mrb[0].mxu0
      %v6189 = vadd.f32 0.0, %v6188
      %v6190 = vpop.f32.mrb[0].mxu0
      %6191 = vmatprep.mubr.f32.mxu0 0.0
      %6192 = vmatmul.mubr.f32.gmra.mrb[0].mxu0 %v5985
      %v6193 = vpop.f32.mrb[0].mxu0
      %v6194 = vadd.f32 0.0, %v6193
      %v6195 = vpop.f32.mrb[0].mxu0
      %6196 = vmatprep.mubr.f32.mxu0 0.0
      %6197 = vmatmul.mubr.f32.gmra.mrb[0].mxu0 %v5988
      %v6198 = vpop.f32.mrb[0].mxu0
      %v6199 = vadd.f32 0.0, %v6198
      %v6200 = vpop.f32.mrb[0].mxu0
      %6201 = vmatprep.mubr.f32.mxu0 0.0
      %6202 = vmatmul.mubr.f32.gmra.mrb[0].mxu0 %v5991
      %v6203 = vpop.f32.mrb[0].mxu0
      %v6204 = vadd.f32 0.0, %v6203
      %v6205 = vpop.f32.mrb[0].mxu0
      %6206 = vmatprep.mubr.f32.mxu0 0.0
      %6207 = vmatmul.mubr.f32.gmra.mrb[0].mxu0 %v5994
      %v6208 = vpop.f32.mrb[0].mxu0
      %v6209 = vadd.f32 0.0, %v6208
      %v6210 = vpop.f32.mrb[0].mxu0
      %6211 = vmatprep.mubr.f32.mxu0 0.0
      %6212 = vmatmul.mubr.f32.gmra.mrb[0].mxu0 %v5997
      %v6213 = vpop.f32.mrb[0].mxu0
      %v6214 = vadd.f32 0.0, %v6213
      %v6215 = vpop.f32.mrb[0].mxu0
      %6216 = vmatprep.mubr.f32.mxu0 0.0
      %6217 = vmatmul.mubr.f32.gmra.mrb[0].mxu0 %v6000
      %v6218 = vpop.f32.mrb[0].mxu0
      %v6219 = vadd.f32 0.0, %v6218
      %v6220 = vpop.f32.mrb[0].mxu0
      %6221 = vmatprep.mubr.f32.mxu0 0.0
      %6222 = vmatmul.mubr.f32.gmra.mrb[0].mxu0 %v6003
      %v6223 = vpop.f32.mrb[0].mxu0
      %v6224 = vadd.f32 0.0, %v6223
      %v6225 = vpop.f32.mrb[0].mxu0
      %6226 = vmatprep.mubr.f32.mxu0 0.0
      %6227 = vmatmul.mubr.f32.gmra.mrb[0].mxu0 %v6006
      %v6228 = vpop.f32.mrb[0].mxu0
      %v6229 = vadd.f32 0.0, %v6228
      %v6230 = vpop.f32.mrb[0].mxu0
      %6231 = vmatprep.mubr.f32.mxu0 0.0
      %6232 = vmatmul.mubr.f32.gmra.mrb[0].mxu0 %v6009
      %v6233 = vpop.f32.mrb[0].mxu0
      %v6234 = vadd.f32 0.0, %v6233
      %v6235 = vpop.f32.mrb[0].mxu0
      %6236 = vmatprep.mubr.f32.mxu0 0.0
      %6237 = vmatmul.mubr.f32.gmra.mrb[0].mxu0 %v6012
      %v6238 = vpop.f32.mrb[0].mxu0
      %v6239 = vadd.f32 0.0, %v6238
      %v6240 = vpop.f32.mrb[0].mxu0
      %6241 = vdwg.mxu0
      %v6242 = vadd.f32 %v5812, %v6084
      %v6243 = vadd.f32 %v5813, %v6089
      %v6244 = vadd.f32 %v5814, %v6094
      %v6245 = vadd.f32 %v5815, %v6099
      %v6246 = vadd.f32 %v5816, %v6104
      %v6247 = vadd.f32 %v5817, %v6109
      %v6248 = vadd.f32 %v5818, %v6114
      %v6249 = vadd.f32 %v5819, %v6119
      %v6250 = vadd.f32 %v5820, %v6124
      %v6251 = vadd.f32 %v5821, %v6129
      %v6252 = vadd.f32 %v5822, %v6134
      %v6253 = vadd.f32 %v5823, %v6139
      %v6254 = vadd.f32 %v5824, %v6144
      %v6255 = vadd.f32 %v5825, %v6149
      %v6256 = vadd.f32 %v5826, %v6154
      %v6257 = vadd.f32 %v5827, %v6159
      %v6258 = vadd.f32 %v5828, %v6164
      %v6259 = vadd.f32 %v5829, %v6169
      %v6260 = vadd.f32 %v5830, %v6174
      %v6261 = vadd.f32 %v5831, %v6179
      %v6262 = vadd.f32 %v5832, %v6184
      %v6263 = vadd.f32 %v5833, %v6189
      %v6264 = vadd.f32 %v5834, %v6194
      %v6265 = vadd.f32 %v5835, %v6199
      %v6266 = vadd.f32 %v5836, %v6204
      %v6267 = vadd.f32 %v5837, %v6209
      %v6268 = vadd.f32 %v5838, %v6214
      %v6269 = vadd.f32 %v5839, %v6219
      %v6270 = vadd.f32 %v5840, %v6224
      %v6271 = vadd.f32 %v5841, %v6229
      %v6272 = vadd.f32 %v5842, %v6234
      %v6273 = vadd.f32 %v5843, %v6239
      %6274 = vst.msk [vmem:[%s254] sm:$0xff] %vm808, %v6242
      %6275 = vst.msk [vmem:[%s254 + $0x8] sm:$0xff] %vm808, %v6243
      %6276 = vst.msk [vmem:[%s254 + $0x10] sm:$0xff] %vm808, %v6244
      %6277 = vst.msk [vmem:[%s254 + $0x18] sm:$0xff] %vm808, %v6245
      %6278 = vst.msk [vmem:[%s254 + $0x20] sm:$0xff] %vm808, %v6246
      %6279 = vst.msk [vmem:[%s254 + $0x28] sm:$0xff] %vm808, %v6247
      %6280 = vst.msk [vmem:[%s254 + $0x30] sm:$0xff] %vm808, %v6248
      %6281 = vst.msk [vmem:[%s254 + $0x38] sm:$0xff] %vm808, %v6249
      %6282 = vst.msk [vmem:[%s254 + $0x40] sm:$0xff] %vm808, %v6250
      %6283 = vst.msk [vmem:[%s254 + $0x48] sm:$0xff] %vm808, %v6251
      %6284 = vst.msk [vmem:[%s254 + $0x50] sm:$0xff] %vm808, %v6252
      %6285 = vst.msk [vmem:[%s254 + $0x58] sm:$0xff] %vm808, %v6253
      %6286 = vst.msk [vmem:[%s254 + $0x60] sm:$0xff] %vm808, %v6254
      %6287 = vst.msk [vmem:[%s254 + $0x68] sm:$0xff] %vm808, %v6255
      %6288 = vst.msk [vmem:[%s254 + $0x70] sm:$0xff] %vm808, %v6256
      %6289 = vst.msk [vmem:[%s254 + $0x78] sm:$0xff] %vm808, %v6257
      %6290 = vst.msk [vmem:[%s254 + $0x80] sm:$0xff] %vm808, %v6258
      %6291 = vst.msk [vmem:[%s254 + $0x88] sm:$0xff] %vm808, %v6259
      %6292 = vst.msk [vmem:[%s254 + $0x90] sm:$0xff] %vm808, %v6260
      %6293 = vst.msk [vmem:[%s254 + $0x98] sm:$0xff] %vm808, %v6261
      %6294 = vst.msk [vmem:[%s254 + $0xa0] sm:$0xff] %vm808, %v6262
      %6295 = vst.msk [vmem:[%s254 + $0xa8] sm:$0xff] %vm808, %v6263
      %6296 = vst.msk [vmem:[%s254 + $0xb0] sm:$0xff] %vm808, %v6264
      %6297 = vst.msk [vmem:[%s254 + $0xb8] sm:$0xff] %vm808, %v6265
      %6298 = vst.msk [vmem:[%s254 + $0xc0] sm:$0xff] %vm808, %v6266
      %6299 = vst.msk [vmem:[%s254 + $0xc8] sm:$0xff] %vm808, %v6267
      %6300 = vst.msk [vmem:[%s254 + $0xd0] sm:$0xff] %vm808, %v6268
      %6301 = vst.msk [vmem:[%s254 + $0xd8] sm:$0xff] %vm808, %v6269
      %6302 = vst.msk [vmem:[%s254 + $0xe0] sm:$0xff] %vm808, %v6270
      %6303 = vst.msk [vmem:[%s254 + $0xe8] sm:$0xff] %vm808, %v6271
      %6304 = vst.msk [vmem:[%s254 + $0xf0] sm:$0xff] %vm808, %v6272
      %6305 = vst.msk [vmem:[%s254 + $0xf8] sm:$0xff] %vm808, %v6273
      %v6306 = vld [vmem:[%s254] sm:$0xff]
      %v6307 = vld [vmem:[%s254 + $0x8] sm:$0xff]
      %v6308 = vld [vmem:[%s254 + $0x10] sm:$0xff]
      %v6309 = vld [vmem:[%s254 + $0x18] sm:$0xff]
      %v6310 = vld [vmem:[%s254 + $0x20] sm:$0xff]
      %v6311 = vld [vmem:[%s254 + $0x28] sm:$0xff]
      %v6312 = vld [vmem:[%s254 + $0x30] sm:$0xff]
      %v6313 = vld [vmem:[%s254 + $0x38] sm:$0xff]
      %v6314 = vld [vmem:[%s254 + $0x40] sm:$0xff]
      %v6315 = vld [vmem:[%s254 + $0x48] sm:$0xff]
      %v6316 = vld [vmem:[%s254 + $0x50] sm:$0xff]
      %v6317 = vld [vmem:[%s254 + $0x58] sm:$0xff]
      %v6318 = vld [vmem:[%s254 + $0x60] sm:$0xff]
      %v6319 = vld [vmem:[%s254 + $0x68] sm:$0xff]
      %v6320 = vld [vmem:[%s254 + $0x70] sm:$0xff]
      %v6321 = vld [vmem:[%s254 + $0x78] sm:$0xff]
      %v6322 = vld [vmem:[%s254 + $0x80] sm:$0xff]
      %v6323 = vld [vmem:[%s254 + $0x88] sm:$0xff]
      %v6324 = vld [vmem:[%s254 + $0x90] sm:$0xff]
      %v6325 = vld [vmem:[%s254 + $0x98] sm:$0xff]
      %v6326 = vld [vmem:[%s254 + $0xa0] sm:$0xff]
      %v6327 = vld [vmem:[%s254 + $0xa8] sm:$0xff]
      %v6328 = vld [vmem:[%s254 + $0xb0] sm:$0xff]
      %v6329 = vld [vmem:[%s254 + $0xb8] sm:$0xff]
      %v6330 = vld [vmem:[%s254 + $0xc0] sm:$0xff]
      %v6331 = vld [vmem:[%s254 + $0xc8] sm:$0xff]
      %v6332 = vld [vmem:[%s254 + $0xd0] sm:$0xff]
      %v6333 = vld [vmem:[%s254 + $0xd8] sm:$0xff]
      %v6334 = vld [vmem:[%s254 + $0xe0] sm:$0xff]
      %v6335 = vld [vmem:[%s254 + $0xe8] sm:$0xff]
      %v6336 = vld [vmem:[%s254 + $0xf0] sm:$0xff]
      %v6337 = vld [vmem:[%s254 + $0xf8] sm:$0xff]
      %v6338 = vld [vmem:[#allocation3 + $0x10] sm:$0xff]
      %v6339 = vld [vmem:[#allocation3 + $0x18] sm:$0xff]
      %v6340 = vld [vmem:[#allocation3 + $0x20] sm:$0xff]
      %v6341 = vld [vmem:[#allocation3 + $0x28] sm:$0xff]
      %v6342 = vld [vmem:[#allocation3 + $0x30] sm:$0xff]
      %v6343 = vld [vmem:[#allocation3 + $0x38] sm:$0xff]
      %v6344 = vld [vmem:[#allocation3 + $0x40] sm:$0xff]
      %v6345 = vld [vmem:[#allocation3 + $0x48] sm:$0xff]
      %v6346 = vld [vmem:[#allocation3 + $0x50] sm:$0xff]
      %v6347 = vld [vmem:[#allocation3 + $0x58] sm:$0xff]
      %v6348 = vld [vmem:[#allocation3 + $0x60] sm:$0xff]
      %v6349 = vld [vmem:[#allocation3 + $0x68] sm:$0xff]
      %v6350 = vld [vmem:[#allocation3 + $0x70] sm:$0xff]
      %v6351 = vld [vmem:[#allocation3 + $0x78] sm:$0xff]
      %v6352 = vld [vmem:[#allocation3 + $0x80] sm:$0xff]
      %v6353 = vld [vmem:[#allocation3 + $0x88] sm:$0xff]
      %v6354 = vld [vmem:[#allocation3 + $0x90] sm:$0xff]
      %v6355 = vld [vmem:[#allocation3 + $0x98] sm:$0xff]
      %v6356 = vld [vmem:[#allocation3 + $0xa0] sm:$0xff]
      %v6357 = vld [vmem:[#allocation3 + $0xa8] sm:$0xff]
      %v6358 = vld [vmem:[#allocation3 + $0xb0] sm:$0xff]
      %v6359 = vld [vmem:[#allocation3 + $0xb8] sm:$0xff]
      %v6360 = vld [vmem:[#allocation3 + $0xc0] sm:$0xff]
      %v6361 = vld [vmem:[#allocation3 + $0xc8] sm:$0xff]
      %v6362 = vld [vmem:[#allocation3 + $0xd0] sm:$0xff]
      %v6363 = vld [vmem:[#allocation3 + $0xd8] sm:$0xff]
      %v6364 = vld [vmem:[#allocation3 + $0xe0] sm:$0xff]
      %v6365 = vld [vmem:[#allocation3 + $0xe8] sm:$0xff]
      %v6366 = vld [vmem:[#allocation3 + $0xf0] sm:$0xff]
      %v6367 = vld [vmem:[#allocation3 + $0xf8] sm:$0xff]
      %v6368 = vld [vmem:[#allocation3 + $0x100] sm:$0xff]
      %v6369 = vld [vmem:[#allocation3 + $0x108] sm:$0xff]
      %v6370 = vsel %vm946, %v6338, 0.0
      %v6371 = vsel %vm947, %v6339, 0.0
      %v6372 = vsel %vm948, %v6340, 0.0
      %v6373 = vsel %vm949, %v6341, 0.0
      %v6374 = vsel %vm950, %v6342, 0.0
      %v6375 = vsel %vm951, %v6343, 0.0
      %v6376 = vsel %vm952, %v6344, 0.0
      %v6377 = vsel %vm953, %v6345, 0.0
      %v6378 = vsel %vm954, %v6346, 0.0
      %v6379 = vsel %vm955, %v6347, 0.0
      %v6380 = vsel %vm956, %v6348, 0.0
      %v6381 = vsel %vm957, %v6349, 0.0
      %v6382 = vsel %vm958, %v6350, 0.0
      %v6383 = vsel %vm959, %v6351, 0.0
      %v6384 = vsel %vm960, %v6352, 0.0
      %v6385 = vsel %vm961, %v6353, 0.0
      %v6386 = vsel %vm962, %v6354, 0.0
      %v6387 = vsel %vm963, %v6355, 0.0
      %v6388 = vsel %vm964, %v6356, 0.0
      %v6389 = vsel %vm965, %v6357, 0.0
      %v6390 = vsel %vm966, %v6358, 0.0
      %v6391 = vsel %vm967, %v6359, 0.0
      %v6392 = vsel %vm968, %v6360, 0.0
      %v6393 = vsel %vm969, %v6361, 0.0
      %v6394 = vsel %vm970, %v6362, 0.0
      %v6395 = vsel %vm971, %v6363, 0.0
      %v6396 = vsel %vm972, %v6364, 0.0
      %v6397 = vsel %vm973, %v6365, 0.0
      %v6398 = vsel %vm974, %v6366, 0.0
      %v6399 = vsel %vm975, %v6367, 0.0
      %v6400 = vsel %vm976, %v6368, 0.0
      %v6401 = vsel %vm977, %v6369, 0.0
      %s6402 = scalar_lea.vmem %s4, 216
      %v6403 = vld [vmem:[%s6402] sm:$0xff]
      %v6404 = vld [vmem:[%s6402 + $0x8] sm:$0xff]
      %v6405 = vld [vmem:[%s6402 + $0x10] sm:$0xff]
      %v6406 = vld [vmem:[%s6402 + $0x18] sm:$0xff]
      %v6407 = vld [vmem:[%s6402 + $0x20] sm:$0xff]
      %v6408 = vld [vmem:[%s6402 + $0x28] sm:$0xff]
      %v6409 = vld [vmem:[%s6402 + $0x30] sm:$0xff]
      %v6410 = vld [vmem:[%s6402 + $0x38] sm:$0xff]
      %v6411 = vld [vmem:[%s6402 + $0x40] sm:$0x1]
      %v6413 = vsel %vm4712, %v6370, 0
      %v6416 = vsel %vm4712, %v6371, 0
      %v6419 = vsel %vm4712, %v6372, 0
      %v6422 = vsel %vm4712, %v6373, 0
      %v6425 = vsel %vm4712, %v6374, 0
      %v6428 = vsel %vm4712, %v6375, 0
      %v6431 = vsel %vm4712, %v6376, 0
      %v6434 = vsel %vm4712, %v6377, 0
      %v6437 = vsel %vm4712, %v6378, 0
      %v6440 = vsel %vm4712, %v6379, 0
      %v6443 = vsel %vm4712, %v6380, 0
      %v6446 = vsel %vm4712, %v6381, 0
      %v6449 = vsel %vm4712, %v6382, 0
      %v6452 = vsel %vm4712, %v6383, 0
      %v6455 = vsel %vm4712, %v6384, 0
      %v6458 = vsel %vm4712, %v6385, 0
      %v6461 = vsel %vm4712, %v6386, 0
      %v6464 = vsel %vm4712, %v6387, 0
      %v6467 = vsel %vm4712, %v6388, 0
      %v6470 = vsel %vm4712, %v6389, 0
      %v6473 = vsel %vm4712, %v6390, 0
      %v6476 = vsel %vm4712, %v6391, 0
      %v6479 = vsel %vm4712, %v6392, 0
      %v6482 = vsel %vm4712, %v6393, 0
      %v6485 = vsel %vm4712, %v6394, 0
      %v6488 = vsel %vm4712, %v6395, 0
      %v6491 = vsel %vm4712, %v6396, 0
      %v6494 = vsel %vm4712, %v6397, 0
      %v6497 = vsel %vm4712, %v6398, 0
      %v6500 = vsel %vm4712, %v6399, 0
      %v6503 = vsel %vm4712, %v6400, 0
      %v6506 = vsel %vm4712, %v6401, 0
      %v6509 = vsel %vm5057, %v6411, 0
      %6511 = vmatprep.subr.mxu0 0.0
      %6512 = vmatpush1.msra.mxu0 %v6403
      %6513 = vmatprep.subr.mxu0 0.0
      %6514 = vmatpush1.msra.mxu0 %v6404
      %6515 = vmatprep.subr.mxu0 0.0
      %6516 = vmatpush1.msra.mxu0 %v6405
      %6517 = vmatprep.subr.mxu0 0.0
      %6518 = vmatpush1.msra.mxu0 %v6406
      %6519 = vmatprep.subr.mxu0 0.0
      %6520 = vmatpush1.msra.mxu0 %v6407
      %6521 = vmatprep.subr.mxu0 0.0
      %6522 = vmatpush1.msra.mxu0 %v6408
      %6523 = vmatprep.subr.mxu0 0.0
      %6524 = vmatpush1.msra.mxu0 %v6409
      %6525 = vmatprep.subr.mxu0 0.0
      %6526 = vmatpush1.msra.mxu0 %v6410
      %6527 = vmatprep.subr.mxu0 0.0
      %6528 = vmatpush1.msra.mxu0 %v6509
      %6529 = vmatprep.subr.mxu0 0.0
      %6530 = vmatpush1.msra.mxu0 0.0
      %6531 = vmatprep.subr.mxu0 0.0
      %6532 = vmatpush1.msra.mxu0 0.0
      %6533 = vmatprep.subr.mxu0 0.0
      %6534 = vmatpush1.msra.mxu0 0.0
      %6535 = vmatprep.subr.mxu0 0.0
      %6536 = vmatpush1.msra.mxu0 0.0
      %6537 = vmatprep.subr.mxu0 0.0
      %6538 = vmatpush1.msra.mxu0 0.0
      %6539 = vmatprep.subr.mxu0 0.0
      %6540 = vmatpush1.msra.mxu0 0.0
      %6541 = vmatprep.subr.mxu0 0.0
      %6542 = vmatpush1.msra.mxu0 0.0
      %6543 = vmatprep.subr.mxu0 0.0
      %6544 = vmatpush1.msra.mxu0 0.0
      %6545 = vmatprep.subr.mxu0 0.0
      %6546 = vmatpush1.msra.mxu0 0.0
      %6547 = vmatprep.subr.mxu0 0.0
      %6548 = vmatpush1.msra.mxu0 0.0
      %6549 = vmatprep.subr.mxu0 0.0
      %6550 = vmatpush1.msra.mxu0 0.0
      %6551 = vmatprep.subr.mxu0 0.0
      %6552 = vmatpush1.msra.mxu0 0.0
      %6553 = vmatprep.subr.mxu0 0.0
      %6554 = vmatpush1.msra.mxu0 0.0
      %6555 = vmatprep.subr.mxu0 0.0
      %6556 = vmatpush1.msra.mxu0 0.0
      %6557 = vmatprep.subr.mxu0 0.0
      %6558 = vmatpush1.msra.mxu0 0.0
      %6559 = vmatprep.subr.mxu0 0.0
      %6560 = vmatpush1.msra.mxu0 0.0
      %6561 = vmatprep.subr.mxu0 0.0
      %6562 = vmatpush1.msra.mxu0 0.0
      %6563 = vmatprep.subr.mxu0 0.0
      %6564 = vmatpush1.msra.mxu0 0.0
      %6565 = vmatprep.subr.mxu0 0.0
      %6566 = vmatpush1.msra.mxu0 0.0
      %6567 = vmatprep.subr.mxu0 0.0
      %6568 = vmatpush1.msra.mxu0 0.0
      %6569 = vmatprep.subr.mxu0 0.0
      %6570 = vmatpush1.msra.mxu0 0.0
      %6571 = vmatprep.subr.mxu0 0.0
      %6572 = vmatpush1.msra.mxu0 0.0
      %6573 = vmatprep.subr.mxu0 0.0
      %6574 = vmatpush1.msra.mxu0 0.0
      %6575 = vmatprep.mubr.f32.mxu0 0.0
      %6576 = vmatmul.mubr.f32.gmra.mrb[0].mxu0 %v6413
      %v6577 = vpop.f32.mrb[0].mxu0
      %v6578 = vadd.f32 0.0, %v6577
      %v6579 = vpop.f32.mrb[0].mxu0
      %6580 = vmatprep.mubr.f32.mxu0 0.0
      %6581 = vmatmul.mubr.f32.gmra.mrb[0].mxu0 %v6416
      %v6582 = vpop.f32.mrb[0].mxu0
      %v6583 = vadd.f32 0.0, %v6582
      %v6584 = vpop.f32.mrb[0].mxu0
      %6585 = vmatprep.mubr.f32.mxu0 0.0
      %6586 = vmatmul.mubr.f32.gmra.mrb[0].mxu0 %v6419
      %v6587 = vpop.f32.mrb[0].mxu0
      %v6588 = vadd.f32 0.0, %v6587
      %v6589 = vpop.f32.mrb[0].mxu0
      %6590 = vmatprep.mubr.f32.mxu0 0.0
      %6591 = vmatmul.mubr.f32.gmra.mrb[0].mxu0 %v6422
      %v6592 = vpop.f32.mrb[0].mxu0
      %v6593 = vadd.f32 0.0, %v6592
      %v6594 = vpop.f32.mrb[0].mxu0
      %6595 = vmatprep.mubr.f32.mxu0 0.0
      %6596 = vmatmul.mubr.f32.gmra.mrb[0].mxu0 %v6425
      %v6597 = vpop.f32.mrb[0].mxu0
      %v6598 = vadd.f32 0.0, %v6597
      %v6599 = vpop.f32.mrb[0].mxu0
      %6600 = vmatprep.mubr.f32.mxu0 0.0
      %6601 = vmatmul.mubr.f32.gmra.mrb[0].mxu0 %v6428
      %v6602 = vpop.f32.mrb[0].mxu0
      %v6603 = vadd.f32 0.0, %v6602
      %v6604 = vpop.f32.mrb[0].mxu0
      %6605 = vmatprep.mubr.f32.mxu0 0.0
      %6606 = vmatmul.mubr.f32.gmra.mrb[0].mxu0 %v6431
      %v6607 = vpop.f32.mrb[0].mxu0
      %v6608 = vadd.f32 0.0, %v6607
      %v6609 = vpop.f32.mrb[0].mxu0
      %6610 = vmatprep.mubr.f32.mxu0 0.0
      %6611 = vmatmul.mubr.f32.gmra.mrb[0].mxu0 %v6434
      %v6612 = vpop.f32.mrb[0].mxu0
      %v6613 = vadd.f32 0.0, %v6612
      %v6614 = vpop.f32.mrb[0].mxu0
      %6615 = vmatprep.mubr.f32.mxu0 0.0
      %6616 = vmatmul.mubr.f32.gmra.mrb[0].mxu0 %v6437
      %v6617 = vpop.f32.mrb[0].mxu0
      %v6618 = vadd.f32 0.0, %v6617
      %v6619 = vpop.f32.mrb[0].mxu0
      %6620 = vmatprep.mubr.f32.mxu0 0.0
      %6621 = vmatmul.mubr.f32.gmra.mrb[0].mxu0 %v6440
      %v6622 = vpop.f32.mrb[0].mxu0
      %v6623 = vadd.f32 0.0, %v6622
      %v6624 = vpop.f32.mrb[0].mxu0
      %6625 = vmatprep.mubr.f32.mxu0 0.0
      %6626 = vmatmul.mubr.f32.gmra.mrb[0].mxu0 %v6443
      %v6627 = vpop.f32.mrb[0].mxu0
      %v6628 = vadd.f32 0.0, %v6627
      %v6629 = vpop.f32.mrb[0].mxu0
      %6630 = vmatprep.mubr.f32.mxu0 0.0
      %6631 = vmatmul.mubr.f32.gmra.mrb[0].mxu0 %v6446
      %v6632 = vpop.f32.mrb[0].mxu0
      %v6633 = vadd.f32 0.0, %v6632
      %v6634 = vpop.f32.mrb[0].mxu0
      %6635 = vmatprep.mubr.f32.mxu0 0.0
      %6636 = vmatmul.mubr.f32.gmra.mrb[0].mxu0 %v6449
      %v6637 = vpop.f32.mrb[0].mxu0
      %v6638 = vadd.f32 0.0, %v6637
      %v6639 = vpop.f32.mrb[0].mxu0
      %6640 = vmatprep.mubr.f32.mxu0 0.0
      %6641 = vmatmul.mubr.f32.gmra.mrb[0].mxu0 %v6452
      %v6642 = vpop.f32.mrb[0].mxu0
      %v6643 = vadd.f32 0.0, %v6642
      %v6644 = vpop.f32.mrb[0].mxu0
      %6645 = vmatprep.mubr.f32.mxu0 0.0
      %6646 = vmatmul.mubr.f32.gmra.mrb[0].mxu0 %v6455
      %v6647 = vpop.f32.mrb[0].mxu0
      %v6648 = vadd.f32 0.0, %v6647
      %v6649 = vpop.f32.mrb[0].mxu0
      %6650 = vmatprep.mubr.f32.mxu0 0.0
      %6651 = vmatmul.mubr.f32.gmra.mrb[0].mxu0 %v6458
      %v6652 = vpop.f32.mrb[0].mxu0
      %v6653 = vadd.f32 0.0, %v6652
      %v6654 = vpop.f32.mrb[0].mxu0
      %6655 = vmatprep.mubr.f32.mxu0 0.0
      %6656 = vmatmul.mubr.f32.gmra.mrb[0].mxu0 %v6461
      %v6657 = vpop.f32.mrb[0].mxu0
      %v6658 = vadd.f32 0.0, %v6657
      %v6659 = vpop.f32.mrb[0].mxu0
      %6660 = vmatprep.mubr.f32.mxu0 0.0
      %6661 = vmatmul.mubr.f32.gmra.mrb[0].mxu0 %v6464
      %v6662 = vpop.f32.mrb[0].mxu0
      %v6663 = vadd.f32 0.0, %v6662
      %v6664 = vpop.f32.mrb[0].mxu0
      %6665 = vmatprep.mubr.f32.mxu0 0.0
      %6666 = vmatmul.mubr.f32.gmra.mrb[0].mxu0 %v6467
      %v6667 = vpop.f32.mrb[0].mxu0
      %v6668 = vadd.f32 0.0, %v6667
      %v6669 = vpop.f32.mrb[0].mxu0
      %6670 = vmatprep.mubr.f32.mxu0 0.0
      %6671 = vmatmul.mubr.f32.gmra.mrb[0].mxu0 %v6470
      %v6672 = vpop.f32.mrb[0].mxu0
      %v6673 = vadd.f32 0.0, %v6672
      %v6674 = vpop.f32.mrb[0].mxu0
      %6675 = vmatprep.mubr.f32.mxu0 0.0
      %6676 = vmatmul.mubr.f32.gmra.mrb[0].mxu0 %v6473
      %v6677 = vpop.f32.mrb[0].mxu0
      %v6678 = vadd.f32 0.0, %v6677
      %v6679 = vpop.f32.mrb[0].mxu0
      %6680 = vmatprep.mubr.f32.mxu0 0.0
      %6681 = vmatmul.mubr.f32.gmra.mrb[0].mxu0 %v6476
      %v6682 = vpop.f32.mrb[0].mxu0
      %v6683 = vadd.f32 0.0, %v6682
      %v6684 = vpop.f32.mrb[0].mxu0
      %6685 = vmatprep.mubr.f32.mxu0 0.0
      %6686 = vmatmul.mubr.f32.gmra.mrb[0].mxu0 %v6479
      %v6687 = vpop.f32.mrb[0].mxu0
      %v6688 = vadd.f32 0.0, %v6687
      %v6689 = vpop.f32.mrb[0].mxu0
      %6690 = vmatprep.mubr.f32.mxu0 0.0
      %6691 = vmatmul.mubr.f32.gmra.mrb[0].mxu0 %v6482
      %v6692 = vpop.f32.mrb[0].mxu0
      %v6693 = vadd.f32 0.0, %v6692
      %v6694 = vpop.f32.mrb[0].mxu0
      %6695 = vmatprep.mubr.f32.mxu0 0.0
      %6696 = vmatmul.mubr.f32.gmra.mrb[0].mxu0 %v6485
      %v6697 = vpop.f32.mrb[0].mxu0
      %v6698 = vadd.f32 0.0, %v6697
      %v6699 = vpop.f32.mrb[0].mxu0
      %6700 = vmatprep.mubr.f32.mxu0 0.0
      %6701 = vmatmul.mubr.f32.gmra.mrb[0].mxu0 %v6488
      %v6702 = vpop.f32.mrb[0].mxu0
      %v6703 = vadd.f32 0.0, %v6702
      %v6704 = vpop.f32.mrb[0].mxu0
      %6705 = vmatprep.mubr.f32.mxu0 0.0
      %6706 = vmatmul.mubr.f32.gmra.mrb[0].mxu0 %v6491
      %v6707 = vpop.f32.mrb[0].mxu0
      %v6708 = vadd.f32 0.0, %v6707
      %v6709 = vpop.f32.mrb[0].mxu0
      %6710 = vmatprep.mubr.f32.mxu0 0.0
      %6711 = vmatmul.mubr.f32.gmra.mrb[0].mxu0 %v6494
      %v6712 = vpop.f32.mrb[0].mxu0
      %v6713 = vadd.f32 0.0, %v6712
      %v6714 = vpop.f32.mrb[0].mxu0
      %6715 = vmatprep.mubr.f32.mxu0 0.0
      %6716 = vmatmul.mubr.f32.gmra.mrb[0].mxu0 %v6497
      %v6717 = vpop.f32.mrb[0].mxu0
      %v6718 = vadd.f32 0.0, %v6717
      %v6719 = vpop.f32.mrb[0].mxu0
      %6720 = vmatprep.mubr.f32.mxu0 0.0
      %6721 = vmatmul.mubr.f32.gmra.mrb[0].mxu0 %v6500
      %v6722 = vpop.f32.mrb[0].mxu0
      %v6723 = vadd.f32 0.0, %v6722
      %v6724 = vpop.f32.mrb[0].mxu0
      %6725 = vmatprep.mubr.f32.mxu0 0.0
      %6726 = vmatmul.mubr.f32.gmra.mrb[0].mxu0 %v6503
      %v6727 = vpop.f32.mrb[0].mxu0
      %v6728 = vadd.f32 0.0, %v6727
      %v6729 = vpop.f32.mrb[0].mxu0
      %6730 = vmatprep.mubr.f32.mxu0 0.0
      %6731 = vmatmul.mubr.f32.gmra.mrb[0].mxu0 %v6506
      %v6732 = vpop.f32.mrb[0].mxu0
      %v6733 = vadd.f32 0.0, %v6732
      %v6734 = vpop.f32.mrb[0].mxu0
      %6735 = vdwg.mxu0
      %v6736 = vadd.f32 %v6306, %v6578
      %v6737 = vadd.f32 %v6307, %v6583
      %v6738 = vadd.f32 %v6308, %v6588
      %v6739 = vadd.f32 %v6309, %v6593
      %v6740 = vadd.f32 %v6310, %v6598
      %v6741 = vadd.f32 %v6311, %v6603
      %v6742 = vadd.f32 %v6312, %v6608
      %v6743 = vadd.f32 %v6313, %v6613
      %v6744 = vadd.f32 %v6314, %v6618
      %v6745 = vadd.f32 %v6315, %v6623
      %v6746 = vadd.f32 %v6316, %v6628
      %v6747 = vadd.f32 %v6317, %v6633
      %v6748 = vadd.f32 %v6318, %v6638
      %v6749 = vadd.f32 %v6319, %v6643
      %v6750 = vadd.f32 %v6320, %v6648
      %v6751 = vadd.f32 %v6321, %v6653
      %v6752 = vadd.f32 %v6322, %v6658
      %v6753 = vadd.f32 %v6323, %v6663
      %v6754 = vadd.f32 %v6324, %v6668
      %v6755 = vadd.f32 %v6325, %v6673
      %v6756 = vadd.f32 %v6326, %v6678
      %v6757 = vadd.f32 %v6327, %v6683
      %v6758 = vadd.f32 %v6328, %v6688
      %v6759 = vadd.f32 %v6329, %v6693
      %v6760 = vadd.f32 %v6330, %v6698
      %v6761 = vadd.f32 %v6331, %v6703
      %v6762 = vadd.f32 %v6332, %v6708
      %v6763 = vadd.f32 %v6333, %v6713
      %v6764 = vadd.f32 %v6334, %v6718
      %v6765 = vadd.f32 %v6335, %v6723
      %v6766 = vadd.f32 %v6336, %v6728
      %v6767 = vadd.f32 %v6337, %v6733
      %6768 = vst.msk [vmem:[%s254] sm:$0xff] %vm808, %v6736
      %6769 = vst.msk [vmem:[%s254 + $0x8] sm:$0xff] %vm808, %v6737
      %6770 = vst.msk [vmem:[%s254 + $0x10] sm:$0xff] %vm808, %v6738
      %6771 = vst.msk [vmem:[%s254 + $0x18] sm:$0xff] %vm808, %v6739
      %6772 = vst.msk [vmem:[%s254 + $0x20] sm:$0xff] %vm808, %v6740
      %6773 = vst.msk [vmem:[%s254 + $0x28] sm:$0xff] %vm808, %v6741
      %6774 = vst.msk [vmem:[%s254 + $0x30] sm:$0xff] %vm808, %v6742
      %6775 = vst.msk [vmem:[%s254 + $0x38] sm:$0xff] %vm808, %v6743
      %6776 = vst.msk [vmem:[%s254 + $0x40] sm:$0xff] %vm808, %v6744
      %6777 = vst.msk [vmem:[%s254 + $0x48] sm:$0xff] %vm808, %v6745
      %6778 = vst.msk [vmem:[%s254 + $0x50] sm:$0xff] %vm808, %v6746
      %6779 = vst.msk [vmem:[%s254 + $0x58] sm:$0xff] %vm808, %v6747
      %6780 = vst.msk [vmem:[%s254 + $0x60] sm:$0xff] %vm808, %v6748
      %6781 = vst.msk [vmem:[%s254 + $0x68] sm:$0xff] %vm808, %v6749
      %6782 = vst.msk [vmem:[%s254 + $0x70] sm:$0xff] %vm808, %v6750
      %6783 = vst.msk [vmem:[%s254 + $0x78] sm:$0xff] %vm808, %v6751
      %6784 = vst.msk [vmem:[%s254 + $0x80] sm:$0xff] %vm808, %v6752
      %6785 = vst.msk [vmem:[%s254 + $0x88] sm:$0xff] %vm808, %v6753
      %6786 = vst.msk [vmem:[%s254 + $0x90] sm:$0xff] %vm808, %v6754
      %6787 = vst.msk [vmem:[%s254 + $0x98] sm:$0xff] %vm808, %v6755
      %6788 = vst.msk [vmem:[%s254 + $0xa0] sm:$0xff] %vm808, %v6756
      %6789 = vst.msk [vmem:[%s254 + $0xa8] sm:$0xff] %vm808, %v6757
      %6790 = vst.msk [vmem:[%s254 + $0xb0] sm:$0xff] %vm808, %v6758
      %6791 = vst.msk [vmem:[%s254 + $0xb8] sm:$0xff] %vm808, %v6759
      %6792 = vst.msk [vmem:[%s254 + $0xc0] sm:$0xff] %vm808, %v6760
      %6793 = vst.msk [vmem:[%s254 + $0xc8] sm:$0xff] %vm808, %v6761
      %6794 = vst.msk [vmem:[%s254 + $0xd0] sm:$0xff] %vm808, %v6762
      %6795 = vst.msk [vmem:[%s254 + $0xd8] sm:$0xff] %vm808, %v6763
      %6796 = vst.msk [vmem:[%s254 + $0xe0] sm:$0xff] %vm808, %v6764
      %6797 = vst.msk [vmem:[%s254 + $0xe8] sm:$0xff] %vm808, %v6765
      %6798 = vst.msk [vmem:[%s254 + $0xf0] sm:$0xff] %vm808, %v6766
      %6799 = vst.msk [vmem:[%s254 + $0xf8] sm:$0xff] %vm808, %v6767
      %v6800 = vld [vmem:[%s254] sm:$0xff]
      %v6801 = vld [vmem:[%s254 + $0x8] sm:$0xff]
      %v6802 = vld [vmem:[%s254 + $0x10] sm:$0xff]
      %v6803 = vld [vmem:[%s254 + $0x18] sm:$0xff]
      %v6804 = vld [vmem:[%s254 + $0x20] sm:$0xff]
      %v6805 = vld [vmem:[%s254 + $0x28] sm:$0xff]
      %v6806 = vld [vmem:[%s254 + $0x30] sm:$0xff]
      %v6807 = vld [vmem:[%s254 + $0x38] sm:$0xff]
      %v6808 = vld [vmem:[%s254 + $0x40] sm:$0xff]
      %v6809 = vld [vmem:[%s254 + $0x48] sm:$0xff]
      %v6810 = vld [vmem:[%s254 + $0x50] sm:$0xff]
      %v6811 = vld [vmem:[%s254 + $0x58] sm:$0xff]
      %v6812 = vld [vmem:[%s254 + $0x60] sm:$0xff]
      %v6813 = vld [vmem:[%s254 + $0x68] sm:$0xff]
      %v6814 = vld [vmem:[%s254 + $0x70] sm:$0xff]
      %v6815 = vld [vmem:[%s254 + $0x78] sm:$0xff]
      %v6816 = vld [vmem:[%s254 + $0x80] sm:$0xff]
      %v6817 = vld [vmem:[%s254 + $0x88] sm:$0xff]
      %v6818 = vld [vmem:[%s254 + $0x90] sm:$0xff]
      %v6819 = vld [vmem:[%s254 + $0x98] sm:$0xff]
      %v6820 = vld [vmem:[%s254 + $0xa0] sm:$0xff]
      %v6821 = vld [vmem:[%s254 + $0xa8] sm:$0xff]
      %v6822 = vld [vmem:[%s254 + $0xb0] sm:$0xff]
      %v6823 = vld [vmem:[%s254 + $0xb8] sm:$0xff]
      %v6824 = vld [vmem:[%s254 + $0xc0] sm:$0xff]
      %v6825 = vld [vmem:[%s254 + $0xc8] sm:$0xff]
      %v6826 = vld [vmem:[%s254 + $0xd0] sm:$0xff]
      %v6827 = vld [vmem:[%s254 + $0xd8] sm:$0xff]
      %v6828 = vld [vmem:[%s254 + $0xe0] sm:$0xff]
      %v6829 = vld [vmem:[%s254 + $0xe8] sm:$0xff]
      %v6830 = vld [vmem:[%s254 + $0xf0] sm:$0xff]
      %v6831 = vld [vmem:[%s254 + $0xf8] sm:$0xff]
      %v6832 = vld [vmem:[#allocation3 + $0x11] sm:$0xff]
      %v6833 = vld [vmem:[#allocation3 + $0x19] sm:$0xff]
      %v6834 = vld [vmem:[#allocation3 + $0x21] sm:$0xff]
      %v6835 = vld [vmem:[#allocation3 + $0x29] sm:$0xff]
      %v6836 = vld [vmem:[#allocation3 + $0x31] sm:$0xff]
      %v6837 = vld [vmem:[#allocation3 + $0x39] sm:$0xff]
      %v6838 = vld [vmem:[#allocation3 + $0x41] sm:$0xff]
      %v6839 = vld [vmem:[#allocation3 + $0x49] sm:$0xff]
      %v6840 = vld [vmem:[#allocation3 + $0x51] sm:$0xff]
      %v6841 = vld [vmem:[#allocation3 + $0x59] sm:$0xff]
      %v6842 = vld [vmem:[#allocation3 + $0x61] sm:$0xff]
      %v6843 = vld [vmem:[#allocation3 + $0x69] sm:$0xff]
      %v6844 = vld [vmem:[#allocation3 + $0x71] sm:$0xff]
      %v6845 = vld [vmem:[#allocation3 + $0x79] sm:$0xff]
      %v6846 = vld [vmem:[#allocation3 + $0x81] sm:$0xff]
      %v6847 = vld [vmem:[#allocation3 + $0x89] sm:$0xff]
      %v6848 = vld [vmem:[#allocation3 + $0x91] sm:$0xff]
      %v6849 = vld [vmem:[#allocation3 + $0x99] sm:$0xff]
      %v6850 = vld [vmem:[#allocation3 + $0xa1] sm:$0xff]
      %v6851 = vld [vmem:[#allocation3 + $0xa9] sm:$0xff]
      %v6852 = vld [vmem:[#allocation3 + $0xb1] sm:$0xff]
      %v6853 = vld [vmem:[#allocation3 + $0xb9] sm:$0xff]
      %v6854 = vld [vmem:[#allocation3 + $0xc1] sm:$0xff]
      %v6855 = vld [vmem:[#allocation3 + $0xc9] sm:$0xff]
      %v6856 = vld [vmem:[#allocation3 + $0xd1] sm:$0xff]
      %v6857 = vld [vmem:[#allocation3 + $0xd9] sm:$0xff]
      %v6858 = vld [vmem:[#allocation3 + $0xe1] sm:$0xff]
      %v6859 = vld [vmem:[#allocation3 + $0xe9] sm:$0xff]
      %v6860 = vld [vmem:[#allocation3 + $0xf1] sm:$0xff]
      %v6861 = vld [vmem:[#allocation3 + $0xf9] sm:$0xff]
      %v6862 = vld [vmem:[#allocation3 + $0x101] sm:$0xff]
      %v6863 = vld [vmem:[#allocation3 + $0x109] sm:$0xff]
      %s6864 = scalar_lea.vmem %s4, 288
      %v6865 = vld [vmem:[%s6864] sm:$0xff]
      %v6866 = vld [vmem:[%s6864 + $0x8] sm:$0xff]
      %v6867 = vld [vmem:[%s6864 + $0x10] sm:$0xff]
      %v6868 = vld [vmem:[%s6864 + $0x18] sm:$0xff]
      %v6869 = vld [vmem:[%s6864 + $0x20] sm:$0xff]
      %v6870 = vld [vmem:[%s6864 + $0x28] sm:$0xff]
      %v6871 = vld [vmem:[%s6864 + $0x30] sm:$0xff]
      %v6872 = vld [vmem:[%s6864 + $0x38] sm:$0xff]
      %v6873 = vld [vmem:[%s6864 + $0x40] sm:$0x1]
      %v6875 = vsel %vm4712, %v6832, 0
      %v6878 = vsel %vm4712, %v6833, 0
      %v6881 = vsel %vm4712, %v6834, 0
      %v6884 = vsel %vm4712, %v6835, 0
      %v6887 = vsel %vm4712, %v6836, 0
      %v6890 = vsel %vm4712, %v6837, 0
      %v6893 = vsel %vm4712, %v6838, 0
      %v6896 = vsel %vm4712, %v6839, 0
      %v6899 = vsel %vm4712, %v6840, 0
      %v6902 = vsel %vm4712, %v6841, 0
      %v6905 = vsel %vm4712, %v6842, 0
      %v6908 = vsel %vm4712, %v6843, 0
      %v6911 = vsel %vm4712, %v6844, 0
      %v6914 = vsel %vm4712, %v6845, 0
      %v6917 = vsel %vm4712, %v6846, 0
      %v6920 = vsel %vm4712, %v6847, 0
      %v6923 = vsel %vm4712, %v6848, 0
      %v6926 = vsel %vm4712, %v6849, 0
      %v6929 = vsel %vm4712, %v6850, 0
      %v6932 = vsel %vm4712, %v6851, 0
      %v6935 = vsel %vm4712, %v6852, 0
      %v6938 = vsel %vm4712, %v6853, 0
      %v6941 = vsel %vm4712, %v6854, 0
      %v6944 = vsel %vm4712, %v6855, 0
      %v6947 = vsel %vm4712, %v6856, 0
      %v6950 = vsel %vm4712, %v6857, 0
      %v6953 = vsel %vm4712, %v6858, 0
      %v6956 = vsel %vm4712, %v6859, 0
      %v6959 = vsel %vm4712, %v6860, 0
      %v6962 = vsel %vm4712, %v6861, 0
      %v6965 = vsel %vm4712, %v6862, 0
      %v6968 = vsel %vm4712, %v6863, 0
      %v6971 = vsel %vm5057, %v6873, 0
      %6973 = vmatprep.subr.mxu0 0.0
      %6974 = vmatpush1.msra.mxu0 %v6865
      %6975 = vmatprep.subr.mxu0 0.0
      %6976 = vmatpush1.msra.mxu0 %v6866
      %6977 = vmatprep.subr.mxu0 0.0
      %6978 = vmatpush1.msra.mxu0 %v6867
      %6979 = vmatprep.subr.mxu0 0.0
      %6980 = vmatpush1.msra.mxu0 %v6868
      %6981 = vmatprep.subr.mxu0 0.0
      %6982 = vmatpush1.msra.mxu0 %v6869
      %6983 = vmatprep.subr.mxu0 0.0
      %6984 = vmatpush1.msra.mxu0 %v6870
      %6985 = vmatprep.subr.mxu0 0.0
      %6986 = vmatpush1.msra.mxu0 %v6871
      %6987 = vmatprep.subr.mxu0 0.0
      %6988 = vmatpush1.msra.mxu0 %v6872
      %6989 = vmatprep.subr.mxu0 0.0
      %6990 = vmatpush1.msra.mxu0 %v6971
      %6991 = vmatprep.subr.mxu0 0.0
      %6992 = vmatpush1.msra.mxu0 0.0
      %6993 = vmatprep.subr.mxu0 0.0
      %6994 = vmatpush1.msra.mxu0 0.0
      %6995 = vmatprep.subr.mxu0 0.0
      %6996 = vmatpush1.msra.mxu0 0.0
      %6997 = vmatprep.subr.mxu0 0.0
      %6998 = vmatpush1.msra.mxu0 0.0
      %6999 = vmatprep.subr.mxu0 0.0
      %7000 = vmatpush1.msra.mxu0 0.0
      %7001 = vmatprep.subr.mxu0 0.0
      %7002 = vmatpush1.msra.mxu0 0.0
      %7003 = vmatprep.subr.mxu0 0.0
      %7004 = vmatpush1.msra.mxu0 0.0
      %7005 = vmatprep.subr.mxu0 0.0
      %7006 = vmatpush1.msra.mxu0 0.0
      %7007 = vmatprep.subr.mxu0 0.0
      %7008 = vmatpush1.msra.mxu0 0.0
      %7009 = vmatprep.subr.mxu0 0.0
      %7010 = vmatpush1.msra.mxu0 0.0
      %7011 = vmatprep.subr.mxu0 0.0
      %7012 = vmatpush1.msra.mxu0 0.0
      %7013 = vmatprep.subr.mxu0 0.0
      %7014 = vmatpush1.msra.mxu0 0.0
      %7015 = vmatprep.subr.mxu0 0.0
      %7016 = vmatpush1.msra.mxu0 0.0
      %7017 = vmatprep.subr.mxu0 0.0
      %7018 = vmatpush1.msra.mxu0 0.0
      %7019 = vmatprep.subr.mxu0 0.0
      %7020 = vmatpush1.msra.mxu0 0.0
      %7021 = vmatprep.subr.mxu0 0.0
      %7022 = vmatpush1.msra.mxu0 0.0
      %7023 = vmatprep.subr.mxu0 0.0
      %7024 = vmatpush1.msra.mxu0 0.0
      %7025 = vmatprep.subr.mxu0 0.0
      %7026 = vmatpush1.msra.mxu0 0.0
      %7027 = vmatprep.subr.mxu0 0.0
      %7028 = vmatpush1.msra.mxu0 0.0
      %7029 = vmatprep.subr.mxu0 0.0
      %7030 = vmatpush1.msra.mxu0 0.0
      %7031 = vmatprep.subr.mxu0 0.0
      %7032 = vmatpush1.msra.mxu0 0.0
      %7033 = vmatprep.subr.mxu0 0.0
      %7034 = vmatpush1.msra.mxu0 0.0
      %7035 = vmatprep.subr.mxu0 0.0
      %7036 = vmatpush1.msra.mxu0 0.0
      %7037 = vmatprep.mubr.f32.mxu0 0.0
      %7038 = vmatmul.mubr.f32.gmra.mrb[0].mxu0 %v6875
      %v7039 = vpop.f32.mrb[0].mxu0
      %v7040 = vadd.f32 0.0, %v7039
      %v7041 = vpop.f32.mrb[0].mxu0
      %7042 = vmatprep.mubr.f32.mxu0 0.0
      %7043 = vmatmul.mubr.f32.gmra.mrb[0].mxu0 %v6878
      %v7044 = vpop.f32.mrb[0].mxu0
      %v7045 = vadd.f32 0.0, %v7044
      %v7046 = vpop.f32.mrb[0].mxu0
      %7047 = vmatprep.mubr.f32.mxu0 0.0
      %7048 = vmatmul.mubr.f32.gmra.mrb[0].mxu0 %v6881
      %v7049 = vpop.f32.mrb[0].mxu0
      %v7050 = vadd.f32 0.0, %v7049
      %v7051 = vpop.f32.mrb[0].mxu0
      %7052 = vmatprep.mubr.f32.mxu0 0.0
      %7053 = vmatmul.mubr.f32.gmra.mrb[0].mxu0 %v6884
      %v7054 = vpop.f32.mrb[0].mxu0
      %v7055 = vadd.f32 0.0, %v7054
      %v7056 = vpop.f32.mrb[0].mxu0
      %7057 = vmatprep.mubr.f32.mxu0 0.0
      %7058 = vmatmul.mubr.f32.gmra.mrb[0].mxu0 %v6887
      %v7059 = vpop.f32.mrb[0].mxu0
      %v7060 = vadd.f32 0.0, %v7059
      %v7061 = vpop.f32.mrb[0].mxu0
      %7062 = vmatprep.mubr.f32.mxu0 0.0
      %7063 = vmatmul.mubr.f32.gmra.mrb[0].mxu0 %v6890
      %v7064 = vpop.f32.mrb[0].mxu0
      %v7065 = vadd.f32 0.0, %v7064
      %v7066 = vpop.f32.mrb[0].mxu0
      %7067 = vmatprep.mubr.f32.mxu0 0.0
      %7068 = vmatmul.mubr.f32.gmra.mrb[0].mxu0 %v6893
      %v7069 = vpop.f32.mrb[0].mxu0
      %v7070 = vadd.f32 0.0, %v7069
      %v7071 = vpop.f32.mrb[0].mxu0
      %7072 = vmatprep.mubr.f32.mxu0 0.0
      %7073 = vmatmul.mubr.f32.gmra.mrb[0].mxu0 %v6896
      %v7074 = vpop.f32.mrb[0].mxu0
      %v7075 = vadd.f32 0.0, %v7074
      %v7076 = vpop.f32.mrb[0].mxu0
      %7077 = vmatprep.mubr.f32.mxu0 0.0
      %7078 = vmatmul.mubr.f32.gmra.mrb[0].mxu0 %v6899
      %v7079 = vpop.f32.mrb[0].mxu0
      %v7080 = vadd.f32 0.0, %v7079
      %v7081 = vpop.f32.mrb[0].mxu0
      %7082 = vmatprep.mubr.f32.mxu0 0.0
      %7083 = vmatmul.mubr.f32.gmra.mrb[0].mxu0 %v6902
      %v7084 = vpop.f32.mrb[0].mxu0
      %v7085 = vadd.f32 0.0, %v7084
      %v7086 = vpop.f32.mrb[0].mxu0
      %7087 = vmatprep.mubr.f32.mxu0 0.0
      %7088 = vmatmul.mubr.f32.gmra.mrb[0].mxu0 %v6905
      %v7089 = vpop.f32.mrb[0].mxu0
      %v7090 = vadd.f32 0.0, %v7089
      %v7091 = vpop.f32.mrb[0].mxu0
      %7092 = vmatprep.mubr.f32.mxu0 0.0
      %7093 = vmatmul.mubr.f32.gmra.mrb[0].mxu0 %v6908
      %v7094 = vpop.f32.mrb[0].mxu0
      %v7095 = vadd.f32 0.0, %v7094
      %v7096 = vpop.f32.mrb[0].mxu0
      %7097 = vmatprep.mubr.f32.mxu0 0.0
      %7098 = vmatmul.mubr.f32.gmra.mrb[0].mxu0 %v6911
      %v7099 = vpop.f32.mrb[0].mxu0
      %v7100 = vadd.f32 0.0, %v7099
      %v7101 = vpop.f32.mrb[0].mxu0
      %7102 = vmatprep.mubr.f32.mxu0 0.0
      %7103 = vmatmul.mubr.f32.gmra.mrb[0].mxu0 %v6914
      %v7104 = vpop.f32.mrb[0].mxu0
      %v7105 = vadd.f32 0.0, %v7104
      %v7106 = vpop.f32.mrb[0].mxu0
      %7107 = vmatprep.mubr.f32.mxu0 0.0
      %7108 = vmatmul.mubr.f32.gmra.mrb[0].mxu0 %v6917
      %v7109 = vpop.f32.mrb[0].mxu0
      %v7110 = vadd.f32 0.0, %v7109
      %v7111 = vpop.f32.mrb[0].mxu0
      %7112 = vmatprep.mubr.f32.mxu0 0.0
      %7113 = vmatmul.mubr.f32.gmra.mrb[0].mxu0 %v6920
      %v7114 = vpop.f32.mrb[0].mxu0
      %v7115 = vadd.f32 0.0, %v7114
      %v7116 = vpop.f32.mrb[0].mxu0
      %7117 = vmatprep.mubr.f32.mxu0 0.0
      %7118 = vmatmul.mubr.f32.gmra.mrb[0].mxu0 %v6923
      %v7119 = vpop.f32.mrb[0].mxu0
      %v7120 = vadd.f32 0.0, %v7119
      %v7121 = vpop.f32.mrb[0].mxu0
      %7122 = vmatprep.mubr.f32.mxu0 0.0
      %7123 = vmatmul.mubr.f32.gmra.mrb[0].mxu0 %v6926
      %v7124 = vpop.f32.mrb[0].mxu0
      %v7125 = vadd.f32 0.0, %v7124
      %v7126 = vpop.f32.mrb[0].mxu0
      %7127 = vmatprep.mubr.f32.mxu0 0.0
      %7128 = vmatmul.mubr.f32.gmra.mrb[0].mxu0 %v6929
      %v7129 = vpop.f32.mrb[0].mxu0
      %v7130 = vadd.f32 0.0, %v7129
      %v7131 = vpop.f32.mrb[0].mxu0
      %7132 = vmatprep.mubr.f32.mxu0 0.0
      %7133 = vmatmul.mubr.f32.gmra.mrb[0].mxu0 %v6932
      %v7134 = vpop.f32.mrb[0].mxu0
      %v7135 = vadd.f32 0.0, %v7134
      %v7136 = vpop.f32.mrb[0].mxu0
      %7137 = vmatprep.mubr.f32.mxu0 0.0
      %7138 = vmatmul.mubr.f32.gmra.mrb[0].mxu0 %v6935
      %v7139 = vpop.f32.mrb[0].mxu0
      %v7140 = vadd.f32 0.0, %v7139
      %v7141 = vpop.f32.mrb[0].mxu0
      %7142 = vmatprep.mubr.f32.mxu0 0.0
      %7143 = vmatmul.mubr.f32.gmra.mrb[0].mxu0 %v6938
      %v7144 = vpop.f32.mrb[0].mxu0
      %v7145 = vadd.f32 0.0, %v7144
      %v7146 = vpop.f32.mrb[0].mxu0
      %7147 = vmatprep.mubr.f32.mxu0 0.0
      %7148 = vmatmul.mubr.f32.gmra.mrb[0].mxu0 %v6941
      %v7149 = vpop.f32.mrb[0].mxu0
      %v7150 = vadd.f32 0.0, %v7149
      %v7151 = vpop.f32.mrb[0].mxu0
      %7152 = vmatprep.mubr.f32.mxu0 0.0
      %7153 = vmatmul.mubr.f32.gmra.mrb[0].mxu0 %v6944
      %v7154 = vpop.f32.mrb[0].mxu0
      %v7155 = vadd.f32 0.0, %v7154
      %v7156 = vpop.f32.mrb[0].mxu0
      %7157 = vmatprep.mubr.f32.mxu0 0.0
      %7158 = vmatmul.mubr.f32.gmra.mrb[0].mxu0 %v6947
      %v7159 = vpop.f32.mrb[0].mxu0
      %v7160 = vadd.f32 0.0, %v7159
      %v7161 = vpop.f32.mrb[0].mxu0
      %7162 = vmatprep.mubr.f32.mxu0 0.0
      %7163 = vmatmul.mubr.f32.gmra.mrb[0].mxu0 %v6950
      %v7164 = vpop.f32.mrb[0].mxu0
      %v7165 = vadd.f32 0.0, %v7164
      %v7166 = vpop.f32.mrb[0].mxu0
      %7167 = vmatprep.mubr.f32.mxu0 0.0
      %7168 = vmatmul.mubr.f32.gmra.mrb[0].mxu0 %v6953
      %v7169 = vpop.f32.mrb[0].mxu0
      %v7170 = vadd.f32 0.0, %v7169
      %v7171 = vpop.f32.mrb[0].mxu0
      %7172 = vmatprep.mubr.f32.mxu0 0.0
      %7173 = vmatmul.mubr.f32.gmra.mrb[0].mxu0 %v6956
      %v7174 = vpop.f32.mrb[0].mxu0
      %v7175 = vadd.f32 0.0, %v7174
      %v7176 = vpop.f32.mrb[0].mxu0
      %7177 = vmatprep.mubr.f32.mxu0 0.0
      %7178 = vmatmul.mubr.f32.gmra.mrb[0].mxu0 %v6959
      %v7179 = vpop.f32.mrb[0].mxu0
      %v7180 = vadd.f32 0.0, %v7179
      %v7181 = vpop.f32.mrb[0].mxu0
      %7182 = vmatprep.mubr.f32.mxu0 0.0
      %7183 = vmatmul.mubr.f32.gmra.mrb[0].mxu0 %v6962
      %v7184 = vpop.f32.mrb[0].mxu0
      %v7185 = vadd.f32 0.0, %v7184
      %v7186 = vpop.f32.mrb[0].mxu0
      %7187 = vmatprep.mubr.f32.mxu0 0.0
      %7188 = vmatmul.mubr.f32.gmra.mrb[0].mxu0 %v6965
      %v7189 = vpop.f32.mrb[0].mxu0
      %v7190 = vadd.f32 0.0, %v7189
      %v7191 = vpop.f32.mrb[0].mxu0
      %7192 = vmatprep.mubr.f32.mxu0 0.0
      %7193 = vmatmul.mubr.f32.gmra.mrb[0].mxu0 %v6968
      %v7194 = vpop.f32.mrb[0].mxu0
      %v7195 = vadd.f32 0.0, %v7194
      %v7196 = vpop.f32.mrb[0].mxu0
      %7197 = vdwg.mxu0
      %v7198 = vadd.f32 %v6800, %v7040
      %v7199 = vadd.f32 %v6801, %v7045
      %v7200 = vadd.f32 %v6802, %v7050
      %v7201 = vadd.f32 %v6803, %v7055
      %v7202 = vadd.f32 %v6804, %v7060
      %v7203 = vadd.f32 %v6805, %v7065
      %v7204 = vadd.f32 %v6806, %v7070
      %v7205 = vadd.f32 %v6807, %v7075
      %v7206 = vadd.f32 %v6808, %v7080
      %v7207 = vadd.f32 %v6809, %v7085
      %v7208 = vadd.f32 %v6810, %v7090
      %v7209 = vadd.f32 %v6811, %v7095
      %v7210 = vadd.f32 %v6812, %v7100
      %v7211 = vadd.f32 %v6813, %v7105
      %v7212 = vadd.f32 %v6814, %v7110
      %v7213 = vadd.f32 %v6815, %v7115
      %v7214 = vadd.f32 %v6816, %v7120
      %v7215 = vadd.f32 %v6817, %v7125
      %v7216 = vadd.f32 %v6818, %v7130
      %v7217 = vadd.f32 %v6819, %v7135
      %v7218 = vadd.f32 %v6820, %v7140
      %v7219 = vadd.f32 %v6821, %v7145
      %v7220 = vadd.f32 %v6822, %v7150
      %v7221 = vadd.f32 %v6823, %v7155
      %v7222 = vadd.f32 %v6824, %v7160
      %v7223 = vadd.f32 %v6825, %v7165
      %v7224 = vadd.f32 %v6826, %v7170
      %v7225 = vadd.f32 %v6827, %v7175
      %v7226 = vadd.f32 %v6828, %v7180
      %v7227 = vadd.f32 %v6829, %v7185
      %v7228 = vadd.f32 %v6830, %v7190
      %v7229 = vadd.f32 %v6831, %v7195
      %7230 = vst.msk [vmem:[%s254] sm:$0xff] %vm808, %v7198
      %7231 = vst.msk [vmem:[%s254 + $0x8] sm:$0xff] %vm808, %v7199
      %7232 = vst.msk [vmem:[%s254 + $0x10] sm:$0xff] %vm808, %v7200
      %7233 = vst.msk [vmem:[%s254 + $0x18] sm:$0xff] %vm808, %v7201
      %7234 = vst.msk [vmem:[%s254 + $0x20] sm:$0xff] %vm808, %v7202
      %7235 = vst.msk [vmem:[%s254 + $0x28] sm:$0xff] %vm808, %v7203
      %7236 = vst.msk [vmem:[%s254 + $0x30] sm:$0xff] %vm808, %v7204
      %7237 = vst.msk [vmem:[%s254 + $0x38] sm:$0xff] %vm808, %v7205
      %7238 = vst.msk [vmem:[%s254 + $0x40] sm:$0xff] %vm808, %v7206
      %7239 = vst.msk [vmem:[%s254 + $0x48] sm:$0xff] %vm808, %v7207
      %7240 = vst.msk [vmem:[%s254 + $0x50] sm:$0xff] %vm808, %v7208
      %7241 = vst.msk [vmem:[%s254 + $0x58] sm:$0xff] %vm808, %v7209
      %7242 = vst.msk [vmem:[%s254 + $0x60] sm:$0xff] %vm808, %v7210
      %7243 = vst.msk [vmem:[%s254 + $0x68] sm:$0xff] %vm808, %v7211
      %7244 = vst.msk [vmem:[%s254 + $0x70] sm:$0xff] %vm808, %v7212
      %7245 = vst.msk [vmem:[%s254 + $0x78] sm:$0xff] %vm808, %v7213
      %7246 = vst.msk [vmem:[%s254 + $0x80] sm:$0xff] %vm808, %v7214
      %7247 = vst.msk [vmem:[%s254 + $0x88] sm:$0xff] %vm808, %v7215
      %7248 = vst.msk [vmem:[%s254 + $0x90] sm:$0xff] %vm808, %v7216
      %7249 = vst.msk [vmem:[%s254 + $0x98] sm:$0xff] %vm808, %v7217
      %7250 = vst.msk [vmem:[%s254 + $0xa0] sm:$0xff] %vm808, %v7218
      %7251 = vst.msk [vmem:[%s254 + $0xa8] sm:$0xff] %vm808, %v7219
      %7252 = vst.msk [vmem:[%s254 + $0xb0] sm:$0xff] %vm808, %v7220
      %7253 = vst.msk [vmem:[%s254 + $0xb8] sm:$0xff] %vm808, %v7221
      %7254 = vst.msk [vmem:[%s254 + $0xc0] sm:$0xff] %vm808, %v7222
      %7255 = vst.msk [vmem:[%s254 + $0xc8] sm:$0xff] %vm808, %v7223
      %7256 = vst.msk [vmem:[%s254 + $0xd0] sm:$0xff] %vm808, %v7224
      %7257 = vst.msk [vmem:[%s254 + $0xd8] sm:$0xff] %vm808, %v7225
      %7258 = vst.msk [vmem:[%s254 + $0xe0] sm:$0xff] %vm808, %v7226
      %7259 = vst.msk [vmem:[%s254 + $0xe8] sm:$0xff] %vm808, %v7227
      %7260 = vst.msk [vmem:[%s254 + $0xf0] sm:$0xff] %vm808, %v7228
      %7261 = vst.msk [vmem:[%s254 + $0xf8] sm:$0xff] %vm808, %v7229
      %v7262 = vld [vmem:[%s254] sm:$0xff]
      %v7263 = vld [vmem:[%s254 + $0x8] sm:$0xff]
      %v7264 = vld [vmem:[%s254 + $0x10] sm:$0xff]
      %v7265 = vld [vmem:[%s254 + $0x18] sm:$0xff]
      %v7266 = vld [vmem:[%s254 + $0x20] sm:$0xff]
      %v7267 = vld [vmem:[%s254 + $0x28] sm:$0xff]
      %v7268 = vld [vmem:[%s254 + $0x30] sm:$0xff]
      %v7269 = vld [vmem:[%s254 + $0x38] sm:$0xff]
      %v7270 = vld [vmem:[%s254 + $0x40] sm:$0xff]
      %v7271 = vld [vmem:[%s254 + $0x48] sm:$0xff]
      %v7272 = vld [vmem:[%s254 + $0x50] sm:$0xff]
      %v7273 = vld [vmem:[%s254 + $0x58] sm:$0xff]
      %v7274 = vld [vmem:[%s254 + $0x60] sm:$0xff]
      %v7275 = vld [vmem:[%s254 + $0x68] sm:$0xff]
      %v7276 = vld [vmem:[%s254 + $0x70] sm:$0xff]
      %v7277 = vld [vmem:[%s254 + $0x78] sm:$0xff]
      %v7278 = vld [vmem:[%s254 + $0x80] sm:$0xff]
      %v7279 = vld [vmem:[%s254 + $0x88] sm:$0xff]
      %v7280 = vld [vmem:[%s254 + $0x90] sm:$0xff]
      %v7281 = vld [vmem:[%s254 + $0x98] sm:$0xff]
      %v7282 = vld [vmem:[%s254 + $0xa0] sm:$0xff]
      %v7283 = vld [vmem:[%s254 + $0xa8] sm:$0xff]
      %v7284 = vld [vmem:[%s254 + $0xb0] sm:$0xff]
      %v7285 = vld [vmem:[%s254 + $0xb8] sm:$0xff]
      %v7286 = vld [vmem:[%s254 + $0xc0] sm:$0xff]
      %v7287 = vld [vmem:[%s254 + $0xc8] sm:$0xff]
      %v7288 = vld [vmem:[%s254 + $0xd0] sm:$0xff]
      %v7289 = vld [vmem:[%s254 + $0xd8] sm:$0xff]
      %v7290 = vld [vmem:[%s254 + $0xe0] sm:$0xff]
      %v7291 = vld [vmem:[%s254 + $0xe8] sm:$0xff]
      %v7292 = vld [vmem:[%s254 + $0xf0] sm:$0xff]
      %v7293 = vld [vmem:[%s254 + $0xf8] sm:$0xff]
      %v7294 = vld [vmem:[#allocation3 + $0x12] sm:$0xff]
      %v7295 = vld [vmem:[#allocation3 + $0x1a] sm:$0xff]
      %v7296 = vld [vmem:[#allocation3 + $0x22] sm:$0xff]
      %v7297 = vld [vmem:[#allocation3 + $0x2a] sm:$0xff]
      %v7298 = vld [vmem:[#allocation3 + $0x32] sm:$0xff]
      %v7299 = vld [vmem:[#allocation3 + $0x3a] sm:$0xff]
      %v7300 = vld [vmem:[#allocation3 + $0x42] sm:$0xff]
      %v7301 = vld [vmem:[#allocation3 + $0x4a] sm:$0xff]
      %v7302 = vld [vmem:[#allocation3 + $0x52] sm:$0xff]
      %v7303 = vld [vmem:[#allocation3 + $0x5a] sm:$0xff]
      %v7304 = vld [vmem:[#allocation3 + $0x62] sm:$0xff]
      %v7305 = vld [vmem:[#allocation3 + $0x6a] sm:$0xff]
      %v7306 = vld [vmem:[#allocation3 + $0x72] sm:$0xff]
      %v7307 = vld [vmem:[#allocation3 + $0x7a] sm:$0xff]
      %v7308 = vld [vmem:[#allocation3 + $0x82] sm:$0xff]
      %v7309 = vld [vmem:[#allocation3 + $0x8a] sm:$0xff]
      %v7310 = vld [vmem:[#allocation3 + $0x92] sm:$0xff]
      %v7311 = vld [vmem:[#allocation3 + $0x9a] sm:$0xff]
      %v7312 = vld [vmem:[#allocation3 + $0xa2] sm:$0xff]
      %v7313 = vld [vmem:[#allocation3 + $0xaa] sm:$0xff]
      %v7314 = vld [vmem:[#allocation3 + $0xb2] sm:$0xff]
      %v7315 = vld [vmem:[#allocation3 + $0xba] sm:$0xff]
      %v7316 = vld [vmem:[#allocation3 + $0xc2] sm:$0xff]
      %v7317 = vld [vmem:[#allocation3 + $0xca] sm:$0xff]
      %v7318 = vld [vmem:[#allocation3 + $0xd2] sm:$0xff]
      %v7319 = vld [vmem:[#allocation3 + $0xda] sm:$0xff]
      %v7320 = vld [vmem:[#allocation3 + $0xe2] sm:$0xff]
      %v7321 = vld [vmem:[#allocation3 + $0xea] sm:$0xff]
      %v7322 = vld [vmem:[#allocation3 + $0xf2] sm:$0xff]
      %v7323 = vld [vmem:[#allocation3 + $0xfa] sm:$0xff]
      %v7324 = vld [vmem:[#allocation3 + $0x102] sm:$0xff]
      %v7325 = vld [vmem:[#allocation3 + $0x10a] sm:$0xff]
      %v7326 = vsel %vm1822, %v7294, 0.0
      %v7327 = vsel %vm1823, %v7295, 0.0
      %v7328 = vsel %vm1824, %v7296, 0.0
      %v7329 = vsel %vm1825, %v7297, 0.0
      %v7330 = vsel %vm1826, %v7298, 0.0
      %v7331 = vsel %vm1827, %v7299, 0.0
      %v7332 = vsel %vm1828, %v7300, 0.0
      %v7333 = vsel %vm1829, %v7301, 0.0
      %v7334 = vsel %vm1830, %v7302, 0.0
      %v7335 = vsel %vm1831, %v7303, 0.0
      %v7336 = vsel %vm1832, %v7304, 0.0
      %v7337 = vsel %vm1833, %v7305, 0.0
      %v7338 = vsel %vm1834, %v7306, 0.0
      %v7339 = vsel %vm1835, %v7307, 0.0
      %v7340 = vsel %vm1836, %v7308, 0.0
      %v7341 = vsel %vm1837, %v7309, 0.0
      %v7342 = vsel %vm1838, %v7310, 0.0
      %v7343 = vsel %vm1839, %v7311, 0.0
      %v7344 = vsel %vm1840, %v7312, 0.0
      %v7345 = vsel %vm1841, %v7313, 0.0
      %v7346 = vsel %vm1842, %v7314, 0.0
      %v7347 = vsel %vm1843, %v7315, 0.0
      %v7348 = vsel %vm1844, %v7316, 0.0
      %v7349 = vsel %vm1845, %v7317, 0.0
      %v7350 = vsel %vm1846, %v7318, 0.0
      %v7351 = vsel %vm1847, %v7319, 0.0
      %v7352 = vsel %vm1848, %v7320, 0.0
      %v7353 = vsel %vm1849, %v7321, 0.0
      %v7354 = vsel %vm1850, %v7322, 0.0
      %v7355 = vsel %vm1851, %v7323, 0.0
      %v7356 = vsel %vm1852, %v7324, 0.0
      %v7357 = vsel %vm1853, %v7325, 0.0
      %s7358 = scalar_lea.vmem %s4, 360
      %v7359 = vld [vmem:[%s7358] sm:$0xff]
      %v7360 = vld [vmem:[%s7358 + $0x8] sm:$0xff]
      %v7361 = vld [vmem:[%s7358 + $0x10] sm:$0xff]
      %v7362 = vld [vmem:[%s7358 + $0x18] sm:$0xff]
      %v7363 = vld [vmem:[%s7358 + $0x20] sm:$0xff]
      %v7364 = vld [vmem:[%s7358 + $0x28] sm:$0xff]
      %v7365 = vld [vmem:[%s7358 + $0x30] sm:$0xff]
      %v7366 = vld [vmem:[%s7358 + $0x38] sm:$0xff]
      %v7367 = vld [vmem:[%s7358 + $0x40] sm:$0x1]
      %v7369 = vsel %vm4712, %v7326, 0
      %v7372 = vsel %vm4712, %v7327, 0
      %v7375 = vsel %vm4712, %v7328, 0
      %v7378 = vsel %vm4712, %v7329, 0
      %v7381 = vsel %vm4712, %v7330, 0
      %v7384 = vsel %vm4712, %v7331, 0
      %v7387 = vsel %vm4712, %v7332, 0
      %v7390 = vsel %vm4712, %v7333, 0
      %v7393 = vsel %vm4712, %v7334, 0
      %v7396 = vsel %vm4712, %v7335, 0
      %v7399 = vsel %vm4712, %v7336, 0
      %v7402 = vsel %vm4712, %v7337, 0
      %v7405 = vsel %vm4712, %v7338, 0
      %v7408 = vsel %vm4712, %v7339, 0
      %v7411 = vsel %vm4712, %v7340, 0
      %v7414 = vsel %vm4712, %v7341, 0
      %v7417 = vsel %vm4712, %v7342, 0
      %v7420 = vsel %vm4712, %v7343, 0
      %v7423 = vsel %vm4712, %v7344, 0
      %v7426 = vsel %vm4712, %v7345, 0
      %v7429 = vsel %vm4712, %v7346, 0
      %v7432 = vsel %vm4712, %v7347, 0
      %v7435 = vsel %vm4712, %v7348, 0
      %v7438 = vsel %vm4712, %v7349, 0
      %v7441 = vsel %vm4712, %v7350, 0
      %v7444 = vsel %vm4712, %v7351, 0
      %v7447 = vsel %vm4712, %v7352, 0
      %v7450 = vsel %vm4712, %v7353, 0
      %v7453 = vsel %vm4712, %v7354, 0
      %v7456 = vsel %vm4712, %v7355, 0
      %v7459 = vsel %vm4712, %v7356, 0
      %v7462 = vsel %vm4712, %v7357, 0
      %v7465 = vsel %vm5057, %v7367, 0
      %7467 = vmatprep.subr.mxu0 0.0
      %7468 = vmatpush1.msra.mxu0 %v7359
      %7469 = vmatprep.subr.mxu0 0.0
      %7470 = vmatpush1.msra.mxu0 %v7360
      %7471 = vmatprep.subr.mxu0 0.0
      %7472 = vmatpush1.msra.mxu0 %v7361
      %7473 = vmatprep.subr.mxu0 0.0
      %7474 = vmatpush1.msra.mxu0 %v7362
      %7475 = vmatprep.subr.mxu0 0.0
      %7476 = vmatpush1.msra.mxu0 %v7363
      %7477 = vmatprep.subr.mxu0 0.0
      %7478 = vmatpush1.msra.mxu0 %v7364
      %7479 = vmatprep.subr.mxu0 0.0
      %7480 = vmatpush1.msra.mxu0 %v7365
      %7481 = vmatprep.subr.mxu0 0.0
      %7482 = vmatpush1.msra.mxu0 %v7366
      %7483 = vmatprep.subr.mxu0 0.0
      %7484 = vmatpush1.msra.mxu0 %v7465
      %7485 = vmatprep.subr.mxu0 0.0
      %7486 = vmatpush1.msra.mxu0 0.0
      %7487 = vmatprep.subr.mxu0 0.0
      %7488 = vmatpush1.msra.mxu0 0.0
      %7489 = vmatprep.subr.mxu0 0.0
      %7490 = vmatpush1.msra.mxu0 0.0
      %7491 = vmatprep.subr.mxu0 0.0
      %7492 = vmatpush1.msra.mxu0 0.0
      %7493 = vmatprep.subr.mxu0 0.0
      %7494 = vmatpush1.msra.mxu0 0.0
      %7495 = vmatprep.subr.mxu0 0.0
      %7496 = vmatpush1.msra.mxu0 0.0
      %7497 = vmatprep.subr.mxu0 0.0
      %7498 = vmatpush1.msra.mxu0 0.0
      %7499 = vmatprep.subr.mxu0 0.0
      %7500 = vmatpush1.msra.mxu0 0.0
      %7501 = vmatprep.subr.mxu0 0.0
      %7502 = vmatpush1.msra.mxu0 0.0
      %7503 = vmatprep.subr.mxu0 0.0
      %7504 = vmatpush1.msra.mxu0 0.0
      %7505 = vmatprep.subr.mxu0 0.0
      %7506 = vmatpush1.msra.mxu0 0.0
      %7507 = vmatprep.subr.mxu0 0.0
      %7508 = vmatpush1.msra.mxu0 0.0
      %7509 = vmatprep.subr.mxu0 0.0
      %7510 = vmatpush1.msra.mxu0 0.0
      %7511 = vmatprep.subr.mxu0 0.0
      %7512 = vmatpush1.msra.mxu0 0.0
      %7513 = vmatprep.subr.mxu0 0.0
      %7514 = vmatpush1.msra.mxu0 0.0
      %7515 = vmatprep.subr.mxu0 0.0
      %7516 = vmatpush1.msra.mxu0 0.0
      %7517 = vmatprep.subr.mxu0 0.0
      %7518 = vmatpush1.msra.mxu0 0.0
      %7519 = vmatprep.subr.mxu0 0.0
      %7520 = vmatpush1.msra.mxu0 0.0
      %7521 = vmatprep.subr.mxu0 0.0
      %7522 = vmatpush1.msra.mxu0 0.0
      %7523 = vmatprep.subr.mxu0 0.0
      %7524 = vmatpush1.msra.mxu0 0.0
      %7525 = vmatprep.subr.mxu0 0.0
      %7526 = vmatpush1.msra.mxu0 0.0
      %7527 = vmatprep.subr.mxu0 0.0
      %7528 = vmatpush1.msra.mxu0 0.0
      %7529 = vmatprep.subr.mxu0 0.0
      %7530 = vmatpush1.msra.mxu0 0.0
      %7531 = vmatprep.mubr.f32.mxu0 0.0
      %7532 = vmatmul.mubr.f32.gmra.mrb[0].mxu0 %v7369
      %v7533 = vpop.f32.mrb[0].mxu0
      %v7534 = vadd.f32 0.0, %v7533
      %v7535 = vpop.f32.mrb[0].mxu0
      %7536 = vmatprep.mubr.f32.mxu0 0.0
      %7537 = vmatmul.mubr.f32.gmra.mrb[0].mxu0 %v7372
      %v7538 = vpop.f32.mrb[0].mxu0
      %v7539 = vadd.f32 0.0, %v7538
      %v7540 = vpop.f32.mrb[0].mxu0
      %7541 = vmatprep.mubr.f32.mxu0 0.0
      %7542 = vmatmul.mubr.f32.gmra.mrb[0].mxu0 %v7375
      %v7543 = vpop.f32.mrb[0].mxu0
      %v7544 = vadd.f32 0.0, %v7543
      %v7545 = vpop.f32.mrb[0].mxu0
      %7546 = vmatprep.mubr.f32.mxu0 0.0
      %7547 = vmatmul.mubr.f32.gmra.mrb[0].mxu0 %v7378
      %v7548 = vpop.f32.mrb[0].mxu0
      %v7549 = vadd.f32 0.0, %v7548
      %v7550 = vpop.f32.mrb[0].mxu0
      %7551 = vmatprep.mubr.f32.mxu0 0.0
      %7552 = vmatmul.mubr.f32.gmra.mrb[0].mxu0 %v7381
      %v7553 = vpop.f32.mrb[0].mxu0
      %v7554 = vadd.f32 0.0, %v7553
      %v7555 = vpop.f32.mrb[0].mxu0
      %7556 = vmatprep.mubr.f32.mxu0 0.0
      %7557 = vmatmul.mubr.f32.gmra.mrb[0].mxu0 %v7384
      %v7558 = vpop.f32.mrb[0].mxu0
      %v7559 = vadd.f32 0.0, %v7558
      %v7560 = vpop.f32.mrb[0].mxu0
      %7561 = vmatprep.mubr.f32.mxu0 0.0
      %7562 = vmatmul.mubr.f32.gmra.mrb[0].mxu0 %v7387
      %v7563 = vpop.f32.mrb[0].mxu0
      %v7564 = vadd.f32 0.0, %v7563
      %v7565 = vpop.f32.mrb[0].mxu0
      %7566 = vmatprep.mubr.f32.mxu0 0.0
      %7567 = vmatmul.mubr.f32.gmra.mrb[0].mxu0 %v7390
      %v7568 = vpop.f32.mrb[0].mxu0
      %v7569 = vadd.f32 0.0, %v7568
      %v7570 = vpop.f32.mrb[0].mxu0
      %7571 = vmatprep.mubr.f32.mxu0 0.0
      %7572 = vmatmul.mubr.f32.gmra.mrb[0].mxu0 %v7393
      %v7573 = vpop.f32.mrb[0].mxu0
      %v7574 = vadd.f32 0.0, %v7573
      %v7575 = vpop.f32.mrb[0].mxu0
      %7576 = vmatprep.mubr.f32.mxu0 0.0
      %7577 = vmatmul.mubr.f32.gmra.mrb[0].mxu0 %v7396
      %v7578 = vpop.f32.mrb[0].mxu0
      %v7579 = vadd.f32 0.0, %v7578
      %v7580 = vpop.f32.mrb[0].mxu0
      %7581 = vmatprep.mubr.f32.mxu0 0.0
      %7582 = vmatmul.mubr.f32.gmra.mrb[0].mxu0 %v7399
      %v7583 = vpop.f32.mrb[0].mxu0
      %v7584 = vadd.f32 0.0, %v7583
      %v7585 = vpop.f32.mrb[0].mxu0
      %7586 = vmatprep.mubr.f32.mxu0 0.0
      %7587 = vmatmul.mubr.f32.gmra.mrb[0].mxu0 %v7402
      %v7588 = vpop.f32.mrb[0].mxu0
      %v7589 = vadd.f32 0.0, %v7588
      %v7590 = vpop.f32.mrb[0].mxu0
      %7591 = vmatprep.mubr.f32.mxu0 0.0
      %7592 = vmatmul.mubr.f32.gmra.mrb[0].mxu0 %v7405
      %v7593 = vpop.f32.mrb[0].mxu0
      %v7594 = vadd.f32 0.0, %v7593
      %v7595 = vpop.f32.mrb[0].mxu0
      %7596 = vmatprep.mubr.f32.mxu0 0.0
      %7597 = vmatmul.mubr.f32.gmra.mrb[0].mxu0 %v7408
      %v7598 = vpop.f32.mrb[0].mxu0
      %v7599 = vadd.f32 0.0, %v7598
      %v7600 = vpop.f32.mrb[0].mxu0
      %7601 = vmatprep.mubr.f32.mxu0 0.0
      %7602 = vmatmul.mubr.f32.gmra.mrb[0].mxu0 %v7411
      %v7603 = vpop.f32.mrb[0].mxu0
      %v7604 = vadd.f32 0.0, %v7603
      %v7605 = vpop.f32.mrb[0].mxu0
      %7606 = vmatprep.mubr.f32.mxu0 0.0
      %7607 = vmatmul.mubr.f32.gmra.mrb[0].mxu0 %v7414
      %v7608 = vpop.f32.mrb[0].mxu0
      %v7609 = vadd.f32 0.0, %v7608
      %v7610 = vpop.f32.mrb[0].mxu0
      %7611 = vmatprep.mubr.f32.mxu0 0.0
      %7612 = vmatmul.mubr.f32.gmra.mrb[0].mxu0 %v7417
      %v7613 = vpop.f32.mrb[0].mxu0
      %v7614 = vadd.f32 0.0, %v7613
      %v7615 = vpop.f32.mrb[0].mxu0
      %7616 = vmatprep.mubr.f32.mxu0 0.0
      %7617 = vmatmul.mubr.f32.gmra.mrb[0].mxu0 %v7420
      %v7618 = vpop.f32.mrb[0].mxu0
      %v7619 = vadd.f32 0.0, %v7618
      %v7620 = vpop.f32.mrb[0].mxu0
      %7621 = vmatprep.mubr.f32.mxu0 0.0
      %7622 = vmatmul.mubr.f32.gmra.mrb[0].mxu0 %v7423
      %v7623 = vpop.f32.mrb[0].mxu0
      %v7624 = vadd.f32 0.0, %v7623
      %v7625 = vpop.f32.mrb[0].mxu0
      %7626 = vmatprep.mubr.f32.mxu0 0.0
      %7627 = vmatmul.mubr.f32.gmra.mrb[0].mxu0 %v7426
      %v7628 = vpop.f32.mrb[0].mxu0
      %v7629 = vadd.f32 0.0, %v7628
      %v7630 = vpop.f32.mrb[0].mxu0
      %7631 = vmatprep.mubr.f32.mxu0 0.0
      %7632 = vmatmul.mubr.f32.gmra.mrb[0].mxu0 %v7429
      %v7633 = vpop.f32.mrb[0].mxu0
      %v7634 = vadd.f32 0.0, %v7633
      %v7635 = vpop.f32.mrb[0].mxu0
      %7636 = vmatprep.mubr.f32.mxu0 0.0
      %7637 = vmatmul.mubr.f32.gmra.mrb[0].mxu0 %v7432
      %v7638 = vpop.f32.mrb[0].mxu0
      %v7639 = vadd.f32 0.0, %v7638
      %v7640 = vpop.f32.mrb[0].mxu0
      %7641 = vmatprep.mubr.f32.mxu0 0.0
      %7642 = vmatmul.mubr.f32.gmra.mrb[0].mxu0 %v7435
      %v7643 = vpop.f32.mrb[0].mxu0
      %v7644 = vadd.f32 0.0, %v7643
      %v7645 = vpop.f32.mrb[0].mxu0
      %7646 = vmatprep.mubr.f32.mxu0 0.0
      %7647 = vmatmul.mubr.f32.gmra.mrb[0].mxu0 %v7438
      %v7648 = vpop.f32.mrb[0].mxu0
      %v7649 = vadd.f32 0.0, %v7648
      %v7650 = vpop.f32.mrb[0].mxu0
      %7651 = vmatprep.mubr.f32.mxu0 0.0
      %7652 = vmatmul.mubr.f32.gmra.mrb[0].mxu0 %v7441
      %v7653 = vpop.f32.mrb[0].mxu0
      %v7654 = vadd.f32 0.0, %v7653
      %v7655 = vpop.f32.mrb[0].mxu0
      %7656 = vmatprep.mubr.f32.mxu0 0.0
      %7657 = vmatmul.mubr.f32.gmra.mrb[0].mxu0 %v7444
      %v7658 = vpop.f32.mrb[0].mxu0
      %v7659 = vadd.f32 0.0, %v7658
      %v7660 = vpop.f32.mrb[0].mxu0
      %7661 = vmatprep.mubr.f32.mxu0 0.0
      %7662 = vmatmul.mubr.f32.gmra.mrb[0].mxu0 %v7447
      %v7663 = vpop.f32.mrb[0].mxu0
      %v7664 = vadd.f32 0.0, %v7663
      %v7665 = vpop.f32.mrb[0].mxu0
      %7666 = vmatprep.mubr.f32.mxu0 0.0
      %7667 = vmatmul.mubr.f32.gmra.mrb[0].mxu0 %v7450
      %v7668 = vpop.f32.mrb[0].mxu0
      %v7669 = vadd.f32 0.0, %v7668
      %v7670 = vpop.f32.mrb[0].mxu0
      %7671 = vmatprep.mubr.f32.mxu0 0.0
      %7672 = vmatmul.mubr.f32.gmra.mrb[0].mxu0 %v7453
      %v7673 = vpop.f32.mrb[0].mxu0
      %v7674 = vadd.f32 0.0, %v7673
      %v7675 = vpop.f32.mrb[0].mxu0
      %7676 = vmatprep.mubr.f32.mxu0 0.0
      %7677 = vmatmul.mubr.f32.gmra.mrb[0].mxu0 %v7456
      %v7678 = vpop.f32.mrb[0].mxu0
      %v7679 = vadd.f32 0.0, %v7678
      %v7680 = vpop.f32.mrb[0].mxu0
      %7681 = vmatprep.mubr.f32.mxu0 0.0
      %7682 = vmatmul.mubr.f32.gmra.mrb[0].mxu0 %v7459
      %v7683 = vpop.f32.mrb[0].mxu0
      %v7684 = vadd.f32 0.0, %v7683
      %v7685 = vpop.f32.mrb[0].mxu0
      %7686 = vmatprep.mubr.f32.mxu0 0.0
      %7687 = vmatmul.mubr.f32.gmra.mrb[0].mxu0 %v7462
      %v7688 = vpop.f32.mrb[0].mxu0
      %v7689 = vadd.f32 0.0, %v7688
      %v7690 = vpop.f32.mrb[0].mxu0
      %7691 = vdwg.mxu0
      %v7692 = vadd.f32 %v7262, %v7534
      %v7693 = vadd.f32 %v7263, %v7539
      %v7694 = vadd.f32 %v7264, %v7544
      %v7695 = vadd.f32 %v7265, %v7549
      %v7696 = vadd.f32 %v7266, %v7554
      %v7697 = vadd.f32 %v7267, %v7559
      %v7698 = vadd.f32 %v7268, %v7564
      %v7699 = vadd.f32 %v7269, %v7569
      %v7700 = vadd.f32 %v7270, %v7574
      %v7701 = vadd.f32 %v7271, %v7579
      %v7702 = vadd.f32 %v7272, %v7584
      %v7703 = vadd.f32 %v7273, %v7589
      %v7704 = vadd.f32 %v7274, %v7594
      %v7705 = vadd.f32 %v7275, %v7599
      %v7706 = vadd.f32 %v7276, %v7604
      %v7707 = vadd.f32 %v7277, %v7609
      %v7708 = vadd.f32 %v7278, %v7614
      %v7709 = vadd.f32 %v7279, %v7619
      %v7710 = vadd.f32 %v7280, %v7624
      %v7711 = vadd.f32 %v7281, %v7629
      %v7712 = vadd.f32 %v7282, %v7634
      %v7713 = vadd.f32 %v7283, %v7639
      %v7714 = vadd.f32 %v7284, %v7644
      %v7715 = vadd.f32 %v7285, %v7649
      %v7716 = vadd.f32 %v7286, %v7654
      %v7717 = vadd.f32 %v7287, %v7659
      %v7718 = vadd.f32 %v7288, %v7664
      %v7719 = vadd.f32 %v7289, %v7669
      %v7720 = vadd.f32 %v7290, %v7674
      %v7721 = vadd.f32 %v7291, %v7679
      %v7722 = vadd.f32 %v7292, %v7684
      %v7723 = vadd.f32 %v7293, %v7689
      %7724 = vst.msk [vmem:[%s254] sm:$0xff] %vm808, %v7692
      %7725 = vst.msk [vmem:[%s254 + $0x8] sm:$0xff] %vm808, %v7693
      %7726 = vst.msk [vmem:[%s254 + $0x10] sm:$0xff] %vm808, %v7694
      %7727 = vst.msk [vmem:[%s254 + $0x18] sm:$0xff] %vm808, %v7695
      %7728 = vst.msk [vmem:[%s254 + $0x20] sm:$0xff] %vm808, %v7696
      %7729 = vst.msk [vmem:[%s254 + $0x28] sm:$0xff] %vm808, %v7697
      %7730 = vst.msk [vmem:[%s254 + $0x30] sm:$0xff] %vm808, %v7698
      %7731 = vst.msk [vmem:[%s254 + $0x38] sm:$0xff] %vm808, %v7699
      %7732 = vst.msk [vmem:[%s254 + $0x40] sm:$0xff] %vm808, %v7700
      %7733 = vst.msk [vmem:[%s254 + $0x48] sm:$0xff] %vm808, %v7701
      %7734 = vst.msk [vmem:[%s254 + $0x50] sm:$0xff] %vm808, %v7702
      %7735 = vst.msk [vmem:[%s254 + $0x58] sm:$0xff] %vm808, %v7703
      %7736 = vst.msk [vmem:[%s254 + $0x60] sm:$0xff] %vm808, %v7704
      %7737 = vst.msk [vmem:[%s254 + $0x68] sm:$0xff] %vm808, %v7705
      %7738 = vst.msk [vmem:[%s254 + $0x70] sm:$0xff] %vm808, %v7706
      %7739 = vst.msk [vmem:[%s254 + $0x78] sm:$0xff] %vm808, %v7707
      %7740 = vst.msk [vmem:[%s254 + $0x80] sm:$0xff] %vm808, %v7708
      %7741 = vst.msk [vmem:[%s254 + $0x88] sm:$0xff] %vm808, %v7709
      %7742 = vst.msk [vmem:[%s254 + $0x90] sm:$0xff] %vm808, %v7710
      %7743 = vst.msk [vmem:[%s254 + $0x98] sm:$0xff] %vm808, %v7711
      %7744 = vst.msk [vmem:[%s254 + $0xa0] sm:$0xff] %vm808, %v7712
      %7745 = vst.msk [vmem:[%s254 + $0xa8] sm:$0xff] %vm808, %v7713
      %7746 = vst.msk [vmem:[%s254 + $0xb0] sm:$0xff] %vm808, %v7714
      %7747 = vst.msk [vmem:[%s254 + $0xb8] sm:$0xff] %vm808, %v7715
      %7748 = vst.msk [vmem:[%s254 + $0xc0] sm:$0xff] %vm808, %v7716
      %7749 = vst.msk [vmem:[%s254 + $0xc8] sm:$0xff] %vm808, %v7717
      %7750 = vst.msk [vmem:[%s254 + $0xd0] sm:$0xff] %vm808, %v7718
      %7751 = vst.msk [vmem:[%s254 + $0xd8] sm:$0xff] %vm808, %v7719
      %7752 = vst.msk [vmem:[%s254 + $0xe0] sm:$0xff] %vm808, %v7720
      %7753 = vst.msk [vmem:[%s254 + $0xe8] sm:$0xff] %vm808, %v7721
      %7754 = vst.msk [vmem:[%s254 + $0xf0] sm:$0xff] %vm808, %v7722
      %7755 = vst.msk [vmem:[%s254 + $0xf8] sm:$0xff] %vm808, %v7723
      %v7756 = vld [vmem:[%s254] sm:$0xff]
      %v7757 = vld [vmem:[%s254 + $0x8] sm:$0xff]
      %v7758 = vld [vmem:[%s254 + $0x10] sm:$0xff]
      %v7759 = vld [vmem:[%s254 + $0x18] sm:$0xff]
      %v7760 = vld [vmem:[%s254 + $0x20] sm:$0xff]
      %v7761 = vld [vmem:[%s254 + $0x28] sm:$0xff]
      %v7762 = vld [vmem:[%s254 + $0x30] sm:$0xff]
      %v7763 = vld [vmem:[%s254 + $0x38] sm:$0xff]
      %v7764 = vld [vmem:[%s254 + $0x40] sm:$0xff]
      %v7765 = vld [vmem:[%s254 + $0x48] sm:$0xff]
      %v7766 = vld [vmem:[%s254 + $0x50] sm:$0xff]
      %v7767 = vld [vmem:[%s254 + $0x58] sm:$0xff]
      %v7768 = vld [vmem:[%s254 + $0x60] sm:$0xff]
      %v7769 = vld [vmem:[%s254 + $0x68] sm:$0xff]
      %v7770 = vld [vmem:[%s254 + $0x70] sm:$0xff]
      %v7771 = vld [vmem:[%s254 + $0x78] sm:$0xff]
      %v7772 = vld [vmem:[%s254 + $0x80] sm:$0xff]
      %v7773 = vld [vmem:[%s254 + $0x88] sm:$0xff]
      %v7774 = vld [vmem:[%s254 + $0x90] sm:$0xff]
      %v7775 = vld [vmem:[%s254 + $0x98] sm:$0xff]
      %v7776 = vld [vmem:[%s254 + $0xa0] sm:$0xff]
      %v7777 = vld [vmem:[%s254 + $0xa8] sm:$0xff]
      %v7778 = vld [vmem:[%s254 + $0xb0] sm:$0xff]
      %v7779 = vld [vmem:[%s254 + $0xb8] sm:$0xff]
      %v7780 = vld [vmem:[%s254 + $0xc0] sm:$0xff]
      %v7781 = vld [vmem:[%s254 + $0xc8] sm:$0xff]
      %v7782 = vld [vmem:[%s254 + $0xd0] sm:$0xff]
      %v7783 = vld [vmem:[%s254 + $0xd8] sm:$0xff]
      %v7784 = vld [vmem:[%s254 + $0xe0] sm:$0xff]
      %v7785 = vld [vmem:[%s254 + $0xe8] sm:$0xff]
      %v7786 = vld [vmem:[%s254 + $0xf0] sm:$0xff]
      %v7787 = vld [vmem:[%s254 + $0xf8] sm:$0xff]
      %v7788 = vld [vmem:[#allocation3 + $0x20] sm:$0xff]
      %v7789 = vld [vmem:[#allocation3 + $0x28] sm:$0xff]
      %v7790 = vld [vmem:[#allocation3 + $0x30] sm:$0xff]
      %v7791 = vld [vmem:[#allocation3 + $0x38] sm:$0xff]
      %v7792 = vld [vmem:[#allocation3 + $0x40] sm:$0xff]
      %v7793 = vld [vmem:[#allocation3 + $0x48] sm:$0xff]
      %v7794 = vld [vmem:[#allocation3 + $0x50] sm:$0xff]
      %v7795 = vld [vmem:[#allocation3 + $0x58] sm:$0xff]
      %v7796 = vld [vmem:[#allocation3 + $0x60] sm:$0xff]
      %v7797 = vld [vmem:[#allocation3 + $0x68] sm:$0xff]
      %v7798 = vld [vmem:[#allocation3 + $0x70] sm:$0xff]
      %v7799 = vld [vmem:[#allocation3 + $0x78] sm:$0xff]
      %v7800 = vld [vmem:[#allocation3 + $0x80] sm:$0xff]
      %v7801 = vld [vmem:[#allocation3 + $0x88] sm:$0xff]
      %v7802 = vld [vmem:[#allocation3 + $0x90] sm:$0xff]
      %v7803 = vld [vmem:[#allocation3 + $0x98] sm:$0xff]
      %v7804 = vld [vmem:[#allocation3 + $0xa0] sm:$0xff]
      %v7805 = vld [vmem:[#allocation3 + $0xa8] sm:$0xff]
      %v7806 = vld [vmem:[#allocation3 + $0xb0] sm:$0xff]
      %v7807 = vld [vmem:[#allocation3 + $0xb8] sm:$0xff]
      %v7808 = vld [vmem:[#allocation3 + $0xc0] sm:$0xff]
      %v7809 = vld [vmem:[#allocation3 + $0xc8] sm:$0xff]
      %v7810 = vld [vmem:[#allocation3 + $0xd0] sm:$0xff]
      %v7811 = vld [vmem:[#allocation3 + $0xd8] sm:$0xff]
      %v7812 = vld [vmem:[#allocation3 + $0xe0] sm:$0xff]
      %v7813 = vld [vmem:[#allocation3 + $0xe8] sm:$0xff]
      %v7814 = vld [vmem:[#allocation3 + $0xf0] sm:$0xff]
      %v7815 = vld [vmem:[#allocation3 + $0xf8] sm:$0xff]
      %v7816 = vld [vmem:[#allocation3 + $0x100] sm:$0xff]
      %v7817 = vld [vmem:[#allocation3 + $0x108] sm:$0xff]
      %v7818 = vld [vmem:[#allocation3 + $0x110] sm:$0xff]
      %v7819 = vld [vmem:[#allocation3 + $0x118] sm:$0xff]
      %v7820 = vsel %vm946, %v7788, 0.0
      %v7821 = vsel %vm947, %v7789, 0.0
      %v7822 = vsel %vm948, %v7790, 0.0
      %v7823 = vsel %vm949, %v7791, 0.0
      %v7824 = vsel %vm950, %v7792, 0.0
      %v7825 = vsel %vm951, %v7793, 0.0
      %v7826 = vsel %vm952, %v7794, 0.0
      %v7827 = vsel %vm953, %v7795, 0.0
      %v7828 = vsel %vm954, %v7796, 0.0
      %v7829 = vsel %vm955, %v7797, 0.0
      %v7830 = vsel %vm956, %v7798, 0.0
      %v7831 = vsel %vm957, %v7799, 0.0
      %v7832 = vsel %vm958, %v7800, 0.0
      %v7833 = vsel %vm959, %v7801, 0.0
      %v7834 = vsel %vm960, %v7802, 0.0
      %v7835 = vsel %vm961, %v7803, 0.0
      %v7836 = vsel %vm962, %v7804, 0.0
      %v7837 = vsel %vm963, %v7805, 0.0
      %v7838 = vsel %vm964, %v7806, 0.0
      %v7839 = vsel %vm965, %v7807, 0.0
      %v7840 = vsel %vm966, %v7808, 0.0
      %v7841 = vsel %vm967, %v7809, 0.0
      %v7842 = vsel %vm968, %v7810, 0.0
      %v7843 = vsel %vm969, %v7811, 0.0
      %v7844 = vsel %vm970, %v7812, 0.0
      %v7845 = vsel %vm971, %v7813, 0.0
      %v7846 = vsel %vm972, %v7814, 0.0
      %v7847 = vsel %vm973, %v7815, 0.0
      %v7848 = vsel %vm974, %v7816, 0.0
      %v7849 = vsel %vm975, %v7817, 0.0
      %v7850 = vsel %vm976, %v7818, 0.0
      %v7851 = vsel %vm977, %v7819, 0.0
      %s7852 = scalar_lea.vmem %s4, 432
      %v7853 = vld [vmem:[%s7852] sm:$0xff]
      %v7854 = vld [vmem:[%s7852 + $0x8] sm:$0xff]
      %v7855 = vld [vmem:[%s7852 + $0x10] sm:$0xff]
      %v7856 = vld [vmem:[%s7852 + $0x18] sm:$0xff]
      %v7857 = vld [vmem:[%s7852 + $0x20] sm:$0xff]
      %v7858 = vld [vmem:[%s7852 + $0x28] sm:$0xff]
      %v7859 = vld [vmem:[%s7852 + $0x30] sm:$0xff]
      %v7860 = vld [vmem:[%s7852 + $0x38] sm:$0xff]
      %v7861 = vld [vmem:[%s7852 + $0x40] sm:$0x1]
      %v7863 = vsel %vm4712, %v7820, 0
      %v7866 = vsel %vm4712, %v7821, 0
      %v7869 = vsel %vm4712, %v7822, 0
      %v7872 = vsel %vm4712, %v7823, 0
      %v7875 = vsel %vm4712, %v7824, 0
      %v7878 = vsel %vm4712, %v7825, 0
      %v7881 = vsel %vm4712, %v7826, 0
      %v7884 = vsel %vm4712, %v7827, 0
      %v7887 = vsel %vm4712, %v7828, 0
      %v7890 = vsel %vm4712, %v7829, 0
      %v7893 = vsel %vm4712, %v7830, 0
      %v7896 = vsel %vm4712, %v7831, 0
      %v7899 = vsel %vm4712, %v7832, 0
      %v7902 = vsel %vm4712, %v7833, 0
      %v7905 = vsel %vm4712, %v7834, 0
      %v7908 = vsel %vm4712, %v7835, 0
      %v7911 = vsel %vm4712, %v7836, 0
      %v7914 = vsel %vm4712, %v7837, 0
      %v7917 = vsel %vm4712, %v7838, 0
      %v7920 = vsel %vm4712, %v7839, 0
      %v7923 = vsel %vm4712, %v7840, 0
      %v7926 = vsel %vm4712, %v7841, 0
      %v7929 = vsel %vm4712, %v7842, 0
      %v7932 = vsel %vm4712, %v7843, 0
      %v7935 = vsel %vm4712, %v7844, 0
      %v7938 = vsel %vm4712, %v7845, 0
      %v7941 = vsel %vm4712, %v7846, 0
      %v7944 = vsel %vm4712, %v7847, 0
      %v7947 = vsel %vm4712, %v7848, 0
      %v7950 = vsel %vm4712, %v7849, 0
      %v7953 = vsel %vm4712, %v7850, 0
      %v7956 = vsel %vm4712, %v7851, 0
      %v7959 = vsel %vm5057, %v7861, 0
      %7961 = vmatprep.subr.mxu0 0.0
      %7962 = vmatpush1.msra.mxu0 %v7853
      %7963 = vmatprep.subr.mxu0 0.0
      %7964 = vmatpush1.msra.mxu0 %v7854
      %7965 = vmatprep.subr.mxu0 0.0
      %7966 = vmatpush1.msra.mxu0 %v7855
      %7967 = vmatprep.subr.mxu0 0.0
      %7968 = vmatpush1.msra.mxu0 %v7856
      %7969 = vmatprep.subr.mxu0 0.0
      %7970 = vmatpush1.msra.mxu0 %v7857
      %7971 = vmatprep.subr.mxu0 0.0
      %7972 = vmatpush1.msra.mxu0 %v7858
      %7973 = vmatprep.subr.mxu0 0.0
      %7974 = vmatpush1.msra.mxu0 %v7859
      %7975 = vmatprep.subr.mxu0 0.0
      %7976 = vmatpush1.msra.mxu0 %v7860
      %7977 = vmatprep.subr.mxu0 0.0
      %7978 = vmatpush1.msra.mxu0 %v7959
      %7979 = vmatprep.subr.mxu0 0.0
      %7980 = vmatpush1.msra.mxu0 0.0
      %7981 = vmatprep.subr.mxu0 0.0
      %7982 = vmatpush1.msra.mxu0 0.0
      %7983 = vmatprep.subr.mxu0 0.0
      %7984 = vmatpush1.msra.mxu0 0.0
      %7985 = vmatprep.subr.mxu0 0.0
      %7986 = vmatpush1.msra.mxu0 0.0
      %7987 = vmatprep.subr.mxu0 0.0
      %7988 = vmatpush1.msra.mxu0 0.0
      %7989 = vmatprep.subr.mxu0 0.0
      %7990 = vmatpush1.msra.mxu0 0.0
      %7991 = vmatprep.subr.mxu0 0.0
      %7992 = vmatpush1.msra.mxu0 0.0
      %7993 = vmatprep.subr.mxu0 0.0
      %7994 = vmatpush1.msra.mxu0 0.0
      %7995 = vmatprep.subr.mxu0 0.0
      %7996 = vmatpush1.msra.mxu0 0.0
      %7997 = vmatprep.subr.mxu0 0.0
      %7998 = vmatpush1.msra.mxu0 0.0
      %7999 = vmatprep.subr.mxu0 0.0
      %8000 = vmatpush1.msra.mxu0 0.0
      %8001 = vmatprep.subr.mxu0 0.0
      %8002 = vmatpush1.msra.mxu0 0.0
      %8003 = vmatprep.subr.mxu0 0.0
      %8004 = vmatpush1.msra.mxu0 0.0
      %8005 = vmatprep.subr.mxu0 0.0
      %8006 = vmatpush1.msra.mxu0 0.0
      %8007 = vmatprep.subr.mxu0 0.0
      %8008 = vmatpush1.msra.mxu0 0.0
      %8009 = vmatprep.subr.mxu0 0.0
      %8010 = vmatpush1.msra.mxu0 0.0
      %8011 = vmatprep.subr.mxu0 0.0
      %8012 = vmatpush1.msra.mxu0 0.0
      %8013 = vmatprep.subr.mxu0 0.0
      %8014 = vmatpush1.msra.mxu0 0.0
      %8015 = vmatprep.subr.mxu0 0.0
      %8016 = vmatpush1.msra.mxu0 0.0
      %8017 = vmatprep.subr.mxu0 0.0
      %8018 = vmatpush1.msra.mxu0 0.0
      %8019 = vmatprep.subr.mxu0 0.0
      %8020 = vmatpush1.msra.mxu0 0.0
      %8021 = vmatprep.subr.mxu0 0.0
      %8022 = vmatpush1.msra.mxu0 0.0
      %8023 = vmatprep.subr.mxu0 0.0
      %8024 = vmatpush1.msra.mxu0 0.0
      %8025 = vmatprep.mubr.f32.mxu0 0.0
      %8026 = vmatmul.mubr.f32.gmra.mrb[0].mxu0 %v7863
      %v8027 = vpop.f32.mrb[0].mxu0
      %v8028 = vadd.f32 0.0, %v8027
      %v8029 = vpop.f32.mrb[0].mxu0
      %8030 = vmatprep.mubr.f32.mxu0 0.0
      %8031 = vmatmul.mubr.f32.gmra.mrb[0].mxu0 %v7866
      %v8032 = vpop.f32.mrb[0].mxu0
      %v8033 = vadd.f32 0.0, %v8032
      %v8034 = vpop.f32.mrb[0].mxu0
      %8035 = vmatprep.mubr.f32.mxu0 0.0
      %8036 = vmatmul.mubr.f32.gmra.mrb[0].mxu0 %v7869
      %v8037 = vpop.f32.mrb[0].mxu0
      %v8038 = vadd.f32 0.0, %v8037
      %v8039 = vpop.f32.mrb[0].mxu0
      %8040 = vmatprep.mubr.f32.mxu0 0.0
      %8041 = vmatmul.mubr.f32.gmra.mrb[0].mxu0 %v7872
      %v8042 = vpop.f32.mrb[0].mxu0
      %v8043 = vadd.f32 0.0, %v8042
      %v8044 = vpop.f32.mrb[0].mxu0
      %8045 = vmatprep.mubr.f32.mxu0 0.0
      %8046 = vmatmul.mubr.f32.gmra.mrb[0].mxu0 %v7875
      %v8047 = vpop.f32.mrb[0].mxu0
      %v8048 = vadd.f32 0.0, %v8047
      %v8049 = vpop.f32.mrb[0].mxu0
      %8050 = vmatprep.mubr.f32.mxu0 0.0
      %8051 = vmatmul.mubr.f32.gmra.mrb[0].mxu0 %v7878
      %v8052 = vpop.f32.mrb[0].mxu0
      %v8053 = vadd.f32 0.0, %v8052
      %v8054 = vpop.f32.mrb[0].mxu0
      %8055 = vmatprep.mubr.f32.mxu0 0.0
      %8056 = vmatmul.mubr.f32.gmra.mrb[0].mxu0 %v7881
      %v8057 = vpop.f32.mrb[0].mxu0
      %v8058 = vadd.f32 0.0, %v8057
      %v8059 = vpop.f32.mrb[0].mxu0
      %8060 = vmatprep.mubr.f32.mxu0 0.0
      %8061 = vmatmul.mubr.f32.gmra.mrb[0].mxu0 %v7884
      %v8062 = vpop.f32.mrb[0].mxu0
      %v8063 = vadd.f32 0.0, %v8062
      %v8064 = vpop.f32.mrb[0].mxu0
      %8065 = vmatprep.mubr.f32.mxu0 0.0
      %8066 = vmatmul.mubr.f32.gmra.mrb[0].mxu0 %v7887
      %v8067 = vpop.f32.mrb[0].mxu0
      %v8068 = vadd.f32 0.0, %v8067
      %v8069 = vpop.f32.mrb[0].mxu0
      %8070 = vmatprep.mubr.f32.mxu0 0.0
      %8071 = vmatmul.mubr.f32.gmra.mrb[0].mxu0 %v7890
      %v8072 = vpop.f32.mrb[0].mxu0
      %v8073 = vadd.f32 0.0, %v8072
      %v8074 = vpop.f32.mrb[0].mxu0
      %8075 = vmatprep.mubr.f32.mxu0 0.0
      %8076 = vmatmul.mubr.f32.gmra.mrb[0].mxu0 %v7893
      %v8077 = vpop.f32.mrb[0].mxu0
      %v8078 = vadd.f32 0.0, %v8077
      %v8079 = vpop.f32.mrb[0].mxu0
      %8080 = vmatprep.mubr.f32.mxu0 0.0
      %8081 = vmatmul.mubr.f32.gmra.mrb[0].mxu0 %v7896
      %v8082 = vpop.f32.mrb[0].mxu0
      %v8083 = vadd.f32 0.0, %v8082
      %v8084 = vpop.f32.mrb[0].mxu0
      %8085 = vmatprep.mubr.f32.mxu0 0.0
      %8086 = vmatmul.mubr.f32.gmra.mrb[0].mxu0 %v7899
      %v8087 = vpop.f32.mrb[0].mxu0
      %v8088 = vadd.f32 0.0, %v8087
      %v8089 = vpop.f32.mrb[0].mxu0
      %8090 = vmatprep.mubr.f32.mxu0 0.0
      %8091 = vmatmul.mubr.f32.gmra.mrb[0].mxu0 %v7902
      %v8092 = vpop.f32.mrb[0].mxu0
      %v8093 = vadd.f32 0.0, %v8092
      %v8094 = vpop.f32.mrb[0].mxu0
      %8095 = vmatprep.mubr.f32.mxu0 0.0
      %8096 = vmatmul.mubr.f32.gmra.mrb[0].mxu0 %v7905
      %v8097 = vpop.f32.mrb[0].mxu0
      %v8098 = vadd.f32 0.0, %v8097
      %v8099 = vpop.f32.mrb[0].mxu0
      %8100 = vmatprep.mubr.f32.mxu0 0.0
      %8101 = vmatmul.mubr.f32.gmra.mrb[0].mxu0 %v7908
      %v8102 = vpop.f32.mrb[0].mxu0
      %v8103 = vadd.f32 0.0, %v8102
      %v8104 = vpop.f32.mrb[0].mxu0
      %8105 = vmatprep.mubr.f32.mxu0 0.0
      %8106 = vmatmul.mubr.f32.gmra.mrb[0].mxu0 %v7911
      %v8107 = vpop.f32.mrb[0].mxu0
      %v8108 = vadd.f32 0.0, %v8107
      %v8109 = vpop.f32.mrb[0].mxu0
      %8110 = vmatprep.mubr.f32.mxu0 0.0
      %8111 = vmatmul.mubr.f32.gmra.mrb[0].mxu0 %v7914
      %v8112 = vpop.f32.mrb[0].mxu0
      %v8113 = vadd.f32 0.0, %v8112
      %v8114 = vpop.f32.mrb[0].mxu0
      %8115 = vmatprep.mubr.f32.mxu0 0.0
      %8116 = vmatmul.mubr.f32.gmra.mrb[0].mxu0 %v7917
      %v8117 = vpop.f32.mrb[0].mxu0
      %v8118 = vadd.f32 0.0, %v8117
      %v8119 = vpop.f32.mrb[0].mxu0
      %8120 = vmatprep.mubr.f32.mxu0 0.0
      %8121 = vmatmul.mubr.f32.gmra.mrb[0].mxu0 %v7920
      %v8122 = vpop.f32.mrb[0].mxu0
      %v8123 = vadd.f32 0.0, %v8122
      %v8124 = vpop.f32.mrb[0].mxu0
      %8125 = vmatprep.mubr.f32.mxu0 0.0
      %8126 = vmatmul.mubr.f32.gmra.mrb[0].mxu0 %v7923
      %v8127 = vpop.f32.mrb[0].mxu0
      %v8128 = vadd.f32 0.0, %v8127
      %v8129 = vpop.f32.mrb[0].mxu0
      %8130 = vmatprep.mubr.f32.mxu0 0.0
      %8131 = vmatmul.mubr.f32.gmra.mrb[0].mxu0 %v7926
      %v8132 = vpop.f32.mrb[0].mxu0
      %v8133 = vadd.f32 0.0, %v8132
      %v8134 = vpop.f32.mrb[0].mxu0
      %8135 = vmatprep.mubr.f32.mxu0 0.0
      %8136 = vmatmul.mubr.f32.gmra.mrb[0].mxu0 %v7929
      %v8137 = vpop.f32.mrb[0].mxu0
      %v8138 = vadd.f32 0.0, %v8137
      %v8139 = vpop.f32.mrb[0].mxu0
      %8140 = vmatprep.mubr.f32.mxu0 0.0
      %8141 = vmatmul.mubr.f32.gmra.mrb[0].mxu0 %v7932
      %v8142 = vpop.f32.mrb[0].mxu0
      %v8143 = vadd.f32 0.0, %v8142
      %v8144 = vpop.f32.mrb[0].mxu0
      %8145 = vmatprep.mubr.f32.mxu0 0.0
      %8146 = vmatmul.mubr.f32.gmra.mrb[0].mxu0 %v7935
      %v8147 = vpop.f32.mrb[0].mxu0
      %v8148 = vadd.f32 0.0, %v8147
      %v8149 = vpop.f32.mrb[0].mxu0
      %8150 = vmatprep.mubr.f32.mxu0 0.0
      %8151 = vmatmul.mubr.f32.gmra.mrb[0].mxu0 %v7938
      %v8152 = vpop.f32.mrb[0].mxu0
      %v8153 = vadd.f32 0.0, %v8152
      %v8154 = vpop.f32.mrb[0].mxu0
      %8155 = vmatprep.mubr.f32.mxu0 0.0
      %8156 = vmatmul.mubr.f32.gmra.mrb[0].mxu0 %v7941
      %v8157 = vpop.f32.mrb[0].mxu0
      %v8158 = vadd.f32 0.0, %v8157
      %v8159 = vpop.f32.mrb[0].mxu0
      %8160 = vmatprep.mubr.f32.mxu0 0.0
      %8161 = vmatmul.mubr.f32.gmra.mrb[0].mxu0 %v7944
      %v8162 = vpop.f32.mrb[0].mxu0
      %v8163 = vadd.f32 0.0, %v8162
      %v8164 = vpop.f32.mrb[0].mxu0
      %8165 = vmatprep.mubr.f32.mxu0 0.0
      %8166 = vmatmul.mubr.f32.gmra.mrb[0].mxu0 %v7947
      %v8167 = vpop.f32.mrb[0].mxu0
      %v8168 = vadd.f32 0.0, %v8167
      %v8169 = vpop.f32.mrb[0].mxu0
      %8170 = vmatprep.mubr.f32.mxu0 0.0
      %8171 = vmatmul.mubr.f32.gmra.mrb[0].mxu0 %v7950
      %v8172 = vpop.f32.mrb[0].mxu0
      %v8173 = vadd.f32 0.0, %v8172
      %v8174 = vpop.f32.mrb[0].mxu0
      %8175 = vmatprep.mubr.f32.mxu0 0.0
      %8176 = vmatmul.mubr.f32.gmra.mrb[0].mxu0 %v7953
      %v8177 = vpop.f32.mrb[0].mxu0
      %v8178 = vadd.f32 0.0, %v8177
      %v8179 = vpop.f32.mrb[0].mxu0
      %8180 = vmatprep.mubr.f32.mxu0 0.0
      %8181 = vmatmul.mubr.f32.gmra.mrb[0].mxu0 %v7956
      %v8182 = vpop.f32.mrb[0].mxu0
      %v8183 = vadd.f32 0.0, %v8182
      %v8184 = vpop.f32.mrb[0].mxu0
      %8185 = vdwg.mxu0
      %v8186 = vadd.f32 %v7756, %v8028
      %v8187 = vadd.f32 %v7757, %v8033
      %v8188 = vadd.f32 %v7758, %v8038
      %v8189 = vadd.f32 %v7759, %v8043
      %v8190 = vadd.f32 %v7760, %v8048
      %v8191 = vadd.f32 %v7761, %v8053
      %v8192 = vadd.f32 %v7762, %v8058
      %v8193 = vadd.f32 %v7763, %v8063
      %v8194 = vadd.f32 %v7764, %v8068
      %v8195 = vadd.f32 %v7765, %v8073
      %v8196 = vadd.f32 %v7766, %v8078
      %v8197 = vadd.f32 %v7767, %v8083
      %v8198 = vadd.f32 %v7768, %v8088
      %v8199 = vadd.f32 %v7769, %v8093
      %v8200 = vadd.f32 %v7770, %v8098
      %v8201 = vadd.f32 %v7771, %v8103
      %v8202 = vadd.f32 %v7772, %v8108
      %v8203 = vadd.f32 %v7773, %v8113
      %v8204 = vadd.f32 %v7774, %v8118
      %v8205 = vadd.f32 %v7775, %v8123
      %v8206 = vadd.f32 %v7776, %v8128
      %v8207 = vadd.f32 %v7777, %v8133
      %v8208 = vadd.f32 %v7778, %v8138
      %v8209 = vadd.f32 %v7779, %v8143
      %v8210 = vadd.f32 %v7780, %v8148
      %v8211 = vadd.f32 %v7781, %v8153
      %v8212 = vadd.f32 %v7782, %v8158
      %v8213 = vadd.f32 %v7783, %v8163
      %v8214 = vadd.f32 %v7784, %v8168
      %v8215 = vadd.f32 %v7785, %v8173
      %v8216 = vadd.f32 %v7786, %v8178
      %v8217 = vadd.f32 %v7787, %v8183
      %8218 = vst.msk [vmem:[%s254] sm:$0xff] %vm808, %v8186
      %8219 = vst.msk [vmem:[%s254 + $0x8] sm:$0xff] %vm808, %v8187
      %8220 = vst.msk [vmem:[%s254 + $0x10] sm:$0xff] %vm808, %v8188
      %8221 = vst.msk [vmem:[%s254 + $0x18] sm:$0xff] %vm808, %v8189
      %8222 = vst.msk [vmem:[%s254 + $0x20] sm:$0xff] %vm808, %v8190
      %8223 = vst.msk [vmem:[%s254 + $0x28] sm:$0xff] %vm808, %v8191
      %8224 = vst.msk [vmem:[%s254 + $0x30] sm:$0xff] %vm808, %v8192
      %8225 = vst.msk [vmem:[%s254 + $0x38] sm:$0xff] %vm808, %v8193
      %8226 = vst.msk [vmem:[%s254 + $0x40] sm:$0xff] %vm808, %v8194
      %8227 = vst.msk [vmem:[%s254 + $0x48] sm:$0xff] %vm808, %v8195
      %8228 = vst.msk [vmem:[%s254 + $0x50] sm:$0xff] %vm808, %v8196
      %8229 = vst.msk [vmem:[%s254 + $0x58] sm:$0xff] %vm808, %v8197
      %8230 = vst.msk [vmem:[%s254 + $0x60] sm:$0xff] %vm808, %v8198
      %8231 = vst.msk [vmem:[%s254 + $0x68] sm:$0xff] %vm808, %v8199
      %8232 = vst.msk [vmem:[%s254 + $0x70] sm:$0xff] %vm808, %v8200
      %8233 = vst.msk [vmem:[%s254 + $0x78] sm:$0xff] %vm808, %v8201
      %8234 = vst.msk [vmem:[%s254 + $0x80] sm:$0xff] %vm808, %v8202
      %8235 = vst.msk [vmem:[%s254 + $0x88] sm:$0xff] %vm808, %v8203
      %8236 = vst.msk [vmem:[%s254 + $0x90] sm:$0xff] %vm808, %v8204
      %8237 = vst.msk [vmem:[%s254 + $0x98] sm:$0xff] %vm808, %v8205
      %8238 = vst.msk [vmem:[%s254 + $0xa0] sm:$0xff] %vm808, %v8206
      %8239 = vst.msk [vmem:[%s254 + $0xa8] sm:$0xff] %vm808, %v8207
      %8240 = vst.msk [vmem:[%s254 + $0xb0] sm:$0xff] %vm808, %v8208
      %8241 = vst.msk [vmem:[%s254 + $0xb8] sm:$0xff] %vm808, %v8209
      %8242 = vst.msk [vmem:[%s254 + $0xc0] sm:$0xff] %vm808, %v8210
      %8243 = vst.msk [vmem:[%s254 + $0xc8] sm:$0xff] %vm808, %v8211
      %8244 = vst.msk [vmem:[%s254 + $0xd0] sm:$0xff] %vm808, %v8212
      %8245 = vst.msk [vmem:[%s254 + $0xd8] sm:$0xff] %vm808, %v8213
      %8246 = vst.msk [vmem:[%s254 + $0xe0] sm:$0xff] %vm808, %v8214
      %8247 = vst.msk [vmem:[%s254 + $0xe8] sm:$0xff] %vm808, %v8215
      %8248 = vst.msk [vmem:[%s254 + $0xf0] sm:$0xff] %vm808, %v8216
      %8249 = vst.msk [vmem:[%s254 + $0xf8] sm:$0xff] %vm808, %v8217
      %v8250 = vld [vmem:[%s254] sm:$0xff]
      %v8251 = vld [vmem:[%s254 + $0x8] sm:$0xff]
      %v8252 = vld [vmem:[%s254 + $0x10] sm:$0xff]
      %v8253 = vld [vmem:[%s254 + $0x18] sm:$0xff]
      %v8254 = vld [vmem:[%s254 + $0x20] sm:$0xff]
      %v8255 = vld [vmem:[%s254 + $0x28] sm:$0xff]
      %v8256 = vld [vmem:[%s254 + $0x30] sm:$0xff]
      %v8257 = vld [vmem:[%s254 + $0x38] sm:$0xff]
      %v8258 = vld [vmem:[%s254 + $0x40] sm:$0xff]
      %v8259 = vld [vmem:[%s254 + $0x48] sm:$0xff]
      %v8260 = vld [vmem:[%s254 + $0x50] sm:$0xff]
      %v8261 = vld [vmem:[%s254 + $0x58] sm:$0xff]
      %v8262 = vld [vmem:[%s254 + $0x60] sm:$0xff]
      %v8263 = vld [vmem:[%s254 + $0x68] sm:$0xff]
      %v8264 = vld [vmem:[%s254 + $0x70] sm:$0xff]
      %v8265 = vld [vmem:[%s254 + $0x78] sm:$0xff]
      %v8266 = vld [vmem:[%s254 + $0x80] sm:$0xff]
      %v8267 = vld [vmem:[%s254 + $0x88] sm:$0xff]
      %v8268 = vld [vmem:[%s254 + $0x90] sm:$0xff]
      %v8269 = vld [vmem:[%s254 + $0x98] sm:$0xff]
      %v8270 = vld [vmem:[%s254 + $0xa0] sm:$0xff]
      %v8271 = vld [vmem:[%s254 + $0xa8] sm:$0xff]
      %v8272 = vld [vmem:[%s254 + $0xb0] sm:$0xff]
      %v8273 = vld [vmem:[%s254 + $0xb8] sm:$0xff]
      %v8274 = vld [vmem:[%s254 + $0xc0] sm:$0xff]
      %v8275 = vld [vmem:[%s254 + $0xc8] sm:$0xff]
      %v8276 = vld [vmem:[%s254 + $0xd0] sm:$0xff]
      %v8277 = vld [vmem:[%s254 + $0xd8] sm:$0xff]
      %v8278 = vld [vmem:[%s254 + $0xe0] sm:$0xff]
      %v8279 = vld [vmem:[%s254 + $0xe8] sm:$0xff]
      %v8280 = vld [vmem:[%s254 + $0xf0] sm:$0xff]
      %v8281 = vld [vmem:[%s254 + $0xf8] sm:$0xff]
      %v8282 = vld [vmem:[#allocation3 + $0x21] sm:$0xff]
      %v8283 = vld [vmem:[#allocation3 + $0x29] sm:$0xff]
      %v8284 = vld [vmem:[#allocation3 + $0x31] sm:$0xff]
      %v8285 = vld [vmem:[#allocation3 + $0x39] sm:$0xff]
      %v8286 = vld [vmem:[#allocation3 + $0x41] sm:$0xff]
      %v8287 = vld [vmem:[#allocation3 + $0x49] sm:$0xff]
      %v8288 = vld [vmem:[#allocation3 + $0x51] sm:$0xff]
      %v8289 = vld [vmem:[#allocation3 + $0x59] sm:$0xff]
      %v8290 = vld [vmem:[#allocation3 + $0x61] sm:$0xff]
      %v8291 = vld [vmem:[#allocation3 + $0x69] sm:$0xff]
      %v8292 = vld [vmem:[#allocation3 + $0x71] sm:$0xff]
      %v8293 = vld [vmem:[#allocation3 + $0x79] sm:$0xff]
      %v8294 = vld [vmem:[#allocation3 + $0x81] sm:$0xff]
      %v8295 = vld [vmem:[#allocation3 + $0x89] sm:$0xff]
      %v8296 = vld [vmem:[#allocation3 + $0x91] sm:$0xff]
      %v8297 = vld [vmem:[#allocation3 + $0x99] sm:$0xff]
      %v8298 = vld [vmem:[#allocation3 + $0xa1] sm:$0xff]
      %v8299 = vld [vmem:[#allocation3 + $0xa9] sm:$0xff]
      %v8300 = vld [vmem:[#allocation3 + $0xb1] sm:$0xff]
      %v8301 = vld [vmem:[#allocation3 + $0xb9] sm:$0xff]
      %v8302 = vld [vmem:[#allocation3 + $0xc1] sm:$0xff]
      %v8303 = vld [vmem:[#allocation3 + $0xc9] sm:$0xff]
      %v8304 = vld [vmem:[#allocation3 + $0xd1] sm:$0xff]
      %v8305 = vld [vmem:[#allocation3 + $0xd9] sm:$0xff]
      %v8306 = vld [vmem:[#allocation3 + $0xe1] sm:$0xff]
      %v8307 = vld [vmem:[#allocation3 + $0xe9] sm:$0xff]
      %v8308 = vld [vmem:[#allocation3 + $0xf1] sm:$0xff]
      %v8309 = vld [vmem:[#allocation3 + $0xf9] sm:$0xff]
      %v8310 = vld [vmem:[#allocation3 + $0x101] sm:$0xff]
      %v8311 = vld [vmem:[#allocation3 + $0x109] sm:$0xff]
      %v8312 = vld [vmem:[#allocation3 + $0x111] sm:$0xff]
      %v8313 = vld [vmem:[#allocation3 + $0x119] sm:$0xff]
      %s8314 = scalar_lea.vmem %s4, 504
      %v8315 = vld [vmem:[%s8314] sm:$0xff]
      %v8316 = vld [vmem:[%s8314 + $0x8] sm:$0xff]
      %v8317 = vld [vmem:[%s8314 + $0x10] sm:$0xff]
      %v8318 = vld [vmem:[%s8314 + $0x18] sm:$0xff]
      %v8319 = vld [vmem:[%s8314 + $0x20] sm:$0xff]
      %v8320 = vld [vmem:[%s8314 + $0x28] sm:$0xff]
      %v8321 = vld [vmem:[%s8314 + $0x30] sm:$0xff]
      %v8322 = vld [vmem:[%s8314 + $0x38] sm:$0xff]
      %v8323 = vld [vmem:[%s8314 + $0x40] sm:$0x1]
      %v8325 = vsel %vm4712, %v8282, 0
      %v8328 = vsel %vm4712, %v8283, 0
      %v8331 = vsel %vm4712, %v8284, 0
      %v8334 = vsel %vm4712, %v8285, 0
      %v8337 = vsel %vm4712, %v8286, 0
      %v8340 = vsel %vm4712, %v8287, 0
      %v8343 = vsel %vm4712, %v8288, 0
      %v8346 = vsel %vm4712, %v8289, 0
      %v8349 = vsel %vm4712, %v8290, 0
      %v8352 = vsel %vm4712, %v8291, 0
      %v8355 = vsel %vm4712, %v8292, 0
      %v8358 = vsel %vm4712, %v8293, 0
      %v8361 = vsel %vm4712, %v8294, 0
      %v8364 = vsel %vm4712, %v8295, 0
      %v8367 = vsel %vm4712, %v8296, 0
      %v8370 = vsel %vm4712, %v8297, 0
      %v8373 = vsel %vm4712, %v8298, 0
      %v8376 = vsel %vm4712, %v8299, 0
      %v8379 = vsel %vm4712, %v8300, 0
      %v8382 = vsel %vm4712, %v8301, 0
      %v8385 = vsel %vm4712, %v8302, 0
      %v8388 = vsel %vm4712, %v8303, 0
      %v8391 = vsel %vm4712, %v8304, 0
      %v8394 = vsel %vm4712, %v8305, 0
      %v8397 = vsel %vm4712, %v8306, 0
      %v8400 = vsel %vm4712, %v8307, 0
      %v8403 = vsel %vm4712, %v8308, 0
      %v8406 = vsel %vm4712, %v8309, 0
      %v8409 = vsel %vm4712, %v8310, 0
      %v8412 = vsel %vm4712, %v8311, 0
      %v8415 = vsel %vm4712, %v8312, 0
      %v8418 = vsel %vm4712, %v8313, 0
      %v8421 = vsel %vm5057, %v8323, 0
      %8423 = vmatprep.subr.mxu0 0.0
      %8424 = vmatpush1.msra.mxu0 %v8315
      %8425 = vmatprep.subr.mxu0 0.0
      %8426 = vmatpush1.msra.mxu0 %v8316
      %8427 = vmatprep.subr.mxu0 0.0
      %8428 = vmatpush1.msra.mxu0 %v8317
      %8429 = vmatprep.subr.mxu0 0.0
      %8430 = vmatpush1.msra.mxu0 %v8318
      %8431 = vmatprep.subr.mxu0 0.0
      %8432 = vmatpush1.msra.mxu0 %v8319
      %8433 = vmatprep.subr.mxu0 0.0
      %8434 = vmatpush1.msra.mxu0 %v8320
      %8435 = vmatprep.subr.mxu0 0.0
      %8436 = vmatpush1.msra.mxu0 %v8321
      %8437 = vmatprep.subr.mxu0 0.0
      %8438 = vmatpush1.msra.mxu0 %v8322
      %8439 = vmatprep.subr.mxu0 0.0
      %8440 = vmatpush1.msra.mxu0 %v8421
      %8441 = vmatprep.subr.mxu0 0.0
      %8442 = vmatpush1.msra.mxu0 0.0
      %8443 = vmatprep.subr.mxu0 0.0
      %8444 = vmatpush1.msra.mxu0 0.0
      %8445 = vmatprep.subr.mxu0 0.0
      %8446 = vmatpush1.msra.mxu0 0.0
      %8447 = vmatprep.subr.mxu0 0.0
      %8448 = vmatpush1.msra.mxu0 0.0
      %8449 = vmatprep.subr.mxu0 0.0
      %8450 = vmatpush1.msra.mxu0 0.0
      %8451 = vmatprep.subr.mxu0 0.0
      %8452 = vmatpush1.msra.mxu0 0.0
      %8453 = vmatprep.subr.mxu0 0.0
      %8454 = vmatpush1.msra.mxu0 0.0
      %8455 = vmatprep.subr.mxu0 0.0
      %8456 = vmatpush1.msra.mxu0 0.0
      %8457 = vmatprep.subr.mxu0 0.0
      %8458 = vmatpush1.msra.mxu0 0.0
      %8459 = vmatprep.subr.mxu0 0.0
      %8460 = vmatpush1.msra.mxu0 0.0
      %8461 = vmatprep.subr.mxu0 0.0
      %8462 = vmatpush1.msra.mxu0 0.0
      %8463 = vmatprep.subr.mxu0 0.0
      %8464 = vmatpush1.msra.mxu0 0.0
      %8465 = vmatprep.subr.mxu0 0.0
      %8466 = vmatpush1.msra.mxu0 0.0
      %8467 = vmatprep.subr.mxu0 0.0
      %8468 = vmatpush1.msra.mxu0 0.0
      %8469 = vmatprep.subr.mxu0 0.0
      %8470 = vmatpush1.msra.mxu0 0.0
      %8471 = vmatprep.subr.mxu0 0.0
      %8472 = vmatpush1.msra.mxu0 0.0
      %8473 = vmatprep.subr.mxu0 0.0
      %8474 = vmatpush1.msra.mxu0 0.0
      %8475 = vmatprep.subr.mxu0 0.0
      %8476 = vmatpush1.msra.mxu0 0.0
      %8477 = vmatprep.subr.mxu0 0.0
      %8478 = vmatpush1.msra.mxu0 0.0
      %8479 = vmatprep.subr.mxu0 0.0
      %8480 = vmatpush1.msra.mxu0 0.0
      %8481 = vmatprep.subr.mxu0 0.0
      %8482 = vmatpush1.msra.mxu0 0.0
      %8483 = vmatprep.subr.mxu0 0.0
      %8484 = vmatpush1.msra.mxu0 0.0
      %8485 = vmatprep.subr.mxu0 0.0
      %8486 = vmatpush1.msra.mxu0 0.0
      %8487 = vmatprep.mubr.f32.mxu0 0.0
      %8488 = vmatmul.mubr.f32.gmra.mrb[0].mxu0 %v8325
      %v8489 = vpop.f32.mrb[0].mxu0
      %v8490 = vadd.f32 0.0, %v8489
      %v8491 = vpop.f32.mrb[0].mxu0
      %8492 = vmatprep.mubr.f32.mxu0 0.0
      %8493 = vmatmul.mubr.f32.gmra.mrb[0].mxu0 %v8328
      %v8494 = vpop.f32.mrb[0].mxu0
      %v8495 = vadd.f32 0.0, %v8494
      %v8496 = vpop.f32.mrb[0].mxu0
      %8497 = vmatprep.mubr.f32.mxu0 0.0
      %8498 = vmatmul.mubr.f32.gmra.mrb[0].mxu0 %v8331
      %v8499 = vpop.f32.mrb[0].mxu0
      %v8500 = vadd.f32 0.0, %v8499
      %v8501 = vpop.f32.mrb[0].mxu0
      %8502 = vmatprep.mubr.f32.mxu0 0.0
      %8503 = vmatmul.mubr.f32.gmra.mrb[0].mxu0 %v8334
      %v8504 = vpop.f32.mrb[0].mxu0
      %v8505 = vadd.f32 0.0, %v8504
      %v8506 = vpop.f32.mrb[0].mxu0
      %8507 = vmatprep.mubr.f32.mxu0 0.0
      %8508 = vmatmul.mubr.f32.gmra.mrb[0].mxu0 %v8337
      %v8509 = vpop.f32.mrb[0].mxu0
      %v8510 = vadd.f32 0.0, %v8509
      %v8511 = vpop.f32.mrb[0].mxu0
      %8512 = vmatprep.mubr.f32.mxu0 0.0
      %8513 = vmatmul.mubr.f32.gmra.mrb[0].mxu0 %v8340
      %v8514 = vpop.f32.mrb[0].mxu0
      %v8515 = vadd.f32 0.0, %v8514
      %v8516 = vpop.f32.mrb[0].mxu0
      %8517 = vmatprep.mubr.f32.mxu0 0.0
      %8518 = vmatmul.mubr.f32.gmra.mrb[0].mxu0 %v8343
      %v8519 = vpop.f32.mrb[0].mxu0
      %v8520 = vadd.f32 0.0, %v8519
      %v8521 = vpop.f32.mrb[0].mxu0
      %8522 = vmatprep.mubr.f32.mxu0 0.0
      %8523 = vmatmul.mubr.f32.gmra.mrb[0].mxu0 %v8346
      %v8524 = vpop.f32.mrb[0].mxu0
      %v8525 = vadd.f32 0.0, %v8524
      %v8526 = vpop.f32.mrb[0].mxu0
      %8527 = vmatprep.mubr.f32.mxu0 0.0
      %8528 = vmatmul.mubr.f32.gmra.mrb[0].mxu0 %v8349
      %v8529 = vpop.f32.mrb[0].mxu0
      %v8530 = vadd.f32 0.0, %v8529
      %v8531 = vpop.f32.mrb[0].mxu0
      %8532 = vmatprep.mubr.f32.mxu0 0.0
      %8533 = vmatmul.mubr.f32.gmra.mrb[0].mxu0 %v8352
      %v8534 = vpop.f32.mrb[0].mxu0
      %v8535 = vadd.f32 0.0, %v8534
      %v8536 = vpop.f32.mrb[0].mxu0
      %8537 = vmatprep.mubr.f32.mxu0 0.0
      %8538 = vmatmul.mubr.f32.gmra.mrb[0].mxu0 %v8355
      %v8539 = vpop.f32.mrb[0].mxu0
      %v8540 = vadd.f32 0.0, %v8539
      %v8541 = vpop.f32.mrb[0].mxu0
      %8542 = vmatprep.mubr.f32.mxu0 0.0
      %8543 = vmatmul.mubr.f32.gmra.mrb[0].mxu0 %v8358
      %v8544 = vpop.f32.mrb[0].mxu0
      %v8545 = vadd.f32 0.0, %v8544
      %v8546 = vpop.f32.mrb[0].mxu0
      %8547 = vmatprep.mubr.f32.mxu0 0.0
      %8548 = vmatmul.mubr.f32.gmra.mrb[0].mxu0 %v8361
      %v8549 = vpop.f32.mrb[0].mxu0
      %v8550 = vadd.f32 0.0, %v8549
      %v8551 = vpop.f32.mrb[0].mxu0
      %8552 = vmatprep.mubr.f32.mxu0 0.0
      %8553 = vmatmul.mubr.f32.gmra.mrb[0].mxu0 %v8364
      %v8554 = vpop.f32.mrb[0].mxu0
      %v8555 = vadd.f32 0.0, %v8554
      %v8556 = vpop.f32.mrb[0].mxu0
      %8557 = vmatprep.mubr.f32.mxu0 0.0
      %8558 = vmatmul.mubr.f32.gmra.mrb[0].mxu0 %v8367
      %v8559 = vpop.f32.mrb[0].mxu0
      %v8560 = vadd.f32 0.0, %v8559
      %v8561 = vpop.f32.mrb[0].mxu0
      %8562 = vmatprep.mubr.f32.mxu0 0.0
      %8563 = vmatmul.mubr.f32.gmra.mrb[0].mxu0 %v8370
      %v8564 = vpop.f32.mrb[0].mxu0
      %v8565 = vadd.f32 0.0, %v8564
      %v8566 = vpop.f32.mrb[0].mxu0
      %8567 = vmatprep.mubr.f32.mxu0 0.0
      %8568 = vmatmul.mubr.f32.gmra.mrb[0].mxu0 %v8373
      %v8569 = vpop.f32.mrb[0].mxu0
      %v8570 = vadd.f32 0.0, %v8569
      %v8571 = vpop.f32.mrb[0].mxu0
      %8572 = vmatprep.mubr.f32.mxu0 0.0
      %8573 = vmatmul.mubr.f32.gmra.mrb[0].mxu0 %v8376
      %v8574 = vpop.f32.mrb[0].mxu0
      %v8575 = vadd.f32 0.0, %v8574
      %v8576 = vpop.f32.mrb[0].mxu0
      %8577 = vmatprep.mubr.f32.mxu0 0.0
      %8578 = vmatmul.mubr.f32.gmra.mrb[0].mxu0 %v8379
      %v8579 = vpop.f32.mrb[0].mxu0
      %v8580 = vadd.f32 0.0, %v8579
      %v8581 = vpop.f32.mrb[0].mxu0
      %8582 = vmatprep.mubr.f32.mxu0 0.0
      %8583 = vmatmul.mubr.f32.gmra.mrb[0].mxu0 %v8382
      %v8584 = vpop.f32.mrb[0].mxu0
      %v8585 = vadd.f32 0.0, %v8584
      %v8586 = vpop.f32.mrb[0].mxu0
      %8587 = vmatprep.mubr.f32.mxu0 0.0
      %8588 = vmatmul.mubr.f32.gmra.mrb[0].mxu0 %v8385
      %v8589 = vpop.f32.mrb[0].mxu0
      %v8590 = vadd.f32 0.0, %v8589
      %v8591 = vpop.f32.mrb[0].mxu0
      %8592 = vmatprep.mubr.f32.mxu0 0.0
      %8593 = vmatmul.mubr.f32.gmra.mrb[0].mxu0 %v8388
      %v8594 = vpop.f32.mrb[0].mxu0
      %v8595 = vadd.f32 0.0, %v8594
      %v8596 = vpop.f32.mrb[0].mxu0
      %8597 = vmatprep.mubr.f32.mxu0 0.0
      %8598 = vmatmul.mubr.f32.gmra.mrb[0].mxu0 %v8391
      %v8599 = vpop.f32.mrb[0].mxu0
      %v8600 = vadd.f32 0.0, %v8599
      %v8601 = vpop.f32.mrb[0].mxu0
      %8602 = vmatprep.mubr.f32.mxu0 0.0
      %8603 = vmatmul.mubr.f32.gmra.mrb[0].mxu0 %v8394
      %v8604 = vpop.f32.mrb[0].mxu0
      %v8605 = vadd.f32 0.0, %v8604
      %v8606 = vpop.f32.mrb[0].mxu0
      %8607 = vmatprep.mubr.f32.mxu0 0.0
      %8608 = vmatmul.mubr.f32.gmra.mrb[0].mxu0 %v8397
      %v8609 = vpop.f32.mrb[0].mxu0
      %v8610 = vadd.f32 0.0, %v8609
      %v8611 = vpop.f32.mrb[0].mxu0
      %8612 = vmatprep.mubr.f32.mxu0 0.0
      %8613 = vmatmul.mubr.f32.gmra.mrb[0].mxu0 %v8400
      %v8614 = vpop.f32.mrb[0].mxu0
      %v8615 = vadd.f32 0.0, %v8614
      %v8616 = vpop.f32.mrb[0].mxu0
      %8617 = vmatprep.mubr.f32.mxu0 0.0
      %8618 = vmatmul.mubr.f32.gmra.mrb[0].mxu0 %v8403
      %v8619 = vpop.f32.mrb[0].mxu0
      %v8620 = vadd.f32 0.0, %v8619
      %v8621 = vpop.f32.mrb[0].mxu0
      %8622 = vmatprep.mubr.f32.mxu0 0.0
      %8623 = vmatmul.mubr.f32.gmra.mrb[0].mxu0 %v8406
      %v8624 = vpop.f32.mrb[0].mxu0
      %v8625 = vadd.f32 0.0, %v8624
      %v8626 = vpop.f32.mrb[0].mxu0
      %8627 = vmatprep.mubr.f32.mxu0 0.0
      %8628 = vmatmul.mubr.f32.gmra.mrb[0].mxu0 %v8409
      %v8629 = vpop.f32.mrb[0].mxu0
      %v8630 = vadd.f32 0.0, %v8629
      %v8631 = vpop.f32.mrb[0].mxu0
      %8632 = vmatprep.mubr.f32.mxu0 0.0
      %8633 = vmatmul.mubr.f32.gmra.mrb[0].mxu0 %v8412
      %v8634 = vpop.f32.mrb[0].mxu0
      %v8635 = vadd.f32 0.0, %v8634
      %v8636 = vpop.f32.mrb[0].mxu0
      %8637 = vmatprep.mubr.f32.mxu0 0.0
      %8638 = vmatmul.mubr.f32.gmra.mrb[0].mxu0 %v8415
      %v8639 = vpop.f32.mrb[0].mxu0
      %v8640 = vadd.f32 0.0, %v8639
      %v8641 = vpop.f32.mrb[0].mxu0
      %8642 = vmatprep.mubr.f32.mxu0 0.0
      %8643 = vmatmul.mubr.f32.gmra.mrb[0].mxu0 %v8418
      %v8644 = vpop.f32.mrb[0].mxu0
      %v8645 = vadd.f32 0.0, %v8644
      %v8646 = vpop.f32.mrb[0].mxu0
      %8647 = vdwg.mxu0
      %v8648 = vadd.f32 %v8250, %v8490
      %v8649 = vadd.f32 %v8251, %v8495
      %v8650 = vadd.f32 %v8252, %v8500
      %v8651 = vadd.f32 %v8253, %v8505
      %v8652 = vadd.f32 %v8254, %v8510
      %v8653 = vadd.f32 %v8255, %v8515
      %v8654 = vadd.f32 %v8256, %v8520
      %v8655 = vadd.f32 %v8257, %v8525
      %v8656 = vadd.f32 %v8258, %v8530
      %v8657 = vadd.f32 %v8259, %v8535
      %v8658 = vadd.f32 %v8260, %v8540
      %v8659 = vadd.f32 %v8261, %v8545
      %v8660 = vadd.f32 %v8262, %v8550
      %v8661 = vadd.f32 %v8263, %v8555
      %v8662 = vadd.f32 %v8264, %v8560
      %v8663 = vadd.f32 %v8265, %v8565
      %v8664 = vadd.f32 %v8266, %v8570
      %v8665 = vadd.f32 %v8267, %v8575
      %v8666 = vadd.f32 %v8268, %v8580
      %v8667 = vadd.f32 %v8269, %v8585
      %v8668 = vadd.f32 %v8270, %v8590
      %v8669 = vadd.f32 %v8271, %v8595
      %v8670 = vadd.f32 %v8272, %v8600
      %v8671 = vadd.f32 %v8273, %v8605
      %v8672 = vadd.f32 %v8274, %v8610
      %v8673 = vadd.f32 %v8275, %v8615
      %v8674 = vadd.f32 %v8276, %v8620
      %v8675 = vadd.f32 %v8277, %v8625
      %v8676 = vadd.f32 %v8278, %v8630
      %v8677 = vadd.f32 %v8279, %v8635
      %v8678 = vadd.f32 %v8280, %v8640
      %v8679 = vadd.f32 %v8281, %v8645
      %8680 = vst.msk [vmem:[%s254] sm:$0xff] %vm808, %v8648
      %8681 = vst.msk [vmem:[%s254 + $0x8] sm:$0xff] %vm808, %v8649
      %8682 = vst.msk [vmem:[%s254 + $0x10] sm:$0xff] %vm808, %v8650
      %8683 = vst.msk [vmem:[%s254 + $0x18] sm:$0xff] %vm808, %v8651
      %8684 = vst.msk [vmem:[%s254 + $0x20] sm:$0xff] %vm808, %v8652
      %8685 = vst.msk [vmem:[%s254 + $0x28] sm:$0xff] %vm808, %v8653
      %8686 = vst.msk [vmem:[%s254 + $0x30] sm:$0xff] %vm808, %v8654
      %8687 = vst.msk [vmem:[%s254 + $0x38] sm:$0xff] %vm808, %v8655
      %8688 = vst.msk [vmem:[%s254 + $0x40] sm:$0xff] %vm808, %v8656
      %8689 = vst.msk [vmem:[%s254 + $0x48] sm:$0xff] %vm808, %v8657
      %8690 = vst.msk [vmem:[%s254 + $0x50] sm:$0xff] %vm808, %v8658
      %8691 = vst.msk [vmem:[%s254 + $0x58] sm:$0xff] %vm808, %v8659
      %8692 = vst.msk [vmem:[%s254 + $0x60] sm:$0xff] %vm808, %v8660
      %8693 = vst.msk [vmem:[%s254 + $0x68] sm:$0xff] %vm808, %v8661
      %8694 = vst.msk [vmem:[%s254 + $0x70] sm:$0xff] %vm808, %v8662
      %8695 = vst.msk [vmem:[%s254 + $0x78] sm:$0xff] %vm808, %v8663
      %8696 = vst.msk [vmem:[%s254 + $0x80] sm:$0xff] %vm808, %v8664
      %8697 = vst.msk [vmem:[%s254 + $0x88] sm:$0xff] %vm808, %v8665
      %8698 = vst.msk [vmem:[%s254 + $0x90] sm:$0xff] %vm808, %v8666
      %8699 = vst.msk [vmem:[%s254 + $0x98] sm:$0xff] %vm808, %v8667
      %8700 = vst.msk [vmem:[%s254 + $0xa0] sm:$0xff] %vm808, %v8668
      %8701 = vst.msk [vmem:[%s254 + $0xa8] sm:$0xff] %vm808, %v8669
      %8702 = vst.msk [vmem:[%s254 + $0xb0] sm:$0xff] %vm808, %v8670
      %8703 = vst.msk [vmem:[%s254 + $0xb8] sm:$0xff] %vm808, %v8671
      %8704 = vst.msk [vmem:[%s254 + $0xc0] sm:$0xff] %vm808, %v8672
      %8705 = vst.msk [vmem:[%s254 + $0xc8] sm:$0xff] %vm808, %v8673
      %8706 = vst.msk [vmem:[%s254 + $0xd0] sm:$0xff] %vm808, %v8674
      %8707 = vst.msk [vmem:[%s254 + $0xd8] sm:$0xff] %vm808, %v8675
      %8708 = vst.msk [vmem:[%s254 + $0xe0] sm:$0xff] %vm808, %v8676
      %8709 = vst.msk [vmem:[%s254 + $0xe8] sm:$0xff] %vm808, %v8677
      %8710 = vst.msk [vmem:[%s254 + $0xf0] sm:$0xff] %vm808, %v8678
      %8711 = vst.msk [vmem:[%s254 + $0xf8] sm:$0xff] %vm808, %v8679
      %v8712 = vld [vmem:[%s254] sm:$0xff]
      %v8713 = vld [vmem:[%s254 + $0x8] sm:$0xff]
      %v8714 = vld [vmem:[%s254 + $0x10] sm:$0xff]
      %v8715 = vld [vmem:[%s254 + $0x18] sm:$0xff]
      %v8716 = vld [vmem:[%s254 + $0x20] sm:$0xff]
      %v8717 = vld [vmem:[%s254 + $0x28] sm:$0xff]
      %v8718 = vld [vmem:[%s254 + $0x30] sm:$0xff]
      %v8719 = vld [vmem:[%s254 + $0x38] sm:$0xff]
      %v8720 = vld [vmem:[%s254 + $0x40] sm:$0xff]
      %v8721 = vld [vmem:[%s254 + $0x48] sm:$0xff]
      %v8722 = vld [vmem:[%s254 + $0x50] sm:$0xff]
      %v8723 = vld [vmem:[%s254 + $0x58] sm:$0xff]
      %v8724 = vld [vmem:[%s254 + $0x60] sm:$0xff]
      %v8725 = vld [vmem:[%s254 + $0x68] sm:$0xff]
      %v8726 = vld [vmem:[%s254 + $0x70] sm:$0xff]
      %v8727 = vld [vmem:[%s254 + $0x78] sm:$0xff]
      %v8728 = vld [vmem:[%s254 + $0x80] sm:$0xff]
      %v8729 = vld [vmem:[%s254 + $0x88] sm:$0xff]
      %v8730 = vld [vmem:[%s254 + $0x90] sm:$0xff]
      %v8731 = vld [vmem:[%s254 + $0x98] sm:$0xff]
      %v8732 = vld [vmem:[%s254 + $0xa0] sm:$0xff]
      %v8733 = vld [vmem:[%s254 + $0xa8] sm:$0xff]
      %v8734 = vld [vmem:[%s254 + $0xb0] sm:$0xff]
      %v8735 = vld [vmem:[%s254 + $0xb8] sm:$0xff]
      %v8736 = vld [vmem:[%s254 + $0xc0] sm:$0xff]
      %v8737 = vld [vmem:[%s254 + $0xc8] sm:$0xff]
      %v8738 = vld [vmem:[%s254 + $0xd0] sm:$0xff]
      %v8739 = vld [vmem:[%s254 + $0xd8] sm:$0xff]
      %v8740 = vld [vmem:[%s254 + $0xe0] sm:$0xff]
      %v8741 = vld [vmem:[%s254 + $0xe8] sm:$0xff]
      %v8742 = vld [vmem:[%s254 + $0xf0] sm:$0xff]
      %v8743 = vld [vmem:[%s254 + $0xf8] sm:$0xff]
      %v8744 = vld [vmem:[#allocation3 + $0x22] sm:$0xff]
      %v8745 = vld [vmem:[#allocation3 + $0x2a] sm:$0xff]
      %v8746 = vld [vmem:[#allocation3 + $0x32] sm:$0xff]
      %v8747 = vld [vmem:[#allocation3 + $0x3a] sm:$0xff]
      %v8748 = vld [vmem:[#allocation3 + $0x42] sm:$0xff]
      %v8749 = vld [vmem:[#allocation3 + $0x4a] sm:$0xff]
      %v8750 = vld [vmem:[#allocation3 + $0x52] sm:$0xff]
      %v8751 = vld [vmem:[#allocation3 + $0x5a] sm:$0xff]
      %v8752 = vld [vmem:[#allocation3 + $0x62] sm:$0xff]
      %v8753 = vld [vmem:[#allocation3 + $0x6a] sm:$0xff]
      %v8754 = vld [vmem:[#allocation3 + $0x72] sm:$0xff]
      %v8755 = vld [vmem:[#allocation3 + $0x7a] sm:$0xff]
      %v8756 = vld [vmem:[#allocation3 + $0x82] sm:$0xff]
      %v8757 = vld [vmem:[#allocation3 + $0x8a] sm:$0xff]
      %v8758 = vld [vmem:[#allocation3 + $0x92] sm:$0xff]
      %v8759 = vld [vmem:[#allocation3 + $0x9a] sm:$0xff]
      %v8760 = vld [vmem:[#allocation3 + $0xa2] sm:$0xff]
      %v8761 = vld [vmem:[#allocation3 + $0xaa] sm:$0xff]
      %v8762 = vld [vmem:[#allocation3 + $0xb2] sm:$0xff]
      %v8763 = vld [vmem:[#allocation3 + $0xba] sm:$0xff]
      %v8764 = vld [vmem:[#allocation3 + $0xc2] sm:$0xff]
      %v8765 = vld [vmem:[#allocation3 + $0xca] sm:$0xff]
      %v8766 = vld [vmem:[#allocation3 + $0xd2] sm:$0xff]
      %v8767 = vld [vmem:[#allocation3 + $0xda] sm:$0xff]
      %v8768 = vld [vmem:[#allocation3 + $0xe2] sm:$0xff]
      %v8769 = vld [vmem:[#allocation3 + $0xea] sm:$0xff]
      %v8770 = vld [vmem:[#allocation3 + $0xf2] sm:$0xff]
      %v8771 = vld [vmem:[#allocation3 + $0xfa] sm:$0xff]
      %v8772 = vld [vmem:[#allocation3 + $0x102] sm:$0xff]
      %v8773 = vld [vmem:[#allocation3 + $0x10a] sm:$0xff]
      %v8774 = vld [vmem:[#allocation3 + $0x112] sm:$0xff]
      %v8775 = vld [vmem:[#allocation3 + $0x11a] sm:$0xff]
      %v8776 = vsel %vm1822, %v8744, 0.0
      %v8777 = vsel %vm1823, %v8745, 0.0
      %v8778 = vsel %vm1824, %v8746, 0.0
      %v8779 = vsel %vm1825, %v8747, 0.0
      %v8780 = vsel %vm1826, %v8748, 0.0
      %v8781 = vsel %vm1827, %v8749, 0.0
      %v8782 = vsel %vm1828, %v8750, 0.0
      %v8783 = vsel %vm1829, %v8751, 0.0
      %v8784 = vsel %vm1830, %v8752, 0.0
      %v8785 = vsel %vm1831, %v8753, 0.0
      %v8786 = vsel %vm1832, %v8754, 0.0
      %v8787 = vsel %vm1833, %v8755, 0.0
      %v8788 = vsel %vm1834, %v8756, 0.0
      %v8789 = vsel %vm1835, %v8757, 0.0
      %v8790 = vsel %vm1836, %v8758, 0.0
      %v8791 = vsel %vm1837, %v8759, 0.0
      %v8792 = vsel %vm1838, %v8760, 0.0
      %v8793 = vsel %vm1839, %v8761, 0.0
      %v8794 = vsel %vm1840, %v8762, 0.0
      %v8795 = vsel %vm1841, %v8763, 0.0
      %v8796 = vsel %vm1842, %v8764, 0.0
      %v8797 = vsel %vm1843, %v8765, 0.0
      %v8798 = vsel %vm1844, %v8766, 0.0
      %v8799 = vsel %vm1845, %v8767, 0.0
      %v8800 = vsel %vm1846, %v8768, 0.0
      %v8801 = vsel %vm1847, %v8769, 0.0
      %v8802 = vsel %vm1848, %v8770, 0.0
      %v8803 = vsel %vm1849, %v8771, 0.0
      %v8804 = vsel %vm1850, %v8772, 0.0
      %v8805 = vsel %vm1851, %v8773, 0.0
      %v8806 = vsel %vm1852, %v8774, 0.0
      %v8807 = vsel %vm1853, %v8775, 0.0
      %s8808 = scalar_lea.vmem %s4, 576
      %v8809 = vld [vmem:[%s8808] sm:$0xff]
      %v8810 = vld [vmem:[%s8808 + $0x8] sm:$0xff]
      %v8811 = vld [vmem:[%s8808 + $0x10] sm:$0xff]
      %v8812 = vld [vmem:[%s8808 + $0x18] sm:$0xff]
      %v8813 = vld [vmem:[%s8808 + $0x20] sm:$0xff]
      %v8814 = vld [vmem:[%s8808 + $0x28] sm:$0xff]
      %v8815 = vld [vmem:[%s8808 + $0x30] sm:$0xff]
      %v8816 = vld [vmem:[%s8808 + $0x38] sm:$0xff]
      %v8817 = vld [vmem:[%s8808 + $0x40] sm:$0x1]
      %v8819 = vsel %vm4712, %v8776, 0
      %v8822 = vsel %vm4712, %v8777, 0
      %v8825 = vsel %vm4712, %v8778, 0
      %v8828 = vsel %vm4712, %v8779, 0
      %v8831 = vsel %vm4712, %v8780, 0
      %v8834 = vsel %vm4712, %v8781, 0
      %v8837 = vsel %vm4712, %v8782, 0
      %v8840 = vsel %vm4712, %v8783, 0
      %v8843 = vsel %vm4712, %v8784, 0
      %v8846 = vsel %vm4712, %v8785, 0
      %v8849 = vsel %vm4712, %v8786, 0
      %v8852 = vsel %vm4712, %v8787, 0
      %v8855 = vsel %vm4712, %v8788, 0
      %v8858 = vsel %vm4712, %v8789, 0
      %v8861 = vsel %vm4712, %v8790, 0
      %v8864 = vsel %vm4712, %v8791, 0
      %v8867 = vsel %vm4712, %v8792, 0
      %v8870 = vsel %vm4712, %v8793, 0
      %v8873 = vsel %vm4712, %v8794, 0
      %v8876 = vsel %vm4712, %v8795, 0
      %v8879 = vsel %vm4712, %v8796, 0
      %v8882 = vsel %vm4712, %v8797, 0
      %v8885 = vsel %vm4712, %v8798, 0
      %v8888 = vsel %vm4712, %v8799, 0
      %v8891 = vsel %vm4712, %v8800, 0
      %v8894 = vsel %vm4712, %v8801, 0
      %v8897 = vsel %vm4712, %v8802, 0
      %v8900 = vsel %vm4712, %v8803, 0
      %v8903 = vsel %vm4712, %v8804, 0
      %v8906 = vsel %vm4712, %v8805, 0
      %v8909 = vsel %vm4712, %v8806, 0
      %v8912 = vsel %vm4712, %v8807, 0
      %v8915 = vsel %vm5057, %v8817, 0
      %8917 = vmatprep.subr.mxu0 0.0
      %8918 = vmatpush1.msra.mxu0 %v8809
      %8919 = vmatprep.subr.mxu0 0.0
      %8920 = vmatpush1.msra.mxu0 %v8810
      %8921 = vmatprep.subr.mxu0 0.0
      %8922 = vmatpush1.msra.mxu0 %v8811
      %8923 = vmatprep.subr.mxu0 0.0
      %8924 = vmatpush1.msra.mxu0 %v8812
      %8925 = vmatprep.subr.mxu0 0.0
      %8926 = vmatpush1.msra.mxu0 %v8813
      %8927 = vmatprep.subr.mxu0 0.0
      %8928 = vmatpush1.msra.mxu0 %v8814
      %8929 = vmatprep.subr.mxu0 0.0
      %8930 = vmatpush1.msra.mxu0 %v8815
      %8931 = vmatprep.subr.mxu0 0.0
      %8932 = vmatpush1.msra.mxu0 %v8816
      %8933 = vmatprep.subr.mxu0 0.0
      %8934 = vmatpush1.msra.mxu0 %v8915
      %8935 = vmatprep.subr.mxu0 0.0
      %8936 = vmatpush1.msra.mxu0 0.0
      %8937 = vmatprep.subr.mxu0 0.0
      %8938 = vmatpush1.msra.mxu0 0.0
      %8939 = vmatprep.subr.mxu0 0.0
      %8940 = vmatpush1.msra.mxu0 0.0
      %8941 = vmatprep.subr.mxu0 0.0
      %8942 = vmatpush1.msra.mxu0 0.0
      %8943 = vmatprep.subr.mxu0 0.0
      %8944 = vmatpush1.msra.mxu0 0.0
      %8945 = vmatprep.subr.mxu0 0.0
      %8946 = vmatpush1.msra.mxu0 0.0
      %8947 = vmatprep.subr.mxu0 0.0
      %8948 = vmatpush1.msra.mxu0 0.0
      %8949 = vmatprep.subr.mxu0 0.0
      %8950 = vmatpush1.msra.mxu0 0.0
      %8951 = vmatprep.subr.mxu0 0.0
      %8952 = vmatpush1.msra.mxu0 0.0
      %8953 = vmatprep.subr.mxu0 0.0
      %8954 = vmatpush1.msra.mxu0 0.0
      %8955 = vmatprep.subr.mxu0 0.0
      %8956 = vmatpush1.msra.mxu0 0.0
      %8957 = vmatprep.subr.mxu0 0.0
      %8958 = vmatpush1.msra.mxu0 0.0
      %8959 = vmatprep.subr.mxu0 0.0
      %8960 = vmatpush1.msra.mxu0 0.0
      %8961 = vmatprep.subr.mxu0 0.0
      %8962 = vmatpush1.msra.mxu0 0.0
      %8963 = vmatprep.subr.mxu0 0.0
      %8964 = vmatpush1.msra.mxu0 0.0
      %8965 = vmatprep.subr.mxu0 0.0
      %8966 = vmatpush1.msra.mxu0 0.0
      %8967 = vmatprep.subr.mxu0 0.0
      %8968 = vmatpush1.msra.mxu0 0.0
      %8969 = vmatprep.subr.mxu0 0.0
      %8970 = vmatpush1.msra.mxu0 0.0
      %8971 = vmatprep.subr.mxu0 0.0
      %8972 = vmatpush1.msra.mxu0 0.0
      %8973 = vmatprep.subr.mxu0 0.0
      %8974 = vmatpush1.msra.mxu0 0.0
      %8975 = vmatprep.subr.mxu0 0.0
      %8976 = vmatpush1.msra.mxu0 0.0
      %8977 = vmatprep.subr.mxu0 0.0
      %8978 = vmatpush1.msra.mxu0 0.0
      %8979 = vmatprep.subr.mxu0 0.0
      %8980 = vmatpush1.msra.mxu0 0.0
      %8981 = vmatprep.mubr.f32.mxu0 0.0
      %8982 = vmatmul.mubr.f32.gmra.mrb[0].mxu0 %v8819
      %v8983 = vpop.f32.mrb[0].mxu0
      %v8984 = vadd.f32 0.0, %v8983
      %v8985 = vpop.f32.mrb[0].mxu0
      %8986 = vmatprep.mubr.f32.mxu0 0.0
      %8987 = vmatmul.mubr.f32.gmra.mrb[0].mxu0 %v8822
      %v8988 = vpop.f32.mrb[0].mxu0
      %v8989 = vadd.f32 0.0, %v8988
      %v8990 = vpop.f32.mrb[0].mxu0
      %8991 = vmatprep.mubr.f32.mxu0 0.0
      %8992 = vmatmul.mubr.f32.gmra.mrb[0].mxu0 %v8825
      %v8993 = vpop.f32.mrb[0].mxu0
      %v8994 = vadd.f32 0.0, %v8993
      %v8995 = vpop.f32.mrb[0].mxu0
      %8996 = vmatprep.mubr.f32.mxu0 0.0
      %8997 = vmatmul.mubr.f32.gmra.mrb[0].mxu0 %v8828
      %v8998 = vpop.f32.mrb[0].mxu0
      %v8999 = vadd.f32 0.0, %v8998
      %v9000 = vpop.f32.mrb[0].mxu0
      %9001 = vmatprep.mubr.f32.mxu0 0.0
      %9002 = vmatmul.mubr.f32.gmra.mrb[0].mxu0 %v8831
      %v9003 = vpop.f32.mrb[0].mxu0
      %v9004 = vadd.f32 0.0, %v9003
      %v9005 = vpop.f32.mrb[0].mxu0
      %9006 = vmatprep.mubr.f32.mxu0 0.0
      %9007 = vmatmul.mubr.f32.gmra.mrb[0].mxu0 %v8834
      %v9008 = vpop.f32.mrb[0].mxu0
      %v9009 = vadd.f32 0.0, %v9008
      %v9010 = vpop.f32.mrb[0].mxu0
      %9011 = vmatprep.mubr.f32.mxu0 0.0
      %9012 = vmatmul.mubr.f32.gmra.mrb[0].mxu0 %v8837
      %v9013 = vpop.f32.mrb[0].mxu0
      %v9014 = vadd.f32 0.0, %v9013
      %v9015 = vpop.f32.mrb[0].mxu0
      %9016 = vmatprep.mubr.f32.mxu0 0.0
      %9017 = vmatmul.mubr.f32.gmra.mrb[0].mxu0 %v8840
      %v9018 = vpop.f32.mrb[0].mxu0
      %v9019 = vadd.f32 0.0, %v9018
      %v9020 = vpop.f32.mrb[0].mxu0
      %9021 = vmatprep.mubr.f32.mxu0 0.0
      %9022 = vmatmul.mubr.f32.gmra.mrb[0].mxu0 %v8843
      %v9023 = vpop.f32.mrb[0].mxu0
      %v9024 = vadd.f32 0.0, %v9023
      %v9025 = vpop.f32.mrb[0].mxu0
      %9026 = vmatprep.mubr.f32.mxu0 0.0
      %9027 = vmatmul.mubr.f32.gmra.mrb[0].mxu0 %v8846
      %v9028 = vpop.f32.mrb[0].mxu0
      %v9029 = vadd.f32 0.0, %v9028
      %v9030 = vpop.f32.mrb[0].mxu0
      %9031 = vmatprep.mubr.f32.mxu0 0.0
      %9032 = vmatmul.mubr.f32.gmra.mrb[0].mxu0 %v8849
      %v9033 = vpop.f32.mrb[0].mxu0
      %v9034 = vadd.f32 0.0, %v9033
      %v9035 = vpop.f32.mrb[0].mxu0
      %9036 = vmatprep.mubr.f32.mxu0 0.0
      %9037 = vmatmul.mubr.f32.gmra.mrb[0].mxu0 %v8852
      %v9038 = vpop.f32.mrb[0].mxu0
      %v9039 = vadd.f32 0.0, %v9038
      %v9040 = vpop.f32.mrb[0].mxu0
      %9041 = vmatprep.mubr.f32.mxu0 0.0
      %9042 = vmatmul.mubr.f32.gmra.mrb[0].mxu0 %v8855
      %v9043 = vpop.f32.mrb[0].mxu0
      %v9044 = vadd.f32 0.0, %v9043
      %v9045 = vpop.f32.mrb[0].mxu0
      %9046 = vmatprep.mubr.f32.mxu0 0.0
      %9047 = vmatmul.mubr.f32.gmra.mrb[0].mxu0 %v8858
      %v9048 = vpop.f32.mrb[0].mxu0
      %v9049 = vadd.f32 0.0, %v9048
      %v9050 = vpop.f32.mrb[0].mxu0
      %9051 = vmatprep.mubr.f32.mxu0 0.0
      %9052 = vmatmul.mubr.f32.gmra.mrb[0].mxu0 %v8861
      %v9053 = vpop.f32.mrb[0].mxu0
      %v9054 = vadd.f32 0.0, %v9053
      %v9055 = vpop.f32.mrb[0].mxu0
      %9056 = vmatprep.mubr.f32.mxu0 0.0
      %9057 = vmatmul.mubr.f32.gmra.mrb[0].mxu0 %v8864
      %v9058 = vpop.f32.mrb[0].mxu0
      %v9059 = vadd.f32 0.0, %v9058
      %v9060 = vpop.f32.mrb[0].mxu0
      %9061 = vmatprep.mubr.f32.mxu0 0.0
      %9062 = vmatmul.mubr.f32.gmra.mrb[0].mxu0 %v8867
      %v9063 = vpop.f32.mrb[0].mxu0
      %v9064 = vadd.f32 0.0, %v9063
      %v9065 = vpop.f32.mrb[0].mxu0
      %9066 = vmatprep.mubr.f32.mxu0 0.0
      %9067 = vmatmul.mubr.f32.gmra.mrb[0].mxu0 %v8870
      %v9068 = vpop.f32.mrb[0].mxu0
      %v9069 = vadd.f32 0.0, %v9068
      %v9070 = vpop.f32.mrb[0].mxu0
      %9071 = vmatprep.mubr.f32.mxu0 0.0
      %9072 = vmatmul.mubr.f32.gmra.mrb[0].mxu0 %v8873
      %v9073 = vpop.f32.mrb[0].mxu0
      %v9074 = vadd.f32 0.0, %v9073
      %v9075 = vpop.f32.mrb[0].mxu0
      %9076 = vmatprep.mubr.f32.mxu0 0.0
      %9077 = vmatmul.mubr.f32.gmra.mrb[0].mxu0 %v8876
      %v9078 = vpop.f32.mrb[0].mxu0
      %v9079 = vadd.f32 0.0, %v9078
      %v9080 = vpop.f32.mrb[0].mxu0
      %9081 = vmatprep.mubr.f32.mxu0 0.0
      %9082 = vmatmul.mubr.f32.gmra.mrb[0].mxu0 %v8879
      %v9083 = vpop.f32.mrb[0].mxu0
      %v9084 = vadd.f32 0.0, %v9083
      %v9085 = vpop.f32.mrb[0].mxu0
      %9086 = vmatprep.mubr.f32.mxu0 0.0
      %9087 = vmatmul.mubr.f32.gmra.mrb[0].mxu0 %v8882
      %v9088 = vpop.f32.mrb[0].mxu0
      %v9089 = vadd.f32 0.0, %v9088
      %v9090 = vpop.f32.mrb[0].mxu0
      %9091 = vmatprep.mubr.f32.mxu0 0.0
      %9092 = vmatmul.mubr.f32.gmra.mrb[0].mxu0 %v8885
      %v9093 = vpop.f32.mrb[0].mxu0
      %v9094 = vadd.f32 0.0, %v9093
      %v9095 = vpop.f32.mrb[0].mxu0
      %9096 = vmatprep.mubr.f32.mxu0 0.0
      %9097 = vmatmul.mubr.f32.gmra.mrb[0].mxu0 %v8888
      %v9098 = vpop.f32.mrb[0].mxu0
      %v9099 = vadd.f32 0.0, %v9098
      %v9100 = vpop.f32.mrb[0].mxu0
      %9101 = vmatprep.mubr.f32.mxu0 0.0
      %9102 = vmatmul.mubr.f32.gmra.mrb[0].mxu0 %v8891
      %v9103 = vpop.f32.mrb[0].mxu0
      %v9104 = vadd.f32 0.0, %v9103
      %v9105 = vpop.f32.mrb[0].mxu0
      %9106 = vmatprep.mubr.f32.mxu0 0.0
      %9107 = vmatmul.mubr.f32.gmra.mrb[0].mxu0 %v8894
      %v9108 = vpop.f32.mrb[0].mxu0
      %v9109 = vadd.f32 0.0, %v9108
      %v9110 = vpop.f32.mrb[0].mxu0
      %9111 = vmatprep.mubr.f32.mxu0 0.0
      %9112 = vmatmul.mubr.f32.gmra.mrb[0].mxu0 %v8897
      %v9113 = vpop.f32.mrb[0].mxu0
      %v9114 = vadd.f32 0.0, %v9113
      %v9115 = vpop.f32.mrb[0].mxu0
      %9116 = vmatprep.mubr.f32.mxu0 0.0
      %9117 = vmatmul.mubr.f32.gmra.mrb[0].mxu0 %v8900
      %v9118 = vpop.f32.mrb[0].mxu0
      %v9119 = vadd.f32 0.0, %v9118
      %v9120 = vpop.f32.mrb[0].mxu0
      %9121 = vmatprep.mubr.f32.mxu0 0.0
      %9122 = vmatmul.mubr.f32.gmra.mrb[0].mxu0 %v8903
      %v9123 = vpop.f32.mrb[0].mxu0
      %v9124 = vadd.f32 0.0, %v9123
      %v9125 = vpop.f32.mrb[0].mxu0
      %9126 = vmatprep.mubr.f32.mxu0 0.0
      %9127 = vmatmul.mubr.f32.gmra.mrb[0].mxu0 %v8906
      %v9128 = vpop.f32.mrb[0].mxu0
      %v9129 = vadd.f32 0.0, %v9128
      %v9130 = vpop.f32.mrb[0].mxu0
      %9131 = vmatprep.mubr.f32.mxu0 0.0
      %9132 = vmatmul.mubr.f32.gmra.mrb[0].mxu0 %v8909
      %v9133 = vpop.f32.mrb[0].mxu0
      %v9134 = vadd.f32 0.0, %v9133
      %v9135 = vpop.f32.mrb[0].mxu0
      %9136 = vmatprep.mubr.f32.mxu0 0.0
      %9137 = vmatmul.mubr.f32.gmra.mrb[0].mxu0 %v8912
      %v9138 = vpop.f32.mrb[0].mxu0
      %v9139 = vadd.f32 0.0, %v9138
      %v9140 = vpop.f32.mrb[0].mxu0
      %9141 = vdwg.mxu0
      %v9142 = vadd.f32 %v8712, %v8984
      %v9143 = vadd.f32 %v8713, %v8989
      %v9144 = vadd.f32 %v8714, %v8994
      %v9145 = vadd.f32 %v8715, %v8999
      %v9146 = vadd.f32 %v8716, %v9004
      %v9147 = vadd.f32 %v8717, %v9009
      %v9148 = vadd.f32 %v8718, %v9014
      %v9149 = vadd.f32 %v8719, %v9019
      %v9150 = vadd.f32 %v8720, %v9024
      %v9151 = vadd.f32 %v8721, %v9029
      %v9152 = vadd.f32 %v8722, %v9034
      %v9153 = vadd.f32 %v8723, %v9039
      %v9154 = vadd.f32 %v8724, %v9044
      %v9155 = vadd.f32 %v8725, %v9049
      %v9156 = vadd.f32 %v8726, %v9054
      %v9157 = vadd.f32 %v8727, %v9059
      %v9158 = vadd.f32 %v8728, %v9064
      %v9159 = vadd.f32 %v8729, %v9069
      %v9160 = vadd.f32 %v8730, %v9074
      %v9161 = vadd.f32 %v8731, %v9079
      %v9162 = vadd.f32 %v8732, %v9084
      %v9163 = vadd.f32 %v8733, %v9089
      %v9164 = vadd.f32 %v8734, %v9094
      %v9165 = vadd.f32 %v8735, %v9099
      %v9166 = vadd.f32 %v8736, %v9104
      %v9167 = vadd.f32 %v8737, %v9109
      %v9168 = vadd.f32 %v8738, %v9114
      %v9169 = vadd.f32 %v8739, %v9119
      %v9170 = vadd.f32 %v8740, %v9124
      %v9171 = vadd.f32 %v8741, %v9129
      %v9172 = vadd.f32 %v8742, %v9134
      %v9173 = vadd.f32 %v8743, %v9139
      %9174 = vst.msk [vmem:[%s254] sm:$0xff] %vm808, %v9142
      %9175 = vst.msk [vmem:[%s254 + $0x8] sm:$0xff] %vm808, %v9143
      %9176 = vst.msk [vmem:[%s254 + $0x10] sm:$0xff] %vm808, %v9144
      %9177 = vst.msk [vmem:[%s254 + $0x18] sm:$0xff] %vm808, %v9145
      %9178 = vst.msk [vmem:[%s254 + $0x20] sm:$0xff] %vm808, %v9146
      %9179 = vst.msk [vmem:[%s254 + $0x28] sm:$0xff] %vm808, %v9147
      %9180 = vst.msk [vmem:[%s254 + $0x30] sm:$0xff] %vm808, %v9148
      %9181 = vst.msk [vmem:[%s254 + $0x38] sm:$0xff] %vm808, %v9149
      %9182 = vst.msk [vmem:[%s254 + $0x40] sm:$0xff] %vm808, %v9150
      %9183 = vst.msk [vmem:[%s254 + $0x48] sm:$0xff] %vm808, %v9151
      %9184 = vst.msk [vmem:[%s254 + $0x50] sm:$0xff] %vm808, %v9152
      %9185 = vst.msk [vmem:[%s254 + $0x58] sm:$0xff] %vm808, %v9153
      %9186 = vst.msk [vmem:[%s254 + $0x60] sm:$0xff] %vm808, %v9154
      %9187 = vst.msk [vmem:[%s254 + $0x68] sm:$0xff] %vm808, %v9155
      %9188 = vst.msk [vmem:[%s254 + $0x70] sm:$0xff] %vm808, %v9156
      %9189 = vst.msk [vmem:[%s254 + $0x78] sm:$0xff] %vm808, %v9157
      %9190 = vst.msk [vmem:[%s254 + $0x80] sm:$0xff] %vm808, %v9158
      %9191 = vst.msk [vmem:[%s254 + $0x88] sm:$0xff] %vm808, %v9159
      %9192 = vst.msk [vmem:[%s254 + $0x90] sm:$0xff] %vm808, %v9160
      %9193 = vst.msk [vmem:[%s254 + $0x98] sm:$0xff] %vm808, %v9161
      %9194 = vst.msk [vmem:[%s254 + $0xa0] sm:$0xff] %vm808, %v9162
      %9195 = vst.msk [vmem:[%s254 + $0xa8] sm:$0xff] %vm808, %v9163
      %9196 = vst.msk [vmem:[%s254 + $0xb0] sm:$0xff] %vm808, %v9164
      %9197 = vst.msk [vmem:[%s254 + $0xb8] sm:$0xff] %vm808, %v9165
      %9198 = vst.msk [vmem:[%s254 + $0xc0] sm:$0xff] %vm808, %v9166
      %9199 = vst.msk [vmem:[%s254 + $0xc8] sm:$0xff] %vm808, %v9167
      %9200 = vst.msk [vmem:[%s254 + $0xd0] sm:$0xff] %vm808, %v9168
      %9201 = vst.msk [vmem:[%s254 + $0xd8] sm:$0xff] %vm808, %v9169
      %9202 = vst.msk [vmem:[%s254 + $0xe0] sm:$0xff] %vm808, %v9170
      %9203 = vst.msk [vmem:[%s254 + $0xe8] sm:$0xff] %vm808, %v9171
      %9204 = vst.msk [vmem:[%s254 + $0xf0] sm:$0xff] %vm808, %v9172
      %9205 = vst.msk [vmem:[%s254 + $0xf8] sm:$0xff] %vm808, %v9173
      %p9206 = scmp.lt.s32.totalorder %s20, 1
      %s9207 = scalar_select %p9206, %s20, 1
      %s9208 = smul.addr %s9207, 32
      %s9209 = smul.addr %s9208, 8
      %s9210 = scalar_lea.vmem %s6, %s9209
      // Predicated region
      $region45: #{tpu_custom_call.1} parent=43 // pred_check
        %p9211 = pneg %p169
      $region46: #{tpu_custom_call.1} parent=43 // pred_check_branch
        %9213 = sbr.rel (%p9211) target = $region48
      $region47: #{tpu_custom_call.1} parent=43 // pred_region
        _
      $region48: #{tpu_custom_call.1} parent=43 // pred_fallthru
        _
    $region44: #{tpu_custom_call.1} parent=5 // pred_fallthru
      _
    %p9214 = scmp.le.s32.totalorder 2, %s15
    // Predicated region
    $region49: #{tpu_custom_call.1} parent=5 // pred_check
      %p9215 = pneg %p9214
    $region50: #{tpu_custom_call.1} parent=5 // pred_check_branch
      %9217 = sbr.rel (%p9215) target = $region52
    $region51: #{tpu_custom_call.1} parent=5 // pred_region
      %s9218 = ssub.s32 %s15, 2
      // Predicated region
      $region53: #{tpu_custom_call.1} parent=51 // pred_check
        %p9219 = pneg %p175
      $region54: #{tpu_custom_call.1} parent=51 // pred_check_branch
        %9221 = sbr.rel (%p9219) target = $region56
      $region55: #{tpu_custom_call.1} parent=51 // pred_region
        %p9222 = scmp.lt.s32.totalorder %s21, 1
        %s9223 = scalar_select %p9222, %s21, 1
        %s9224 = smul.addr %s9223, 32
        %s9225 = smul.addr %s9224, 8
        %s9226 = scalar_lea.vmem %s6, %s9225
      $region56: #{tpu_custom_call.1} parent=51 // pred_fallthru
        _
    $region52: #{tpu_custom_call.1} parent=5 // pred_fallthru
      _
  $region6: #{tpu_custom_call.1} parent=0 // loop_footer
    %s19 = sadd.s32 1, %s15
  $region7: #{tpu_custom_call.1} parent=0 // loop_footer_branch
    %14 = sbr.rel target = $region3
  $region8: #{tpu_custom_call.1} parent=0 // loop_exit
    _

</llo_original>
